<compile_context>
chip_gen: v6e
topology: v6e:2x2x1
jax: 0.10.0
libtpu: 0.0.40
codegen_flags: <defaults>
</compile_context>

<pallas_src>
import jax
import jax.numpy as jnp
from jax import lax
from jax.experimental import pallas as pl
from jax.experimental.pallas import tpu as pltpu

CHA = 4
PATCH_SIZES = (1, 3, 5, 7)
KSIZE = max(PATCH_SIZES)      # folded kernel size: 7
PAD = (KSIZE - 1) // 2        # 3


def _round_up(v, m):
    return -(-v // m) * m


def _fold_weights(conv_weights_oihw, proj_weight_oihw):
    """Fold the 4 branch convs + the 1x1 projection into one flat (K*K*C*C,) weight vector.

    out = proj(concat_b conv_b(x)) == conv7x7(x, W_fold) with
    W_fold[kh, kw, ci, co] = sum_b sum_ob proj[co, b*C+ob] * W_b[ob, ci, kh-off_b, kw-off_b],
    off_b = 3 - (ps_b - 1)//2.  Exact (everything is linear).
    Flat index: ((kh*K + kw)*C + ci)*C + co.
    """
    C = conv_weights_oihw[0].shape[0]
    wproj = proj_weight_oihw[:, :, 0, 0].astype(jnp.float32)            # (C, 4C): [co, b*C+ob]
    w_fold = jnp.zeros((KSIZE, KSIZE, C, C), jnp.float32)               # (kh, kw, ci, co)
    for b, w in enumerate(conv_weights_oihw):
        ps = w.shape[-1]
        off = PAD - (ps - 1) // 2
        pb = wproj[:, b * C:(b + 1) * C]                                # (co, ob)
        wf = jnp.einsum('ab,bikl->aikl', pb, w.astype(jnp.float32),
                        precision=lax.Precision.HIGHEST)                # (co, ci, kh, kw)
        w_fold = w_fold.at[off:off + ps, off:off + ps].add(jnp.transpose(wf, (2, 3, 1, 0)))
    return w_fold.reshape(-1)


def _msc_kernel(x_ref, w_ref, o_ref):
    # x_ref: (C, Hg+2*PAD, LB) packed input lane-block (guards + halos already materialised), VMEM
    # w_ref: (K*K*C*C,)        folded weights, flat f32 scalars in SMEM
    # o_ref: (C, Hg, LB)       output lane-block (first Wt lanes of each segment are meaningful;
    #                          the wrapper discards the per-segment guard lanes)
    C, Hp, LB = x_ref.shape
    Hg = Hp - 2 * PAD

    acc = [jnp.zeros((Hg, LB), jnp.float32) for _ in range(C)]
    for ci in range(C):
        for kh in range(KSIZE):
            rows = x_ref[ci, kh:kh + Hg, :]                  # static sublane-offset load, (Hg, LB)
            for kw in range(KSIZE):
                # patch[h, l] == rows[h, l + kw]: a static lane rotate on the XLU (free slot);
                # wrap-around only lands in discarded guard/padding lanes.
                patch = pltpu.roll(rows, LB - kw, 1) if kw else rows
                base = (kh * KSIZE + kw) * C * C + ci * C
                for co in range(C):
                    # SMEM scalar * full (Hg, LB) plane: scalar-operand vmul + vadd on the VPU.
                    acc[co] = acc[co] + w_ref[base + co] * patch
    for co in range(C):
        o_ref[co] = acc[co]


def _choose_tiling(N, H, W):
    """Pick (Wt, Hg, spb): column-tile width, rows per segment, segments per lane block."""
    # Column tile: whole rows when they fit a vreg row; else the divisor of W that best fills
    # 128 lanes once the 2*PAD halo columns are added (and wastes least on the halo itself).
    if W + 2 * PAD <= 128:
        Wt = W
    else:
        cands = [d for d in range(1, W + 1) if W % d == 0 and d + 2 * PAD <= 128]
        if cands:
            def score(d):
                sw = d + 2 * PAD
                return (max(1, 128 // sw) * sw) / 128.0 * (d / sw)
            Wt = max(cands, key=score)
        else:
            Wt = W                            # rare fallback (W prime > 122)
    seg_w = Wt + 2 * PAD

    # Rows per segment: as tall as possible (amortise the 2*PAD-row halo and per-step overhead)
    # subject to the accumulator vreg budget; for tiny images prefer more, shorter segments so
    # the 128-lane rows actually get filled.  Prefer multiples of 8 (clean sublane layout).
    divs = [d for d in range(1, H + 1) if H % d == 0 and d <= 64]
    pref = [d for d in divs if d % 8 == 0] or divs
    total_lanes = lambda d: N * (H // d) * (W // Wt) * seg_w
    ok = [d for d in pref if total_lanes(d) >= 256]
    Hg = max(ok) if ok else min(pref)

    # Segments per lane block: fill one 128-lane vreg row, capped so the per-channel f32
    # accumulator stays <= 8192 elements (<= 8 vregs -> <= 32 vregs for C=4).
    S = N * (H // Hg) * (W // Wt)
    cap = max(1, (8192 // max(Hg, 1)) // seg_w)
    spb = min(S, max(1, 128 // seg_w), cap)
    if -(-S // spb) == 1 and S >= 2:
        spb = -(-S // 2)                      # >= 2 grid steps so both v7x TensorCores are fed
    return Wt, Hg, spb


def multi_scale_conv(x_nchw, conv_weights_oihw, proj_weight_oihw):
    """x_nchw: (N, C, H, W) f32. conv_weights_oihw: list of (C, C, ps, ps). proj: (C, 4C, 1, 1)."""
    N, C, H, W = x_nchw.shape
    assert C == conv_weights_oihw[0].shape[0]
    w_flat = _fold_weights(conv_weights_oihw, proj_weight_oihw)

    Wt, Hg, spb = _choose_tiling(N, H, W)
    seg_w = Wt + 2 * PAD
    Hp = Hg + 2 * PAD
    G, CG = H // Hg, W // Wt
    S = N * G * CG
    num_blocks = -(-S // spb)
    S_pad = num_blocks * spb
    lane_block = _round_up(spb * seg_w, 128)

    # ---- pack: gather (batch, row-group, col-group) windows -- SAME-padding zeros and
    # inter-segment halos included -- and lay the segments along the 128-lane axis.
    x = x_nchw.astype(jnp.float32)
    xp = jnp.pad(x, ((0, 0), (0, 0), (PAD, PAD), (PAD, PAD)))
    xr = jnp.stack([xp[:, :, g * Hg:g * Hg + Hp, :] for g in range(G)], axis=1)      # (N,G,C,Hp,W+2P)
    xc = jnp.stack([xr[..., cg * Wt:cg * Wt + seg_w] for cg in range(CG)], axis=2)   # (N,G,CG,C,Hp,sw)
    pack = jnp.transpose(xc, (3, 4, 0, 1, 2, 5)).reshape(C, Hp, S * seg_w)
    pack = jnp.pad(pack, ((0, 0), (0, 0), (0, (S_pad - S) * seg_w)))
    pack = pack.reshape(C, Hp, num_blocks, spb * seg_w)
    pack = jnp.pad(pack, ((0, 0), (0, 0), (0, 0), (0, lane_block - spb * seg_w)))
    pack = pack.reshape(C, Hp, num_blocks * lane_block)

    out_packed = pl.pallas_call(
        _msc_kernel,
        out_shape=jax.ShapeDtypeStruct((C, Hg, num_blocks * lane_block), jnp.float32),
        grid_spec=pltpu.PrefetchScalarGridSpec(
            num_scalar_prefetch=0,
            grid=(num_blocks,),
            in_specs=[
                # one lane block per grid step -- each input element is fetched once
                pl.BlockSpec((C, Hp, lane_block), lambda b: (0, 0, b)),
                # folded conv weights as SMEM scalars
                pl.BlockSpec(memory_space=pltpu.MemorySpace.SMEM),
            ],
            out_specs=pl.BlockSpec((C, Hg, lane_block), lambda b: (0, 0, b)),
        ),
        compiler_params=pltpu.CompilerParams(
            dimension_semantics=("parallel",),
        ),
    )(pack, w_flat)

    # ---- unpack: drop lane padding + per-segment guard columns, restore (N, C, H, W).
    o = out_packed.reshape(C, Hg, num_blocks, lane_block)[..., :spb * seg_w]
    o = o.reshape(C, Hg, S_pad, seg_w)[:, :, :S, :Wt]
    o = o.reshape(C, Hg, N, G, CG, Wt)
    return jnp.transpose(o, (2, 0, 3, 1, 4, 5)).reshape(N, C, H, W)


def _reference(x_nchw, conv_weights_oihw, proj_weight_oihw):
    outs = []
    for w in conv_weights_oihw:
        ps = w.shape[-1]
        pad = (ps - 1) // 2
        outs.append(lax.conv_general_dilated(
            x_nchw, w, window_strides=(1, 1),
            padding=((pad, pad), (pad, pad)),
            dimension_numbers=("NCHW", "OIHW", "NCHW"),
            precision=lax.Precision.HIGHEST))
    cat = jnp.concatenate(outs, axis=1)
    return lax.conv_general_dilated(
        cat, proj_weight_oihw, window_strides=(1, 1), padding="VALID",
        dimension_numbers=("NCHW", "OIHW", "NCHW"),
        precision=lax.Precision.HIGHEST)


if __name__ == "__main__":
    key = jax.random.PRNGKey(0)
    k_x, k_p, *k_ws = jax.random.split(key, 2 + len(PATCH_SIZES))

    N, C, H, W = 2, CHA, 16, 16
    x = jax.random.normal(k_x, (N, C, H, W), dtype=jnp.float32)
    # Deterministic synthetic parameters (no bias, matching nn.Conv2d weight shapes).
    conv_weights = [0.1 * jax.random.normal(k, (C, C, ps, ps), dtype=jnp.float32)
                    for k, ps in zip(k_ws, PATCH_SIZES)]
    proj_weight = 0.1 * jax.random.normal(k_p, (C, 4 * C, 1, 1), dtype=jnp.float32)

    msc = jax.jit(multi_scale_conv)

    # Narrow-image path: batch + row-group segments packed along the 128 lanes (2 lane blocks,
    # exercises the inter-row-group halos and the image-border zero guards).
    out = jax.block_until_ready(msc(x, conv_weights, proj_weight))
    ref = _reference(x, conv_weights, proj_weight)
    assert out.shape == (N, C, H, W)
    assert jnp.allclose(out, ref, atol=1e-4, rtol=1e-4), "mismatch vs reference conv (16x16)"

    # Wide-image path: column tiles with 3-column halos packed along lanes (exercises CG > 1
    # and a zero-padded trailing segment in the last lane block).
    x2 = jax.random.normal(jax.random.PRNGKey(1), (1, C, 8, 256), dtype=jnp.float32)
    out2 = jax.block_until_ready(msc(x2, conv_weights, proj_weight))
    ref2 = _reference(x2, conv_weights, proj_weight)
    assert jnp.allclose(out2, ref2, atol=1e-4, rtol=1e-4), "mismatch vs reference conv (wide W)"

    print("KERNEL_OK")
</pallas_src>

<mosaic_0001>
module attributes {stable_mosaic.version = 11 : i64} {
  func.func @_msc_kernel(%arg0: i32, %arg1: memref<4x14x128xf32, #tpu.memory_space<vmem>>, %arg2: memref<784xf32, #tpu.memory_space<smem>>, %arg3: memref<4x8x128xf32, #tpu.memory_space<vmem>>) attributes {dimension_semantics = [#tpu.dimension_semantics<parallel>], iteration_bounds = array<i64: 2>, scalar_prefetch = 0 : i64, scratch_operands = 0 : i64, tpu.core_type = #tpu.core_type<tc>, window_params = [{transform_indices = @transform_0, window_bounds = array<i64: 4, 14, 128>}, {transform_indices = @transform_1, window_bounds = array<i64: 784>}, {transform_indices = @transform_2, window_bounds = array<i64: 4, 8, 128>}]} {
    %cst = arith.constant 0.000000e+00 : f32
    %0 = vector.broadcast %cst : f32 to vector<8x128xf32>
    %cst_0 = arith.constant 0.000000e+00 : f32
    %1 = vector.broadcast %cst_0 : f32 to vector<8x128xf32>
    %cst_1 = arith.constant 0.000000e+00 : f32
    %2 = vector.broadcast %cst_1 : f32 to vector<8x128xf32>
    %cst_2 = arith.constant 0.000000e+00 : f32
    %3 = vector.broadcast %cst_2 : f32 to vector<8x128xf32>
    %c0 = arith.constant 0 : index
    %c0_3 = arith.constant 0 : index
    %c0_4 = arith.constant 0 : index
    %4 = vector.load %arg1[%c0, %c0_3, %c0_4] : memref<4x14x128xf32, #tpu.memory_space<vmem>>, vector<1x8x128xf32>
    %5 = vector.shape_cast %4 : vector<1x8x128xf32> to vector<8x128xf32>
    %c0_5 = arith.constant 0 : index
    %6 = memref.load %arg2[%c0_5] : memref<784xf32, #tpu.memory_space<smem>>
    %7 = vector.broadcast %6 : f32 to vector<8x128xf32>
    %8 = arith.mulf %7, %5 : vector<8x128xf32>
    %9 = arith.addf %0, %8 : vector<8x128xf32>
    %c1 = arith.constant 1 : index
    %10 = memref.load %arg2[%c1] : memref<784xf32, #tpu.memory_space<smem>>
    %11 = vector.broadcast %10 : f32 to vector<8x128xf32>
    %12 = arith.mulf %11, %5 : vector<8x128xf32>
    %13 = arith.addf %1, %12 : vector<8x128xf32>
    %c2 = arith.constant 2 : index
    %14 = memref.load %arg2[%c2] : memref<784xf32, #tpu.memory_space<smem>>
    %15 = vector.broadcast %14 : f32 to vector<8x128xf32>
    %16 = arith.mulf %15, %5 : vector<8x128xf32>
    %17 = arith.addf %2, %16 : vector<8x128xf32>
    %c3 = arith.constant 3 : index
    %18 = memref.load %arg2[%c3] : memref<784xf32, #tpu.memory_space<smem>>
    %19 = vector.broadcast %18 : f32 to vector<8x128xf32>
    %20 = arith.mulf %19, %5 : vector<8x128xf32>
    %21 = arith.addf %3, %20 : vector<8x128xf32>
    %c127_i32 = arith.constant 127 : i32
    %22 = tpu.dynamic_rotate %5 by %c127_i32 dim 1 : vector<8x128xf32>, i32 -> vector<8x128xf32>
    %c16 = arith.constant 16 : index
    %23 = memref.load %arg2[%c16] : memref<784xf32, #tpu.memory_space<smem>>
    %24 = vector.broadcast %23 : f32 to vector<8x128xf32>
    %25 = arith.mulf %24, %22 : vector<8x128xf32>
    %26 = arith.addf %9, %25 : vector<8x128xf32>
    %c17 = arith.constant 17 : index
    %27 = memref.load %arg2[%c17] : memref<784xf32, #tpu.memory_space<smem>>
    %28 = vector.broadcast %27 : f32 to vector<8x128xf32>
    %29 = arith.mulf %28, %22 : vector<8x128xf32>
    %30 = arith.addf %13, %29 : vector<8x128xf32>
    %c18 = arith.constant 18 : index
    %31 = memref.load %arg2[%c18] : memref<784xf32, #tpu.memory_space<smem>>
    %32 = vector.broadcast %31 : f32 to vector<8x128xf32>
    %33 = arith.mulf %32, %22 : vector<8x128xf32>
    %34 = arith.addf %17, %33 : vector<8x128xf32>
    %c19 = arith.constant 19 : index
    %35 = memref.load %arg2[%c19] : memref<784xf32, #tpu.memory_space<smem>>
    %36 = vector.broadcast %35 : f32 to vector<8x128xf32>
    %37 = arith.mulf %36, %22 : vector<8x128xf32>
    %38 = arith.addf %21, %37 : vector<8x128xf32>
    %c126_i32 = arith.constant 126 : i32
    %39 = tpu.dynamic_rotate %5 by %c126_i32 dim 1 : vector<8x128xf32>, i32 -> vector<8x128xf32>
    %c32 = arith.constant 32 : index
    %40 = memref.load %arg2[%c32] : memref<784xf32, #tpu.memory_space<smem>>
    %41 = vector.broadcast %40 : f32 to vector<8x128xf32>
    %42 = arith.mulf %41, %39 : vector<8x128xf32>
    %43 = arith.addf %26, %42 : vector<8x128xf32>
    %c33 = arith.constant 33 : index
    %44 = memref.load %arg2[%c33] : memref<784xf32, #tpu.memory_space<smem>>
    %45 = vector.broadcast %44 : f32 to vector<8x128xf32>
    %46 = arith.mulf %45, %39 : vector<8x128xf32>
    %47 = arith.addf %30, %46 : vector<8x128xf32>
    %c34 = arith.constant 34 : index
    %48 = memref.load %arg2[%c34] : memref<784xf32, #tpu.memory_space<smem>>
    %49 = vector.broadcast %48 : f32 to vector<8x128xf32>
    %50 = arith.mulf %49, %39 : vector<8x128xf32>
    %51 = arith.addf %34, %50 : vector<8x128xf32>
    %c35 = arith.constant 35 : index
    %52 = memref.load %arg2[%c35] : memref<784xf32, #tpu.memory_space<smem>>
    %53 = vector.broadcast %52 : f32 to vector<8x128xf32>
    %54 = arith.mulf %53, %39 : vector<8x128xf32>
    %55 = arith.addf %38, %54 : vector<8x128xf32>
    %c125_i32 = arith.constant 125 : i32
    %56 = tpu.dynamic_rotate %5 by %c125_i32 dim 1 : vector<8x128xf32>, i32 -> vector<8x128xf32>
    %c48 = arith.constant 48 : index
    %57 = memref.load %arg2[%c48] : memref<784xf32, #tpu.memory_space<smem>>
    %58 = vector.broadcast %57 : f32 to vector<8x128xf32>
    %59 = arith.mulf %58, %56 : vector<8x128xf32>
    %60 = arith.addf %43, %59 : vector<8x128xf32>
    %c49 = arith.constant 49 : index
    %61 = memref.load %arg2[%c49] : memref<784xf32, #tpu.memory_space<smem>>
    %62 = vector.broadcast %61 : f32 to vector<8x128xf32>
    %63 = arith.mulf %62, %56 : vector<8x128xf32>
    %64 = arith.addf %47, %63 : vector<8x128xf32>
    %c50 = arith.constant 50 : index
    %65 = memref.load %arg2[%c50] : memref<784xf32, #tpu.memory_space<smem>>
    %66 = vector.broadcast %65 : f32 to vector<8x128xf32>
    %67 = arith.mulf %66, %56 : vector<8x128xf32>
    %68 = arith.addf %51, %67 : vector<8x128xf32>
    %c51 = arith.constant 51 : index
    %69 = memref.load %arg2[%c51] : memref<784xf32, #tpu.memory_space<smem>>
    %70 = vector.broadcast %69 : f32 to vector<8x128xf32>
    %71 = arith.mulf %70, %56 : vector<8x128xf32>
    %72 = arith.addf %55, %71 : vector<8x128xf32>
    %c124_i32 = arith.constant 124 : i32
    %73 = tpu.dynamic_rotate %5 by %c124_i32 dim 1 : vector<8x128xf32>, i32 -> vector<8x128xf32>
    %c64 = arith.constant 64 : index
    %74 = memref.load %arg2[%c64] : memref<784xf32, #tpu.memory_space<smem>>
    %75 = vector.broadcast %74 : f32 to vector<8x128xf32>
    %76 = arith.mulf %75, %73 : vector<8x128xf32>
    %77 = arith.addf %60, %76 : vector<8x128xf32>
    %c65 = arith.constant 65 : index
    %78 = memref.load %arg2[%c65] : memref<784xf32, #tpu.memory_space<smem>>
    %79 = vector.broadcast %78 : f32 to vector<8x128xf32>
    %80 = arith.mulf %79, %73 : vector<8x128xf32>
    %81 = arith.addf %64, %80 : vector<8x128xf32>
    %c66 = arith.constant 66 : index
    %82 = memref.load %arg2[%c66] : memref<784xf32, #tpu.memory_space<smem>>
    %83 = vector.broadcast %82 : f32 to vector<8x128xf32>
    %84 = arith.mulf %83, %73 : vector<8x128xf32>
    %85 = arith.addf %68, %84 : vector<8x128xf32>
    %c67 = arith.constant 67 : index
    %86 = memref.load %arg2[%c67] : memref<784xf32, #tpu.memory_space<smem>>
    %87 = vector.broadcast %86 : f32 to vector<8x128xf32>
    %88 = arith.mulf %87, %73 : vector<8x128xf32>
    %89 = arith.addf %72, %88 : vector<8x128xf32>
    %c123_i32 = arith.constant 123 : i32
    %90 = tpu.dynamic_rotate %5 by %c123_i32 dim 1 : vector<8x128xf32>, i32 -> vector<8x128xf32>
    %c80 = arith.constant 80 : index
    %91 = memref.load %arg2[%c80] : memref<784xf32, #tpu.memory_space<smem>>
    %92 = vector.broadcast %91 : f32 to vector<8x128xf32>
    %93 = arith.mulf %92, %90 : vector<8x128xf32>
    %94 = arith.addf %77, %93 : vector<8x128xf32>
    %c81 = arith.constant 81 : index
    %95 = memref.load %arg2[%c81] : memref<784xf32, #tpu.memory_space<smem>>
    %96 = vector.broadcast %95 : f32 to vector<8x128xf32>
    %97 = arith.mulf %96, %90 : vector<8x128xf32>
    %98 = arith.addf %81, %97 : vector<8x128xf32>
    %c82 = arith.constant 82 : index
    %99 = memref.load %arg2[%c82] : memref<784xf32, #tpu.memory_space<smem>>
    %100 = vector.broadcast %99 : f32 to vector<8x128xf32>
    %101 = arith.mulf %100, %90 : vector<8x128xf32>
    %102 = arith.addf %85, %101 : vector<8x128xf32>
    %c83 = arith.constant 83 : index
    %103 = memref.load %arg2[%c83] : memref<784xf32, #tpu.memory_space<smem>>
    %104 = vector.broadcast %103 : f32 to vector<8x128xf32>
    %105 = arith.mulf %104, %90 : vector<8x128xf32>
    %106 = arith.addf %89, %105 : vector<8x128xf32>
    %c122_i32 = arith.constant 122 : i32
    %107 = tpu.dynamic_rotate %5 by %c122_i32 dim 1 : vector<8x128xf32>, i32 -> vector<8x128xf32>
    %c96 = arith.constant 96 : index
    %108 = memref.load %arg2[%c96] : memref<784xf32, #tpu.memory_space<smem>>
    %109 = vector.broadcast %108 : f32 to vector<8x128xf32>
    %110 = arith.mulf %109, %107 : vector<8x128xf32>
    %111 = arith.addf %94, %110 : vector<8x128xf32>
    %c97 = arith.constant 97 : index
    %112 = memref.load %arg2[%c97] : memref<784xf32, #tpu.memory_space<smem>>
    %113 = vector.broadcast %112 : f32 to vector<8x128xf32>
    %114 = arith.mulf %113, %107 : vector<8x128xf32>
    %115 = arith.addf %98, %114 : vector<8x128xf32>
    %c98 = arith.constant 98 : index
    %116 = memref.load %arg2[%c98] : memref<784xf32, #tpu.memory_space<smem>>
    %117 = vector.broadcast %116 : f32 to vector<8x128xf32>
    %118 = arith.mulf %117, %107 : vector<8x128xf32>
    %119 = arith.addf %102, %118 : vector<8x128xf32>
    %c99 = arith.constant 99 : index
    %120 = memref.load %arg2[%c99] : memref<784xf32, #tpu.memory_space<smem>>
    %121 = vector.broadcast %120 : f32 to vector<8x128xf32>
    %122 = arith.mulf %121, %107 : vector<8x128xf32>
    %123 = arith.addf %106, %122 : vector<8x128xf32>
    %c0_6 = arith.constant 0 : index
    %c1_7 = arith.constant 1 : index
    %c0_8 = arith.constant 0 : index
    %124 = vector.load %arg1[%c0_6, %c1_7, %c0_8] : memref<4x14x128xf32, #tpu.memory_space<vmem>>, vector<1x8x128xf32>
    %125 = vector.shape_cast %124 : vector<1x8x128xf32> to vector<8x128xf32>
    %c112 = arith.constant 112 : index
    %126 = memref.load %arg2[%c112] : memref<784xf32, #tpu.memory_space<smem>>
    %127 = vector.broadcast %126 : f32 to vector<8x128xf32>
    %128 = arith.mulf %127, %125 : vector<8x128xf32>
    %129 = arith.addf %111, %128 : vector<8x128xf32>
    %c113 = arith.constant 113 : index
    %130 = memref.load %arg2[%c113] : memref<784xf32, #tpu.memory_space<smem>>
    %131 = vector.broadcast %130 : f32 to vector<8x128xf32>
    %132 = arith.mulf %131, %125 : vector<8x128xf32>
    %133 = arith.addf %115, %132 : vector<8x128xf32>
    %c114 = arith.constant 114 : index
    %134 = memref.load %arg2[%c114] : memref<784xf32, #tpu.memory_space<smem>>
    %135 = vector.broadcast %134 : f32 to vector<8x128xf32>
    %136 = arith.mulf %135, %125 : vector<8x128xf32>
    %137 = arith.addf %119, %136 : vector<8x128xf32>
    %c115 = arith.constant 115 : index
    %138 = memref.load %arg2[%c115] : memref<784xf32, #tpu.memory_space<smem>>
    %139 = vector.broadcast %138 : f32 to vector<8x128xf32>
    %140 = arith.mulf %139, %125 : vector<8x128xf32>
    %141 = arith.addf %123, %140 : vector<8x128xf32>
    %c127_i32_9 = arith.constant 127 : i32
    %142 = tpu.dynamic_rotate %125 by %c127_i32_9 dim 1 : vector<8x128xf32>, i32 -> vector<8x128xf32>
    %c128 = arith.constant 128 : index
    %143 = memref.load %arg2[%c128] : memref<784xf32, #tpu.memory_space<smem>>
    %144 = vector.broadcast %143 : f32 to vector<8x128xf32>
    %145 = arith.mulf %144, %142 : vector<8x128xf32>
    %146 = arith.addf %129, %145 : vector<8x128xf32>
    %c129 = arith.constant 129 : index
    %147 = memref.load %arg2[%c129] : memref<784xf32, #tpu.memory_space<smem>>
    %148 = vector.broadcast %147 : f32 to vector<8x128xf32>
    %149 = arith.mulf %148, %142 : vector<8x128xf32>
    %150 = arith.addf %133, %149 : vector<8x128xf32>
    %c130 = arith.constant 130 : index
    %151 = memref.load %arg2[%c130] : memref<784xf32, #tpu.memory_space<smem>>
    %152 = vector.broadcast %151 : f32 to vector<8x128xf32>
    %153 = arith.mulf %152, %142 : vector<8x128xf32>
    %154 = arith.addf %137, %153 : vector<8x128xf32>
    %c131 = arith.constant 131 : index
    %155 = memref.load %arg2[%c131] : memref<784xf32, #tpu.memory_space<smem>>
    %156 = vector.broadcast %155 : f32 to vector<8x128xf32>
    %157 = arith.mulf %156, %142 : vector<8x128xf32>
    %158 = arith.addf %141, %157 : vector<8x128xf32>
    %c126_i32_10 = arith.constant 126 : i32
    %159 = tpu.dynamic_rotate %125 by %c126_i32_10 dim 1 : vector<8x128xf32>, i32 -> vector<8x128xf32>
    %c144 = arith.constant 144 : index
    %160 = memref.load %arg2[%c144] : memref<784xf32, #tpu.memory_space<smem>>
    %161 = vector.broadcast %160 : f32 to vector<8x128xf32>
    %162 = arith.mulf %161, %159 : vector<8x128xf32>
    %163 = arith.addf %146, %162 : vector<8x128xf32>
    %c145 = arith.constant 145 : index
    %164 = memref.load %arg2[%c145] : memref<784xf32, #tpu.memory_space<smem>>
    %165 = vector.broadcast %164 : f32 to vector<8x128xf32>
    %166 = arith.mulf %165, %159 : vector<8x128xf32>
    %167 = arith.addf %150, %166 : vector<8x128xf32>
    %c146 = arith.constant 146 : index
    %168 = memref.load %arg2[%c146] : memref<784xf32, #tpu.memory_space<smem>>
    %169 = vector.broadcast %168 : f32 to vector<8x128xf32>
    %170 = arith.mulf %169, %159 : vector<8x128xf32>
    %171 = arith.addf %154, %170 : vector<8x128xf32>
    %c147 = arith.constant 147 : index
    %172 = memref.load %arg2[%c147] : memref<784xf32, #tpu.memory_space<smem>>
    %173 = vector.broadcast %172 : f32 to vector<8x128xf32>
    %174 = arith.mulf %173, %159 : vector<8x128xf32>
    %175 = arith.addf %158, %174 : vector<8x128xf32>
    %c125_i32_11 = arith.constant 125 : i32
    %176 = tpu.dynamic_rotate %125 by %c125_i32_11 dim 1 : vector<8x128xf32>, i32 -> vector<8x128xf32>
    %c160 = arith.constant 160 : index
    %177 = memref.load %arg2[%c160] : memref<784xf32, #tpu.memory_space<smem>>
    %178 = vector.broadcast %177 : f32 to vector<8x128xf32>
    %179 = arith.mulf %178, %176 : vector<8x128xf32>
    %180 = arith.addf %163, %179 : vector<8x128xf32>
    %c161 = arith.constant 161 : index
    %181 = memref.load %arg2[%c161] : memref<784xf32, #tpu.memory_space<smem>>
    %182 = vector.broadcast %181 : f32 to vector<8x128xf32>
    %183 = arith.mulf %182, %176 : vector<8x128xf32>
    %184 = arith.addf %167, %183 : vector<8x128xf32>
    %c162 = arith.constant 162 : index
    %185 = memref.load %arg2[%c162] : memref<784xf32, #tpu.memory_space<smem>>
    %186 = vector.broadcast %185 : f32 to vector<8x128xf32>
    %187 = arith.mulf %186, %176 : vector<8x128xf32>
    %188 = arith.addf %171, %187 : vector<8x128xf32>
    %c163 = arith.constant 163 : index
    %189 = memref.load %arg2[%c163] : memref<784xf32, #tpu.memory_space<smem>>
    %190 = vector.broadcast %189 : f32 to vector<8x128xf32>
    %191 = arith.mulf %190, %176 : vector<8x128xf32>
    %192 = arith.addf %175, %191 : vector<8x128xf32>
    %c124_i32_12 = arith.constant 124 : i32
    %193 = tpu.dynamic_rotate %125 by %c124_i32_12 dim 1 : vector<8x128xf32>, i32 -> vector<8x128xf32>
    %c176 = arith.constant 176 : index
    %194 = memref.load %arg2[%c176] : memref<784xf32, #tpu.memory_space<smem>>
    %195 = vector.broadcast %194 : f32 to vector<8x128xf32>
    %196 = arith.mulf %195, %193 : vector<8x128xf32>
    %197 = arith.addf %180, %196 : vector<8x128xf32>
    %c177 = arith.constant 177 : index
    %198 = memref.load %arg2[%c177] : memref<784xf32, #tpu.memory_space<smem>>
    %199 = vector.broadcast %198 : f32 to vector<8x128xf32>
    %200 = arith.mulf %199, %193 : vector<8x128xf32>
    %201 = arith.addf %184, %200 : vector<8x128xf32>
    %c178 = arith.constant 178 : index
    %202 = memref.load %arg2[%c178] : memref<784xf32, #tpu.memory_space<smem>>
    %203 = vector.broadcast %202 : f32 to vector<8x128xf32>
    %204 = arith.mulf %203, %193 : vector<8x128xf32>
    %205 = arith.addf %188, %204 : vector<8x128xf32>
    %c179 = arith.constant 179 : index
    %206 = memref.load %arg2[%c179] : memref<784xf32, #tpu.memory_space<smem>>
    %207 = vector.broadcast %206 : f32 to vector<8x128xf32>
    %208 = arith.mulf %207, %193 : vector<8x128xf32>
    %209 = arith.addf %192, %208 : vector<8x128xf32>
    %c123_i32_13 = arith.constant 123 : i32
    %210 = tpu.dynamic_rotate %125 by %c123_i32_13 dim 1 : vector<8x128xf32>, i32 -> vector<8x128xf32>
    %c192 = arith.constant 192 : index
    %211 = memref.load %arg2[%c192] : memref<784xf32, #tpu.memory_space<smem>>
    %212 = vector.broadcast %211 : f32 to vector<8x128xf32>
    %213 = arith.mulf %212, %210 : vector<8x128xf32>
    %214 = arith.addf %197, %213 : vector<8x128xf32>
    %c193 = arith.constant 193 : index
    %215 = memref.load %arg2[%c193] : memref<784xf32, #tpu.memory_space<smem>>
    %216 = vector.broadcast %215 : f32 to vector<8x128xf32>
    %217 = arith.mulf %216, %210 : vector<8x128xf32>
    %218 = arith.addf %201, %217 : vector<8x128xf32>
    %c194 = arith.constant 194 : index
    %219 = memref.load %arg2[%c194] : memref<784xf32, #tpu.memory_space<smem>>
    %220 = vector.broadcast %219 : f32 to vector<8x128xf32>
    %221 = arith.mulf %220, %210 : vector<8x128xf32>
    %222 = arith.addf %205, %221 : vector<8x128xf32>
    %c195 = arith.constant 195 : index
    %223 = memref.load %arg2[%c195] : memref<784xf32, #tpu.memory_space<smem>>
    %224 = vector.broadcast %223 : f32 to vector<8x128xf32>
    %225 = arith.mulf %224, %210 : vector<8x128xf32>
    %226 = arith.addf %209, %225 : vector<8x128xf32>
    %c122_i32_14 = arith.constant 122 : i32
    %227 = tpu.dynamic_rotate %125 by %c122_i32_14 dim 1 : vector<8x128xf32>, i32 -> vector<8x128xf32>
    %c208 = arith.constant 208 : index
    %228 = memref.load %arg2[%c208] : memref<784xf32, #tpu.memory_space<smem>>
    %229 = vector.broadcast %228 : f32 to vector<8x128xf32>
    %230 = arith.mulf %229, %227 : vector<8x128xf32>
    %231 = arith.addf %214, %230 : vector<8x128xf32>
    %c209 = arith.constant 209 : index
    %232 = memref.load %arg2[%c209] : memref<784xf32, #tpu.memory_space<smem>>
    %233 = vector.broadcast %232 : f32 to vector<8x128xf32>
    %234 = arith.mulf %233, %227 : vector<8x128xf32>
    %235 = arith.addf %218, %234 : vector<8x128xf32>
    %c210 = arith.constant 210 : index
    %236 = memref.load %arg2[%c210] : memref<784xf32, #tpu.memory_space<smem>>
    %237 = vector.broadcast %236 : f32 to vector<8x128xf32>
    %238 = arith.mulf %237, %227 : vector<8x128xf32>
    %239 = arith.addf %222, %238 : vector<8x128xf32>
    %c211 = arith.constant 211 : index
    %240 = memref.load %arg2[%c211] : memref<784xf32, #tpu.memory_space<smem>>
    %241 = vector.broadcast %240 : f32 to vector<8x128xf32>
    %242 = arith.mulf %241, %227 : vector<8x128xf32>
    %243 = arith.addf %226, %242 : vector<8x128xf32>
    %c0_15 = arith.constant 0 : index
    %c2_16 = arith.constant 2 : index
    %c0_17 = arith.constant 0 : index
    %244 = vector.load %arg1[%c0_15, %c2_16, %c0_17] : memref<4x14x128xf32, #tpu.memory_space<vmem>>, vector<1x8x128xf32>
    %245 = vector.shape_cast %244 : vector<1x8x128xf32> to vector<8x128xf32>
    %c224 = arith.constant 224 : index
    %246 = memref.load %arg2[%c224] : memref<784xf32, #tpu.memory_space<smem>>
    %247 = vector.broadcast %246 : f32 to vector<8x128xf32>
    %248 = arith.mulf %247, %245 : vector<8x128xf32>
    %249 = arith.addf %231, %248 : vector<8x128xf32>
    %c225 = arith.constant 225 : index
    %250 = memref.load %arg2[%c225] : memref<784xf32, #tpu.memory_space<smem>>
    %251 = vector.broadcast %250 : f32 to vector<8x128xf32>
    %252 = arith.mulf %251, %245 : vector<8x128xf32>
    %253 = arith.addf %235, %252 : vector<8x128xf32>
    %c226 = arith.constant 226 : index
    %254 = memref.load %arg2[%c226] : memref<784xf32, #tpu.memory_space<smem>>
    %255 = vector.broadcast %254 : f32 to vector<8x128xf32>
    %256 = arith.mulf %255, %245 : vector<8x128xf32>
    %257 = arith.addf %239, %256 : vector<8x128xf32>
    %c227 = arith.constant 227 : index
    %258 = memref.load %arg2[%c227] : memref<784xf32, #tpu.memory_space<smem>>
    %259 = vector.broadcast %258 : f32 to vector<8x128xf32>
    %260 = arith.mulf %259, %245 : vector<8x128xf32>
    %261 = arith.addf %243, %260 : vector<8x128xf32>
    %c127_i32_18 = arith.constant 127 : i32
    %262 = tpu.dynamic_rotate %245 by %c127_i32_18 dim 1 : vector<8x128xf32>, i32 -> vector<8x128xf32>
    %c240 = arith.constant 240 : index
    %263 = memref.load %arg2[%c240] : memref<784xf32, #tpu.memory_space<smem>>
    %264 = vector.broadcast %263 : f32 to vector<8x128xf32>
    %265 = arith.mulf %264, %262 : vector<8x128xf32>
    %266 = arith.addf %249, %265 : vector<8x128xf32>
    %c241 = arith.constant 241 : index
    %267 = memref.load %arg2[%c241] : memref<784xf32, #tpu.memory_space<smem>>
    %268 = vector.broadcast %267 : f32 to vector<8x128xf32>
    %269 = arith.mulf %268, %262 : vector<8x128xf32>
    %270 = arith.addf %253, %269 : vector<8x128xf32>
    %c242 = arith.constant 242 : index
    %271 = memref.load %arg2[%c242] : memref<784xf32, #tpu.memory_space<smem>>
    %272 = vector.broadcast %271 : f32 to vector<8x128xf32>
    %273 = arith.mulf %272, %262 : vector<8x128xf32>
    %274 = arith.addf %257, %273 : vector<8x128xf32>
    %c243 = arith.constant 243 : index
    %275 = memref.load %arg2[%c243] : memref<784xf32, #tpu.memory_space<smem>>
    %276 = vector.broadcast %275 : f32 to vector<8x128xf32>
    %277 = arith.mulf %276, %262 : vector<8x128xf32>
    %278 = arith.addf %261, %277 : vector<8x128xf32>
    %c126_i32_19 = arith.constant 126 : i32
    %279 = tpu.dynamic_rotate %245 by %c126_i32_19 dim 1 : vector<8x128xf32>, i32 -> vector<8x128xf32>
    %c256 = arith.constant 256 : index
    %280 = memref.load %arg2[%c256] : memref<784xf32, #tpu.memory_space<smem>>
    %281 = vector.broadcast %280 : f32 to vector<8x128xf32>
    %282 = arith.mulf %281, %279 : vector<8x128xf32>
    %283 = arith.addf %266, %282 : vector<8x128xf32>
    %c257 = arith.constant 257 : index
    %284 = memref.load %arg2[%c257] : memref<784xf32, #tpu.memory_space<smem>>
    %285 = vector.broadcast %284 : f32 to vector<8x128xf32>
    %286 = arith.mulf %285, %279 : vector<8x128xf32>
    %287 = arith.addf %270, %286 : vector<8x128xf32>
    %c258 = arith.constant 258 : index
    %288 = memref.load %arg2[%c258] : memref<784xf32, #tpu.memory_space<smem>>
    %289 = vector.broadcast %288 : f32 to vector<8x128xf32>
    %290 = arith.mulf %289, %279 : vector<8x128xf32>
    %291 = arith.addf %274, %290 : vector<8x128xf32>
    %c259 = arith.constant 259 : index
    %292 = memref.load %arg2[%c259] : memref<784xf32, #tpu.memory_space<smem>>
    %293 = vector.broadcast %292 : f32 to vector<8x128xf32>
    %294 = arith.mulf %293, %279 : vector<8x128xf32>
    %295 = arith.addf %278, %294 : vector<8x128xf32>
    %c125_i32_20 = arith.constant 125 : i32
    %296 = tpu.dynamic_rotate %245 by %c125_i32_20 dim 1 : vector<8x128xf32>, i32 -> vector<8x128xf32>
    %c272 = arith.constant 272 : index
    %297 = memref.load %arg2[%c272] : memref<784xf32, #tpu.memory_space<smem>>
    %298 = vector.broadcast %297 : f32 to vector<8x128xf32>
    %299 = arith.mulf %298, %296 : vector<8x128xf32>
    %300 = arith.addf %283, %299 : vector<8x128xf32>
    %c273 = arith.constant 273 : index
    %301 = memref.load %arg2[%c273] : memref<784xf32, #tpu.memory_space<smem>>
    %302 = vector.broadcast %301 : f32 to vector<8x128xf32>
    %303 = arith.mulf %302, %296 : vector<8x128xf32>
    %304 = arith.addf %287, %303 : vector<8x128xf32>
    %c274 = arith.constant 274 : index
    %305 = memref.load %arg2[%c274] : memref<784xf32, #tpu.memory_space<smem>>
    %306 = vector.broadcast %305 : f32 to vector<8x128xf32>
    %307 = arith.mulf %306, %296 : vector<8x128xf32>
    %308 = arith.addf %291, %307 : vector<8x128xf32>
    %c275 = arith.constant 275 : index
    %309 = memref.load %arg2[%c275] : memref<784xf32, #tpu.memory_space<smem>>
    %310 = vector.broadcast %309 : f32 to vector<8x128xf32>
    %311 = arith.mulf %310, %296 : vector<8x128xf32>
    %312 = arith.addf %295, %311 : vector<8x128xf32>
    %c124_i32_21 = arith.constant 124 : i32
    %313 = tpu.dynamic_rotate %245 by %c124_i32_21 dim 1 : vector<8x128xf32>, i32 -> vector<8x128xf32>
    %c288 = arith.constant 288 : index
    %314 = memref.load %arg2[%c288] : memref<784xf32, #tpu.memory_space<smem>>
    %315 = vector.broadcast %314 : f32 to vector<8x128xf32>
    %316 = arith.mulf %315, %313 : vector<8x128xf32>
    %317 = arith.addf %300, %316 : vector<8x128xf32>
    %c289 = arith.constant 289 : index
    %318 = memref.load %arg2[%c289] : memref<784xf32, #tpu.memory_space<smem>>
    %319 = vector.broadcast %318 : f32 to vector<8x128xf32>
    %320 = arith.mulf %319, %313 : vector<8x128xf32>
    %321 = arith.addf %304, %320 : vector<8x128xf32>
    %c290 = arith.constant 290 : index
    %322 = memref.load %arg2[%c290] : memref<784xf32, #tpu.memory_space<smem>>
    %323 = vector.broadcast %322 : f32 to vector<8x128xf32>
    %324 = arith.mulf %323, %313 : vector<8x128xf32>
    %325 = arith.addf %308, %324 : vector<8x128xf32>
    %c291 = arith.constant 291 : index
    %326 = memref.load %arg2[%c291] : memref<784xf32, #tpu.memory_space<smem>>
    %327 = vector.broadcast %326 : f32 to vector<8x128xf32>
    %328 = arith.mulf %327, %313 : vector<8x128xf32>
    %329 = arith.addf %312, %328 : vector<8x128xf32>
    %c123_i32_22 = arith.constant 123 : i32
    %330 = tpu.dynamic_rotate %245 by %c123_i32_22 dim 1 : vector<8x128xf32>, i32 -> vector<8x128xf32>
    %c304 = arith.constant 304 : index
    %331 = memref.load %arg2[%c304] : memref<784xf32, #tpu.memory_space<smem>>
    %332 = vector.broadcast %331 : f32 to vector<8x128xf32>
    %333 = arith.mulf %332, %330 : vector<8x128xf32>
    %334 = arith.addf %317, %333 : vector<8x128xf32>
    %c305 = arith.constant 305 : index
    %335 = memref.load %arg2[%c305] : memref<784xf32, #tpu.memory_space<smem>>
    %336 = vector.broadcast %335 : f32 to vector<8x128xf32>
    %337 = arith.mulf %336, %330 : vector<8x128xf32>
    %338 = arith.addf %321, %337 : vector<8x128xf32>
    %c306 = arith.constant 306 : index
    %339 = memref.load %arg2[%c306] : memref<784xf32, #tpu.memory_space<smem>>
    %340 = vector.broadcast %339 : f32 to vector<8x128xf32>
    %341 = arith.mulf %340, %330 : vector<8x128xf32>
    %342 = arith.addf %325, %341 : vector<8x128xf32>
    %c307 = arith.constant 307 : index
    %343 = memref.load %arg2[%c307] : memref<784xf32, #tpu.memory_space<smem>>
    %344 = vector.broadcast %343 : f32 to vector<8x128xf32>
    %345 = arith.mulf %344, %330 : vector<8x128xf32>
    %346 = arith.addf %329, %345 : vector<8x128xf32>
    %c122_i32_23 = arith.constant 122 : i32
    %347 = tpu.dynamic_rotate %245 by %c122_i32_23 dim 1 : vector<8x128xf32>, i32 -> vector<8x128xf32>
    %c320 = arith.constant 320 : index
    %348 = memref.load %arg2[%c320] : memref<784xf32, #tpu.memory_space<smem>>
    %349 = vector.broadcast %348 : f32 to vector<8x128xf32>
    %350 = arith.mulf %349, %347 : vector<8x128xf32>
    %351 = arith.addf %334, %350 : vector<8x128xf32>
    %c321 = arith.constant 321 : index
    %352 = memref.load %arg2[%c321] : memref<784xf32, #tpu.memory_space<smem>>
    %353 = vector.broadcast %352 : f32 to vector<8x128xf32>
    %354 = arith.mulf %353, %347 : vector<8x128xf32>
    %355 = arith.addf %338, %354 : vector<8x128xf32>
    %c322 = arith.constant 322 : index
    %356 = memref.load %arg2[%c322] : memref<784xf32, #tpu.memory_space<smem>>
    %357 = vector.broadcast %356 : f32 to vector<8x128xf32>
    %358 = arith.mulf %357, %347 : vector<8x128xf32>
    %359 = arith.addf %342, %358 : vector<8x128xf32>
    %c323 = arith.constant 323 : index
    %360 = memref.load %arg2[%c323] : memref<784xf32, #tpu.memory_space<smem>>
    %361 = vector.broadcast %360 : f32 to vector<8x128xf32>
    %362 = arith.mulf %361, %347 : vector<8x128xf32>
    %363 = arith.addf %346, %362 : vector<8x128xf32>
    %c0_24 = arith.constant 0 : index
    %c3_25 = arith.constant 3 : index
    %c0_26 = arith.constant 0 : index
    %364 = vector.load %arg1[%c0_24, %c3_25, %c0_26] : memref<4x14x128xf32, #tpu.memory_space<vmem>>, vector<1x8x128xf32>
    %365 = vector.shape_cast %364 : vector<1x8x128xf32> to vector<8x128xf32>
    %c336 = arith.constant 336 : index
    %366 = memref.load %arg2[%c336] : memref<784xf32, #tpu.memory_space<smem>>
    %367 = vector.broadcast %366 : f32 to vector<8x128xf32>
    %368 = arith.mulf %367, %365 : vector<8x128xf32>
    %369 = arith.addf %351, %368 : vector<8x128xf32>
    %c337 = arith.constant 337 : index
    %370 = memref.load %arg2[%c337] : memref<784xf32, #tpu.memory_space<smem>>
    %371 = vector.broadcast %370 : f32 to vector<8x128xf32>
    %372 = arith.mulf %371, %365 : vector<8x128xf32>
    %373 = arith.addf %355, %372 : vector<8x128xf32>
    %c338 = arith.constant 338 : index
    %374 = memref.load %arg2[%c338] : memref<784xf32, #tpu.memory_space<smem>>
    %375 = vector.broadcast %374 : f32 to vector<8x128xf32>
    %376 = arith.mulf %375, %365 : vector<8x128xf32>
    %377 = arith.addf %359, %376 : vector<8x128xf32>
    %c339 = arith.constant 339 : index
    %378 = memref.load %arg2[%c339] : memref<784xf32, #tpu.memory_space<smem>>
    %379 = vector.broadcast %378 : f32 to vector<8x128xf32>
    %380 = arith.mulf %379, %365 : vector<8x128xf32>
    %381 = arith.addf %363, %380 : vector<8x128xf32>
    %c127_i32_27 = arith.constant 127 : i32
    %382 = tpu.dynamic_rotate %365 by %c127_i32_27 dim 1 : vector<8x128xf32>, i32 -> vector<8x128xf32>
    %c352 = arith.constant 352 : index
    %383 = memref.load %arg2[%c352] : memref<784xf32, #tpu.memory_space<smem>>
    %384 = vector.broadcast %383 : f32 to vector<8x128xf32>
    %385 = arith.mulf %384, %382 : vector<8x128xf32>
    %386 = arith.addf %369, %385 : vector<8x128xf32>
    %c353 = arith.constant 353 : index
    %387 = memref.load %arg2[%c353] : memref<784xf32, #tpu.memory_space<smem>>
    %388 = vector.broadcast %387 : f32 to vector<8x128xf32>
    %389 = arith.mulf %388, %382 : vector<8x128xf32>
    %390 = arith.addf %373, %389 : vector<8x128xf32>
    %c354 = arith.constant 354 : index
    %391 = memref.load %arg2[%c354] : memref<784xf32, #tpu.memory_space<smem>>
    %392 = vector.broadcast %391 : f32 to vector<8x128xf32>
    %393 = arith.mulf %392, %382 : vector<8x128xf32>
    %394 = arith.addf %377, %393 : vector<8x128xf32>
    %c355 = arith.constant 355 : index
    %395 = memref.load %arg2[%c355] : memref<784xf32, #tpu.memory_space<smem>>
    %396 = vector.broadcast %395 : f32 to vector<8x128xf32>
    %397 = arith.mulf %396, %382 : vector<8x128xf32>
    %398 = arith.addf %381, %397 : vector<8x128xf32>
    %c126_i32_28 = arith.constant 126 : i32
    %399 = tpu.dynamic_rotate %365 by %c126_i32_28 dim 1 : vector<8x128xf32>, i32 -> vector<8x128xf32>
    %c368 = arith.constant 368 : index
    %400 = memref.load %arg2[%c368] : memref<784xf32, #tpu.memory_space<smem>>
    %401 = vector.broadcast %400 : f32 to vector<8x128xf32>
    %402 = arith.mulf %401, %399 : vector<8x128xf32>
    %403 = arith.addf %386, %402 : vector<8x128xf32>
    %c369 = arith.constant 369 : index
    %404 = memref.load %arg2[%c369] : memref<784xf32, #tpu.memory_space<smem>>
    %405 = vector.broadcast %404 : f32 to vector<8x128xf32>
    %406 = arith.mulf %405, %399 : vector<8x128xf32>
    %407 = arith.addf %390, %406 : vector<8x128xf32>
    %c370 = arith.constant 370 : index
    %408 = memref.load %arg2[%c370] : memref<784xf32, #tpu.memory_space<smem>>
    %409 = vector.broadcast %408 : f32 to vector<8x128xf32>
    %410 = arith.mulf %409, %399 : vector<8x128xf32>
    %411 = arith.addf %394, %410 : vector<8x128xf32>
    %c371 = arith.constant 371 : index
    %412 = memref.load %arg2[%c371] : memref<784xf32, #tpu.memory_space<smem>>
    %413 = vector.broadcast %412 : f32 to vector<8x128xf32>
    %414 = arith.mulf %413, %399 : vector<8x128xf32>
    %415 = arith.addf %398, %414 : vector<8x128xf32>
    %c125_i32_29 = arith.constant 125 : i32
    %416 = tpu.dynamic_rotate %365 by %c125_i32_29 dim 1 : vector<8x128xf32>, i32 -> vector<8x128xf32>
    %c384 = arith.constant 384 : index
    %417 = memref.load %arg2[%c384] : memref<784xf32, #tpu.memory_space<smem>>
    %418 = vector.broadcast %417 : f32 to vector<8x128xf32>
    %419 = arith.mulf %418, %416 : vector<8x128xf32>
    %420 = arith.addf %403, %419 : vector<8x128xf32>
    %c385 = arith.constant 385 : index
    %421 = memref.load %arg2[%c385] : memref<784xf32, #tpu.memory_space<smem>>
    %422 = vector.broadcast %421 : f32 to vector<8x128xf32>
    %423 = arith.mulf %422, %416 : vector<8x128xf32>
    %424 = arith.addf %407, %423 : vector<8x128xf32>
    %c386 = arith.constant 386 : index
    %425 = memref.load %arg2[%c386] : memref<784xf32, #tpu.memory_space<smem>>
    %426 = vector.broadcast %425 : f32 to vector<8x128xf32>
    %427 = arith.mulf %426, %416 : vector<8x128xf32>
    %428 = arith.addf %411, %427 : vector<8x128xf32>
    %c387 = arith.constant 387 : index
    %429 = memref.load %arg2[%c387] : memref<784xf32, #tpu.memory_space<smem>>
    %430 = vector.broadcast %429 : f32 to vector<8x128xf32>
    %431 = arith.mulf %430, %416 : vector<8x128xf32>
    %432 = arith.addf %415, %431 : vector<8x128xf32>
    %c124_i32_30 = arith.constant 124 : i32
    %433 = tpu.dynamic_rotate %365 by %c124_i32_30 dim 1 : vector<8x128xf32>, i32 -> vector<8x128xf32>
    %c400 = arith.constant 400 : index
    %434 = memref.load %arg2[%c400] : memref<784xf32, #tpu.memory_space<smem>>
    %435 = vector.broadcast %434 : f32 to vector<8x128xf32>
    %436 = arith.mulf %435, %433 : vector<8x128xf32>
    %437 = arith.addf %420, %436 : vector<8x128xf32>
    %c401 = arith.constant 401 : index
    %438 = memref.load %arg2[%c401] : memref<784xf32, #tpu.memory_space<smem>>
    %439 = vector.broadcast %438 : f32 to vector<8x128xf32>
    %440 = arith.mulf %439, %433 : vector<8x128xf32>
    %441 = arith.addf %424, %440 : vector<8x128xf32>
    %c402 = arith.constant 402 : index
    %442 = memref.load %arg2[%c402] : memref<784xf32, #tpu.memory_space<smem>>
    %443 = vector.broadcast %442 : f32 to vector<8x128xf32>
    %444 = arith.mulf %443, %433 : vector<8x128xf32>
    %445 = arith.addf %428, %444 : vector<8x128xf32>
    %c403 = arith.constant 403 : index
    %446 = memref.load %arg2[%c403] : memref<784xf32, #tpu.memory_space<smem>>
    %447 = vector.broadcast %446 : f32 to vector<8x128xf32>
    %448 = arith.mulf %447, %433 : vector<8x128xf32>
    %449 = arith.addf %432, %448 : vector<8x128xf32>
    %c123_i32_31 = arith.constant 123 : i32
    %450 = tpu.dynamic_rotate %365 by %c123_i32_31 dim 1 : vector<8x128xf32>, i32 -> vector<8x128xf32>
    %c416 = arith.constant 416 : index
    %451 = memref.load %arg2[%c416] : memref<784xf32, #tpu.memory_space<smem>>
    %452 = vector.broadcast %451 : f32 to vector<8x128xf32>
    %453 = arith.mulf %452, %450 : vector<8x128xf32>
    %454 = arith.addf %437, %453 : vector<8x128xf32>
    %c417 = arith.constant 417 : index
    %455 = memref.load %arg2[%c417] : memref<784xf32, #tpu.memory_space<smem>>
    %456 = vector.broadcast %455 : f32 to vector<8x128xf32>
    %457 = arith.mulf %456, %450 : vector<8x128xf32>
    %458 = arith.addf %441, %457 : vector<8x128xf32>
    %c418 = arith.constant 418 : index
    %459 = memref.load %arg2[%c418] : memref<784xf32, #tpu.memory_space<smem>>
    %460 = vector.broadcast %459 : f32 to vector<8x128xf32>
    %461 = arith.mulf %460, %450 : vector<8x128xf32>
    %462 = arith.addf %445, %461 : vector<8x128xf32>
    %c419 = arith.constant 419 : index
    %463 = memref.load %arg2[%c419] : memref<784xf32, #tpu.memory_space<smem>>
    %464 = vector.broadcast %463 : f32 to vector<8x128xf32>
    %465 = arith.mulf %464, %450 : vector<8x128xf32>
    %466 = arith.addf %449, %465 : vector<8x128xf32>
    %c122_i32_32 = arith.constant 122 : i32
    %467 = tpu.dynamic_rotate %365 by %c122_i32_32 dim 1 : vector<8x128xf32>, i32 -> vector<8x128xf32>
    %c432 = arith.constant 432 : index
    %468 = memref.load %arg2[%c432] : memref<784xf32, #tpu.memory_space<smem>>
    %469 = vector.broadcast %468 : f32 to vector<8x128xf32>
    %470 = arith.mulf %469, %467 : vector<8x128xf32>
    %471 = arith.addf %454, %470 : vector<8x128xf32>
    %c433 = arith.constant 433 : index
    %472 = memref.load %arg2[%c433] : memref<784xf32, #tpu.memory_space<smem>>
    %473 = vector.broadcast %472 : f32 to vector<8x128xf32>
    %474 = arith.mulf %473, %467 : vector<8x128xf32>
    %475 = arith.addf %458, %474 : vector<8x128xf32>
    %c434 = arith.constant 434 : index
    %476 = memref.load %arg2[%c434] : memref<784xf32, #tpu.memory_space<smem>>
    %477 = vector.broadcast %476 : f32 to vector<8x128xf32>
    %478 = arith.mulf %477, %467 : vector<8x128xf32>
    %479 = arith.addf %462, %478 : vector<8x128xf32>
    %c435 = arith.constant 435 : index
    %480 = memref.load %arg2[%c435] : memref<784xf32, #tpu.memory_space<smem>>
    %481 = vector.broadcast %480 : f32 to vector<8x128xf32>
    %482 = arith.mulf %481, %467 : vector<8x128xf32>
    %483 = arith.addf %466, %482 : vector<8x128xf32>
    %c0_33 = arith.constant 0 : index
    %c4 = arith.constant 4 : index
    %c0_34 = arith.constant 0 : index
    %484 = vector.load %arg1[%c0_33, %c4, %c0_34] : memref<4x14x128xf32, #tpu.memory_space<vmem>>, vector<1x8x128xf32>
    %485 = vector.shape_cast %484 : vector<1x8x128xf32> to vector<8x128xf32>
    %c448 = arith.constant 448 : index
    %486 = memref.load %arg2[%c448] : memref<784xf32, #tpu.memory_space<smem>>
    %487 = vector.broadcast %486 : f32 to vector<8x128xf32>
    %488 = arith.mulf %487, %485 : vector<8x128xf32>
    %489 = arith.addf %471, %488 : vector<8x128xf32>
    %c449 = arith.constant 449 : index
    %490 = memref.load %arg2[%c449] : memref<784xf32, #tpu.memory_space<smem>>
    %491 = vector.broadcast %490 : f32 to vector<8x128xf32>
    %492 = arith.mulf %491, %485 : vector<8x128xf32>
    %493 = arith.addf %475, %492 : vector<8x128xf32>
    %c450 = arith.constant 450 : index
    %494 = memref.load %arg2[%c450] : memref<784xf32, #tpu.memory_space<smem>>
    %495 = vector.broadcast %494 : f32 to vector<8x128xf32>
    %496 = arith.mulf %495, %485 : vector<8x128xf32>
    %497 = arith.addf %479, %496 : vector<8x128xf32>
    %c451 = arith.constant 451 : index
    %498 = memref.load %arg2[%c451] : memref<784xf32, #tpu.memory_space<smem>>
    %499 = vector.broadcast %498 : f32 to vector<8x128xf32>
    %500 = arith.mulf %499, %485 : vector<8x128xf32>
    %501 = arith.addf %483, %500 : vector<8x128xf32>
    %c127_i32_35 = arith.constant 127 : i32
    %502 = tpu.dynamic_rotate %485 by %c127_i32_35 dim 1 : vector<8x128xf32>, i32 -> vector<8x128xf32>
    %c464 = arith.constant 464 : index
    %503 = memref.load %arg2[%c464] : memref<784xf32, #tpu.memory_space<smem>>
    %504 = vector.broadcast %503 : f32 to vector<8x128xf32>
    %505 = arith.mulf %504, %502 : vector<8x128xf32>
    %506 = arith.addf %489, %505 : vector<8x128xf32>
    %c465 = arith.constant 465 : index
    %507 = memref.load %arg2[%c465] : memref<784xf32, #tpu.memory_space<smem>>
    %508 = vector.broadcast %507 : f32 to vector<8x128xf32>
    %509 = arith.mulf %508, %502 : vector<8x128xf32>
    %510 = arith.addf %493, %509 : vector<8x128xf32>
    %c466 = arith.constant 466 : index
    %511 = memref.load %arg2[%c466] : memref<784xf32, #tpu.memory_space<smem>>
    %512 = vector.broadcast %511 : f32 to vector<8x128xf32>
    %513 = arith.mulf %512, %502 : vector<8x128xf32>
    %514 = arith.addf %497, %513 : vector<8x128xf32>
    %c467 = arith.constant 467 : index
    %515 = memref.load %arg2[%c467] : memref<784xf32, #tpu.memory_space<smem>>
    %516 = vector.broadcast %515 : f32 to vector<8x128xf32>
    %517 = arith.mulf %516, %502 : vector<8x128xf32>
    %518 = arith.addf %501, %517 : vector<8x128xf32>
    %c126_i32_36 = arith.constant 126 : i32
    %519 = tpu.dynamic_rotate %485 by %c126_i32_36 dim 1 : vector<8x128xf32>, i32 -> vector<8x128xf32>
    %c480 = arith.constant 480 : index
    %520 = memref.load %arg2[%c480] : memref<784xf32, #tpu.memory_space<smem>>
    %521 = vector.broadcast %520 : f32 to vector<8x128xf32>
    %522 = arith.mulf %521, %519 : vector<8x128xf32>
    %523 = arith.addf %506, %522 : vector<8x128xf32>
    %c481 = arith.constant 481 : index
    %524 = memref.load %arg2[%c481] : memref<784xf32, #tpu.memory_space<smem>>
    %525 = vector.broadcast %524 : f32 to vector<8x128xf32>
    %526 = arith.mulf %525, %519 : vector<8x128xf32>
    %527 = arith.addf %510, %526 : vector<8x128xf32>
    %c482 = arith.constant 482 : index
    %528 = memref.load %arg2[%c482] : memref<784xf32, #tpu.memory_space<smem>>
    %529 = vector.broadcast %528 : f32 to vector<8x128xf32>
    %530 = arith.mulf %529, %519 : vector<8x128xf32>
    %531 = arith.addf %514, %530 : vector<8x128xf32>
    %c483 = arith.constant 483 : index
    %532 = memref.load %arg2[%c483] : memref<784xf32, #tpu.memory_space<smem>>
    %533 = vector.broadcast %532 : f32 to vector<8x128xf32>
    %534 = arith.mulf %533, %519 : vector<8x128xf32>
    %535 = arith.addf %518, %534 : vector<8x128xf32>
    %c125_i32_37 = arith.constant 125 : i32
    %536 = tpu.dynamic_rotate %485 by %c125_i32_37 dim 1 : vector<8x128xf32>, i32 -> vector<8x128xf32>
    %c496 = arith.constant 496 : index
    %537 = memref.load %arg2[%c496] : memref<784xf32, #tpu.memory_space<smem>>
    %538 = vector.broadcast %537 : f32 to vector<8x128xf32>
    %539 = arith.mulf %538, %536 : vector<8x128xf32>
    %540 = arith.addf %523, %539 : vector<8x128xf32>
    %c497 = arith.constant 497 : index
    %541 = memref.load %arg2[%c497] : memref<784xf32, #tpu.memory_space<smem>>
    %542 = vector.broadcast %541 : f32 to vector<8x128xf32>
    %543 = arith.mulf %542, %536 : vector<8x128xf32>
    %544 = arith.addf %527, %543 : vector<8x128xf32>
    %c498 = arith.constant 498 : index
    %545 = memref.load %arg2[%c498] : memref<784xf32, #tpu.memory_space<smem>>
    %546 = vector.broadcast %545 : f32 to vector<8x128xf32>
    %547 = arith.mulf %546, %536 : vector<8x128xf32>
    %548 = arith.addf %531, %547 : vector<8x128xf32>
    %c499 = arith.constant 499 : index
    %549 = memref.load %arg2[%c499] : memref<784xf32, #tpu.memory_space<smem>>
    %550 = vector.broadcast %549 : f32 to vector<8x128xf32>
    %551 = arith.mulf %550, %536 : vector<8x128xf32>
    %552 = arith.addf %535, %551 : vector<8x128xf32>
    %c124_i32_38 = arith.constant 124 : i32
    %553 = tpu.dynamic_rotate %485 by %c124_i32_38 dim 1 : vector<8x128xf32>, i32 -> vector<8x128xf32>
    %c512 = arith.constant 512 : index
    %554 = memref.load %arg2[%c512] : memref<784xf32, #tpu.memory_space<smem>>
    %555 = vector.broadcast %554 : f32 to vector<8x128xf32>
    %556 = arith.mulf %555, %553 : vector<8x128xf32>
    %557 = arith.addf %540, %556 : vector<8x128xf32>
    %c513 = arith.constant 513 : index
    %558 = memref.load %arg2[%c513] : memref<784xf32, #tpu.memory_space<smem>>
    %559 = vector.broadcast %558 : f32 to vector<8x128xf32>
    %560 = arith.mulf %559, %553 : vector<8x128xf32>
    %561 = arith.addf %544, %560 : vector<8x128xf32>
    %c514 = arith.constant 514 : index
    %562 = memref.load %arg2[%c514] : memref<784xf32, #tpu.memory_space<smem>>
    %563 = vector.broadcast %562 : f32 to vector<8x128xf32>
    %564 = arith.mulf %563, %553 : vector<8x128xf32>
    %565 = arith.addf %548, %564 : vector<8x128xf32>
    %c515 = arith.constant 515 : index
    %566 = memref.load %arg2[%c515] : memref<784xf32, #tpu.memory_space<smem>>
    %567 = vector.broadcast %566 : f32 to vector<8x128xf32>
    %568 = arith.mulf %567, %553 : vector<8x128xf32>
    %569 = arith.addf %552, %568 : vector<8x128xf32>
    %c123_i32_39 = arith.constant 123 : i32
    %570 = tpu.dynamic_rotate %485 by %c123_i32_39 dim 1 : vector<8x128xf32>, i32 -> vector<8x128xf32>
    %c528 = arith.constant 528 : index
    %571 = memref.load %arg2[%c528] : memref<784xf32, #tpu.memory_space<smem>>
    %572 = vector.broadcast %571 : f32 to vector<8x128xf32>
    %573 = arith.mulf %572, %570 : vector<8x128xf32>
    %574 = arith.addf %557, %573 : vector<8x128xf32>
    %c529 = arith.constant 529 : index
    %575 = memref.load %arg2[%c529] : memref<784xf32, #tpu.memory_space<smem>>
    %576 = vector.broadcast %575 : f32 to vector<8x128xf32>
    %577 = arith.mulf %576, %570 : vector<8x128xf32>
    %578 = arith.addf %561, %577 : vector<8x128xf32>
    %c530 = arith.constant 530 : index
    %579 = memref.load %arg2[%c530] : memref<784xf32, #tpu.memory_space<smem>>
    %580 = vector.broadcast %579 : f32 to vector<8x128xf32>
    %581 = arith.mulf %580, %570 : vector<8x128xf32>
    %582 = arith.addf %565, %581 : vector<8x128xf32>
    %c531 = arith.constant 531 : index
    %583 = memref.load %arg2[%c531] : memref<784xf32, #tpu.memory_space<smem>>
    %584 = vector.broadcast %583 : f32 to vector<8x128xf32>
    %585 = arith.mulf %584, %570 : vector<8x128xf32>
    %586 = arith.addf %569, %585 : vector<8x128xf32>
    %c122_i32_40 = arith.constant 122 : i32
    %587 = tpu.dynamic_rotate %485 by %c122_i32_40 dim 1 : vector<8x128xf32>, i32 -> vector<8x128xf32>
    %c544 = arith.constant 544 : index
    %588 = memref.load %arg2[%c544] : memref<784xf32, #tpu.memory_space<smem>>
    %589 = vector.broadcast %588 : f32 to vector<8x128xf32>
    %590 = arith.mulf %589, %587 : vector<8x128xf32>
    %591 = arith.addf %574, %590 : vector<8x128xf32>
    %c545 = arith.constant 545 : index
    %592 = memref.load %arg2[%c545] : memref<784xf32, #tpu.memory_space<smem>>
    %593 = vector.broadcast %592 : f32 to vector<8x128xf32>
    %594 = arith.mulf %593, %587 : vector<8x128xf32>
    %595 = arith.addf %578, %594 : vector<8x128xf32>
    %c546 = arith.constant 546 : index
    %596 = memref.load %arg2[%c546] : memref<784xf32, #tpu.memory_space<smem>>
    %597 = vector.broadcast %596 : f32 to vector<8x128xf32>
    %598 = arith.mulf %597, %587 : vector<8x128xf32>
    %599 = arith.addf %582, %598 : vector<8x128xf32>
    %c547 = arith.constant 547 : index
    %600 = memref.load %arg2[%c547] : memref<784xf32, #tpu.memory_space<smem>>
    %601 = vector.broadcast %600 : f32 to vector<8x128xf32>
    %602 = arith.mulf %601, %587 : vector<8x128xf32>
    %603 = arith.addf %586, %602 : vector<8x128xf32>
    %c0_41 = arith.constant 0 : index
    %c5 = arith.constant 5 : index
    %c0_42 = arith.constant 0 : index
    %604 = vector.load %arg1[%c0_41, %c5, %c0_42] : memref<4x14x128xf32, #tpu.memory_space<vmem>>, vector<1x8x128xf32>
    %605 = vector.shape_cast %604 : vector<1x8x128xf32> to vector<8x128xf32>
    %c560 = arith.constant 560 : index
    %606 = memref.load %arg2[%c560] : memref<784xf32, #tpu.memory_space<smem>>
    %607 = vector.broadcast %606 : f32 to vector<8x128xf32>
    %608 = arith.mulf %607, %605 : vector<8x128xf32>
    %609 = arith.addf %591, %608 : vector<8x128xf32>
    %c561 = arith.constant 561 : index
    %610 = memref.load %arg2[%c561] : memref<784xf32, #tpu.memory_space<smem>>
    %611 = vector.broadcast %610 : f32 to vector<8x128xf32>
    %612 = arith.mulf %611, %605 : vector<8x128xf32>
    %613 = arith.addf %595, %612 : vector<8x128xf32>
    %c562 = arith.constant 562 : index
    %614 = memref.load %arg2[%c562] : memref<784xf32, #tpu.memory_space<smem>>
    %615 = vector.broadcast %614 : f32 to vector<8x128xf32>
    %616 = arith.mulf %615, %605 : vector<8x128xf32>
    %617 = arith.addf %599, %616 : vector<8x128xf32>
    %c563 = arith.constant 563 : index
    %618 = memref.load %arg2[%c563] : memref<784xf32, #tpu.memory_space<smem>>
    %619 = vector.broadcast %618 : f32 to vector<8x128xf32>
    %620 = arith.mulf %619, %605 : vector<8x128xf32>
    %621 = arith.addf %603, %620 : vector<8x128xf32>
    %c127_i32_43 = arith.constant 127 : i32
    %622 = tpu.dynamic_rotate %605 by %c127_i32_43 dim 1 : vector<8x128xf32>, i32 -> vector<8x128xf32>
    %c576 = arith.constant 576 : index
    %623 = memref.load %arg2[%c576] : memref<784xf32, #tpu.memory_space<smem>>
    %624 = vector.broadcast %623 : f32 to vector<8x128xf32>
    %625 = arith.mulf %624, %622 : vector<8x128xf32>
    %626 = arith.addf %609, %625 : vector<8x128xf32>
    %c577 = arith.constant 577 : index
    %627 = memref.load %arg2[%c577] : memref<784xf32, #tpu.memory_space<smem>>
    %628 = vector.broadcast %627 : f32 to vector<8x128xf32>
    %629 = arith.mulf %628, %622 : vector<8x128xf32>
    %630 = arith.addf %613, %629 : vector<8x128xf32>
    %c578 = arith.constant 578 : index
    %631 = memref.load %arg2[%c578] : memref<784xf32, #tpu.memory_space<smem>>
    %632 = vector.broadcast %631 : f32 to vector<8x128xf32>
    %633 = arith.mulf %632, %622 : vector<8x128xf32>
    %634 = arith.addf %617, %633 : vector<8x128xf32>
    %c579 = arith.constant 579 : index
    %635 = memref.load %arg2[%c579] : memref<784xf32, #tpu.memory_space<smem>>
    %636 = vector.broadcast %635 : f32 to vector<8x128xf32>
    %637 = arith.mulf %636, %622 : vector<8x128xf32>
    %638 = arith.addf %621, %637 : vector<8x128xf32>
    %c126_i32_44 = arith.constant 126 : i32
    %639 = tpu.dynamic_rotate %605 by %c126_i32_44 dim 1 : vector<8x128xf32>, i32 -> vector<8x128xf32>
    %c592 = arith.constant 592 : index
    %640 = memref.load %arg2[%c592] : memref<784xf32, #tpu.memory_space<smem>>
    %641 = vector.broadcast %640 : f32 to vector<8x128xf32>
    %642 = arith.mulf %641, %639 : vector<8x128xf32>
    %643 = arith.addf %626, %642 : vector<8x128xf32>
    %c593 = arith.constant 593 : index
    %644 = memref.load %arg2[%c593] : memref<784xf32, #tpu.memory_space<smem>>
    %645 = vector.broadcast %644 : f32 to vector<8x128xf32>
    %646 = arith.mulf %645, %639 : vector<8x128xf32>
    %647 = arith.addf %630, %646 : vector<8x128xf32>
    %c594 = arith.constant 594 : index
    %648 = memref.load %arg2[%c594] : memref<784xf32, #tpu.memory_space<smem>>
    %649 = vector.broadcast %648 : f32 to vector<8x128xf32>
    %650 = arith.mulf %649, %639 : vector<8x128xf32>
    %651 = arith.addf %634, %650 : vector<8x128xf32>
    %c595 = arith.constant 595 : index
    %652 = memref.load %arg2[%c595] : memref<784xf32, #tpu.memory_space<smem>>
    %653 = vector.broadcast %652 : f32 to vector<8x128xf32>
    %654 = arith.mulf %653, %639 : vector<8x128xf32>
    %655 = arith.addf %638, %654 : vector<8x128xf32>
    %c125_i32_45 = arith.constant 125 : i32
    %656 = tpu.dynamic_rotate %605 by %c125_i32_45 dim 1 : vector<8x128xf32>, i32 -> vector<8x128xf32>
    %c608 = arith.constant 608 : index
    %657 = memref.load %arg2[%c608] : memref<784xf32, #tpu.memory_space<smem>>
    %658 = vector.broadcast %657 : f32 to vector<8x128xf32>
    %659 = arith.mulf %658, %656 : vector<8x128xf32>
    %660 = arith.addf %643, %659 : vector<8x128xf32>
    %c609 = arith.constant 609 : index
    %661 = memref.load %arg2[%c609] : memref<784xf32, #tpu.memory_space<smem>>
    %662 = vector.broadcast %661 : f32 to vector<8x128xf32>
    %663 = arith.mulf %662, %656 : vector<8x128xf32>
    %664 = arith.addf %647, %663 : vector<8x128xf32>
    %c610 = arith.constant 610 : index
    %665 = memref.load %arg2[%c610] : memref<784xf32, #tpu.memory_space<smem>>
    %666 = vector.broadcast %665 : f32 to vector<8x128xf32>
    %667 = arith.mulf %666, %656 : vector<8x128xf32>
    %668 = arith.addf %651, %667 : vector<8x128xf32>
    %c611 = arith.constant 611 : index
    %669 = memref.load %arg2[%c611] : memref<784xf32, #tpu.memory_space<smem>>
    %670 = vector.broadcast %669 : f32 to vector<8x128xf32>
    %671 = arith.mulf %670, %656 : vector<8x128xf32>
    %672 = arith.addf %655, %671 : vector<8x128xf32>
    %c124_i32_46 = arith.constant 124 : i32
    %673 = tpu.dynamic_rotate %605 by %c124_i32_46 dim 1 : vector<8x128xf32>, i32 -> vector<8x128xf32>
    %c624 = arith.constant 624 : index
    %674 = memref.load %arg2[%c624] : memref<784xf32, #tpu.memory_space<smem>>
    %675 = vector.broadcast %674 : f32 to vector<8x128xf32>
    %676 = arith.mulf %675, %673 : vector<8x128xf32>
    %677 = arith.addf %660, %676 : vector<8x128xf32>
    %c625 = arith.constant 625 : index
    %678 = memref.load %arg2[%c625] : memref<784xf32, #tpu.memory_space<smem>>
    %679 = vector.broadcast %678 : f32 to vector<8x128xf32>
    %680 = arith.mulf %679, %673 : vector<8x128xf32>
    %681 = arith.addf %664, %680 : vector<8x128xf32>
    %c626 = arith.constant 626 : index
    %682 = memref.load %arg2[%c626] : memref<784xf32, #tpu.memory_space<smem>>
    %683 = vector.broadcast %682 : f32 to vector<8x128xf32>
    %684 = arith.mulf %683, %673 : vector<8x128xf32>
    %685 = arith.addf %668, %684 : vector<8x128xf32>
    %c627 = arith.constant 627 : index
    %686 = memref.load %arg2[%c627] : memref<784xf32, #tpu.memory_space<smem>>
    %687 = vector.broadcast %686 : f32 to vector<8x128xf32>
    %688 = arith.mulf %687, %673 : vector<8x128xf32>
    %689 = arith.addf %672, %688 : vector<8x128xf32>
    %c123_i32_47 = arith.constant 123 : i32
    %690 = tpu.dynamic_rotate %605 by %c123_i32_47 dim 1 : vector<8x128xf32>, i32 -> vector<8x128xf32>
    %c640 = arith.constant 640 : index
    %691 = memref.load %arg2[%c640] : memref<784xf32, #tpu.memory_space<smem>>
    %692 = vector.broadcast %691 : f32 to vector<8x128xf32>
    %693 = arith.mulf %692, %690 : vector<8x128xf32>
    %694 = arith.addf %677, %693 : vector<8x128xf32>
    %c641 = arith.constant 641 : index
    %695 = memref.load %arg2[%c641] : memref<784xf32, #tpu.memory_space<smem>>
    %696 = vector.broadcast %695 : f32 to vector<8x128xf32>
    %697 = arith.mulf %696, %690 : vector<8x128xf32>
    %698 = arith.addf %681, %697 : vector<8x128xf32>
    %c642 = arith.constant 642 : index
    %699 = memref.load %arg2[%c642] : memref<784xf32, #tpu.memory_space<smem>>
    %700 = vector.broadcast %699 : f32 to vector<8x128xf32>
    %701 = arith.mulf %700, %690 : vector<8x128xf32>
    %702 = arith.addf %685, %701 : vector<8x128xf32>
    %c643 = arith.constant 643 : index
    %703 = memref.load %arg2[%c643] : memref<784xf32, #tpu.memory_space<smem>>
    %704 = vector.broadcast %703 : f32 to vector<8x128xf32>
    %705 = arith.mulf %704, %690 : vector<8x128xf32>
    %706 = arith.addf %689, %705 : vector<8x128xf32>
    %c122_i32_48 = arith.constant 122 : i32
    %707 = tpu.dynamic_rotate %605 by %c122_i32_48 dim 1 : vector<8x128xf32>, i32 -> vector<8x128xf32>
    %c656 = arith.constant 656 : index
    %708 = memref.load %arg2[%c656] : memref<784xf32, #tpu.memory_space<smem>>
    %709 = vector.broadcast %708 : f32 to vector<8x128xf32>
    %710 = arith.mulf %709, %707 : vector<8x128xf32>
    %711 = arith.addf %694, %710 : vector<8x128xf32>
    %c657 = arith.constant 657 : index
    %712 = memref.load %arg2[%c657] : memref<784xf32, #tpu.memory_space<smem>>
    %713 = vector.broadcast %712 : f32 to vector<8x128xf32>
    %714 = arith.mulf %713, %707 : vector<8x128xf32>
    %715 = arith.addf %698, %714 : vector<8x128xf32>
    %c658 = arith.constant 658 : index
    %716 = memref.load %arg2[%c658] : memref<784xf32, #tpu.memory_space<smem>>
    %717 = vector.broadcast %716 : f32 to vector<8x128xf32>
    %718 = arith.mulf %717, %707 : vector<8x128xf32>
    %719 = arith.addf %702, %718 : vector<8x128xf32>
    %c659 = arith.constant 659 : index
    %720 = memref.load %arg2[%c659] : memref<784xf32, #tpu.memory_space<smem>>
    %721 = vector.broadcast %720 : f32 to vector<8x128xf32>
    %722 = arith.mulf %721, %707 : vector<8x128xf32>
    %723 = arith.addf %706, %722 : vector<8x128xf32>
    %c0_49 = arith.constant 0 : index
    %c6 = arith.constant 6 : index
    %c0_50 = arith.constant 0 : index
    %724 = vector.load %arg1[%c0_49, %c6, %c0_50] : memref<4x14x128xf32, #tpu.memory_space<vmem>>, vector<1x8x128xf32>
    %725 = vector.shape_cast %724 : vector<1x8x128xf32> to vector<8x128xf32>
    %c672 = arith.constant 672 : index
    %726 = memref.load %arg2[%c672] : memref<784xf32, #tpu.memory_space<smem>>
    %727 = vector.broadcast %726 : f32 to vector<8x128xf32>
    %728 = arith.mulf %727, %725 : vector<8x128xf32>
    %729 = arith.addf %711, %728 : vector<8x128xf32>
    %c673 = arith.constant 673 : index
    %730 = memref.load %arg2[%c673] : memref<784xf32, #tpu.memory_space<smem>>
    %731 = vector.broadcast %730 : f32 to vector<8x128xf32>
    %732 = arith.mulf %731, %725 : vector<8x128xf32>
    %733 = arith.addf %715, %732 : vector<8x128xf32>
    %c674 = arith.constant 674 : index
    %734 = memref.load %arg2[%c674] : memref<784xf32, #tpu.memory_space<smem>>
    %735 = vector.broadcast %734 : f32 to vector<8x128xf32>
    %736 = arith.mulf %735, %725 : vector<8x128xf32>
    %737 = arith.addf %719, %736 : vector<8x128xf32>
    %c675 = arith.constant 675 : index
    %738 = memref.load %arg2[%c675] : memref<784xf32, #tpu.memory_space<smem>>
    %739 = vector.broadcast %738 : f32 to vector<8x128xf32>
    %740 = arith.mulf %739, %725 : vector<8x128xf32>
    %741 = arith.addf %723, %740 : vector<8x128xf32>
    %c127_i32_51 = arith.constant 127 : i32
    %742 = tpu.dynamic_rotate %725 by %c127_i32_51 dim 1 : vector<8x128xf32>, i32 -> vector<8x128xf32>
    %c688 = arith.constant 688 : index
    %743 = memref.load %arg2[%c688] : memref<784xf32, #tpu.memory_space<smem>>
    %744 = vector.broadcast %743 : f32 to vector<8x128xf32>
    %745 = arith.mulf %744, %742 : vector<8x128xf32>
    %746 = arith.addf %729, %745 : vector<8x128xf32>
    %c689 = arith.constant 689 : index
    %747 = memref.load %arg2[%c689] : memref<784xf32, #tpu.memory_space<smem>>
    %748 = vector.broadcast %747 : f32 to vector<8x128xf32>
    %749 = arith.mulf %748, %742 : vector<8x128xf32>
    %750 = arith.addf %733, %749 : vector<8x128xf32>
    %c690 = arith.constant 690 : index
    %751 = memref.load %arg2[%c690] : memref<784xf32, #tpu.memory_space<smem>>
    %752 = vector.broadcast %751 : f32 to vector<8x128xf32>
    %753 = arith.mulf %752, %742 : vector<8x128xf32>
    %754 = arith.addf %737, %753 : vector<8x128xf32>
    %c691 = arith.constant 691 : index
    %755 = memref.load %arg2[%c691] : memref<784xf32, #tpu.memory_space<smem>>
    %756 = vector.broadcast %755 : f32 to vector<8x128xf32>
    %757 = arith.mulf %756, %742 : vector<8x128xf32>
    %758 = arith.addf %741, %757 : vector<8x128xf32>
    %c126_i32_52 = arith.constant 126 : i32
    %759 = tpu.dynamic_rotate %725 by %c126_i32_52 dim 1 : vector<8x128xf32>, i32 -> vector<8x128xf32>
    %c704 = arith.constant 704 : index
    %760 = memref.load %arg2[%c704] : memref<784xf32, #tpu.memory_space<smem>>
    %761 = vector.broadcast %760 : f32 to vector<8x128xf32>
    %762 = arith.mulf %761, %759 : vector<8x128xf32>
    %763 = arith.addf %746, %762 : vector<8x128xf32>
    %c705 = arith.constant 705 : index
    %764 = memref.load %arg2[%c705] : memref<784xf32, #tpu.memory_space<smem>>
    %765 = vector.broadcast %764 : f32 to vector<8x128xf32>
    %766 = arith.mulf %765, %759 : vector<8x128xf32>
    %767 = arith.addf %750, %766 : vector<8x128xf32>
    %c706 = arith.constant 706 : index
    %768 = memref.load %arg2[%c706] : memref<784xf32, #tpu.memory_space<smem>>
    %769 = vector.broadcast %768 : f32 to vector<8x128xf32>
    %770 = arith.mulf %769, %759 : vector<8x128xf32>
    %771 = arith.addf %754, %770 : vector<8x128xf32>
    %c707 = arith.constant 707 : index
    %772 = memref.load %arg2[%c707] : memref<784xf32, #tpu.memory_space<smem>>
    %773 = vector.broadcast %772 : f32 to vector<8x128xf32>
    %774 = arith.mulf %773, %759 : vector<8x128xf32>
    %775 = arith.addf %758, %774 : vector<8x128xf32>
    %c125_i32_53 = arith.constant 125 : i32
    %776 = tpu.dynamic_rotate %725 by %c125_i32_53 dim 1 : vector<8x128xf32>, i32 -> vector<8x128xf32>
    %c720 = arith.constant 720 : index
    %777 = memref.load %arg2[%c720] : memref<784xf32, #tpu.memory_space<smem>>
    %778 = vector.broadcast %777 : f32 to vector<8x128xf32>
    %779 = arith.mulf %778, %776 : vector<8x128xf32>
    %780 = arith.addf %763, %779 : vector<8x128xf32>
    %c721 = arith.constant 721 : index
    %781 = memref.load %arg2[%c721] : memref<784xf32, #tpu.memory_space<smem>>
    %782 = vector.broadcast %781 : f32 to vector<8x128xf32>
    %783 = arith.mulf %782, %776 : vector<8x128xf32>
    %784 = arith.addf %767, %783 : vector<8x128xf32>
    %c722 = arith.constant 722 : index
    %785 = memref.load %arg2[%c722] : memref<784xf32, #tpu.memory_space<smem>>
    %786 = vector.broadcast %785 : f32 to vector<8x128xf32>
    %787 = arith.mulf %786, %776 : vector<8x128xf32>
    %788 = arith.addf %771, %787 : vector<8x128xf32>
    %c723 = arith.constant 723 : index
    %789 = memref.load %arg2[%c723] : memref<784xf32, #tpu.memory_space<smem>>
    %790 = vector.broadcast %789 : f32 to vector<8x128xf32>
    %791 = arith.mulf %790, %776 : vector<8x128xf32>
    %792 = arith.addf %775, %791 : vector<8x128xf32>
    %c124_i32_54 = arith.constant 124 : i32
    %793 = tpu.dynamic_rotate %725 by %c124_i32_54 dim 1 : vector<8x128xf32>, i32 -> vector<8x128xf32>
    %c736 = arith.constant 736 : index
    %794 = memref.load %arg2[%c736] : memref<784xf32, #tpu.memory_space<smem>>
    %795 = vector.broadcast %794 : f32 to vector<8x128xf32>
    %796 = arith.mulf %795, %793 : vector<8x128xf32>
    %797 = arith.addf %780, %796 : vector<8x128xf32>
    %c737 = arith.constant 737 : index
    %798 = memref.load %arg2[%c737] : memref<784xf32, #tpu.memory_space<smem>>
    %799 = vector.broadcast %798 : f32 to vector<8x128xf32>
    %800 = arith.mulf %799, %793 : vector<8x128xf32>
    %801 = arith.addf %784, %800 : vector<8x128xf32>
    %c738 = arith.constant 738 : index
    %802 = memref.load %arg2[%c738] : memref<784xf32, #tpu.memory_space<smem>>
    %803 = vector.broadcast %802 : f32 to vector<8x128xf32>
    %804 = arith.mulf %803, %793 : vector<8x128xf32>
    %805 = arith.addf %788, %804 : vector<8x128xf32>
    %c739 = arith.constant 739 : index
    %806 = memref.load %arg2[%c739] : memref<784xf32, #tpu.memory_space<smem>>
    %807 = vector.broadcast %806 : f32 to vector<8x128xf32>
    %808 = arith.mulf %807, %793 : vector<8x128xf32>
    %809 = arith.addf %792, %808 : vector<8x128xf32>
    %c123_i32_55 = arith.constant 123 : i32
    %810 = tpu.dynamic_rotate %725 by %c123_i32_55 dim 1 : vector<8x128xf32>, i32 -> vector<8x128xf32>
    %c752 = arith.constant 752 : index
    %811 = memref.load %arg2[%c752] : memref<784xf32, #tpu.memory_space<smem>>
    %812 = vector.broadcast %811 : f32 to vector<8x128xf32>
    %813 = arith.mulf %812, %810 : vector<8x128xf32>
    %814 = arith.addf %797, %813 : vector<8x128xf32>
    %c753 = arith.constant 753 : index
    %815 = memref.load %arg2[%c753] : memref<784xf32, #tpu.memory_space<smem>>
    %816 = vector.broadcast %815 : f32 to vector<8x128xf32>
    %817 = arith.mulf %816, %810 : vector<8x128xf32>
    %818 = arith.addf %801, %817 : vector<8x128xf32>
    %c754 = arith.constant 754 : index
    %819 = memref.load %arg2[%c754] : memref<784xf32, #tpu.memory_space<smem>>
    %820 = vector.broadcast %819 : f32 to vector<8x128xf32>
    %821 = arith.mulf %820, %810 : vector<8x128xf32>
    %822 = arith.addf %805, %821 : vector<8x128xf32>
    %c755 = arith.constant 755 : index
    %823 = memref.load %arg2[%c755] : memref<784xf32, #tpu.memory_space<smem>>
    %824 = vector.broadcast %823 : f32 to vector<8x128xf32>
    %825 = arith.mulf %824, %810 : vector<8x128xf32>
    %826 = arith.addf %809, %825 : vector<8x128xf32>
    %c122_i32_56 = arith.constant 122 : i32
    %827 = tpu.dynamic_rotate %725 by %c122_i32_56 dim 1 : vector<8x128xf32>, i32 -> vector<8x128xf32>
    %c768 = arith.constant 768 : index
    %828 = memref.load %arg2[%c768] : memref<784xf32, #tpu.memory_space<smem>>
    %829 = vector.broadcast %828 : f32 to vector<8x128xf32>
    %830 = arith.mulf %829, %827 : vector<8x128xf32>
    %831 = arith.addf %814, %830 : vector<8x128xf32>
    %c769 = arith.constant 769 : index
    %832 = memref.load %arg2[%c769] : memref<784xf32, #tpu.memory_space<smem>>
    %833 = vector.broadcast %832 : f32 to vector<8x128xf32>
    %834 = arith.mulf %833, %827 : vector<8x128xf32>
    %835 = arith.addf %818, %834 : vector<8x128xf32>
    %c770 = arith.constant 770 : index
    %836 = memref.load %arg2[%c770] : memref<784xf32, #tpu.memory_space<smem>>
    %837 = vector.broadcast %836 : f32 to vector<8x128xf32>
    %838 = arith.mulf %837, %827 : vector<8x128xf32>
    %839 = arith.addf %822, %838 : vector<8x128xf32>
    %c771 = arith.constant 771 : index
    %840 = memref.load %arg2[%c771] : memref<784xf32, #tpu.memory_space<smem>>
    %841 = vector.broadcast %840 : f32 to vector<8x128xf32>
    %842 = arith.mulf %841, %827 : vector<8x128xf32>
    %843 = arith.addf %826, %842 : vector<8x128xf32>
    %c1_57 = arith.constant 1 : index
    %c0_58 = arith.constant 0 : index
    %c0_59 = arith.constant 0 : index
    %844 = vector.load %arg1[%c1_57, %c0_58, %c0_59] : memref<4x14x128xf32, #tpu.memory_space<vmem>>, vector<1x8x128xf32>
    %845 = vector.shape_cast %844 : vector<1x8x128xf32> to vector<8x128xf32>
    %c4_60 = arith.constant 4 : index
    %846 = memref.load %arg2[%c4_60] : memref<784xf32, #tpu.memory_space<smem>>
    %847 = vector.broadcast %846 : f32 to vector<8x128xf32>
    %848 = arith.mulf %847, %845 : vector<8x128xf32>
    %849 = arith.addf %831, %848 : vector<8x128xf32>
    %c5_61 = arith.constant 5 : index
    %850 = memref.load %arg2[%c5_61] : memref<784xf32, #tpu.memory_space<smem>>
    %851 = vector.broadcast %850 : f32 to vector<8x128xf32>
    %852 = arith.mulf %851, %845 : vector<8x128xf32>
    %853 = arith.addf %835, %852 : vector<8x128xf32>
    %c6_62 = arith.constant 6 : index
    %854 = memref.load %arg2[%c6_62] : memref<784xf32, #tpu.memory_space<smem>>
    %855 = vector.broadcast %854 : f32 to vector<8x128xf32>
    %856 = arith.mulf %855, %845 : vector<8x128xf32>
    %857 = arith.addf %839, %856 : vector<8x128xf32>
    %c7 = arith.constant 7 : index
    %858 = memref.load %arg2[%c7] : memref<784xf32, #tpu.memory_space<smem>>
    %859 = vector.broadcast %858 : f32 to vector<8x128xf32>
    %860 = arith.mulf %859, %845 : vector<8x128xf32>
    %861 = arith.addf %843, %860 : vector<8x128xf32>
    %c127_i32_63 = arith.constant 127 : i32
    %862 = tpu.dynamic_rotate %845 by %c127_i32_63 dim 1 : vector<8x128xf32>, i32 -> vector<8x128xf32>
    %c20 = arith.constant 20 : index
    %863 = memref.load %arg2[%c20] : memref<784xf32, #tpu.memory_space<smem>>
    %864 = vector.broadcast %863 : f32 to vector<8x128xf32>
    %865 = arith.mulf %864, %862 : vector<8x128xf32>
    %866 = arith.addf %849, %865 : vector<8x128xf32>
    %c21 = arith.constant 21 : index
    %867 = memref.load %arg2[%c21] : memref<784xf32, #tpu.memory_space<smem>>
    %868 = vector.broadcast %867 : f32 to vector<8x128xf32>
    %869 = arith.mulf %868, %862 : vector<8x128xf32>
    %870 = arith.addf %853, %869 : vector<8x128xf32>
    %c22 = arith.constant 22 : index
    %871 = memref.load %arg2[%c22] : memref<784xf32, #tpu.memory_space<smem>>
    %872 = vector.broadcast %871 : f32 to vector<8x128xf32>
    %873 = arith.mulf %872, %862 : vector<8x128xf32>
    %874 = arith.addf %857, %873 : vector<8x128xf32>
    %c23 = arith.constant 23 : index
    %875 = memref.load %arg2[%c23] : memref<784xf32, #tpu.memory_space<smem>>
    %876 = vector.broadcast %875 : f32 to vector<8x128xf32>
    %877 = arith.mulf %876, %862 : vector<8x128xf32>
    %878 = arith.addf %861, %877 : vector<8x128xf32>
    %c126_i32_64 = arith.constant 126 : i32
    %879 = tpu.dynamic_rotate %845 by %c126_i32_64 dim 1 : vector<8x128xf32>, i32 -> vector<8x128xf32>
    %c36 = arith.constant 36 : index
    %880 = memref.load %arg2[%c36] : memref<784xf32, #tpu.memory_space<smem>>
    %881 = vector.broadcast %880 : f32 to vector<8x128xf32>
    %882 = arith.mulf %881, %879 : vector<8x128xf32>
    %883 = arith.addf %866, %882 : vector<8x128xf32>
    %c37 = arith.constant 37 : index
    %884 = memref.load %arg2[%c37] : memref<784xf32, #tpu.memory_space<smem>>
    %885 = vector.broadcast %884 : f32 to vector<8x128xf32>
    %886 = arith.mulf %885, %879 : vector<8x128xf32>
    %887 = arith.addf %870, %886 : vector<8x128xf32>
    %c38 = arith.constant 38 : index
    %888 = memref.load %arg2[%c38] : memref<784xf32, #tpu.memory_space<smem>>
    %889 = vector.broadcast %888 : f32 to vector<8x128xf32>
    %890 = arith.mulf %889, %879 : vector<8x128xf32>
    %891 = arith.addf %874, %890 : vector<8x128xf32>
    %c39 = arith.constant 39 : index
    %892 = memref.load %arg2[%c39] : memref<784xf32, #tpu.memory_space<smem>>
    %893 = vector.broadcast %892 : f32 to vector<8x128xf32>
    %894 = arith.mulf %893, %879 : vector<8x128xf32>
    %895 = arith.addf %878, %894 : vector<8x128xf32>
    %c125_i32_65 = arith.constant 125 : i32
    %896 = tpu.dynamic_rotate %845 by %c125_i32_65 dim 1 : vector<8x128xf32>, i32 -> vector<8x128xf32>
    %c52 = arith.constant 52 : index
    %897 = memref.load %arg2[%c52] : memref<784xf32, #tpu.memory_space<smem>>
    %898 = vector.broadcast %897 : f32 to vector<8x128xf32>
    %899 = arith.mulf %898, %896 : vector<8x128xf32>
    %900 = arith.addf %883, %899 : vector<8x128xf32>
    %c53 = arith.constant 53 : index
    %901 = memref.load %arg2[%c53] : memref<784xf32, #tpu.memory_space<smem>>
    %902 = vector.broadcast %901 : f32 to vector<8x128xf32>
    %903 = arith.mulf %902, %896 : vector<8x128xf32>
    %904 = arith.addf %887, %903 : vector<8x128xf32>
    %c54 = arith.constant 54 : index
    %905 = memref.load %arg2[%c54] : memref<784xf32, #tpu.memory_space<smem>>
    %906 = vector.broadcast %905 : f32 to vector<8x128xf32>
    %907 = arith.mulf %906, %896 : vector<8x128xf32>
    %908 = arith.addf %891, %907 : vector<8x128xf32>
    %c55 = arith.constant 55 : index
    %909 = memref.load %arg2[%c55] : memref<784xf32, #tpu.memory_space<smem>>
    %910 = vector.broadcast %909 : f32 to vector<8x128xf32>
    %911 = arith.mulf %910, %896 : vector<8x128xf32>
    %912 = arith.addf %895, %911 : vector<8x128xf32>
    %c124_i32_66 = arith.constant 124 : i32
    %913 = tpu.dynamic_rotate %845 by %c124_i32_66 dim 1 : vector<8x128xf32>, i32 -> vector<8x128xf32>
    %c68 = arith.constant 68 : index
    %914 = memref.load %arg2[%c68] : memref<784xf32, #tpu.memory_space<smem>>
    %915 = vector.broadcast %914 : f32 to vector<8x128xf32>
    %916 = arith.mulf %915, %913 : vector<8x128xf32>
    %917 = arith.addf %900, %916 : vector<8x128xf32>
    %c69 = arith.constant 69 : index
    %918 = memref.load %arg2[%c69] : memref<784xf32, #tpu.memory_space<smem>>
    %919 = vector.broadcast %918 : f32 to vector<8x128xf32>
    %920 = arith.mulf %919, %913 : vector<8x128xf32>
    %921 = arith.addf %904, %920 : vector<8x128xf32>
    %c70 = arith.constant 70 : index
    %922 = memref.load %arg2[%c70] : memref<784xf32, #tpu.memory_space<smem>>
    %923 = vector.broadcast %922 : f32 to vector<8x128xf32>
    %924 = arith.mulf %923, %913 : vector<8x128xf32>
    %925 = arith.addf %908, %924 : vector<8x128xf32>
    %c71 = arith.constant 71 : index
    %926 = memref.load %arg2[%c71] : memref<784xf32, #tpu.memory_space<smem>>
    %927 = vector.broadcast %926 : f32 to vector<8x128xf32>
    %928 = arith.mulf %927, %913 : vector<8x128xf32>
    %929 = arith.addf %912, %928 : vector<8x128xf32>
    %c123_i32_67 = arith.constant 123 : i32
    %930 = tpu.dynamic_rotate %845 by %c123_i32_67 dim 1 : vector<8x128xf32>, i32 -> vector<8x128xf32>
    %c84 = arith.constant 84 : index
    %931 = memref.load %arg2[%c84] : memref<784xf32, #tpu.memory_space<smem>>
    %932 = vector.broadcast %931 : f32 to vector<8x128xf32>
    %933 = arith.mulf %932, %930 : vector<8x128xf32>
    %934 = arith.addf %917, %933 : vector<8x128xf32>
    %c85 = arith.constant 85 : index
    %935 = memref.load %arg2[%c85] : memref<784xf32, #tpu.memory_space<smem>>
    %936 = vector.broadcast %935 : f32 to vector<8x128xf32>
    %937 = arith.mulf %936, %930 : vector<8x128xf32>
    %938 = arith.addf %921, %937 : vector<8x128xf32>
    %c86 = arith.constant 86 : index
    %939 = memref.load %arg2[%c86] : memref<784xf32, #tpu.memory_space<smem>>
    %940 = vector.broadcast %939 : f32 to vector<8x128xf32>
    %941 = arith.mulf %940, %930 : vector<8x128xf32>
    %942 = arith.addf %925, %941 : vector<8x128xf32>
    %c87 = arith.constant 87 : index
    %943 = memref.load %arg2[%c87] : memref<784xf32, #tpu.memory_space<smem>>
    %944 = vector.broadcast %943 : f32 to vector<8x128xf32>
    %945 = arith.mulf %944, %930 : vector<8x128xf32>
    %946 = arith.addf %929, %945 : vector<8x128xf32>
    %c122_i32_68 = arith.constant 122 : i32
    %947 = tpu.dynamic_rotate %845 by %c122_i32_68 dim 1 : vector<8x128xf32>, i32 -> vector<8x128xf32>
    %c100 = arith.constant 100 : index
    %948 = memref.load %arg2[%c100] : memref<784xf32, #tpu.memory_space<smem>>
    %949 = vector.broadcast %948 : f32 to vector<8x128xf32>
    %950 = arith.mulf %949, %947 : vector<8x128xf32>
    %951 = arith.addf %934, %950 : vector<8x128xf32>
    %c101 = arith.constant 101 : index
    %952 = memref.load %arg2[%c101] : memref<784xf32, #tpu.memory_space<smem>>
    %953 = vector.broadcast %952 : f32 to vector<8x128xf32>
    %954 = arith.mulf %953, %947 : vector<8x128xf32>
    %955 = arith.addf %938, %954 : vector<8x128xf32>
    %c102 = arith.constant 102 : index
    %956 = memref.load %arg2[%c102] : memref<784xf32, #tpu.memory_space<smem>>
    %957 = vector.broadcast %956 : f32 to vector<8x128xf32>
    %958 = arith.mulf %957, %947 : vector<8x128xf32>
    %959 = arith.addf %942, %958 : vector<8x128xf32>
    %c103 = arith.constant 103 : index
    %960 = memref.load %arg2[%c103] : memref<784xf32, #tpu.memory_space<smem>>
    %961 = vector.broadcast %960 : f32 to vector<8x128xf32>
    %962 = arith.mulf %961, %947 : vector<8x128xf32>
    %963 = arith.addf %946, %962 : vector<8x128xf32>
    %c1_69 = arith.constant 1 : index
    %c1_70 = arith.constant 1 : index
    %c0_71 = arith.constant 0 : index
    %964 = vector.load %arg1[%c1_69, %c1_70, %c0_71] : memref<4x14x128xf32, #tpu.memory_space<vmem>>, vector<1x8x128xf32>
    %965 = vector.shape_cast %964 : vector<1x8x128xf32> to vector<8x128xf32>
    %c116 = arith.constant 116 : index
    %966 = memref.load %arg2[%c116] : memref<784xf32, #tpu.memory_space<smem>>
    %967 = vector.broadcast %966 : f32 to vector<8x128xf32>
    %968 = arith.mulf %967, %965 : vector<8x128xf32>
    %969 = arith.addf %951, %968 : vector<8x128xf32>
    %c117 = arith.constant 117 : index
    %970 = memref.load %arg2[%c117] : memref<784xf32, #tpu.memory_space<smem>>
    %971 = vector.broadcast %970 : f32 to vector<8x128xf32>
    %972 = arith.mulf %971, %965 : vector<8x128xf32>
    %973 = arith.addf %955, %972 : vector<8x128xf32>
    %c118 = arith.constant 118 : index
    %974 = memref.load %arg2[%c118] : memref<784xf32, #tpu.memory_space<smem>>
    %975 = vector.broadcast %974 : f32 to vector<8x128xf32>
    %976 = arith.mulf %975, %965 : vector<8x128xf32>
    %977 = arith.addf %959, %976 : vector<8x128xf32>
    %c119 = arith.constant 119 : index
    %978 = memref.load %arg2[%c119] : memref<784xf32, #tpu.memory_space<smem>>
    %979 = vector.broadcast %978 : f32 to vector<8x128xf32>
    %980 = arith.mulf %979, %965 : vector<8x128xf32>
    %981 = arith.addf %963, %980 : vector<8x128xf32>
    %c127_i32_72 = arith.constant 127 : i32
    %982 = tpu.dynamic_rotate %965 by %c127_i32_72 dim 1 : vector<8x128xf32>, i32 -> vector<8x128xf32>
    %c132 = arith.constant 132 : index
    %983 = memref.load %arg2[%c132] : memref<784xf32, #tpu.memory_space<smem>>
    %984 = vector.broadcast %983 : f32 to vector<8x128xf32>
    %985 = arith.mulf %984, %982 : vector<8x128xf32>
    %986 = arith.addf %969, %985 : vector<8x128xf32>
    %c133 = arith.constant 133 : index
    %987 = memref.load %arg2[%c133] : memref<784xf32, #tpu.memory_space<smem>>
    %988 = vector.broadcast %987 : f32 to vector<8x128xf32>
    %989 = arith.mulf %988, %982 : vector<8x128xf32>
    %990 = arith.addf %973, %989 : vector<8x128xf32>
    %c134 = arith.constant 134 : index
    %991 = memref.load %arg2[%c134] : memref<784xf32, #tpu.memory_space<smem>>
    %992 = vector.broadcast %991 : f32 to vector<8x128xf32>
    %993 = arith.mulf %992, %982 : vector<8x128xf32>
    %994 = arith.addf %977, %993 : vector<8x128xf32>
    %c135 = arith.constant 135 : index
    %995 = memref.load %arg2[%c135] : memref<784xf32, #tpu.memory_space<smem>>
    %996 = vector.broadcast %995 : f32 to vector<8x128xf32>
    %997 = arith.mulf %996, %982 : vector<8x128xf32>
    %998 = arith.addf %981, %997 : vector<8x128xf32>
    %c126_i32_73 = arith.constant 126 : i32
    %999 = tpu.dynamic_rotate %965 by %c126_i32_73 dim 1 : vector<8x128xf32>, i32 -> vector<8x128xf32>
    %c148 = arith.constant 148 : index
    %1000 = memref.load %arg2[%c148] : memref<784xf32, #tpu.memory_space<smem>>
    %1001 = vector.broadcast %1000 : f32 to vector<8x128xf32>
    %1002 = arith.mulf %1001, %999 : vector<8x128xf32>
    %1003 = arith.addf %986, %1002 : vector<8x128xf32>
    %c149 = arith.constant 149 : index
    %1004 = memref.load %arg2[%c149] : memref<784xf32, #tpu.memory_space<smem>>
    %1005 = vector.broadcast %1004 : f32 to vector<8x128xf32>
    %1006 = arith.mulf %1005, %999 : vector<8x128xf32>
    %1007 = arith.addf %990, %1006 : vector<8x128xf32>
    %c150 = arith.constant 150 : index
    %1008 = memref.load %arg2[%c150] : memref<784xf32, #tpu.memory_space<smem>>
    %1009 = vector.broadcast %1008 : f32 to vector<8x128xf32>
    %1010 = arith.mulf %1009, %999 : vector<8x128xf32>
    %1011 = arith.addf %994, %1010 : vector<8x128xf32>
    %c151 = arith.constant 151 : index
    %1012 = memref.load %arg2[%c151] : memref<784xf32, #tpu.memory_space<smem>>
    %1013 = vector.broadcast %1012 : f32 to vector<8x128xf32>
    %1014 = arith.mulf %1013, %999 : vector<8x128xf32>
    %1015 = arith.addf %998, %1014 : vector<8x128xf32>
    %c125_i32_74 = arith.constant 125 : i32
    %1016 = tpu.dynamic_rotate %965 by %c125_i32_74 dim 1 : vector<8x128xf32>, i32 -> vector<8x128xf32>
    %c164 = arith.constant 164 : index
    %1017 = memref.load %arg2[%c164] : memref<784xf32, #tpu.memory_space<smem>>
    %1018 = vector.broadcast %1017 : f32 to vector<8x128xf32>
    %1019 = arith.mulf %1018, %1016 : vector<8x128xf32>
    %1020 = arith.addf %1003, %1019 : vector<8x128xf32>
    %c165 = arith.constant 165 : index
    %1021 = memref.load %arg2[%c165] : memref<784xf32, #tpu.memory_space<smem>>
    %1022 = vector.broadcast %1021 : f32 to vector<8x128xf32>
    %1023 = arith.mulf %1022, %1016 : vector<8x128xf32>
    %1024 = arith.addf %1007, %1023 : vector<8x128xf32>
    %c166 = arith.constant 166 : index
    %1025 = memref.load %arg2[%c166] : memref<784xf32, #tpu.memory_space<smem>>
    %1026 = vector.broadcast %1025 : f32 to vector<8x128xf32>
    %1027 = arith.mulf %1026, %1016 : vector<8x128xf32>
    %1028 = arith.addf %1011, %1027 : vector<8x128xf32>
    %c167 = arith.constant 167 : index
    %1029 = memref.load %arg2[%c167] : memref<784xf32, #tpu.memory_space<smem>>
    %1030 = vector.broadcast %1029 : f32 to vector<8x128xf32>
    %1031 = arith.mulf %1030, %1016 : vector<8x128xf32>
    %1032 = arith.addf %1015, %1031 : vector<8x128xf32>
    %c124_i32_75 = arith.constant 124 : i32
    %1033 = tpu.dynamic_rotate %965 by %c124_i32_75 dim 1 : vector<8x128xf32>, i32 -> vector<8x128xf32>
    %c180 = arith.constant 180 : index
    %1034 = memref.load %arg2[%c180] : memref<784xf32, #tpu.memory_space<smem>>
    %1035 = vector.broadcast %1034 : f32 to vector<8x128xf32>
    %1036 = arith.mulf %1035, %1033 : vector<8x128xf32>
    %1037 = arith.addf %1020, %1036 : vector<8x128xf32>
    %c181 = arith.constant 181 : index
    %1038 = memref.load %arg2[%c181] : memref<784xf32, #tpu.memory_space<smem>>
    %1039 = vector.broadcast %1038 : f32 to vector<8x128xf32>
    %1040 = arith.mulf %1039, %1033 : vector<8x128xf32>
    %1041 = arith.addf %1024, %1040 : vector<8x128xf32>
    %c182 = arith.constant 182 : index
    %1042 = memref.load %arg2[%c182] : memref<784xf32, #tpu.memory_space<smem>>
    %1043 = vector.broadcast %1042 : f32 to vector<8x128xf32>
    %1044 = arith.mulf %1043, %1033 : vector<8x128xf32>
    %1045 = arith.addf %1028, %1044 : vector<8x128xf32>
    %c183 = arith.constant 183 : index
    %1046 = memref.load %arg2[%c183] : memref<784xf32, #tpu.memory_space<smem>>
    %1047 = vector.broadcast %1046 : f32 to vector<8x128xf32>
    %1048 = arith.mulf %1047, %1033 : vector<8x128xf32>
    %1049 = arith.addf %1032, %1048 : vector<8x128xf32>
    %c123_i32_76 = arith.constant 123 : i32
    %1050 = tpu.dynamic_rotate %965 by %c123_i32_76 dim 1 : vector<8x128xf32>, i32 -> vector<8x128xf32>
    %c196 = arith.constant 196 : index
    %1051 = memref.load %arg2[%c196] : memref<784xf32, #tpu.memory_space<smem>>
    %1052 = vector.broadcast %1051 : f32 to vector<8x128xf32>
    %1053 = arith.mulf %1052, %1050 : vector<8x128xf32>
    %1054 = arith.addf %1037, %1053 : vector<8x128xf32>
    %c197 = arith.constant 197 : index
    %1055 = memref.load %arg2[%c197] : memref<784xf32, #tpu.memory_space<smem>>
    %1056 = vector.broadcast %1055 : f32 to vector<8x128xf32>
    %1057 = arith.mulf %1056, %1050 : vector<8x128xf32>
    %1058 = arith.addf %1041, %1057 : vector<8x128xf32>
    %c198 = arith.constant 198 : index
    %1059 = memref.load %arg2[%c198] : memref<784xf32, #tpu.memory_space<smem>>
    %1060 = vector.broadcast %1059 : f32 to vector<8x128xf32>
    %1061 = arith.mulf %1060, %1050 : vector<8x128xf32>
    %1062 = arith.addf %1045, %1061 : vector<8x128xf32>
    %c199 = arith.constant 199 : index
    %1063 = memref.load %arg2[%c199] : memref<784xf32, #tpu.memory_space<smem>>
    %1064 = vector.broadcast %1063 : f32 to vector<8x128xf32>
    %1065 = arith.mulf %1064, %1050 : vector<8x128xf32>
    %1066 = arith.addf %1049, %1065 : vector<8x128xf32>
    %c122_i32_77 = arith.constant 122 : i32
    %1067 = tpu.dynamic_rotate %965 by %c122_i32_77 dim 1 : vector<8x128xf32>, i32 -> vector<8x128xf32>
    %c212 = arith.constant 212 : index
    %1068 = memref.load %arg2[%c212] : memref<784xf32, #tpu.memory_space<smem>>
    %1069 = vector.broadcast %1068 : f32 to vector<8x128xf32>
    %1070 = arith.mulf %1069, %1067 : vector<8x128xf32>
    %1071 = arith.addf %1054, %1070 : vector<8x128xf32>
    %c213 = arith.constant 213 : index
    %1072 = memref.load %arg2[%c213] : memref<784xf32, #tpu.memory_space<smem>>
    %1073 = vector.broadcast %1072 : f32 to vector<8x128xf32>
    %1074 = arith.mulf %1073, %1067 : vector<8x128xf32>
    %1075 = arith.addf %1058, %1074 : vector<8x128xf32>
    %c214 = arith.constant 214 : index
    %1076 = memref.load %arg2[%c214] : memref<784xf32, #tpu.memory_space<smem>>
    %1077 = vector.broadcast %1076 : f32 to vector<8x128xf32>
    %1078 = arith.mulf %1077, %1067 : vector<8x128xf32>
    %1079 = arith.addf %1062, %1078 : vector<8x128xf32>
    %c215 = arith.constant 215 : index
    %1080 = memref.load %arg2[%c215] : memref<784xf32, #tpu.memory_space<smem>>
    %1081 = vector.broadcast %1080 : f32 to vector<8x128xf32>
    %1082 = arith.mulf %1081, %1067 : vector<8x128xf32>
    %1083 = arith.addf %1066, %1082 : vector<8x128xf32>
    %c1_78 = arith.constant 1 : index
    %c2_79 = arith.constant 2 : index
    %c0_80 = arith.constant 0 : index
    %1084 = vector.load %arg1[%c1_78, %c2_79, %c0_80] : memref<4x14x128xf32, #tpu.memory_space<vmem>>, vector<1x8x128xf32>
    %1085 = vector.shape_cast %1084 : vector<1x8x128xf32> to vector<8x128xf32>
    %c228 = arith.constant 228 : index
    %1086 = memref.load %arg2[%c228] : memref<784xf32, #tpu.memory_space<smem>>
    %1087 = vector.broadcast %1086 : f32 to vector<8x128xf32>
    %1088 = arith.mulf %1087, %1085 : vector<8x128xf32>
    %1089 = arith.addf %1071, %1088 : vector<8x128xf32>
    %c229 = arith.constant 229 : index
    %1090 = memref.load %arg2[%c229] : memref<784xf32, #tpu.memory_space<smem>>
    %1091 = vector.broadcast %1090 : f32 to vector<8x128xf32>
    %1092 = arith.mulf %1091, %1085 : vector<8x128xf32>
    %1093 = arith.addf %1075, %1092 : vector<8x128xf32>
    %c230 = arith.constant 230 : index
    %1094 = memref.load %arg2[%c230] : memref<784xf32, #tpu.memory_space<smem>>
    %1095 = vector.broadcast %1094 : f32 to vector<8x128xf32>
    %1096 = arith.mulf %1095, %1085 : vector<8x128xf32>
    %1097 = arith.addf %1079, %1096 : vector<8x128xf32>
    %c231 = arith.constant 231 : index
    %1098 = memref.load %arg2[%c231] : memref<784xf32, #tpu.memory_space<smem>>
    %1099 = vector.broadcast %1098 : f32 to vector<8x128xf32>
    %1100 = arith.mulf %1099, %1085 : vector<8x128xf32>
    %1101 = arith.addf %1083, %1100 : vector<8x128xf32>
    %c127_i32_81 = arith.constant 127 : i32
    %1102 = tpu.dynamic_rotate %1085 by %c127_i32_81 dim 1 : vector<8x128xf32>, i32 -> vector<8x128xf32>
    %c244 = arith.constant 244 : index
    %1103 = memref.load %arg2[%c244] : memref<784xf32, #tpu.memory_space<smem>>
    %1104 = vector.broadcast %1103 : f32 to vector<8x128xf32>
    %1105 = arith.mulf %1104, %1102 : vector<8x128xf32>
    %1106 = arith.addf %1089, %1105 : vector<8x128xf32>
    %c245 = arith.constant 245 : index
    %1107 = memref.load %arg2[%c245] : memref<784xf32, #tpu.memory_space<smem>>
    %1108 = vector.broadcast %1107 : f32 to vector<8x128xf32>
    %1109 = arith.mulf %1108, %1102 : vector<8x128xf32>
    %1110 = arith.addf %1093, %1109 : vector<8x128xf32>
    %c246 = arith.constant 246 : index
    %1111 = memref.load %arg2[%c246] : memref<784xf32, #tpu.memory_space<smem>>
    %1112 = vector.broadcast %1111 : f32 to vector<8x128xf32>
    %1113 = arith.mulf %1112, %1102 : vector<8x128xf32>
    %1114 = arith.addf %1097, %1113 : vector<8x128xf32>
    %c247 = arith.constant 247 : index
    %1115 = memref.load %arg2[%c247] : memref<784xf32, #tpu.memory_space<smem>>
    %1116 = vector.broadcast %1115 : f32 to vector<8x128xf32>
    %1117 = arith.mulf %1116, %1102 : vector<8x128xf32>
    %1118 = arith.addf %1101, %1117 : vector<8x128xf32>
    %c126_i32_82 = arith.constant 126 : i32
    %1119 = tpu.dynamic_rotate %1085 by %c126_i32_82 dim 1 : vector<8x128xf32>, i32 -> vector<8x128xf32>
    %c260 = arith.constant 260 : index
    %1120 = memref.load %arg2[%c260] : memref<784xf32, #tpu.memory_space<smem>>
    %1121 = vector.broadcast %1120 : f32 to vector<8x128xf32>
    %1122 = arith.mulf %1121, %1119 : vector<8x128xf32>
    %1123 = arith.addf %1106, %1122 : vector<8x128xf32>
    %c261 = arith.constant 261 : index
    %1124 = memref.load %arg2[%c261] : memref<784xf32, #tpu.memory_space<smem>>
    %1125 = vector.broadcast %1124 : f32 to vector<8x128xf32>
    %1126 = arith.mulf %1125, %1119 : vector<8x128xf32>
    %1127 = arith.addf %1110, %1126 : vector<8x128xf32>
    %c262 = arith.constant 262 : index
    %1128 = memref.load %arg2[%c262] : memref<784xf32, #tpu.memory_space<smem>>
    %1129 = vector.broadcast %1128 : f32 to vector<8x128xf32>
    %1130 = arith.mulf %1129, %1119 : vector<8x128xf32>
    %1131 = arith.addf %1114, %1130 : vector<8x128xf32>
    %c263 = arith.constant 263 : index
    %1132 = memref.load %arg2[%c263] : memref<784xf32, #tpu.memory_space<smem>>
    %1133 = vector.broadcast %1132 : f32 to vector<8x128xf32>
    %1134 = arith.mulf %1133, %1119 : vector<8x128xf32>
    %1135 = arith.addf %1118, %1134 : vector<8x128xf32>
    %c125_i32_83 = arith.constant 125 : i32
    %1136 = tpu.dynamic_rotate %1085 by %c125_i32_83 dim 1 : vector<8x128xf32>, i32 -> vector<8x128xf32>
    %c276 = arith.constant 276 : index
    %1137 = memref.load %arg2[%c276] : memref<784xf32, #tpu.memory_space<smem>>
    %1138 = vector.broadcast %1137 : f32 to vector<8x128xf32>
    %1139 = arith.mulf %1138, %1136 : vector<8x128xf32>
    %1140 = arith.addf %1123, %1139 : vector<8x128xf32>
    %c277 = arith.constant 277 : index
    %1141 = memref.load %arg2[%c277] : memref<784xf32, #tpu.memory_space<smem>>
    %1142 = vector.broadcast %1141 : f32 to vector<8x128xf32>
    %1143 = arith.mulf %1142, %1136 : vector<8x128xf32>
    %1144 = arith.addf %1127, %1143 : vector<8x128xf32>
    %c278 = arith.constant 278 : index
    %1145 = memref.load %arg2[%c278] : memref<784xf32, #tpu.memory_space<smem>>
    %1146 = vector.broadcast %1145 : f32 to vector<8x128xf32>
    %1147 = arith.mulf %1146, %1136 : vector<8x128xf32>
    %1148 = arith.addf %1131, %1147 : vector<8x128xf32>
    %c279 = arith.constant 279 : index
    %1149 = memref.load %arg2[%c279] : memref<784xf32, #tpu.memory_space<smem>>
    %1150 = vector.broadcast %1149 : f32 to vector<8x128xf32>
    %1151 = arith.mulf %1150, %1136 : vector<8x128xf32>
    %1152 = arith.addf %1135, %1151 : vector<8x128xf32>
    %c124_i32_84 = arith.constant 124 : i32
    %1153 = tpu.dynamic_rotate %1085 by %c124_i32_84 dim 1 : vector<8x128xf32>, i32 -> vector<8x128xf32>
    %c292 = arith.constant 292 : index
    %1154 = memref.load %arg2[%c292] : memref<784xf32, #tpu.memory_space<smem>>
    %1155 = vector.broadcast %1154 : f32 to vector<8x128xf32>
    %1156 = arith.mulf %1155, %1153 : vector<8x128xf32>
    %1157 = arith.addf %1140, %1156 : vector<8x128xf32>
    %c293 = arith.constant 293 : index
    %1158 = memref.load %arg2[%c293] : memref<784xf32, #tpu.memory_space<smem>>
    %1159 = vector.broadcast %1158 : f32 to vector<8x128xf32>
    %1160 = arith.mulf %1159, %1153 : vector<8x128xf32>
    %1161 = arith.addf %1144, %1160 : vector<8x128xf32>
    %c294 = arith.constant 294 : index
    %1162 = memref.load %arg2[%c294] : memref<784xf32, #tpu.memory_space<smem>>
    %1163 = vector.broadcast %1162 : f32 to vector<8x128xf32>
    %1164 = arith.mulf %1163, %1153 : vector<8x128xf32>
    %1165 = arith.addf %1148, %1164 : vector<8x128xf32>
    %c295 = arith.constant 295 : index
    %1166 = memref.load %arg2[%c295] : memref<784xf32, #tpu.memory_space<smem>>
    %1167 = vector.broadcast %1166 : f32 to vector<8x128xf32>
    %1168 = arith.mulf %1167, %1153 : vector<8x128xf32>
    %1169 = arith.addf %1152, %1168 : vector<8x128xf32>
    %c123_i32_85 = arith.constant 123 : i32
    %1170 = tpu.dynamic_rotate %1085 by %c123_i32_85 dim 1 : vector<8x128xf32>, i32 -> vector<8x128xf32>
    %c308 = arith.constant 308 : index
    %1171 = memref.load %arg2[%c308] : memref<784xf32, #tpu.memory_space<smem>>
    %1172 = vector.broadcast %1171 : f32 to vector<8x128xf32>
    %1173 = arith.mulf %1172, %1170 : vector<8x128xf32>
    %1174 = arith.addf %1157, %1173 : vector<8x128xf32>
    %c309 = arith.constant 309 : index
    %1175 = memref.load %arg2[%c309] : memref<784xf32, #tpu.memory_space<smem>>
    %1176 = vector.broadcast %1175 : f32 to vector<8x128xf32>
    %1177 = arith.mulf %1176, %1170 : vector<8x128xf32>
    %1178 = arith.addf %1161, %1177 : vector<8x128xf32>
    %c310 = arith.constant 310 : index
    %1179 = memref.load %arg2[%c310] : memref<784xf32, #tpu.memory_space<smem>>
    %1180 = vector.broadcast %1179 : f32 to vector<8x128xf32>
    %1181 = arith.mulf %1180, %1170 : vector<8x128xf32>
    %1182 = arith.addf %1165, %1181 : vector<8x128xf32>
    %c311 = arith.constant 311 : index
    %1183 = memref.load %arg2[%c311] : memref<784xf32, #tpu.memory_space<smem>>
    %1184 = vector.broadcast %1183 : f32 to vector<8x128xf32>
    %1185 = arith.mulf %1184, %1170 : vector<8x128xf32>
    %1186 = arith.addf %1169, %1185 : vector<8x128xf32>
    %c122_i32_86 = arith.constant 122 : i32
    %1187 = tpu.dynamic_rotate %1085 by %c122_i32_86 dim 1 : vector<8x128xf32>, i32 -> vector<8x128xf32>
    %c324 = arith.constant 324 : index
    %1188 = memref.load %arg2[%c324] : memref<784xf32, #tpu.memory_space<smem>>
    %1189 = vector.broadcast %1188 : f32 to vector<8x128xf32>
    %1190 = arith.mulf %1189, %1187 : vector<8x128xf32>
    %1191 = arith.addf %1174, %1190 : vector<8x128xf32>
    %c325 = arith.constant 325 : index
    %1192 = memref.load %arg2[%c325] : memref<784xf32, #tpu.memory_space<smem>>
    %1193 = vector.broadcast %1192 : f32 to vector<8x128xf32>
    %1194 = arith.mulf %1193, %1187 : vector<8x128xf32>
    %1195 = arith.addf %1178, %1194 : vector<8x128xf32>
    %c326 = arith.constant 326 : index
    %1196 = memref.load %arg2[%c326] : memref<784xf32, #tpu.memory_space<smem>>
    %1197 = vector.broadcast %1196 : f32 to vector<8x128xf32>
    %1198 = arith.mulf %1197, %1187 : vector<8x128xf32>
    %1199 = arith.addf %1182, %1198 : vector<8x128xf32>
    %c327 = arith.constant 327 : index
    %1200 = memref.load %arg2[%c327] : memref<784xf32, #tpu.memory_space<smem>>
    %1201 = vector.broadcast %1200 : f32 to vector<8x128xf32>
    %1202 = arith.mulf %1201, %1187 : vector<8x128xf32>
    %1203 = arith.addf %1186, %1202 : vector<8x128xf32>
    %c1_87 = arith.constant 1 : index
    %c3_88 = arith.constant 3 : index
    %c0_89 = arith.constant 0 : index
    %1204 = vector.load %arg1[%c1_87, %c3_88, %c0_89] : memref<4x14x128xf32, #tpu.memory_space<vmem>>, vector<1x8x128xf32>
    %1205 = vector.shape_cast %1204 : vector<1x8x128xf32> to vector<8x128xf32>
    %c340 = arith.constant 340 : index
    %1206 = memref.load %arg2[%c340] : memref<784xf32, #tpu.memory_space<smem>>
    %1207 = vector.broadcast %1206 : f32 to vector<8x128xf32>
    %1208 = arith.mulf %1207, %1205 : vector<8x128xf32>
    %1209 = arith.addf %1191, %1208 : vector<8x128xf32>
    %c341 = arith.constant 341 : index
    %1210 = memref.load %arg2[%c341] : memref<784xf32, #tpu.memory_space<smem>>
    %1211 = vector.broadcast %1210 : f32 to vector<8x128xf32>
    %1212 = arith.mulf %1211, %1205 : vector<8x128xf32>
    %1213 = arith.addf %1195, %1212 : vector<8x128xf32>
    %c342 = arith.constant 342 : index
    %1214 = memref.load %arg2[%c342] : memref<784xf32, #tpu.memory_space<smem>>
    %1215 = vector.broadcast %1214 : f32 to vector<8x128xf32>
    %1216 = arith.mulf %1215, %1205 : vector<8x128xf32>
    %1217 = arith.addf %1199, %1216 : vector<8x128xf32>
    %c343 = arith.constant 343 : index
    %1218 = memref.load %arg2[%c343] : memref<784xf32, #tpu.memory_space<smem>>
    %1219 = vector.broadcast %1218 : f32 to vector<8x128xf32>
    %1220 = arith.mulf %1219, %1205 : vector<8x128xf32>
    %1221 = arith.addf %1203, %1220 : vector<8x128xf32>
    %c127_i32_90 = arith.constant 127 : i32
    %1222 = tpu.dynamic_rotate %1205 by %c127_i32_90 dim 1 : vector<8x128xf32>, i32 -> vector<8x128xf32>
    %c356 = arith.constant 356 : index
    %1223 = memref.load %arg2[%c356] : memref<784xf32, #tpu.memory_space<smem>>
    %1224 = vector.broadcast %1223 : f32 to vector<8x128xf32>
    %1225 = arith.mulf %1224, %1222 : vector<8x128xf32>
    %1226 = arith.addf %1209, %1225 : vector<8x128xf32>
    %c357 = arith.constant 357 : index
    %1227 = memref.load %arg2[%c357] : memref<784xf32, #tpu.memory_space<smem>>
    %1228 = vector.broadcast %1227 : f32 to vector<8x128xf32>
    %1229 = arith.mulf %1228, %1222 : vector<8x128xf32>
    %1230 = arith.addf %1213, %1229 : vector<8x128xf32>
    %c358 = arith.constant 358 : index
    %1231 = memref.load %arg2[%c358] : memref<784xf32, #tpu.memory_space<smem>>
    %1232 = vector.broadcast %1231 : f32 to vector<8x128xf32>
    %1233 = arith.mulf %1232, %1222 : vector<8x128xf32>
    %1234 = arith.addf %1217, %1233 : vector<8x128xf32>
    %c359 = arith.constant 359 : index
    %1235 = memref.load %arg2[%c359] : memref<784xf32, #tpu.memory_space<smem>>
    %1236 = vector.broadcast %1235 : f32 to vector<8x128xf32>
    %1237 = arith.mulf %1236, %1222 : vector<8x128xf32>
    %1238 = arith.addf %1221, %1237 : vector<8x128xf32>
    %c126_i32_91 = arith.constant 126 : i32
    %1239 = tpu.dynamic_rotate %1205 by %c126_i32_91 dim 1 : vector<8x128xf32>, i32 -> vector<8x128xf32>
    %c372 = arith.constant 372 : index
    %1240 = memref.load %arg2[%c372] : memref<784xf32, #tpu.memory_space<smem>>
    %1241 = vector.broadcast %1240 : f32 to vector<8x128xf32>
    %1242 = arith.mulf %1241, %1239 : vector<8x128xf32>
    %1243 = arith.addf %1226, %1242 : vector<8x128xf32>
    %c373 = arith.constant 373 : index
    %1244 = memref.load %arg2[%c373] : memref<784xf32, #tpu.memory_space<smem>>
    %1245 = vector.broadcast %1244 : f32 to vector<8x128xf32>
    %1246 = arith.mulf %1245, %1239 : vector<8x128xf32>
    %1247 = arith.addf %1230, %1246 : vector<8x128xf32>
    %c374 = arith.constant 374 : index
    %1248 = memref.load %arg2[%c374] : memref<784xf32, #tpu.memory_space<smem>>
    %1249 = vector.broadcast %1248 : f32 to vector<8x128xf32>
    %1250 = arith.mulf %1249, %1239 : vector<8x128xf32>
    %1251 = arith.addf %1234, %1250 : vector<8x128xf32>
    %c375 = arith.constant 375 : index
    %1252 = memref.load %arg2[%c375] : memref<784xf32, #tpu.memory_space<smem>>
    %1253 = vector.broadcast %1252 : f32 to vector<8x128xf32>
    %1254 = arith.mulf %1253, %1239 : vector<8x128xf32>
    %1255 = arith.addf %1238, %1254 : vector<8x128xf32>
    %c125_i32_92 = arith.constant 125 : i32
    %1256 = tpu.dynamic_rotate %1205 by %c125_i32_92 dim 1 : vector<8x128xf32>, i32 -> vector<8x128xf32>
    %c388 = arith.constant 388 : index
    %1257 = memref.load %arg2[%c388] : memref<784xf32, #tpu.memory_space<smem>>
    %1258 = vector.broadcast %1257 : f32 to vector<8x128xf32>
    %1259 = arith.mulf %1258, %1256 : vector<8x128xf32>
    %1260 = arith.addf %1243, %1259 : vector<8x128xf32>
    %c389 = arith.constant 389 : index
    %1261 = memref.load %arg2[%c389] : memref<784xf32, #tpu.memory_space<smem>>
    %1262 = vector.broadcast %1261 : f32 to vector<8x128xf32>
    %1263 = arith.mulf %1262, %1256 : vector<8x128xf32>
    %1264 = arith.addf %1247, %1263 : vector<8x128xf32>
    %c390 = arith.constant 390 : index
    %1265 = memref.load %arg2[%c390] : memref<784xf32, #tpu.memory_space<smem>>
    %1266 = vector.broadcast %1265 : f32 to vector<8x128xf32>
    %1267 = arith.mulf %1266, %1256 : vector<8x128xf32>
    %1268 = arith.addf %1251, %1267 : vector<8x128xf32>
    %c391 = arith.constant 391 : index
    %1269 = memref.load %arg2[%c391] : memref<784xf32, #tpu.memory_space<smem>>
    %1270 = vector.broadcast %1269 : f32 to vector<8x128xf32>
    %1271 = arith.mulf %1270, %1256 : vector<8x128xf32>
    %1272 = arith.addf %1255, %1271 : vector<8x128xf32>
    %c124_i32_93 = arith.constant 124 : i32
    %1273 = tpu.dynamic_rotate %1205 by %c124_i32_93 dim 1 : vector<8x128xf32>, i32 -> vector<8x128xf32>
    %c404 = arith.constant 404 : index
    %1274 = memref.load %arg2[%c404] : memref<784xf32, #tpu.memory_space<smem>>
    %1275 = vector.broadcast %1274 : f32 to vector<8x128xf32>
    %1276 = arith.mulf %1275, %1273 : vector<8x128xf32>
    %1277 = arith.addf %1260, %1276 : vector<8x128xf32>
    %c405 = arith.constant 405 : index
    %1278 = memref.load %arg2[%c405] : memref<784xf32, #tpu.memory_space<smem>>
    %1279 = vector.broadcast %1278 : f32 to vector<8x128xf32>
    %1280 = arith.mulf %1279, %1273 : vector<8x128xf32>
    %1281 = arith.addf %1264, %1280 : vector<8x128xf32>
    %c406 = arith.constant 406 : index
    %1282 = memref.load %arg2[%c406] : memref<784xf32, #tpu.memory_space<smem>>
    %1283 = vector.broadcast %1282 : f32 to vector<8x128xf32>
    %1284 = arith.mulf %1283, %1273 : vector<8x128xf32>
    %1285 = arith.addf %1268, %1284 : vector<8x128xf32>
    %c407 = arith.constant 407 : index
    %1286 = memref.load %arg2[%c407] : memref<784xf32, #tpu.memory_space<smem>>
    %1287 = vector.broadcast %1286 : f32 to vector<8x128xf32>
    %1288 = arith.mulf %1287, %1273 : vector<8x128xf32>
    %1289 = arith.addf %1272, %1288 : vector<8x128xf32>
    %c123_i32_94 = arith.constant 123 : i32
    %1290 = tpu.dynamic_rotate %1205 by %c123_i32_94 dim 1 : vector<8x128xf32>, i32 -> vector<8x128xf32>
    %c420 = arith.constant 420 : index
    %1291 = memref.load %arg2[%c420] : memref<784xf32, #tpu.memory_space<smem>>
    %1292 = vector.broadcast %1291 : f32 to vector<8x128xf32>
    %1293 = arith.mulf %1292, %1290 : vector<8x128xf32>
    %1294 = arith.addf %1277, %1293 : vector<8x128xf32>
    %c421 = arith.constant 421 : index
    %1295 = memref.load %arg2[%c421] : memref<784xf32, #tpu.memory_space<smem>>
    %1296 = vector.broadcast %1295 : f32 to vector<8x128xf32>
    %1297 = arith.mulf %1296, %1290 : vector<8x128xf32>
    %1298 = arith.addf %1281, %1297 : vector<8x128xf32>
    %c422 = arith.constant 422 : index
    %1299 = memref.load %arg2[%c422] : memref<784xf32, #tpu.memory_space<smem>>
    %1300 = vector.broadcast %1299 : f32 to vector<8x128xf32>
    %1301 = arith.mulf %1300, %1290 : vector<8x128xf32>
    %1302 = arith.addf %1285, %1301 : vector<8x128xf32>
    %c423 = arith.constant 423 : index
    %1303 = memref.load %arg2[%c423] : memref<784xf32, #tpu.memory_space<smem>>
    %1304 = vector.broadcast %1303 : f32 to vector<8x128xf32>
    %1305 = arith.mulf %1304, %1290 : vector<8x128xf32>
    %1306 = arith.addf %1289, %1305 : vector<8x128xf32>
    %c122_i32_95 = arith.constant 122 : i32
    %1307 = tpu.dynamic_rotate %1205 by %c122_i32_95 dim 1 : vector<8x128xf32>, i32 -> vector<8x128xf32>
    %c436 = arith.constant 436 : index
    %1308 = memref.load %arg2[%c436] : memref<784xf32, #tpu.memory_space<smem>>
    %1309 = vector.broadcast %1308 : f32 to vector<8x128xf32>
    %1310 = arith.mulf %1309, %1307 : vector<8x128xf32>
    %1311 = arith.addf %1294, %1310 : vector<8x128xf32>
    %c437 = arith.constant 437 : index
    %1312 = memref.load %arg2[%c437] : memref<784xf32, #tpu.memory_space<smem>>
    %1313 = vector.broadcast %1312 : f32 to vector<8x128xf32>
    %1314 = arith.mulf %1313, %1307 : vector<8x128xf32>
    %1315 = arith.addf %1298, %1314 : vector<8x128xf32>
    %c438 = arith.constant 438 : index
    %1316 = memref.load %arg2[%c438] : memref<784xf32, #tpu.memory_space<smem>>
    %1317 = vector.broadcast %1316 : f32 to vector<8x128xf32>
    %1318 = arith.mulf %1317, %1307 : vector<8x128xf32>
    %1319 = arith.addf %1302, %1318 : vector<8x128xf32>
    %c439 = arith.constant 439 : index
    %1320 = memref.load %arg2[%c439] : memref<784xf32, #tpu.memory_space<smem>>
    %1321 = vector.broadcast %1320 : f32 to vector<8x128xf32>
    %1322 = arith.mulf %1321, %1307 : vector<8x128xf32>
    %1323 = arith.addf %1306, %1322 : vector<8x128xf32>
    %c1_96 = arith.constant 1 : index
    %c4_97 = arith.constant 4 : index
    %c0_98 = arith.constant 0 : index
    %1324 = vector.load %arg1[%c1_96, %c4_97, %c0_98] : memref<4x14x128xf32, #tpu.memory_space<vmem>>, vector<1x8x128xf32>
    %1325 = vector.shape_cast %1324 : vector<1x8x128xf32> to vector<8x128xf32>
    %c452 = arith.constant 452 : index
    %1326 = memref.load %arg2[%c452] : memref<784xf32, #tpu.memory_space<smem>>
    %1327 = vector.broadcast %1326 : f32 to vector<8x128xf32>
    %1328 = arith.mulf %1327, %1325 : vector<8x128xf32>
    %1329 = arith.addf %1311, %1328 : vector<8x128xf32>
    %c453 = arith.constant 453 : index
    %1330 = memref.load %arg2[%c453] : memref<784xf32, #tpu.memory_space<smem>>
    %1331 = vector.broadcast %1330 : f32 to vector<8x128xf32>
    %1332 = arith.mulf %1331, %1325 : vector<8x128xf32>
    %1333 = arith.addf %1315, %1332 : vector<8x128xf32>
    %c454 = arith.constant 454 : index
    %1334 = memref.load %arg2[%c454] : memref<784xf32, #tpu.memory_space<smem>>
    %1335 = vector.broadcast %1334 : f32 to vector<8x128xf32>
    %1336 = arith.mulf %1335, %1325 : vector<8x128xf32>
    %1337 = arith.addf %1319, %1336 : vector<8x128xf32>
    %c455 = arith.constant 455 : index
    %1338 = memref.load %arg2[%c455] : memref<784xf32, #tpu.memory_space<smem>>
    %1339 = vector.broadcast %1338 : f32 to vector<8x128xf32>
    %1340 = arith.mulf %1339, %1325 : vector<8x128xf32>
    %1341 = arith.addf %1323, %1340 : vector<8x128xf32>
    %c127_i32_99 = arith.constant 127 : i32
    %1342 = tpu.dynamic_rotate %1325 by %c127_i32_99 dim 1 : vector<8x128xf32>, i32 -> vector<8x128xf32>
    %c468 = arith.constant 468 : index
    %1343 = memref.load %arg2[%c468] : memref<784xf32, #tpu.memory_space<smem>>
    %1344 = vector.broadcast %1343 : f32 to vector<8x128xf32>
    %1345 = arith.mulf %1344, %1342 : vector<8x128xf32>
    %1346 = arith.addf %1329, %1345 : vector<8x128xf32>
    %c469 = arith.constant 469 : index
    %1347 = memref.load %arg2[%c469] : memref<784xf32, #tpu.memory_space<smem>>
    %1348 = vector.broadcast %1347 : f32 to vector<8x128xf32>
    %1349 = arith.mulf %1348, %1342 : vector<8x128xf32>
    %1350 = arith.addf %1333, %1349 : vector<8x128xf32>
    %c470 = arith.constant 470 : index
    %1351 = memref.load %arg2[%c470] : memref<784xf32, #tpu.memory_space<smem>>
    %1352 = vector.broadcast %1351 : f32 to vector<8x128xf32>
    %1353 = arith.mulf %1352, %1342 : vector<8x128xf32>
    %1354 = arith.addf %1337, %1353 : vector<8x128xf32>
    %c471 = arith.constant 471 : index
    %1355 = memref.load %arg2[%c471] : memref<784xf32, #tpu.memory_space<smem>>
    %1356 = vector.broadcast %1355 : f32 to vector<8x128xf32>
    %1357 = arith.mulf %1356, %1342 : vector<8x128xf32>
    %1358 = arith.addf %1341, %1357 : vector<8x128xf32>
    %c126_i32_100 = arith.constant 126 : i32
    %1359 = tpu.dynamic_rotate %1325 by %c126_i32_100 dim 1 : vector<8x128xf32>, i32 -> vector<8x128xf32>
    %c484 = arith.constant 484 : index
    %1360 = memref.load %arg2[%c484] : memref<784xf32, #tpu.memory_space<smem>>
    %1361 = vector.broadcast %1360 : f32 to vector<8x128xf32>
    %1362 = arith.mulf %1361, %1359 : vector<8x128xf32>
    %1363 = arith.addf %1346, %1362 : vector<8x128xf32>
    %c485 = arith.constant 485 : index
    %1364 = memref.load %arg2[%c485] : memref<784xf32, #tpu.memory_space<smem>>
    %1365 = vector.broadcast %1364 : f32 to vector<8x128xf32>
    %1366 = arith.mulf %1365, %1359 : vector<8x128xf32>
    %1367 = arith.addf %1350, %1366 : vector<8x128xf32>
    %c486 = arith.constant 486 : index
    %1368 = memref.load %arg2[%c486] : memref<784xf32, #tpu.memory_space<smem>>
    %1369 = vector.broadcast %1368 : f32 to vector<8x128xf32>
    %1370 = arith.mulf %1369, %1359 : vector<8x128xf32>
    %1371 = arith.addf %1354, %1370 : vector<8x128xf32>
    %c487 = arith.constant 487 : index
    %1372 = memref.load %arg2[%c487] : memref<784xf32, #tpu.memory_space<smem>>
    %1373 = vector.broadcast %1372 : f32 to vector<8x128xf32>
    %1374 = arith.mulf %1373, %1359 : vector<8x128xf32>
    %1375 = arith.addf %1358, %1374 : vector<8x128xf32>
    %c125_i32_101 = arith.constant 125 : i32
    %1376 = tpu.dynamic_rotate %1325 by %c125_i32_101 dim 1 : vector<8x128xf32>, i32 -> vector<8x128xf32>
    %c500 = arith.constant 500 : index
    %1377 = memref.load %arg2[%c500] : memref<784xf32, #tpu.memory_space<smem>>
    %1378 = vector.broadcast %1377 : f32 to vector<8x128xf32>
    %1379 = arith.mulf %1378, %1376 : vector<8x128xf32>
    %1380 = arith.addf %1363, %1379 : vector<8x128xf32>
    %c501 = arith.constant 501 : index
    %1381 = memref.load %arg2[%c501] : memref<784xf32, #tpu.memory_space<smem>>
    %1382 = vector.broadcast %1381 : f32 to vector<8x128xf32>
    %1383 = arith.mulf %1382, %1376 : vector<8x128xf32>
    %1384 = arith.addf %1367, %1383 : vector<8x128xf32>
    %c502 = arith.constant 502 : index
    %1385 = memref.load %arg2[%c502] : memref<784xf32, #tpu.memory_space<smem>>
    %1386 = vector.broadcast %1385 : f32 to vector<8x128xf32>
    %1387 = arith.mulf %1386, %1376 : vector<8x128xf32>
    %1388 = arith.addf %1371, %1387 : vector<8x128xf32>
    %c503 = arith.constant 503 : index
    %1389 = memref.load %arg2[%c503] : memref<784xf32, #tpu.memory_space<smem>>
    %1390 = vector.broadcast %1389 : f32 to vector<8x128xf32>
    %1391 = arith.mulf %1390, %1376 : vector<8x128xf32>
    %1392 = arith.addf %1375, %1391 : vector<8x128xf32>
    %c124_i32_102 = arith.constant 124 : i32
    %1393 = tpu.dynamic_rotate %1325 by %c124_i32_102 dim 1 : vector<8x128xf32>, i32 -> vector<8x128xf32>
    %c516 = arith.constant 516 : index
    %1394 = memref.load %arg2[%c516] : memref<784xf32, #tpu.memory_space<smem>>
    %1395 = vector.broadcast %1394 : f32 to vector<8x128xf32>
    %1396 = arith.mulf %1395, %1393 : vector<8x128xf32>
    %1397 = arith.addf %1380, %1396 : vector<8x128xf32>
    %c517 = arith.constant 517 : index
    %1398 = memref.load %arg2[%c517] : memref<784xf32, #tpu.memory_space<smem>>
    %1399 = vector.broadcast %1398 : f32 to vector<8x128xf32>
    %1400 = arith.mulf %1399, %1393 : vector<8x128xf32>
    %1401 = arith.addf %1384, %1400 : vector<8x128xf32>
    %c518 = arith.constant 518 : index
    %1402 = memref.load %arg2[%c518] : memref<784xf32, #tpu.memory_space<smem>>
    %1403 = vector.broadcast %1402 : f32 to vector<8x128xf32>
    %1404 = arith.mulf %1403, %1393 : vector<8x128xf32>
    %1405 = arith.addf %1388, %1404 : vector<8x128xf32>
    %c519 = arith.constant 519 : index
    %1406 = memref.load %arg2[%c519] : memref<784xf32, #tpu.memory_space<smem>>
    %1407 = vector.broadcast %1406 : f32 to vector<8x128xf32>
    %1408 = arith.mulf %1407, %1393 : vector<8x128xf32>
    %1409 = arith.addf %1392, %1408 : vector<8x128xf32>
    %c123_i32_103 = arith.constant 123 : i32
    %1410 = tpu.dynamic_rotate %1325 by %c123_i32_103 dim 1 : vector<8x128xf32>, i32 -> vector<8x128xf32>
    %c532 = arith.constant 532 : index
    %1411 = memref.load %arg2[%c532] : memref<784xf32, #tpu.memory_space<smem>>
    %1412 = vector.broadcast %1411 : f32 to vector<8x128xf32>
    %1413 = arith.mulf %1412, %1410 : vector<8x128xf32>
    %1414 = arith.addf %1397, %1413 : vector<8x128xf32>
    %c533 = arith.constant 533 : index
    %1415 = memref.load %arg2[%c533] : memref<784xf32, #tpu.memory_space<smem>>
    %1416 = vector.broadcast %1415 : f32 to vector<8x128xf32>
    %1417 = arith.mulf %1416, %1410 : vector<8x128xf32>
    %1418 = arith.addf %1401, %1417 : vector<8x128xf32>
    %c534 = arith.constant 534 : index
    %1419 = memref.load %arg2[%c534] : memref<784xf32, #tpu.memory_space<smem>>
    %1420 = vector.broadcast %1419 : f32 to vector<8x128xf32>
    %1421 = arith.mulf %1420, %1410 : vector<8x128xf32>
    %1422 = arith.addf %1405, %1421 : vector<8x128xf32>
    %c535 = arith.constant 535 : index
    %1423 = memref.load %arg2[%c535] : memref<784xf32, #tpu.memory_space<smem>>
    %1424 = vector.broadcast %1423 : f32 to vector<8x128xf32>
    %1425 = arith.mulf %1424, %1410 : vector<8x128xf32>
    %1426 = arith.addf %1409, %1425 : vector<8x128xf32>
    %c122_i32_104 = arith.constant 122 : i32
    %1427 = tpu.dynamic_rotate %1325 by %c122_i32_104 dim 1 : vector<8x128xf32>, i32 -> vector<8x128xf32>
    %c548 = arith.constant 548 : index
    %1428 = memref.load %arg2[%c548] : memref<784xf32, #tpu.memory_space<smem>>
    %1429 = vector.broadcast %1428 : f32 to vector<8x128xf32>
    %1430 = arith.mulf %1429, %1427 : vector<8x128xf32>
    %1431 = arith.addf %1414, %1430 : vector<8x128xf32>
    %c549 = arith.constant 549 : index
    %1432 = memref.load %arg2[%c549] : memref<784xf32, #tpu.memory_space<smem>>
    %1433 = vector.broadcast %1432 : f32 to vector<8x128xf32>
    %1434 = arith.mulf %1433, %1427 : vector<8x128xf32>
    %1435 = arith.addf %1418, %1434 : vector<8x128xf32>
    %c550 = arith.constant 550 : index
    %1436 = memref.load %arg2[%c550] : memref<784xf32, #tpu.memory_space<smem>>
    %1437 = vector.broadcast %1436 : f32 to vector<8x128xf32>
    %1438 = arith.mulf %1437, %1427 : vector<8x128xf32>
    %1439 = arith.addf %1422, %1438 : vector<8x128xf32>
    %c551 = arith.constant 551 : index
    %1440 = memref.load %arg2[%c551] : memref<784xf32, #tpu.memory_space<smem>>
    %1441 = vector.broadcast %1440 : f32 to vector<8x128xf32>
    %1442 = arith.mulf %1441, %1427 : vector<8x128xf32>
    %1443 = arith.addf %1426, %1442 : vector<8x128xf32>
    %c1_105 = arith.constant 1 : index
    %c5_106 = arith.constant 5 : index
    %c0_107 = arith.constant 0 : index
    %1444 = vector.load %arg1[%c1_105, %c5_106, %c0_107] : memref<4x14x128xf32, #tpu.memory_space<vmem>>, vector<1x8x128xf32>
    %1445 = vector.shape_cast %1444 : vector<1x8x128xf32> to vector<8x128xf32>
    %c564 = arith.constant 564 : index
    %1446 = memref.load %arg2[%c564] : memref<784xf32, #tpu.memory_space<smem>>
    %1447 = vector.broadcast %1446 : f32 to vector<8x128xf32>
    %1448 = arith.mulf %1447, %1445 : vector<8x128xf32>
    %1449 = arith.addf %1431, %1448 : vector<8x128xf32>
    %c565 = arith.constant 565 : index
    %1450 = memref.load %arg2[%c565] : memref<784xf32, #tpu.memory_space<smem>>
    %1451 = vector.broadcast %1450 : f32 to vector<8x128xf32>
    %1452 = arith.mulf %1451, %1445 : vector<8x128xf32>
    %1453 = arith.addf %1435, %1452 : vector<8x128xf32>
    %c566 = arith.constant 566 : index
    %1454 = memref.load %arg2[%c566] : memref<784xf32, #tpu.memory_space<smem>>
    %1455 = vector.broadcast %1454 : f32 to vector<8x128xf32>
    %1456 = arith.mulf %1455, %1445 : vector<8x128xf32>
    %1457 = arith.addf %1439, %1456 : vector<8x128xf32>
    %c567 = arith.constant 567 : index
    %1458 = memref.load %arg2[%c567] : memref<784xf32, #tpu.memory_space<smem>>
    %1459 = vector.broadcast %1458 : f32 to vector<8x128xf32>
    %1460 = arith.mulf %1459, %1445 : vector<8x128xf32>
    %1461 = arith.addf %1443, %1460 : vector<8x128xf32>
    %c127_i32_108 = arith.constant 127 : i32
    %1462 = tpu.dynamic_rotate %1445 by %c127_i32_108 dim 1 : vector<8x128xf32>, i32 -> vector<8x128xf32>
    %c580 = arith.constant 580 : index
    %1463 = memref.load %arg2[%c580] : memref<784xf32, #tpu.memory_space<smem>>
    %1464 = vector.broadcast %1463 : f32 to vector<8x128xf32>
    %1465 = arith.mulf %1464, %1462 : vector<8x128xf32>
    %1466 = arith.addf %1449, %1465 : vector<8x128xf32>
    %c581 = arith.constant 581 : index
    %1467 = memref.load %arg2[%c581] : memref<784xf32, #tpu.memory_space<smem>>
    %1468 = vector.broadcast %1467 : f32 to vector<8x128xf32>
    %1469 = arith.mulf %1468, %1462 : vector<8x128xf32>
    %1470 = arith.addf %1453, %1469 : vector<8x128xf32>
    %c582 = arith.constant 582 : index
    %1471 = memref.load %arg2[%c582] : memref<784xf32, #tpu.memory_space<smem>>
    %1472 = vector.broadcast %1471 : f32 to vector<8x128xf32>
    %1473 = arith.mulf %1472, %1462 : vector<8x128xf32>
    %1474 = arith.addf %1457, %1473 : vector<8x128xf32>
    %c583 = arith.constant 583 : index
    %1475 = memref.load %arg2[%c583] : memref<784xf32, #tpu.memory_space<smem>>
    %1476 = vector.broadcast %1475 : f32 to vector<8x128xf32>
    %1477 = arith.mulf %1476, %1462 : vector<8x128xf32>
    %1478 = arith.addf %1461, %1477 : vector<8x128xf32>
    %c126_i32_109 = arith.constant 126 : i32
    %1479 = tpu.dynamic_rotate %1445 by %c126_i32_109 dim 1 : vector<8x128xf32>, i32 -> vector<8x128xf32>
    %c596 = arith.constant 596 : index
    %1480 = memref.load %arg2[%c596] : memref<784xf32, #tpu.memory_space<smem>>
    %1481 = vector.broadcast %1480 : f32 to vector<8x128xf32>
    %1482 = arith.mulf %1481, %1479 : vector<8x128xf32>
    %1483 = arith.addf %1466, %1482 : vector<8x128xf32>
    %c597 = arith.constant 597 : index
    %1484 = memref.load %arg2[%c597] : memref<784xf32, #tpu.memory_space<smem>>
    %1485 = vector.broadcast %1484 : f32 to vector<8x128xf32>
    %1486 = arith.mulf %1485, %1479 : vector<8x128xf32>
    %1487 = arith.addf %1470, %1486 : vector<8x128xf32>
    %c598 = arith.constant 598 : index
    %1488 = memref.load %arg2[%c598] : memref<784xf32, #tpu.memory_space<smem>>
    %1489 = vector.broadcast %1488 : f32 to vector<8x128xf32>
    %1490 = arith.mulf %1489, %1479 : vector<8x128xf32>
    %1491 = arith.addf %1474, %1490 : vector<8x128xf32>
    %c599 = arith.constant 599 : index
    %1492 = memref.load %arg2[%c599] : memref<784xf32, #tpu.memory_space<smem>>
    %1493 = vector.broadcast %1492 : f32 to vector<8x128xf32>
    %1494 = arith.mulf %1493, %1479 : vector<8x128xf32>
    %1495 = arith.addf %1478, %1494 : vector<8x128xf32>
    %c125_i32_110 = arith.constant 125 : i32
    %1496 = tpu.dynamic_rotate %1445 by %c125_i32_110 dim 1 : vector<8x128xf32>, i32 -> vector<8x128xf32>
    %c612 = arith.constant 612 : index
    %1497 = memref.load %arg2[%c612] : memref<784xf32, #tpu.memory_space<smem>>
    %1498 = vector.broadcast %1497 : f32 to vector<8x128xf32>
    %1499 = arith.mulf %1498, %1496 : vector<8x128xf32>
    %1500 = arith.addf %1483, %1499 : vector<8x128xf32>
    %c613 = arith.constant 613 : index
    %1501 = memref.load %arg2[%c613] : memref<784xf32, #tpu.memory_space<smem>>
    %1502 = vector.broadcast %1501 : f32 to vector<8x128xf32>
    %1503 = arith.mulf %1502, %1496 : vector<8x128xf32>
    %1504 = arith.addf %1487, %1503 : vector<8x128xf32>
    %c614 = arith.constant 614 : index
    %1505 = memref.load %arg2[%c614] : memref<784xf32, #tpu.memory_space<smem>>
    %1506 = vector.broadcast %1505 : f32 to vector<8x128xf32>
    %1507 = arith.mulf %1506, %1496 : vector<8x128xf32>
    %1508 = arith.addf %1491, %1507 : vector<8x128xf32>
    %c615 = arith.constant 615 : index
    %1509 = memref.load %arg2[%c615] : memref<784xf32, #tpu.memory_space<smem>>
    %1510 = vector.broadcast %1509 : f32 to vector<8x128xf32>
    %1511 = arith.mulf %1510, %1496 : vector<8x128xf32>
    %1512 = arith.addf %1495, %1511 : vector<8x128xf32>
    %c124_i32_111 = arith.constant 124 : i32
    %1513 = tpu.dynamic_rotate %1445 by %c124_i32_111 dim 1 : vector<8x128xf32>, i32 -> vector<8x128xf32>
    %c628 = arith.constant 628 : index
    %1514 = memref.load %arg2[%c628] : memref<784xf32, #tpu.memory_space<smem>>
    %1515 = vector.broadcast %1514 : f32 to vector<8x128xf32>
    %1516 = arith.mulf %1515, %1513 : vector<8x128xf32>
    %1517 = arith.addf %1500, %1516 : vector<8x128xf32>
    %c629 = arith.constant 629 : index
    %1518 = memref.load %arg2[%c629] : memref<784xf32, #tpu.memory_space<smem>>
    %1519 = vector.broadcast %1518 : f32 to vector<8x128xf32>
    %1520 = arith.mulf %1519, %1513 : vector<8x128xf32>
    %1521 = arith.addf %1504, %1520 : vector<8x128xf32>
    %c630 = arith.constant 630 : index
    %1522 = memref.load %arg2[%c630] : memref<784xf32, #tpu.memory_space<smem>>
    %1523 = vector.broadcast %1522 : f32 to vector<8x128xf32>
    %1524 = arith.mulf %1523, %1513 : vector<8x128xf32>
    %1525 = arith.addf %1508, %1524 : vector<8x128xf32>
    %c631 = arith.constant 631 : index
    %1526 = memref.load %arg2[%c631] : memref<784xf32, #tpu.memory_space<smem>>
    %1527 = vector.broadcast %1526 : f32 to vector<8x128xf32>
    %1528 = arith.mulf %1527, %1513 : vector<8x128xf32>
    %1529 = arith.addf %1512, %1528 : vector<8x128xf32>
    %c123_i32_112 = arith.constant 123 : i32
    %1530 = tpu.dynamic_rotate %1445 by %c123_i32_112 dim 1 : vector<8x128xf32>, i32 -> vector<8x128xf32>
    %c644 = arith.constant 644 : index
    %1531 = memref.load %arg2[%c644] : memref<784xf32, #tpu.memory_space<smem>>
    %1532 = vector.broadcast %1531 : f32 to vector<8x128xf32>
    %1533 = arith.mulf %1532, %1530 : vector<8x128xf32>
    %1534 = arith.addf %1517, %1533 : vector<8x128xf32>
    %c645 = arith.constant 645 : index
    %1535 = memref.load %arg2[%c645] : memref<784xf32, #tpu.memory_space<smem>>
    %1536 = vector.broadcast %1535 : f32 to vector<8x128xf32>
    %1537 = arith.mulf %1536, %1530 : vector<8x128xf32>
    %1538 = arith.addf %1521, %1537 : vector<8x128xf32>
    %c646 = arith.constant 646 : index
    %1539 = memref.load %arg2[%c646] : memref<784xf32, #tpu.memory_space<smem>>
    %1540 = vector.broadcast %1539 : f32 to vector<8x128xf32>
    %1541 = arith.mulf %1540, %1530 : vector<8x128xf32>
    %1542 = arith.addf %1525, %1541 : vector<8x128xf32>
    %c647 = arith.constant 647 : index
    %1543 = memref.load %arg2[%c647] : memref<784xf32, #tpu.memory_space<smem>>
    %1544 = vector.broadcast %1543 : f32 to vector<8x128xf32>
    %1545 = arith.mulf %1544, %1530 : vector<8x128xf32>
    %1546 = arith.addf %1529, %1545 : vector<8x128xf32>
    %c122_i32_113 = arith.constant 122 : i32
    %1547 = tpu.dynamic_rotate %1445 by %c122_i32_113 dim 1 : vector<8x128xf32>, i32 -> vector<8x128xf32>
    %c660 = arith.constant 660 : index
    %1548 = memref.load %arg2[%c660] : memref<784xf32, #tpu.memory_space<smem>>
    %1549 = vector.broadcast %1548 : f32 to vector<8x128xf32>
    %1550 = arith.mulf %1549, %1547 : vector<8x128xf32>
    %1551 = arith.addf %1534, %1550 : vector<8x128xf32>
    %c661 = arith.constant 661 : index
    %1552 = memref.load %arg2[%c661] : memref<784xf32, #tpu.memory_space<smem>>
    %1553 = vector.broadcast %1552 : f32 to vector<8x128xf32>
    %1554 = arith.mulf %1553, %1547 : vector<8x128xf32>
    %1555 = arith.addf %1538, %1554 : vector<8x128xf32>
    %c662 = arith.constant 662 : index
    %1556 = memref.load %arg2[%c662] : memref<784xf32, #tpu.memory_space<smem>>
    %1557 = vector.broadcast %1556 : f32 to vector<8x128xf32>
    %1558 = arith.mulf %1557, %1547 : vector<8x128xf32>
    %1559 = arith.addf %1542, %1558 : vector<8x128xf32>
    %c663 = arith.constant 663 : index
    %1560 = memref.load %arg2[%c663] : memref<784xf32, #tpu.memory_space<smem>>
    %1561 = vector.broadcast %1560 : f32 to vector<8x128xf32>
    %1562 = arith.mulf %1561, %1547 : vector<8x128xf32>
    %1563 = arith.addf %1546, %1562 : vector<8x128xf32>
    %c1_114 = arith.constant 1 : index
    %c6_115 = arith.constant 6 : index
    %c0_116 = arith.constant 0 : index
    %1564 = vector.load %arg1[%c1_114, %c6_115, %c0_116] : memref<4x14x128xf32, #tpu.memory_space<vmem>>, vector<1x8x128xf32>
    %1565 = vector.shape_cast %1564 : vector<1x8x128xf32> to vector<8x128xf32>
    %c676 = arith.constant 676 : index
    %1566 = memref.load %arg2[%c676] : memref<784xf32, #tpu.memory_space<smem>>
    %1567 = vector.broadcast %1566 : f32 to vector<8x128xf32>
    %1568 = arith.mulf %1567, %1565 : vector<8x128xf32>
    %1569 = arith.addf %1551, %1568 : vector<8x128xf32>
    %c677 = arith.constant 677 : index
    %1570 = memref.load %arg2[%c677] : memref<784xf32, #tpu.memory_space<smem>>
    %1571 = vector.broadcast %1570 : f32 to vector<8x128xf32>
    %1572 = arith.mulf %1571, %1565 : vector<8x128xf32>
    %1573 = arith.addf %1555, %1572 : vector<8x128xf32>
    %c678 = arith.constant 678 : index
    %1574 = memref.load %arg2[%c678] : memref<784xf32, #tpu.memory_space<smem>>
    %1575 = vector.broadcast %1574 : f32 to vector<8x128xf32>
    %1576 = arith.mulf %1575, %1565 : vector<8x128xf32>
    %1577 = arith.addf %1559, %1576 : vector<8x128xf32>
    %c679 = arith.constant 679 : index
    %1578 = memref.load %arg2[%c679] : memref<784xf32, #tpu.memory_space<smem>>
    %1579 = vector.broadcast %1578 : f32 to vector<8x128xf32>
    %1580 = arith.mulf %1579, %1565 : vector<8x128xf32>
    %1581 = arith.addf %1563, %1580 : vector<8x128xf32>
    %c127_i32_117 = arith.constant 127 : i32
    %1582 = tpu.dynamic_rotate %1565 by %c127_i32_117 dim 1 : vector<8x128xf32>, i32 -> vector<8x128xf32>
    %c692 = arith.constant 692 : index
    %1583 = memref.load %arg2[%c692] : memref<784xf32, #tpu.memory_space<smem>>
    %1584 = vector.broadcast %1583 : f32 to vector<8x128xf32>
    %1585 = arith.mulf %1584, %1582 : vector<8x128xf32>
    %1586 = arith.addf %1569, %1585 : vector<8x128xf32>
    %c693 = arith.constant 693 : index
    %1587 = memref.load %arg2[%c693] : memref<784xf32, #tpu.memory_space<smem>>
    %1588 = vector.broadcast %1587 : f32 to vector<8x128xf32>
    %1589 = arith.mulf %1588, %1582 : vector<8x128xf32>
    %1590 = arith.addf %1573, %1589 : vector<8x128xf32>
    %c694 = arith.constant 694 : index
    %1591 = memref.load %arg2[%c694] : memref<784xf32, #tpu.memory_space<smem>>
    %1592 = vector.broadcast %1591 : f32 to vector<8x128xf32>
    %1593 = arith.mulf %1592, %1582 : vector<8x128xf32>
    %1594 = arith.addf %1577, %1593 : vector<8x128xf32>
    %c695 = arith.constant 695 : index
    %1595 = memref.load %arg2[%c695] : memref<784xf32, #tpu.memory_space<smem>>
    %1596 = vector.broadcast %1595 : f32 to vector<8x128xf32>
    %1597 = arith.mulf %1596, %1582 : vector<8x128xf32>
    %1598 = arith.addf %1581, %1597 : vector<8x128xf32>
    %c126_i32_118 = arith.constant 126 : i32
    %1599 = tpu.dynamic_rotate %1565 by %c126_i32_118 dim 1 : vector<8x128xf32>, i32 -> vector<8x128xf32>
    %c708 = arith.constant 708 : index
    %1600 = memref.load %arg2[%c708] : memref<784xf32, #tpu.memory_space<smem>>
    %1601 = vector.broadcast %1600 : f32 to vector<8x128xf32>
    %1602 = arith.mulf %1601, %1599 : vector<8x128xf32>
    %1603 = arith.addf %1586, %1602 : vector<8x128xf32>
    %c709 = arith.constant 709 : index
    %1604 = memref.load %arg2[%c709] : memref<784xf32, #tpu.memory_space<smem>>
    %1605 = vector.broadcast %1604 : f32 to vector<8x128xf32>
    %1606 = arith.mulf %1605, %1599 : vector<8x128xf32>
    %1607 = arith.addf %1590, %1606 : vector<8x128xf32>
    %c710 = arith.constant 710 : index
    %1608 = memref.load %arg2[%c710] : memref<784xf32, #tpu.memory_space<smem>>
    %1609 = vector.broadcast %1608 : f32 to vector<8x128xf32>
    %1610 = arith.mulf %1609, %1599 : vector<8x128xf32>
    %1611 = arith.addf %1594, %1610 : vector<8x128xf32>
    %c711 = arith.constant 711 : index
    %1612 = memref.load %arg2[%c711] : memref<784xf32, #tpu.memory_space<smem>>
    %1613 = vector.broadcast %1612 : f32 to vector<8x128xf32>
    %1614 = arith.mulf %1613, %1599 : vector<8x128xf32>
    %1615 = arith.addf %1598, %1614 : vector<8x128xf32>
    %c125_i32_119 = arith.constant 125 : i32
    %1616 = tpu.dynamic_rotate %1565 by %c125_i32_119 dim 1 : vector<8x128xf32>, i32 -> vector<8x128xf32>
    %c724 = arith.constant 724 : index
    %1617 = memref.load %arg2[%c724] : memref<784xf32, #tpu.memory_space<smem>>
    %1618 = vector.broadcast %1617 : f32 to vector<8x128xf32>
    %1619 = arith.mulf %1618, %1616 : vector<8x128xf32>
    %1620 = arith.addf %1603, %1619 : vector<8x128xf32>
    %c725 = arith.constant 725 : index
    %1621 = memref.load %arg2[%c725] : memref<784xf32, #tpu.memory_space<smem>>
    %1622 = vector.broadcast %1621 : f32 to vector<8x128xf32>
    %1623 = arith.mulf %1622, %1616 : vector<8x128xf32>
    %1624 = arith.addf %1607, %1623 : vector<8x128xf32>
    %c726 = arith.constant 726 : index
    %1625 = memref.load %arg2[%c726] : memref<784xf32, #tpu.memory_space<smem>>
    %1626 = vector.broadcast %1625 : f32 to vector<8x128xf32>
    %1627 = arith.mulf %1626, %1616 : vector<8x128xf32>
    %1628 = arith.addf %1611, %1627 : vector<8x128xf32>
    %c727 = arith.constant 727 : index
    %1629 = memref.load %arg2[%c727] : memref<784xf32, #tpu.memory_space<smem>>
    %1630 = vector.broadcast %1629 : f32 to vector<8x128xf32>
    %1631 = arith.mulf %1630, %1616 : vector<8x128xf32>
    %1632 = arith.addf %1615, %1631 : vector<8x128xf32>
    %c124_i32_120 = arith.constant 124 : i32
    %1633 = tpu.dynamic_rotate %1565 by %c124_i32_120 dim 1 : vector<8x128xf32>, i32 -> vector<8x128xf32>
    %c740 = arith.constant 740 : index
    %1634 = memref.load %arg2[%c740] : memref<784xf32, #tpu.memory_space<smem>>
    %1635 = vector.broadcast %1634 : f32 to vector<8x128xf32>
    %1636 = arith.mulf %1635, %1633 : vector<8x128xf32>
    %1637 = arith.addf %1620, %1636 : vector<8x128xf32>
    %c741 = arith.constant 741 : index
    %1638 = memref.load %arg2[%c741] : memref<784xf32, #tpu.memory_space<smem>>
    %1639 = vector.broadcast %1638 : f32 to vector<8x128xf32>
    %1640 = arith.mulf %1639, %1633 : vector<8x128xf32>
    %1641 = arith.addf %1624, %1640 : vector<8x128xf32>
    %c742 = arith.constant 742 : index
    %1642 = memref.load %arg2[%c742] : memref<784xf32, #tpu.memory_space<smem>>
    %1643 = vector.broadcast %1642 : f32 to vector<8x128xf32>
    %1644 = arith.mulf %1643, %1633 : vector<8x128xf32>
    %1645 = arith.addf %1628, %1644 : vector<8x128xf32>
    %c743 = arith.constant 743 : index
    %1646 = memref.load %arg2[%c743] : memref<784xf32, #tpu.memory_space<smem>>
    %1647 = vector.broadcast %1646 : f32 to vector<8x128xf32>
    %1648 = arith.mulf %1647, %1633 : vector<8x128xf32>
    %1649 = arith.addf %1632, %1648 : vector<8x128xf32>
    %c123_i32_121 = arith.constant 123 : i32
    %1650 = tpu.dynamic_rotate %1565 by %c123_i32_121 dim 1 : vector<8x128xf32>, i32 -> vector<8x128xf32>
    %c756 = arith.constant 756 : index
    %1651 = memref.load %arg2[%c756] : memref<784xf32, #tpu.memory_space<smem>>
    %1652 = vector.broadcast %1651 : f32 to vector<8x128xf32>
    %1653 = arith.mulf %1652, %1650 : vector<8x128xf32>
    %1654 = arith.addf %1637, %1653 : vector<8x128xf32>
    %c757 = arith.constant 757 : index
    %1655 = memref.load %arg2[%c757] : memref<784xf32, #tpu.memory_space<smem>>
    %1656 = vector.broadcast %1655 : f32 to vector<8x128xf32>
    %1657 = arith.mulf %1656, %1650 : vector<8x128xf32>
    %1658 = arith.addf %1641, %1657 : vector<8x128xf32>
    %c758 = arith.constant 758 : index
    %1659 = memref.load %arg2[%c758] : memref<784xf32, #tpu.memory_space<smem>>
    %1660 = vector.broadcast %1659 : f32 to vector<8x128xf32>
    %1661 = arith.mulf %1660, %1650 : vector<8x128xf32>
    %1662 = arith.addf %1645, %1661 : vector<8x128xf32>
    %c759 = arith.constant 759 : index
    %1663 = memref.load %arg2[%c759] : memref<784xf32, #tpu.memory_space<smem>>
    %1664 = vector.broadcast %1663 : f32 to vector<8x128xf32>
    %1665 = arith.mulf %1664, %1650 : vector<8x128xf32>
    %1666 = arith.addf %1649, %1665 : vector<8x128xf32>
    %c122_i32_122 = arith.constant 122 : i32
    %1667 = tpu.dynamic_rotate %1565 by %c122_i32_122 dim 1 : vector<8x128xf32>, i32 -> vector<8x128xf32>
    %c772 = arith.constant 772 : index
    %1668 = memref.load %arg2[%c772] : memref<784xf32, #tpu.memory_space<smem>>
    %1669 = vector.broadcast %1668 : f32 to vector<8x128xf32>
    %1670 = arith.mulf %1669, %1667 : vector<8x128xf32>
    %1671 = arith.addf %1654, %1670 : vector<8x128xf32>
    %c773 = arith.constant 773 : index
    %1672 = memref.load %arg2[%c773] : memref<784xf32, #tpu.memory_space<smem>>
    %1673 = vector.broadcast %1672 : f32 to vector<8x128xf32>
    %1674 = arith.mulf %1673, %1667 : vector<8x128xf32>
    %1675 = arith.addf %1658, %1674 : vector<8x128xf32>
    %c774 = arith.constant 774 : index
    %1676 = memref.load %arg2[%c774] : memref<784xf32, #tpu.memory_space<smem>>
    %1677 = vector.broadcast %1676 : f32 to vector<8x128xf32>
    %1678 = arith.mulf %1677, %1667 : vector<8x128xf32>
    %1679 = arith.addf %1662, %1678 : vector<8x128xf32>
    %c775 = arith.constant 775 : index
    %1680 = memref.load %arg2[%c775] : memref<784xf32, #tpu.memory_space<smem>>
    %1681 = vector.broadcast %1680 : f32 to vector<8x128xf32>
    %1682 = arith.mulf %1681, %1667 : vector<8x128xf32>
    %1683 = arith.addf %1666, %1682 : vector<8x128xf32>
    %c2_123 = arith.constant 2 : index
    %c0_124 = arith.constant 0 : index
    %c0_125 = arith.constant 0 : index
    %1684 = vector.load %arg1[%c2_123, %c0_124, %c0_125] : memref<4x14x128xf32, #tpu.memory_space<vmem>>, vector<1x8x128xf32>
    %1685 = vector.shape_cast %1684 : vector<1x8x128xf32> to vector<8x128xf32>
    %c8 = arith.constant 8 : index
    %1686 = memref.load %arg2[%c8] : memref<784xf32, #tpu.memory_space<smem>>
    %1687 = vector.broadcast %1686 : f32 to vector<8x128xf32>
    %1688 = arith.mulf %1687, %1685 : vector<8x128xf32>
    %1689 = arith.addf %1671, %1688 : vector<8x128xf32>
    %c9 = arith.constant 9 : index
    %1690 = memref.load %arg2[%c9] : memref<784xf32, #tpu.memory_space<smem>>
    %1691 = vector.broadcast %1690 : f32 to vector<8x128xf32>
    %1692 = arith.mulf %1691, %1685 : vector<8x128xf32>
    %1693 = arith.addf %1675, %1692 : vector<8x128xf32>
    %c10 = arith.constant 10 : index
    %1694 = memref.load %arg2[%c10] : memref<784xf32, #tpu.memory_space<smem>>
    %1695 = vector.broadcast %1694 : f32 to vector<8x128xf32>
    %1696 = arith.mulf %1695, %1685 : vector<8x128xf32>
    %1697 = arith.addf %1679, %1696 : vector<8x128xf32>
    %c11 = arith.constant 11 : index
    %1698 = memref.load %arg2[%c11] : memref<784xf32, #tpu.memory_space<smem>>
    %1699 = vector.broadcast %1698 : f32 to vector<8x128xf32>
    %1700 = arith.mulf %1699, %1685 : vector<8x128xf32>
    %1701 = arith.addf %1683, %1700 : vector<8x128xf32>
    %c127_i32_126 = arith.constant 127 : i32
    %1702 = tpu.dynamic_rotate %1685 by %c127_i32_126 dim 1 : vector<8x128xf32>, i32 -> vector<8x128xf32>
    %c24 = arith.constant 24 : index
    %1703 = memref.load %arg2[%c24] : memref<784xf32, #tpu.memory_space<smem>>
    %1704 = vector.broadcast %1703 : f32 to vector<8x128xf32>
    %1705 = arith.mulf %1704, %1702 : vector<8x128xf32>
    %1706 = arith.addf %1689, %1705 : vector<8x128xf32>
    %c25 = arith.constant 25 : index
    %1707 = memref.load %arg2[%c25] : memref<784xf32, #tpu.memory_space<smem>>
    %1708 = vector.broadcast %1707 : f32 to vector<8x128xf32>
    %1709 = arith.mulf %1708, %1702 : vector<8x128xf32>
    %1710 = arith.addf %1693, %1709 : vector<8x128xf32>
    %c26 = arith.constant 26 : index
    %1711 = memref.load %arg2[%c26] : memref<784xf32, #tpu.memory_space<smem>>
    %1712 = vector.broadcast %1711 : f32 to vector<8x128xf32>
    %1713 = arith.mulf %1712, %1702 : vector<8x128xf32>
    %1714 = arith.addf %1697, %1713 : vector<8x128xf32>
    %c27 = arith.constant 27 : index
    %1715 = memref.load %arg2[%c27] : memref<784xf32, #tpu.memory_space<smem>>
    %1716 = vector.broadcast %1715 : f32 to vector<8x128xf32>
    %1717 = arith.mulf %1716, %1702 : vector<8x128xf32>
    %1718 = arith.addf %1701, %1717 : vector<8x128xf32>
    %c126_i32_127 = arith.constant 126 : i32
    %1719 = tpu.dynamic_rotate %1685 by %c126_i32_127 dim 1 : vector<8x128xf32>, i32 -> vector<8x128xf32>
    %c40 = arith.constant 40 : index
    %1720 = memref.load %arg2[%c40] : memref<784xf32, #tpu.memory_space<smem>>
    %1721 = vector.broadcast %1720 : f32 to vector<8x128xf32>
    %1722 = arith.mulf %1721, %1719 : vector<8x128xf32>
    %1723 = arith.addf %1706, %1722 : vector<8x128xf32>
    %c41 = arith.constant 41 : index
    %1724 = memref.load %arg2[%c41] : memref<784xf32, #tpu.memory_space<smem>>
    %1725 = vector.broadcast %1724 : f32 to vector<8x128xf32>
    %1726 = arith.mulf %1725, %1719 : vector<8x128xf32>
    %1727 = arith.addf %1710, %1726 : vector<8x128xf32>
    %c42 = arith.constant 42 : index
    %1728 = memref.load %arg2[%c42] : memref<784xf32, #tpu.memory_space<smem>>
    %1729 = vector.broadcast %1728 : f32 to vector<8x128xf32>
    %1730 = arith.mulf %1729, %1719 : vector<8x128xf32>
    %1731 = arith.addf %1714, %1730 : vector<8x128xf32>
    %c43 = arith.constant 43 : index
    %1732 = memref.load %arg2[%c43] : memref<784xf32, #tpu.memory_space<smem>>
    %1733 = vector.broadcast %1732 : f32 to vector<8x128xf32>
    %1734 = arith.mulf %1733, %1719 : vector<8x128xf32>
    %1735 = arith.addf %1718, %1734 : vector<8x128xf32>
    %c125_i32_128 = arith.constant 125 : i32
    %1736 = tpu.dynamic_rotate %1685 by %c125_i32_128 dim 1 : vector<8x128xf32>, i32 -> vector<8x128xf32>
    %c56 = arith.constant 56 : index
    %1737 = memref.load %arg2[%c56] : memref<784xf32, #tpu.memory_space<smem>>
    %1738 = vector.broadcast %1737 : f32 to vector<8x128xf32>
    %1739 = arith.mulf %1738, %1736 : vector<8x128xf32>
    %1740 = arith.addf %1723, %1739 : vector<8x128xf32>
    %c57 = arith.constant 57 : index
    %1741 = memref.load %arg2[%c57] : memref<784xf32, #tpu.memory_space<smem>>
    %1742 = vector.broadcast %1741 : f32 to vector<8x128xf32>
    %1743 = arith.mulf %1742, %1736 : vector<8x128xf32>
    %1744 = arith.addf %1727, %1743 : vector<8x128xf32>
    %c58 = arith.constant 58 : index
    %1745 = memref.load %arg2[%c58] : memref<784xf32, #tpu.memory_space<smem>>
    %1746 = vector.broadcast %1745 : f32 to vector<8x128xf32>
    %1747 = arith.mulf %1746, %1736 : vector<8x128xf32>
    %1748 = arith.addf %1731, %1747 : vector<8x128xf32>
    %c59 = arith.constant 59 : index
    %1749 = memref.load %arg2[%c59] : memref<784xf32, #tpu.memory_space<smem>>
    %1750 = vector.broadcast %1749 : f32 to vector<8x128xf32>
    %1751 = arith.mulf %1750, %1736 : vector<8x128xf32>
    %1752 = arith.addf %1735, %1751 : vector<8x128xf32>
    %c124_i32_129 = arith.constant 124 : i32
    %1753 = tpu.dynamic_rotate %1685 by %c124_i32_129 dim 1 : vector<8x128xf32>, i32 -> vector<8x128xf32>
    %c72 = arith.constant 72 : index
    %1754 = memref.load %arg2[%c72] : memref<784xf32, #tpu.memory_space<smem>>
    %1755 = vector.broadcast %1754 : f32 to vector<8x128xf32>
    %1756 = arith.mulf %1755, %1753 : vector<8x128xf32>
    %1757 = arith.addf %1740, %1756 : vector<8x128xf32>
    %c73 = arith.constant 73 : index
    %1758 = memref.load %arg2[%c73] : memref<784xf32, #tpu.memory_space<smem>>
    %1759 = vector.broadcast %1758 : f32 to vector<8x128xf32>
    %1760 = arith.mulf %1759, %1753 : vector<8x128xf32>
    %1761 = arith.addf %1744, %1760 : vector<8x128xf32>
    %c74 = arith.constant 74 : index
    %1762 = memref.load %arg2[%c74] : memref<784xf32, #tpu.memory_space<smem>>
    %1763 = vector.broadcast %1762 : f32 to vector<8x128xf32>
    %1764 = arith.mulf %1763, %1753 : vector<8x128xf32>
    %1765 = arith.addf %1748, %1764 : vector<8x128xf32>
    %c75 = arith.constant 75 : index
    %1766 = memref.load %arg2[%c75] : memref<784xf32, #tpu.memory_space<smem>>
    %1767 = vector.broadcast %1766 : f32 to vector<8x128xf32>
    %1768 = arith.mulf %1767, %1753 : vector<8x128xf32>
    %1769 = arith.addf %1752, %1768 : vector<8x128xf32>
    %c123_i32_130 = arith.constant 123 : i32
    %1770 = tpu.dynamic_rotate %1685 by %c123_i32_130 dim 1 : vector<8x128xf32>, i32 -> vector<8x128xf32>
    %c88 = arith.constant 88 : index
    %1771 = memref.load %arg2[%c88] : memref<784xf32, #tpu.memory_space<smem>>
    %1772 = vector.broadcast %1771 : f32 to vector<8x128xf32>
    %1773 = arith.mulf %1772, %1770 : vector<8x128xf32>
    %1774 = arith.addf %1757, %1773 : vector<8x128xf32>
    %c89 = arith.constant 89 : index
    %1775 = memref.load %arg2[%c89] : memref<784xf32, #tpu.memory_space<smem>>
    %1776 = vector.broadcast %1775 : f32 to vector<8x128xf32>
    %1777 = arith.mulf %1776, %1770 : vector<8x128xf32>
    %1778 = arith.addf %1761, %1777 : vector<8x128xf32>
    %c90 = arith.constant 90 : index
    %1779 = memref.load %arg2[%c90] : memref<784xf32, #tpu.memory_space<smem>>
    %1780 = vector.broadcast %1779 : f32 to vector<8x128xf32>
    %1781 = arith.mulf %1780, %1770 : vector<8x128xf32>
    %1782 = arith.addf %1765, %1781 : vector<8x128xf32>
    %c91 = arith.constant 91 : index
    %1783 = memref.load %arg2[%c91] : memref<784xf32, #tpu.memory_space<smem>>
    %1784 = vector.broadcast %1783 : f32 to vector<8x128xf32>
    %1785 = arith.mulf %1784, %1770 : vector<8x128xf32>
    %1786 = arith.addf %1769, %1785 : vector<8x128xf32>
    %c122_i32_131 = arith.constant 122 : i32
    %1787 = tpu.dynamic_rotate %1685 by %c122_i32_131 dim 1 : vector<8x128xf32>, i32 -> vector<8x128xf32>
    %c104 = arith.constant 104 : index
    %1788 = memref.load %arg2[%c104] : memref<784xf32, #tpu.memory_space<smem>>
    %1789 = vector.broadcast %1788 : f32 to vector<8x128xf32>
    %1790 = arith.mulf %1789, %1787 : vector<8x128xf32>
    %1791 = arith.addf %1774, %1790 : vector<8x128xf32>
    %c105 = arith.constant 105 : index
    %1792 = memref.load %arg2[%c105] : memref<784xf32, #tpu.memory_space<smem>>
    %1793 = vector.broadcast %1792 : f32 to vector<8x128xf32>
    %1794 = arith.mulf %1793, %1787 : vector<8x128xf32>
    %1795 = arith.addf %1778, %1794 : vector<8x128xf32>
    %c106 = arith.constant 106 : index
    %1796 = memref.load %arg2[%c106] : memref<784xf32, #tpu.memory_space<smem>>
    %1797 = vector.broadcast %1796 : f32 to vector<8x128xf32>
    %1798 = arith.mulf %1797, %1787 : vector<8x128xf32>
    %1799 = arith.addf %1782, %1798 : vector<8x128xf32>
    %c107 = arith.constant 107 : index
    %1800 = memref.load %arg2[%c107] : memref<784xf32, #tpu.memory_space<smem>>
    %1801 = vector.broadcast %1800 : f32 to vector<8x128xf32>
    %1802 = arith.mulf %1801, %1787 : vector<8x128xf32>
    %1803 = arith.addf %1786, %1802 : vector<8x128xf32>
    %c2_132 = arith.constant 2 : index
    %c1_133 = arith.constant 1 : index
    %c0_134 = arith.constant 0 : index
    %1804 = vector.load %arg1[%c2_132, %c1_133, %c0_134] : memref<4x14x128xf32, #tpu.memory_space<vmem>>, vector<1x8x128xf32>
    %1805 = vector.shape_cast %1804 : vector<1x8x128xf32> to vector<8x128xf32>
    %c120 = arith.constant 120 : index
    %1806 = memref.load %arg2[%c120] : memref<784xf32, #tpu.memory_space<smem>>
    %1807 = vector.broadcast %1806 : f32 to vector<8x128xf32>
    %1808 = arith.mulf %1807, %1805 : vector<8x128xf32>
    %1809 = arith.addf %1791, %1808 : vector<8x128xf32>
    %c121 = arith.constant 121 : index
    %1810 = memref.load %arg2[%c121] : memref<784xf32, #tpu.memory_space<smem>>
    %1811 = vector.broadcast %1810 : f32 to vector<8x128xf32>
    %1812 = arith.mulf %1811, %1805 : vector<8x128xf32>
    %1813 = arith.addf %1795, %1812 : vector<8x128xf32>
    %c122 = arith.constant 122 : index
    %1814 = memref.load %arg2[%c122] : memref<784xf32, #tpu.memory_space<smem>>
    %1815 = vector.broadcast %1814 : f32 to vector<8x128xf32>
    %1816 = arith.mulf %1815, %1805 : vector<8x128xf32>
    %1817 = arith.addf %1799, %1816 : vector<8x128xf32>
    %c123 = arith.constant 123 : index
    %1818 = memref.load %arg2[%c123] : memref<784xf32, #tpu.memory_space<smem>>
    %1819 = vector.broadcast %1818 : f32 to vector<8x128xf32>
    %1820 = arith.mulf %1819, %1805 : vector<8x128xf32>
    %1821 = arith.addf %1803, %1820 : vector<8x128xf32>
    %c127_i32_135 = arith.constant 127 : i32
    %1822 = tpu.dynamic_rotate %1805 by %c127_i32_135 dim 1 : vector<8x128xf32>, i32 -> vector<8x128xf32>
    %c136 = arith.constant 136 : index
    %1823 = memref.load %arg2[%c136] : memref<784xf32, #tpu.memory_space<smem>>
    %1824 = vector.broadcast %1823 : f32 to vector<8x128xf32>
    %1825 = arith.mulf %1824, %1822 : vector<8x128xf32>
    %1826 = arith.addf %1809, %1825 : vector<8x128xf32>
    %c137 = arith.constant 137 : index
    %1827 = memref.load %arg2[%c137] : memref<784xf32, #tpu.memory_space<smem>>
    %1828 = vector.broadcast %1827 : f32 to vector<8x128xf32>
    %1829 = arith.mulf %1828, %1822 : vector<8x128xf32>
    %1830 = arith.addf %1813, %1829 : vector<8x128xf32>
    %c138 = arith.constant 138 : index
    %1831 = memref.load %arg2[%c138] : memref<784xf32, #tpu.memory_space<smem>>
    %1832 = vector.broadcast %1831 : f32 to vector<8x128xf32>
    %1833 = arith.mulf %1832, %1822 : vector<8x128xf32>
    %1834 = arith.addf %1817, %1833 : vector<8x128xf32>
    %c139 = arith.constant 139 : index
    %1835 = memref.load %arg2[%c139] : memref<784xf32, #tpu.memory_space<smem>>
    %1836 = vector.broadcast %1835 : f32 to vector<8x128xf32>
    %1837 = arith.mulf %1836, %1822 : vector<8x128xf32>
    %1838 = arith.addf %1821, %1837 : vector<8x128xf32>
    %c126_i32_136 = arith.constant 126 : i32
    %1839 = tpu.dynamic_rotate %1805 by %c126_i32_136 dim 1 : vector<8x128xf32>, i32 -> vector<8x128xf32>
    %c152 = arith.constant 152 : index
    %1840 = memref.load %arg2[%c152] : memref<784xf32, #tpu.memory_space<smem>>
    %1841 = vector.broadcast %1840 : f32 to vector<8x128xf32>
    %1842 = arith.mulf %1841, %1839 : vector<8x128xf32>
    %1843 = arith.addf %1826, %1842 : vector<8x128xf32>
    %c153 = arith.constant 153 : index
    %1844 = memref.load %arg2[%c153] : memref<784xf32, #tpu.memory_space<smem>>
    %1845 = vector.broadcast %1844 : f32 to vector<8x128xf32>
    %1846 = arith.mulf %1845, %1839 : vector<8x128xf32>
    %1847 = arith.addf %1830, %1846 : vector<8x128xf32>
    %c154 = arith.constant 154 : index
    %1848 = memref.load %arg2[%c154] : memref<784xf32, #tpu.memory_space<smem>>
    %1849 = vector.broadcast %1848 : f32 to vector<8x128xf32>
    %1850 = arith.mulf %1849, %1839 : vector<8x128xf32>
    %1851 = arith.addf %1834, %1850 : vector<8x128xf32>
    %c155 = arith.constant 155 : index
    %1852 = memref.load %arg2[%c155] : memref<784xf32, #tpu.memory_space<smem>>
    %1853 = vector.broadcast %1852 : f32 to vector<8x128xf32>
    %1854 = arith.mulf %1853, %1839 : vector<8x128xf32>
    %1855 = arith.addf %1838, %1854 : vector<8x128xf32>
    %c125_i32_137 = arith.constant 125 : i32
    %1856 = tpu.dynamic_rotate %1805 by %c125_i32_137 dim 1 : vector<8x128xf32>, i32 -> vector<8x128xf32>
    %c168 = arith.constant 168 : index
    %1857 = memref.load %arg2[%c168] : memref<784xf32, #tpu.memory_space<smem>>
    %1858 = vector.broadcast %1857 : f32 to vector<8x128xf32>
    %1859 = arith.mulf %1858, %1856 : vector<8x128xf32>
    %1860 = arith.addf %1843, %1859 : vector<8x128xf32>
    %c169 = arith.constant 169 : index
    %1861 = memref.load %arg2[%c169] : memref<784xf32, #tpu.memory_space<smem>>
    %1862 = vector.broadcast %1861 : f32 to vector<8x128xf32>
    %1863 = arith.mulf %1862, %1856 : vector<8x128xf32>
    %1864 = arith.addf %1847, %1863 : vector<8x128xf32>
    %c170 = arith.constant 170 : index
    %1865 = memref.load %arg2[%c170] : memref<784xf32, #tpu.memory_space<smem>>
    %1866 = vector.broadcast %1865 : f32 to vector<8x128xf32>
    %1867 = arith.mulf %1866, %1856 : vector<8x128xf32>
    %1868 = arith.addf %1851, %1867 : vector<8x128xf32>
    %c171 = arith.constant 171 : index
    %1869 = memref.load %arg2[%c171] : memref<784xf32, #tpu.memory_space<smem>>
    %1870 = vector.broadcast %1869 : f32 to vector<8x128xf32>
    %1871 = arith.mulf %1870, %1856 : vector<8x128xf32>
    %1872 = arith.addf %1855, %1871 : vector<8x128xf32>
    %c124_i32_138 = arith.constant 124 : i32
    %1873 = tpu.dynamic_rotate %1805 by %c124_i32_138 dim 1 : vector<8x128xf32>, i32 -> vector<8x128xf32>
    %c184 = arith.constant 184 : index
    %1874 = memref.load %arg2[%c184] : memref<784xf32, #tpu.memory_space<smem>>
    %1875 = vector.broadcast %1874 : f32 to vector<8x128xf32>
    %1876 = arith.mulf %1875, %1873 : vector<8x128xf32>
    %1877 = arith.addf %1860, %1876 : vector<8x128xf32>
    %c185 = arith.constant 185 : index
    %1878 = memref.load %arg2[%c185] : memref<784xf32, #tpu.memory_space<smem>>
    %1879 = vector.broadcast %1878 : f32 to vector<8x128xf32>
    %1880 = arith.mulf %1879, %1873 : vector<8x128xf32>
    %1881 = arith.addf %1864, %1880 : vector<8x128xf32>
    %c186 = arith.constant 186 : index
    %1882 = memref.load %arg2[%c186] : memref<784xf32, #tpu.memory_space<smem>>
    %1883 = vector.broadcast %1882 : f32 to vector<8x128xf32>
    %1884 = arith.mulf %1883, %1873 : vector<8x128xf32>
    %1885 = arith.addf %1868, %1884 : vector<8x128xf32>
    %c187 = arith.constant 187 : index
    %1886 = memref.load %arg2[%c187] : memref<784xf32, #tpu.memory_space<smem>>
    %1887 = vector.broadcast %1886 : f32 to vector<8x128xf32>
    %1888 = arith.mulf %1887, %1873 : vector<8x128xf32>
    %1889 = arith.addf %1872, %1888 : vector<8x128xf32>
    %c123_i32_139 = arith.constant 123 : i32
    %1890 = tpu.dynamic_rotate %1805 by %c123_i32_139 dim 1 : vector<8x128xf32>, i32 -> vector<8x128xf32>
    %c200 = arith.constant 200 : index
    %1891 = memref.load %arg2[%c200] : memref<784xf32, #tpu.memory_space<smem>>
    %1892 = vector.broadcast %1891 : f32 to vector<8x128xf32>
    %1893 = arith.mulf %1892, %1890 : vector<8x128xf32>
    %1894 = arith.addf %1877, %1893 : vector<8x128xf32>
    %c201 = arith.constant 201 : index
    %1895 = memref.load %arg2[%c201] : memref<784xf32, #tpu.memory_space<smem>>
    %1896 = vector.broadcast %1895 : f32 to vector<8x128xf32>
    %1897 = arith.mulf %1896, %1890 : vector<8x128xf32>
    %1898 = arith.addf %1881, %1897 : vector<8x128xf32>
    %c202 = arith.constant 202 : index
    %1899 = memref.load %arg2[%c202] : memref<784xf32, #tpu.memory_space<smem>>
    %1900 = vector.broadcast %1899 : f32 to vector<8x128xf32>
    %1901 = arith.mulf %1900, %1890 : vector<8x128xf32>
    %1902 = arith.addf %1885, %1901 : vector<8x128xf32>
    %c203 = arith.constant 203 : index
    %1903 = memref.load %arg2[%c203] : memref<784xf32, #tpu.memory_space<smem>>
    %1904 = vector.broadcast %1903 : f32 to vector<8x128xf32>
    %1905 = arith.mulf %1904, %1890 : vector<8x128xf32>
    %1906 = arith.addf %1889, %1905 : vector<8x128xf32>
    %c122_i32_140 = arith.constant 122 : i32
    %1907 = tpu.dynamic_rotate %1805 by %c122_i32_140 dim 1 : vector<8x128xf32>, i32 -> vector<8x128xf32>
    %c216 = arith.constant 216 : index
    %1908 = memref.load %arg2[%c216] : memref<784xf32, #tpu.memory_space<smem>>
    %1909 = vector.broadcast %1908 : f32 to vector<8x128xf32>
    %1910 = arith.mulf %1909, %1907 : vector<8x128xf32>
    %1911 = arith.addf %1894, %1910 : vector<8x128xf32>
    %c217 = arith.constant 217 : index
    %1912 = memref.load %arg2[%c217] : memref<784xf32, #tpu.memory_space<smem>>
    %1913 = vector.broadcast %1912 : f32 to vector<8x128xf32>
    %1914 = arith.mulf %1913, %1907 : vector<8x128xf32>
    %1915 = arith.addf %1898, %1914 : vector<8x128xf32>
    %c218 = arith.constant 218 : index
    %1916 = memref.load %arg2[%c218] : memref<784xf32, #tpu.memory_space<smem>>
    %1917 = vector.broadcast %1916 : f32 to vector<8x128xf32>
    %1918 = arith.mulf %1917, %1907 : vector<8x128xf32>
    %1919 = arith.addf %1902, %1918 : vector<8x128xf32>
    %c219 = arith.constant 219 : index
    %1920 = memref.load %arg2[%c219] : memref<784xf32, #tpu.memory_space<smem>>
    %1921 = vector.broadcast %1920 : f32 to vector<8x128xf32>
    %1922 = arith.mulf %1921, %1907 : vector<8x128xf32>
    %1923 = arith.addf %1906, %1922 : vector<8x128xf32>
    %c2_141 = arith.constant 2 : index
    %c2_142 = arith.constant 2 : index
    %c0_143 = arith.constant 0 : index
    %1924 = vector.load %arg1[%c2_141, %c2_142, %c0_143] : memref<4x14x128xf32, #tpu.memory_space<vmem>>, vector<1x8x128xf32>
    %1925 = vector.shape_cast %1924 : vector<1x8x128xf32> to vector<8x128xf32>
    %c232 = arith.constant 232 : index
    %1926 = memref.load %arg2[%c232] : memref<784xf32, #tpu.memory_space<smem>>
    %1927 = vector.broadcast %1926 : f32 to vector<8x128xf32>
    %1928 = arith.mulf %1927, %1925 : vector<8x128xf32>
    %1929 = arith.addf %1911, %1928 : vector<8x128xf32>
    %c233 = arith.constant 233 : index
    %1930 = memref.load %arg2[%c233] : memref<784xf32, #tpu.memory_space<smem>>
    %1931 = vector.broadcast %1930 : f32 to vector<8x128xf32>
    %1932 = arith.mulf %1931, %1925 : vector<8x128xf32>
    %1933 = arith.addf %1915, %1932 : vector<8x128xf32>
    %c234 = arith.constant 234 : index
    %1934 = memref.load %arg2[%c234] : memref<784xf32, #tpu.memory_space<smem>>
    %1935 = vector.broadcast %1934 : f32 to vector<8x128xf32>
    %1936 = arith.mulf %1935, %1925 : vector<8x128xf32>
    %1937 = arith.addf %1919, %1936 : vector<8x128xf32>
    %c235 = arith.constant 235 : index
    %1938 = memref.load %arg2[%c235] : memref<784xf32, #tpu.memory_space<smem>>
    %1939 = vector.broadcast %1938 : f32 to vector<8x128xf32>
    %1940 = arith.mulf %1939, %1925 : vector<8x128xf32>
    %1941 = arith.addf %1923, %1940 : vector<8x128xf32>
    %c127_i32_144 = arith.constant 127 : i32
    %1942 = tpu.dynamic_rotate %1925 by %c127_i32_144 dim 1 : vector<8x128xf32>, i32 -> vector<8x128xf32>
    %c248 = arith.constant 248 : index
    %1943 = memref.load %arg2[%c248] : memref<784xf32, #tpu.memory_space<smem>>
    %1944 = vector.broadcast %1943 : f32 to vector<8x128xf32>
    %1945 = arith.mulf %1944, %1942 : vector<8x128xf32>
    %1946 = arith.addf %1929, %1945 : vector<8x128xf32>
    %c249 = arith.constant 249 : index
    %1947 = memref.load %arg2[%c249] : memref<784xf32, #tpu.memory_space<smem>>
    %1948 = vector.broadcast %1947 : f32 to vector<8x128xf32>
    %1949 = arith.mulf %1948, %1942 : vector<8x128xf32>
    %1950 = arith.addf %1933, %1949 : vector<8x128xf32>
    %c250 = arith.constant 250 : index
    %1951 = memref.load %arg2[%c250] : memref<784xf32, #tpu.memory_space<smem>>
    %1952 = vector.broadcast %1951 : f32 to vector<8x128xf32>
    %1953 = arith.mulf %1952, %1942 : vector<8x128xf32>
    %1954 = arith.addf %1937, %1953 : vector<8x128xf32>
    %c251 = arith.constant 251 : index
    %1955 = memref.load %arg2[%c251] : memref<784xf32, #tpu.memory_space<smem>>
    %1956 = vector.broadcast %1955 : f32 to vector<8x128xf32>
    %1957 = arith.mulf %1956, %1942 : vector<8x128xf32>
    %1958 = arith.addf %1941, %1957 : vector<8x128xf32>
    %c126_i32_145 = arith.constant 126 : i32
    %1959 = tpu.dynamic_rotate %1925 by %c126_i32_145 dim 1 : vector<8x128xf32>, i32 -> vector<8x128xf32>
    %c264 = arith.constant 264 : index
    %1960 = memref.load %arg2[%c264] : memref<784xf32, #tpu.memory_space<smem>>
    %1961 = vector.broadcast %1960 : f32 to vector<8x128xf32>
    %1962 = arith.mulf %1961, %1959 : vector<8x128xf32>
    %1963 = arith.addf %1946, %1962 : vector<8x128xf32>
    %c265 = arith.constant 265 : index
    %1964 = memref.load %arg2[%c265] : memref<784xf32, #tpu.memory_space<smem>>
    %1965 = vector.broadcast %1964 : f32 to vector<8x128xf32>
    %1966 = arith.mulf %1965, %1959 : vector<8x128xf32>
    %1967 = arith.addf %1950, %1966 : vector<8x128xf32>
    %c266 = arith.constant 266 : index
    %1968 = memref.load %arg2[%c266] : memref<784xf32, #tpu.memory_space<smem>>
    %1969 = vector.broadcast %1968 : f32 to vector<8x128xf32>
    %1970 = arith.mulf %1969, %1959 : vector<8x128xf32>
    %1971 = arith.addf %1954, %1970 : vector<8x128xf32>
    %c267 = arith.constant 267 : index
    %1972 = memref.load %arg2[%c267] : memref<784xf32, #tpu.memory_space<smem>>
    %1973 = vector.broadcast %1972 : f32 to vector<8x128xf32>
    %1974 = arith.mulf %1973, %1959 : vector<8x128xf32>
    %1975 = arith.addf %1958, %1974 : vector<8x128xf32>
    %c125_i32_146 = arith.constant 125 : i32
    %1976 = tpu.dynamic_rotate %1925 by %c125_i32_146 dim 1 : vector<8x128xf32>, i32 -> vector<8x128xf32>
    %c280 = arith.constant 280 : index
    %1977 = memref.load %arg2[%c280] : memref<784xf32, #tpu.memory_space<smem>>
    %1978 = vector.broadcast %1977 : f32 to vector<8x128xf32>
    %1979 = arith.mulf %1978, %1976 : vector<8x128xf32>
    %1980 = arith.addf %1963, %1979 : vector<8x128xf32>
    %c281 = arith.constant 281 : index
    %1981 = memref.load %arg2[%c281] : memref<784xf32, #tpu.memory_space<smem>>
    %1982 = vector.broadcast %1981 : f32 to vector<8x128xf32>
    %1983 = arith.mulf %1982, %1976 : vector<8x128xf32>
    %1984 = arith.addf %1967, %1983 : vector<8x128xf32>
    %c282 = arith.constant 282 : index
    %1985 = memref.load %arg2[%c282] : memref<784xf32, #tpu.memory_space<smem>>
    %1986 = vector.broadcast %1985 : f32 to vector<8x128xf32>
    %1987 = arith.mulf %1986, %1976 : vector<8x128xf32>
    %1988 = arith.addf %1971, %1987 : vector<8x128xf32>
    %c283 = arith.constant 283 : index
    %1989 = memref.load %arg2[%c283] : memref<784xf32, #tpu.memory_space<smem>>
    %1990 = vector.broadcast %1989 : f32 to vector<8x128xf32>
    %1991 = arith.mulf %1990, %1976 : vector<8x128xf32>
    %1992 = arith.addf %1975, %1991 : vector<8x128xf32>
    %c124_i32_147 = arith.constant 124 : i32
    %1993 = tpu.dynamic_rotate %1925 by %c124_i32_147 dim 1 : vector<8x128xf32>, i32 -> vector<8x128xf32>
    %c296 = arith.constant 296 : index
    %1994 = memref.load %arg2[%c296] : memref<784xf32, #tpu.memory_space<smem>>
    %1995 = vector.broadcast %1994 : f32 to vector<8x128xf32>
    %1996 = arith.mulf %1995, %1993 : vector<8x128xf32>
    %1997 = arith.addf %1980, %1996 : vector<8x128xf32>
    %c297 = arith.constant 297 : index
    %1998 = memref.load %arg2[%c297] : memref<784xf32, #tpu.memory_space<smem>>
    %1999 = vector.broadcast %1998 : f32 to vector<8x128xf32>
    %2000 = arith.mulf %1999, %1993 : vector<8x128xf32>
    %2001 = arith.addf %1984, %2000 : vector<8x128xf32>
    %c298 = arith.constant 298 : index
    %2002 = memref.load %arg2[%c298] : memref<784xf32, #tpu.memory_space<smem>>
    %2003 = vector.broadcast %2002 : f32 to vector<8x128xf32>
    %2004 = arith.mulf %2003, %1993 : vector<8x128xf32>
    %2005 = arith.addf %1988, %2004 : vector<8x128xf32>
    %c299 = arith.constant 299 : index
    %2006 = memref.load %arg2[%c299] : memref<784xf32, #tpu.memory_space<smem>>
    %2007 = vector.broadcast %2006 : f32 to vector<8x128xf32>
    %2008 = arith.mulf %2007, %1993 : vector<8x128xf32>
    %2009 = arith.addf %1992, %2008 : vector<8x128xf32>
    %c123_i32_148 = arith.constant 123 : i32
    %2010 = tpu.dynamic_rotate %1925 by %c123_i32_148 dim 1 : vector<8x128xf32>, i32 -> vector<8x128xf32>
    %c312 = arith.constant 312 : index
    %2011 = memref.load %arg2[%c312] : memref<784xf32, #tpu.memory_space<smem>>
    %2012 = vector.broadcast %2011 : f32 to vector<8x128xf32>
    %2013 = arith.mulf %2012, %2010 : vector<8x128xf32>
    %2014 = arith.addf %1997, %2013 : vector<8x128xf32>
    %c313 = arith.constant 313 : index
    %2015 = memref.load %arg2[%c313] : memref<784xf32, #tpu.memory_space<smem>>
    %2016 = vector.broadcast %2015 : f32 to vector<8x128xf32>
    %2017 = arith.mulf %2016, %2010 : vector<8x128xf32>
    %2018 = arith.addf %2001, %2017 : vector<8x128xf32>
    %c314 = arith.constant 314 : index
    %2019 = memref.load %arg2[%c314] : memref<784xf32, #tpu.memory_space<smem>>
    %2020 = vector.broadcast %2019 : f32 to vector<8x128xf32>
    %2021 = arith.mulf %2020, %2010 : vector<8x128xf32>
    %2022 = arith.addf %2005, %2021 : vector<8x128xf32>
    %c315 = arith.constant 315 : index
    %2023 = memref.load %arg2[%c315] : memref<784xf32, #tpu.memory_space<smem>>
    %2024 = vector.broadcast %2023 : f32 to vector<8x128xf32>
    %2025 = arith.mulf %2024, %2010 : vector<8x128xf32>
    %2026 = arith.addf %2009, %2025 : vector<8x128xf32>
    %c122_i32_149 = arith.constant 122 : i32
    %2027 = tpu.dynamic_rotate %1925 by %c122_i32_149 dim 1 : vector<8x128xf32>, i32 -> vector<8x128xf32>
    %c328 = arith.constant 328 : index
    %2028 = memref.load %arg2[%c328] : memref<784xf32, #tpu.memory_space<smem>>
    %2029 = vector.broadcast %2028 : f32 to vector<8x128xf32>
    %2030 = arith.mulf %2029, %2027 : vector<8x128xf32>
    %2031 = arith.addf %2014, %2030 : vector<8x128xf32>
    %c329 = arith.constant 329 : index
    %2032 = memref.load %arg2[%c329] : memref<784xf32, #tpu.memory_space<smem>>
    %2033 = vector.broadcast %2032 : f32 to vector<8x128xf32>
    %2034 = arith.mulf %2033, %2027 : vector<8x128xf32>
    %2035 = arith.addf %2018, %2034 : vector<8x128xf32>
    %c330 = arith.constant 330 : index
    %2036 = memref.load %arg2[%c330] : memref<784xf32, #tpu.memory_space<smem>>
    %2037 = vector.broadcast %2036 : f32 to vector<8x128xf32>
    %2038 = arith.mulf %2037, %2027 : vector<8x128xf32>
    %2039 = arith.addf %2022, %2038 : vector<8x128xf32>
    %c331 = arith.constant 331 : index
    %2040 = memref.load %arg2[%c331] : memref<784xf32, #tpu.memory_space<smem>>
    %2041 = vector.broadcast %2040 : f32 to vector<8x128xf32>
    %2042 = arith.mulf %2041, %2027 : vector<8x128xf32>
    %2043 = arith.addf %2026, %2042 : vector<8x128xf32>
    %c2_150 = arith.constant 2 : index
    %c3_151 = arith.constant 3 : index
    %c0_152 = arith.constant 0 : index
    %2044 = vector.load %arg1[%c2_150, %c3_151, %c0_152] : memref<4x14x128xf32, #tpu.memory_space<vmem>>, vector<1x8x128xf32>
    %2045 = vector.shape_cast %2044 : vector<1x8x128xf32> to vector<8x128xf32>
    %c344 = arith.constant 344 : index
    %2046 = memref.load %arg2[%c344] : memref<784xf32, #tpu.memory_space<smem>>
    %2047 = vector.broadcast %2046 : f32 to vector<8x128xf32>
    %2048 = arith.mulf %2047, %2045 : vector<8x128xf32>
    %2049 = arith.addf %2031, %2048 : vector<8x128xf32>
    %c345 = arith.constant 345 : index
    %2050 = memref.load %arg2[%c345] : memref<784xf32, #tpu.memory_space<smem>>
    %2051 = vector.broadcast %2050 : f32 to vector<8x128xf32>
    %2052 = arith.mulf %2051, %2045 : vector<8x128xf32>
    %2053 = arith.addf %2035, %2052 : vector<8x128xf32>
    %c346 = arith.constant 346 : index
    %2054 = memref.load %arg2[%c346] : memref<784xf32, #tpu.memory_space<smem>>
    %2055 = vector.broadcast %2054 : f32 to vector<8x128xf32>
    %2056 = arith.mulf %2055, %2045 : vector<8x128xf32>
    %2057 = arith.addf %2039, %2056 : vector<8x128xf32>
    %c347 = arith.constant 347 : index
    %2058 = memref.load %arg2[%c347] : memref<784xf32, #tpu.memory_space<smem>>
    %2059 = vector.broadcast %2058 : f32 to vector<8x128xf32>
    %2060 = arith.mulf %2059, %2045 : vector<8x128xf32>
    %2061 = arith.addf %2043, %2060 : vector<8x128xf32>
    %c127_i32_153 = arith.constant 127 : i32
    %2062 = tpu.dynamic_rotate %2045 by %c127_i32_153 dim 1 : vector<8x128xf32>, i32 -> vector<8x128xf32>
    %c360 = arith.constant 360 : index
    %2063 = memref.load %arg2[%c360] : memref<784xf32, #tpu.memory_space<smem>>
    %2064 = vector.broadcast %2063 : f32 to vector<8x128xf32>
    %2065 = arith.mulf %2064, %2062 : vector<8x128xf32>
    %2066 = arith.addf %2049, %2065 : vector<8x128xf32>
    %c361 = arith.constant 361 : index
    %2067 = memref.load %arg2[%c361] : memref<784xf32, #tpu.memory_space<smem>>
    %2068 = vector.broadcast %2067 : f32 to vector<8x128xf32>
    %2069 = arith.mulf %2068, %2062 : vector<8x128xf32>
    %2070 = arith.addf %2053, %2069 : vector<8x128xf32>
    %c362 = arith.constant 362 : index
    %2071 = memref.load %arg2[%c362] : memref<784xf32, #tpu.memory_space<smem>>
    %2072 = vector.broadcast %2071 : f32 to vector<8x128xf32>
    %2073 = arith.mulf %2072, %2062 : vector<8x128xf32>
    %2074 = arith.addf %2057, %2073 : vector<8x128xf32>
    %c363 = arith.constant 363 : index
    %2075 = memref.load %arg2[%c363] : memref<784xf32, #tpu.memory_space<smem>>
    %2076 = vector.broadcast %2075 : f32 to vector<8x128xf32>
    %2077 = arith.mulf %2076, %2062 : vector<8x128xf32>
    %2078 = arith.addf %2061, %2077 : vector<8x128xf32>
    %c126_i32_154 = arith.constant 126 : i32
    %2079 = tpu.dynamic_rotate %2045 by %c126_i32_154 dim 1 : vector<8x128xf32>, i32 -> vector<8x128xf32>
    %c376 = arith.constant 376 : index
    %2080 = memref.load %arg2[%c376] : memref<784xf32, #tpu.memory_space<smem>>
    %2081 = vector.broadcast %2080 : f32 to vector<8x128xf32>
    %2082 = arith.mulf %2081, %2079 : vector<8x128xf32>
    %2083 = arith.addf %2066, %2082 : vector<8x128xf32>
    %c377 = arith.constant 377 : index
    %2084 = memref.load %arg2[%c377] : memref<784xf32, #tpu.memory_space<smem>>
    %2085 = vector.broadcast %2084 : f32 to vector<8x128xf32>
    %2086 = arith.mulf %2085, %2079 : vector<8x128xf32>
    %2087 = arith.addf %2070, %2086 : vector<8x128xf32>
    %c378 = arith.constant 378 : index
    %2088 = memref.load %arg2[%c378] : memref<784xf32, #tpu.memory_space<smem>>
    %2089 = vector.broadcast %2088 : f32 to vector<8x128xf32>
    %2090 = arith.mulf %2089, %2079 : vector<8x128xf32>
    %2091 = arith.addf %2074, %2090 : vector<8x128xf32>
    %c379 = arith.constant 379 : index
    %2092 = memref.load %arg2[%c379] : memref<784xf32, #tpu.memory_space<smem>>
    %2093 = vector.broadcast %2092 : f32 to vector<8x128xf32>
    %2094 = arith.mulf %2093, %2079 : vector<8x128xf32>
    %2095 = arith.addf %2078, %2094 : vector<8x128xf32>
    %c125_i32_155 = arith.constant 125 : i32
    %2096 = tpu.dynamic_rotate %2045 by %c125_i32_155 dim 1 : vector<8x128xf32>, i32 -> vector<8x128xf32>
    %c392 = arith.constant 392 : index
    %2097 = memref.load %arg2[%c392] : memref<784xf32, #tpu.memory_space<smem>>
    %2098 = vector.broadcast %2097 : f32 to vector<8x128xf32>
    %2099 = arith.mulf %2098, %2096 : vector<8x128xf32>
    %2100 = arith.addf %2083, %2099 : vector<8x128xf32>
    %c393 = arith.constant 393 : index
    %2101 = memref.load %arg2[%c393] : memref<784xf32, #tpu.memory_space<smem>>
    %2102 = vector.broadcast %2101 : f32 to vector<8x128xf32>
    %2103 = arith.mulf %2102, %2096 : vector<8x128xf32>
    %2104 = arith.addf %2087, %2103 : vector<8x128xf32>
    %c394 = arith.constant 394 : index
    %2105 = memref.load %arg2[%c394] : memref<784xf32, #tpu.memory_space<smem>>
    %2106 = vector.broadcast %2105 : f32 to vector<8x128xf32>
    %2107 = arith.mulf %2106, %2096 : vector<8x128xf32>
    %2108 = arith.addf %2091, %2107 : vector<8x128xf32>
    %c395 = arith.constant 395 : index
    %2109 = memref.load %arg2[%c395] : memref<784xf32, #tpu.memory_space<smem>>
    %2110 = vector.broadcast %2109 : f32 to vector<8x128xf32>
    %2111 = arith.mulf %2110, %2096 : vector<8x128xf32>
    %2112 = arith.addf %2095, %2111 : vector<8x128xf32>
    %c124_i32_156 = arith.constant 124 : i32
    %2113 = tpu.dynamic_rotate %2045 by %c124_i32_156 dim 1 : vector<8x128xf32>, i32 -> vector<8x128xf32>
    %c408 = arith.constant 408 : index
    %2114 = memref.load %arg2[%c408] : memref<784xf32, #tpu.memory_space<smem>>
    %2115 = vector.broadcast %2114 : f32 to vector<8x128xf32>
    %2116 = arith.mulf %2115, %2113 : vector<8x128xf32>
    %2117 = arith.addf %2100, %2116 : vector<8x128xf32>
    %c409 = arith.constant 409 : index
    %2118 = memref.load %arg2[%c409] : memref<784xf32, #tpu.memory_space<smem>>
    %2119 = vector.broadcast %2118 : f32 to vector<8x128xf32>
    %2120 = arith.mulf %2119, %2113 : vector<8x128xf32>
    %2121 = arith.addf %2104, %2120 : vector<8x128xf32>
    %c410 = arith.constant 410 : index
    %2122 = memref.load %arg2[%c410] : memref<784xf32, #tpu.memory_space<smem>>
    %2123 = vector.broadcast %2122 : f32 to vector<8x128xf32>
    %2124 = arith.mulf %2123, %2113 : vector<8x128xf32>
    %2125 = arith.addf %2108, %2124 : vector<8x128xf32>
    %c411 = arith.constant 411 : index
    %2126 = memref.load %arg2[%c411] : memref<784xf32, #tpu.memory_space<smem>>
    %2127 = vector.broadcast %2126 : f32 to vector<8x128xf32>
    %2128 = arith.mulf %2127, %2113 : vector<8x128xf32>
    %2129 = arith.addf %2112, %2128 : vector<8x128xf32>
    %c123_i32_157 = arith.constant 123 : i32
    %2130 = tpu.dynamic_rotate %2045 by %c123_i32_157 dim 1 : vector<8x128xf32>, i32 -> vector<8x128xf32>
    %c424 = arith.constant 424 : index
    %2131 = memref.load %arg2[%c424] : memref<784xf32, #tpu.memory_space<smem>>
    %2132 = vector.broadcast %2131 : f32 to vector<8x128xf32>
    %2133 = arith.mulf %2132, %2130 : vector<8x128xf32>
    %2134 = arith.addf %2117, %2133 : vector<8x128xf32>
    %c425 = arith.constant 425 : index
    %2135 = memref.load %arg2[%c425] : memref<784xf32, #tpu.memory_space<smem>>
    %2136 = vector.broadcast %2135 : f32 to vector<8x128xf32>
    %2137 = arith.mulf %2136, %2130 : vector<8x128xf32>
    %2138 = arith.addf %2121, %2137 : vector<8x128xf32>
    %c426 = arith.constant 426 : index
    %2139 = memref.load %arg2[%c426] : memref<784xf32, #tpu.memory_space<smem>>
    %2140 = vector.broadcast %2139 : f32 to vector<8x128xf32>
    %2141 = arith.mulf %2140, %2130 : vector<8x128xf32>
    %2142 = arith.addf %2125, %2141 : vector<8x128xf32>
    %c427 = arith.constant 427 : index
    %2143 = memref.load %arg2[%c427] : memref<784xf32, #tpu.memory_space<smem>>
    %2144 = vector.broadcast %2143 : f32 to vector<8x128xf32>
    %2145 = arith.mulf %2144, %2130 : vector<8x128xf32>
    %2146 = arith.addf %2129, %2145 : vector<8x128xf32>
    %c122_i32_158 = arith.constant 122 : i32
    %2147 = tpu.dynamic_rotate %2045 by %c122_i32_158 dim 1 : vector<8x128xf32>, i32 -> vector<8x128xf32>
    %c440 = arith.constant 440 : index
    %2148 = memref.load %arg2[%c440] : memref<784xf32, #tpu.memory_space<smem>>
    %2149 = vector.broadcast %2148 : f32 to vector<8x128xf32>
    %2150 = arith.mulf %2149, %2147 : vector<8x128xf32>
    %2151 = arith.addf %2134, %2150 : vector<8x128xf32>
    %c441 = arith.constant 441 : index
    %2152 = memref.load %arg2[%c441] : memref<784xf32, #tpu.memory_space<smem>>
    %2153 = vector.broadcast %2152 : f32 to vector<8x128xf32>
    %2154 = arith.mulf %2153, %2147 : vector<8x128xf32>
    %2155 = arith.addf %2138, %2154 : vector<8x128xf32>
    %c442 = arith.constant 442 : index
    %2156 = memref.load %arg2[%c442] : memref<784xf32, #tpu.memory_space<smem>>
    %2157 = vector.broadcast %2156 : f32 to vector<8x128xf32>
    %2158 = arith.mulf %2157, %2147 : vector<8x128xf32>
    %2159 = arith.addf %2142, %2158 : vector<8x128xf32>
    %c443 = arith.constant 443 : index
    %2160 = memref.load %arg2[%c443] : memref<784xf32, #tpu.memory_space<smem>>
    %2161 = vector.broadcast %2160 : f32 to vector<8x128xf32>
    %2162 = arith.mulf %2161, %2147 : vector<8x128xf32>
    %2163 = arith.addf %2146, %2162 : vector<8x128xf32>
    %c2_159 = arith.constant 2 : index
    %c4_160 = arith.constant 4 : index
    %c0_161 = arith.constant 0 : index
    %2164 = vector.load %arg1[%c2_159, %c4_160, %c0_161] : memref<4x14x128xf32, #tpu.memory_space<vmem>>, vector<1x8x128xf32>
    %2165 = vector.shape_cast %2164 : vector<1x8x128xf32> to vector<8x128xf32>
    %c456 = arith.constant 456 : index
    %2166 = memref.load %arg2[%c456] : memref<784xf32, #tpu.memory_space<smem>>
    %2167 = vector.broadcast %2166 : f32 to vector<8x128xf32>
    %2168 = arith.mulf %2167, %2165 : vector<8x128xf32>
    %2169 = arith.addf %2151, %2168 : vector<8x128xf32>
    %c457 = arith.constant 457 : index
    %2170 = memref.load %arg2[%c457] : memref<784xf32, #tpu.memory_space<smem>>
    %2171 = vector.broadcast %2170 : f32 to vector<8x128xf32>
    %2172 = arith.mulf %2171, %2165 : vector<8x128xf32>
    %2173 = arith.addf %2155, %2172 : vector<8x128xf32>
    %c458 = arith.constant 458 : index
    %2174 = memref.load %arg2[%c458] : memref<784xf32, #tpu.memory_space<smem>>
    %2175 = vector.broadcast %2174 : f32 to vector<8x128xf32>
    %2176 = arith.mulf %2175, %2165 : vector<8x128xf32>
    %2177 = arith.addf %2159, %2176 : vector<8x128xf32>
    %c459 = arith.constant 459 : index
    %2178 = memref.load %arg2[%c459] : memref<784xf32, #tpu.memory_space<smem>>
    %2179 = vector.broadcast %2178 : f32 to vector<8x128xf32>
    %2180 = arith.mulf %2179, %2165 : vector<8x128xf32>
    %2181 = arith.addf %2163, %2180 : vector<8x128xf32>
    %c127_i32_162 = arith.constant 127 : i32
    %2182 = tpu.dynamic_rotate %2165 by %c127_i32_162 dim 1 : vector<8x128xf32>, i32 -> vector<8x128xf32>
    %c472 = arith.constant 472 : index
    %2183 = memref.load %arg2[%c472] : memref<784xf32, #tpu.memory_space<smem>>
    %2184 = vector.broadcast %2183 : f32 to vector<8x128xf32>
    %2185 = arith.mulf %2184, %2182 : vector<8x128xf32>
    %2186 = arith.addf %2169, %2185 : vector<8x128xf32>
    %c473 = arith.constant 473 : index
    %2187 = memref.load %arg2[%c473] : memref<784xf32, #tpu.memory_space<smem>>
    %2188 = vector.broadcast %2187 : f32 to vector<8x128xf32>
    %2189 = arith.mulf %2188, %2182 : vector<8x128xf32>
    %2190 = arith.addf %2173, %2189 : vector<8x128xf32>
    %c474 = arith.constant 474 : index
    %2191 = memref.load %arg2[%c474] : memref<784xf32, #tpu.memory_space<smem>>
    %2192 = vector.broadcast %2191 : f32 to vector<8x128xf32>
    %2193 = arith.mulf %2192, %2182 : vector<8x128xf32>
    %2194 = arith.addf %2177, %2193 : vector<8x128xf32>
    %c475 = arith.constant 475 : index
    %2195 = memref.load %arg2[%c475] : memref<784xf32, #tpu.memory_space<smem>>
    %2196 = vector.broadcast %2195 : f32 to vector<8x128xf32>
    %2197 = arith.mulf %2196, %2182 : vector<8x128xf32>
    %2198 = arith.addf %2181, %2197 : vector<8x128xf32>
    %c126_i32_163 = arith.constant 126 : i32
    %2199 = tpu.dynamic_rotate %2165 by %c126_i32_163 dim 1 : vector<8x128xf32>, i32 -> vector<8x128xf32>
    %c488 = arith.constant 488 : index
    %2200 = memref.load %arg2[%c488] : memref<784xf32, #tpu.memory_space<smem>>
    %2201 = vector.broadcast %2200 : f32 to vector<8x128xf32>
    %2202 = arith.mulf %2201, %2199 : vector<8x128xf32>
    %2203 = arith.addf %2186, %2202 : vector<8x128xf32>
    %c489 = arith.constant 489 : index
    %2204 = memref.load %arg2[%c489] : memref<784xf32, #tpu.memory_space<smem>>
    %2205 = vector.broadcast %2204 : f32 to vector<8x128xf32>
    %2206 = arith.mulf %2205, %2199 : vector<8x128xf32>
    %2207 = arith.addf %2190, %2206 : vector<8x128xf32>
    %c490 = arith.constant 490 : index
    %2208 = memref.load %arg2[%c490] : memref<784xf32, #tpu.memory_space<smem>>
    %2209 = vector.broadcast %2208 : f32 to vector<8x128xf32>
    %2210 = arith.mulf %2209, %2199 : vector<8x128xf32>
    %2211 = arith.addf %2194, %2210 : vector<8x128xf32>
    %c491 = arith.constant 491 : index
    %2212 = memref.load %arg2[%c491] : memref<784xf32, #tpu.memory_space<smem>>
    %2213 = vector.broadcast %2212 : f32 to vector<8x128xf32>
    %2214 = arith.mulf %2213, %2199 : vector<8x128xf32>
    %2215 = arith.addf %2198, %2214 : vector<8x128xf32>
    %c125_i32_164 = arith.constant 125 : i32
    %2216 = tpu.dynamic_rotate %2165 by %c125_i32_164 dim 1 : vector<8x128xf32>, i32 -> vector<8x128xf32>
    %c504 = arith.constant 504 : index
    %2217 = memref.load %arg2[%c504] : memref<784xf32, #tpu.memory_space<smem>>
    %2218 = vector.broadcast %2217 : f32 to vector<8x128xf32>
    %2219 = arith.mulf %2218, %2216 : vector<8x128xf32>
    %2220 = arith.addf %2203, %2219 : vector<8x128xf32>
    %c505 = arith.constant 505 : index
    %2221 = memref.load %arg2[%c505] : memref<784xf32, #tpu.memory_space<smem>>
    %2222 = vector.broadcast %2221 : f32 to vector<8x128xf32>
    %2223 = arith.mulf %2222, %2216 : vector<8x128xf32>
    %2224 = arith.addf %2207, %2223 : vector<8x128xf32>
    %c506 = arith.constant 506 : index
    %2225 = memref.load %arg2[%c506] : memref<784xf32, #tpu.memory_space<smem>>
    %2226 = vector.broadcast %2225 : f32 to vector<8x128xf32>
    %2227 = arith.mulf %2226, %2216 : vector<8x128xf32>
    %2228 = arith.addf %2211, %2227 : vector<8x128xf32>
    %c507 = arith.constant 507 : index
    %2229 = memref.load %arg2[%c507] : memref<784xf32, #tpu.memory_space<smem>>
    %2230 = vector.broadcast %2229 : f32 to vector<8x128xf32>
    %2231 = arith.mulf %2230, %2216 : vector<8x128xf32>
    %2232 = arith.addf %2215, %2231 : vector<8x128xf32>
    %c124_i32_165 = arith.constant 124 : i32
    %2233 = tpu.dynamic_rotate %2165 by %c124_i32_165 dim 1 : vector<8x128xf32>, i32 -> vector<8x128xf32>
    %c520 = arith.constant 520 : index
    %2234 = memref.load %arg2[%c520] : memref<784xf32, #tpu.memory_space<smem>>
    %2235 = vector.broadcast %2234 : f32 to vector<8x128xf32>
    %2236 = arith.mulf %2235, %2233 : vector<8x128xf32>
    %2237 = arith.addf %2220, %2236 : vector<8x128xf32>
    %c521 = arith.constant 521 : index
    %2238 = memref.load %arg2[%c521] : memref<784xf32, #tpu.memory_space<smem>>
    %2239 = vector.broadcast %2238 : f32 to vector<8x128xf32>
    %2240 = arith.mulf %2239, %2233 : vector<8x128xf32>
    %2241 = arith.addf %2224, %2240 : vector<8x128xf32>
    %c522 = arith.constant 522 : index
    %2242 = memref.load %arg2[%c522] : memref<784xf32, #tpu.memory_space<smem>>
    %2243 = vector.broadcast %2242 : f32 to vector<8x128xf32>
    %2244 = arith.mulf %2243, %2233 : vector<8x128xf32>
    %2245 = arith.addf %2228, %2244 : vector<8x128xf32>
    %c523 = arith.constant 523 : index
    %2246 = memref.load %arg2[%c523] : memref<784xf32, #tpu.memory_space<smem>>
    %2247 = vector.broadcast %2246 : f32 to vector<8x128xf32>
    %2248 = arith.mulf %2247, %2233 : vector<8x128xf32>
    %2249 = arith.addf %2232, %2248 : vector<8x128xf32>
    %c123_i32_166 = arith.constant 123 : i32
    %2250 = tpu.dynamic_rotate %2165 by %c123_i32_166 dim 1 : vector<8x128xf32>, i32 -> vector<8x128xf32>
    %c536 = arith.constant 536 : index
    %2251 = memref.load %arg2[%c536] : memref<784xf32, #tpu.memory_space<smem>>
    %2252 = vector.broadcast %2251 : f32 to vector<8x128xf32>
    %2253 = arith.mulf %2252, %2250 : vector<8x128xf32>
    %2254 = arith.addf %2237, %2253 : vector<8x128xf32>
    %c537 = arith.constant 537 : index
    %2255 = memref.load %arg2[%c537] : memref<784xf32, #tpu.memory_space<smem>>
    %2256 = vector.broadcast %2255 : f32 to vector<8x128xf32>
    %2257 = arith.mulf %2256, %2250 : vector<8x128xf32>
    %2258 = arith.addf %2241, %2257 : vector<8x128xf32>
    %c538 = arith.constant 538 : index
    %2259 = memref.load %arg2[%c538] : memref<784xf32, #tpu.memory_space<smem>>
    %2260 = vector.broadcast %2259 : f32 to vector<8x128xf32>
    %2261 = arith.mulf %2260, %2250 : vector<8x128xf32>
    %2262 = arith.addf %2245, %2261 : vector<8x128xf32>
    %c539 = arith.constant 539 : index
    %2263 = memref.load %arg2[%c539] : memref<784xf32, #tpu.memory_space<smem>>
    %2264 = vector.broadcast %2263 : f32 to vector<8x128xf32>
    %2265 = arith.mulf %2264, %2250 : vector<8x128xf32>
    %2266 = arith.addf %2249, %2265 : vector<8x128xf32>
    %c122_i32_167 = arith.constant 122 : i32
    %2267 = tpu.dynamic_rotate %2165 by %c122_i32_167 dim 1 : vector<8x128xf32>, i32 -> vector<8x128xf32>
    %c552 = arith.constant 552 : index
    %2268 = memref.load %arg2[%c552] : memref<784xf32, #tpu.memory_space<smem>>
    %2269 = vector.broadcast %2268 : f32 to vector<8x128xf32>
    %2270 = arith.mulf %2269, %2267 : vector<8x128xf32>
    %2271 = arith.addf %2254, %2270 : vector<8x128xf32>
    %c553 = arith.constant 553 : index
    %2272 = memref.load %arg2[%c553] : memref<784xf32, #tpu.memory_space<smem>>
    %2273 = vector.broadcast %2272 : f32 to vector<8x128xf32>
    %2274 = arith.mulf %2273, %2267 : vector<8x128xf32>
    %2275 = arith.addf %2258, %2274 : vector<8x128xf32>
    %c554 = arith.constant 554 : index
    %2276 = memref.load %arg2[%c554] : memref<784xf32, #tpu.memory_space<smem>>
    %2277 = vector.broadcast %2276 : f32 to vector<8x128xf32>
    %2278 = arith.mulf %2277, %2267 : vector<8x128xf32>
    %2279 = arith.addf %2262, %2278 : vector<8x128xf32>
    %c555 = arith.constant 555 : index
    %2280 = memref.load %arg2[%c555] : memref<784xf32, #tpu.memory_space<smem>>
    %2281 = vector.broadcast %2280 : f32 to vector<8x128xf32>
    %2282 = arith.mulf %2281, %2267 : vector<8x128xf32>
    %2283 = arith.addf %2266, %2282 : vector<8x128xf32>
    %c2_168 = arith.constant 2 : index
    %c5_169 = arith.constant 5 : index
    %c0_170 = arith.constant 0 : index
    %2284 = vector.load %arg1[%c2_168, %c5_169, %c0_170] : memref<4x14x128xf32, #tpu.memory_space<vmem>>, vector<1x8x128xf32>
    %2285 = vector.shape_cast %2284 : vector<1x8x128xf32> to vector<8x128xf32>
    %c568 = arith.constant 568 : index
    %2286 = memref.load %arg2[%c568] : memref<784xf32, #tpu.memory_space<smem>>
    %2287 = vector.broadcast %2286 : f32 to vector<8x128xf32>
    %2288 = arith.mulf %2287, %2285 : vector<8x128xf32>
    %2289 = arith.addf %2271, %2288 : vector<8x128xf32>
    %c569 = arith.constant 569 : index
    %2290 = memref.load %arg2[%c569] : memref<784xf32, #tpu.memory_space<smem>>
    %2291 = vector.broadcast %2290 : f32 to vector<8x128xf32>
    %2292 = arith.mulf %2291, %2285 : vector<8x128xf32>
    %2293 = arith.addf %2275, %2292 : vector<8x128xf32>
    %c570 = arith.constant 570 : index
    %2294 = memref.load %arg2[%c570] : memref<784xf32, #tpu.memory_space<smem>>
    %2295 = vector.broadcast %2294 : f32 to vector<8x128xf32>
    %2296 = arith.mulf %2295, %2285 : vector<8x128xf32>
    %2297 = arith.addf %2279, %2296 : vector<8x128xf32>
    %c571 = arith.constant 571 : index
    %2298 = memref.load %arg2[%c571] : memref<784xf32, #tpu.memory_space<smem>>
    %2299 = vector.broadcast %2298 : f32 to vector<8x128xf32>
    %2300 = arith.mulf %2299, %2285 : vector<8x128xf32>
    %2301 = arith.addf %2283, %2300 : vector<8x128xf32>
    %c127_i32_171 = arith.constant 127 : i32
    %2302 = tpu.dynamic_rotate %2285 by %c127_i32_171 dim 1 : vector<8x128xf32>, i32 -> vector<8x128xf32>
    %c584 = arith.constant 584 : index
    %2303 = memref.load %arg2[%c584] : memref<784xf32, #tpu.memory_space<smem>>
    %2304 = vector.broadcast %2303 : f32 to vector<8x128xf32>
    %2305 = arith.mulf %2304, %2302 : vector<8x128xf32>
    %2306 = arith.addf %2289, %2305 : vector<8x128xf32>
    %c585 = arith.constant 585 : index
    %2307 = memref.load %arg2[%c585] : memref<784xf32, #tpu.memory_space<smem>>
    %2308 = vector.broadcast %2307 : f32 to vector<8x128xf32>
    %2309 = arith.mulf %2308, %2302 : vector<8x128xf32>
    %2310 = arith.addf %2293, %2309 : vector<8x128xf32>
    %c586 = arith.constant 586 : index
    %2311 = memref.load %arg2[%c586] : memref<784xf32, #tpu.memory_space<smem>>
    %2312 = vector.broadcast %2311 : f32 to vector<8x128xf32>
    %2313 = arith.mulf %2312, %2302 : vector<8x128xf32>
    %2314 = arith.addf %2297, %2313 : vector<8x128xf32>
    %c587 = arith.constant 587 : index
    %2315 = memref.load %arg2[%c587] : memref<784xf32, #tpu.memory_space<smem>>
    %2316 = vector.broadcast %2315 : f32 to vector<8x128xf32>
    %2317 = arith.mulf %2316, %2302 : vector<8x128xf32>
    %2318 = arith.addf %2301, %2317 : vector<8x128xf32>
    %c126_i32_172 = arith.constant 126 : i32
    %2319 = tpu.dynamic_rotate %2285 by %c126_i32_172 dim 1 : vector<8x128xf32>, i32 -> vector<8x128xf32>
    %c600 = arith.constant 600 : index
    %2320 = memref.load %arg2[%c600] : memref<784xf32, #tpu.memory_space<smem>>
    %2321 = vector.broadcast %2320 : f32 to vector<8x128xf32>
    %2322 = arith.mulf %2321, %2319 : vector<8x128xf32>
    %2323 = arith.addf %2306, %2322 : vector<8x128xf32>
    %c601 = arith.constant 601 : index
    %2324 = memref.load %arg2[%c601] : memref<784xf32, #tpu.memory_space<smem>>
    %2325 = vector.broadcast %2324 : f32 to vector<8x128xf32>
    %2326 = arith.mulf %2325, %2319 : vector<8x128xf32>
    %2327 = arith.addf %2310, %2326 : vector<8x128xf32>
    %c602 = arith.constant 602 : index
    %2328 = memref.load %arg2[%c602] : memref<784xf32, #tpu.memory_space<smem>>
    %2329 = vector.broadcast %2328 : f32 to vector<8x128xf32>
    %2330 = arith.mulf %2329, %2319 : vector<8x128xf32>
    %2331 = arith.addf %2314, %2330 : vector<8x128xf32>
    %c603 = arith.constant 603 : index
    %2332 = memref.load %arg2[%c603] : memref<784xf32, #tpu.memory_space<smem>>
    %2333 = vector.broadcast %2332 : f32 to vector<8x128xf32>
    %2334 = arith.mulf %2333, %2319 : vector<8x128xf32>
    %2335 = arith.addf %2318, %2334 : vector<8x128xf32>
    %c125_i32_173 = arith.constant 125 : i32
    %2336 = tpu.dynamic_rotate %2285 by %c125_i32_173 dim 1 : vector<8x128xf32>, i32 -> vector<8x128xf32>
    %c616 = arith.constant 616 : index
    %2337 = memref.load %arg2[%c616] : memref<784xf32, #tpu.memory_space<smem>>
    %2338 = vector.broadcast %2337 : f32 to vector<8x128xf32>
    %2339 = arith.mulf %2338, %2336 : vector<8x128xf32>
    %2340 = arith.addf %2323, %2339 : vector<8x128xf32>
    %c617 = arith.constant 617 : index
    %2341 = memref.load %arg2[%c617] : memref<784xf32, #tpu.memory_space<smem>>
    %2342 = vector.broadcast %2341 : f32 to vector<8x128xf32>
    %2343 = arith.mulf %2342, %2336 : vector<8x128xf32>
    %2344 = arith.addf %2327, %2343 : vector<8x128xf32>
    %c618 = arith.constant 618 : index
    %2345 = memref.load %arg2[%c618] : memref<784xf32, #tpu.memory_space<smem>>
    %2346 = vector.broadcast %2345 : f32 to vector<8x128xf32>
    %2347 = arith.mulf %2346, %2336 : vector<8x128xf32>
    %2348 = arith.addf %2331, %2347 : vector<8x128xf32>
    %c619 = arith.constant 619 : index
    %2349 = memref.load %arg2[%c619] : memref<784xf32, #tpu.memory_space<smem>>
    %2350 = vector.broadcast %2349 : f32 to vector<8x128xf32>
    %2351 = arith.mulf %2350, %2336 : vector<8x128xf32>
    %2352 = arith.addf %2335, %2351 : vector<8x128xf32>
    %c124_i32_174 = arith.constant 124 : i32
    %2353 = tpu.dynamic_rotate %2285 by %c124_i32_174 dim 1 : vector<8x128xf32>, i32 -> vector<8x128xf32>
    %c632 = arith.constant 632 : index
    %2354 = memref.load %arg2[%c632] : memref<784xf32, #tpu.memory_space<smem>>
    %2355 = vector.broadcast %2354 : f32 to vector<8x128xf32>
    %2356 = arith.mulf %2355, %2353 : vector<8x128xf32>
    %2357 = arith.addf %2340, %2356 : vector<8x128xf32>
    %c633 = arith.constant 633 : index
    %2358 = memref.load %arg2[%c633] : memref<784xf32, #tpu.memory_space<smem>>
    %2359 = vector.broadcast %2358 : f32 to vector<8x128xf32>
    %2360 = arith.mulf %2359, %2353 : vector<8x128xf32>
    %2361 = arith.addf %2344, %2360 : vector<8x128xf32>
    %c634 = arith.constant 634 : index
    %2362 = memref.load %arg2[%c634] : memref<784xf32, #tpu.memory_space<smem>>
    %2363 = vector.broadcast %2362 : f32 to vector<8x128xf32>
    %2364 = arith.mulf %2363, %2353 : vector<8x128xf32>
    %2365 = arith.addf %2348, %2364 : vector<8x128xf32>
    %c635 = arith.constant 635 : index
    %2366 = memref.load %arg2[%c635] : memref<784xf32, #tpu.memory_space<smem>>
    %2367 = vector.broadcast %2366 : f32 to vector<8x128xf32>
    %2368 = arith.mulf %2367, %2353 : vector<8x128xf32>
    %2369 = arith.addf %2352, %2368 : vector<8x128xf32>
    %c123_i32_175 = arith.constant 123 : i32
    %2370 = tpu.dynamic_rotate %2285 by %c123_i32_175 dim 1 : vector<8x128xf32>, i32 -> vector<8x128xf32>
    %c648 = arith.constant 648 : index
    %2371 = memref.load %arg2[%c648] : memref<784xf32, #tpu.memory_space<smem>>
    %2372 = vector.broadcast %2371 : f32 to vector<8x128xf32>
    %2373 = arith.mulf %2372, %2370 : vector<8x128xf32>
    %2374 = arith.addf %2357, %2373 : vector<8x128xf32>
    %c649 = arith.constant 649 : index
    %2375 = memref.load %arg2[%c649] : memref<784xf32, #tpu.memory_space<smem>>
    %2376 = vector.broadcast %2375 : f32 to vector<8x128xf32>
    %2377 = arith.mulf %2376, %2370 : vector<8x128xf32>
    %2378 = arith.addf %2361, %2377 : vector<8x128xf32>
    %c650 = arith.constant 650 : index
    %2379 = memref.load %arg2[%c650] : memref<784xf32, #tpu.memory_space<smem>>
    %2380 = vector.broadcast %2379 : f32 to vector<8x128xf32>
    %2381 = arith.mulf %2380, %2370 : vector<8x128xf32>
    %2382 = arith.addf %2365, %2381 : vector<8x128xf32>
    %c651 = arith.constant 651 : index
    %2383 = memref.load %arg2[%c651] : memref<784xf32, #tpu.memory_space<smem>>
    %2384 = vector.broadcast %2383 : f32 to vector<8x128xf32>
    %2385 = arith.mulf %2384, %2370 : vector<8x128xf32>
    %2386 = arith.addf %2369, %2385 : vector<8x128xf32>
    %c122_i32_176 = arith.constant 122 : i32
    %2387 = tpu.dynamic_rotate %2285 by %c122_i32_176 dim 1 : vector<8x128xf32>, i32 -> vector<8x128xf32>
    %c664 = arith.constant 664 : index
    %2388 = memref.load %arg2[%c664] : memref<784xf32, #tpu.memory_space<smem>>
    %2389 = vector.broadcast %2388 : f32 to vector<8x128xf32>
    %2390 = arith.mulf %2389, %2387 : vector<8x128xf32>
    %2391 = arith.addf %2374, %2390 : vector<8x128xf32>
    %c665 = arith.constant 665 : index
    %2392 = memref.load %arg2[%c665] : memref<784xf32, #tpu.memory_space<smem>>
    %2393 = vector.broadcast %2392 : f32 to vector<8x128xf32>
    %2394 = arith.mulf %2393, %2387 : vector<8x128xf32>
    %2395 = arith.addf %2378, %2394 : vector<8x128xf32>
    %c666 = arith.constant 666 : index
    %2396 = memref.load %arg2[%c666] : memref<784xf32, #tpu.memory_space<smem>>
    %2397 = vector.broadcast %2396 : f32 to vector<8x128xf32>
    %2398 = arith.mulf %2397, %2387 : vector<8x128xf32>
    %2399 = arith.addf %2382, %2398 : vector<8x128xf32>
    %c667 = arith.constant 667 : index
    %2400 = memref.load %arg2[%c667] : memref<784xf32, #tpu.memory_space<smem>>
    %2401 = vector.broadcast %2400 : f32 to vector<8x128xf32>
    %2402 = arith.mulf %2401, %2387 : vector<8x128xf32>
    %2403 = arith.addf %2386, %2402 : vector<8x128xf32>
    %c2_177 = arith.constant 2 : index
    %c6_178 = arith.constant 6 : index
    %c0_179 = arith.constant 0 : index
    %2404 = vector.load %arg1[%c2_177, %c6_178, %c0_179] : memref<4x14x128xf32, #tpu.memory_space<vmem>>, vector<1x8x128xf32>
    %2405 = vector.shape_cast %2404 : vector<1x8x128xf32> to vector<8x128xf32>
    %c680 = arith.constant 680 : index
    %2406 = memref.load %arg2[%c680] : memref<784xf32, #tpu.memory_space<smem>>
    %2407 = vector.broadcast %2406 : f32 to vector<8x128xf32>
    %2408 = arith.mulf %2407, %2405 : vector<8x128xf32>
    %2409 = arith.addf %2391, %2408 : vector<8x128xf32>
    %c681 = arith.constant 681 : index
    %2410 = memref.load %arg2[%c681] : memref<784xf32, #tpu.memory_space<smem>>
    %2411 = vector.broadcast %2410 : f32 to vector<8x128xf32>
    %2412 = arith.mulf %2411, %2405 : vector<8x128xf32>
    %2413 = arith.addf %2395, %2412 : vector<8x128xf32>
    %c682 = arith.constant 682 : index
    %2414 = memref.load %arg2[%c682] : memref<784xf32, #tpu.memory_space<smem>>
    %2415 = vector.broadcast %2414 : f32 to vector<8x128xf32>
    %2416 = arith.mulf %2415, %2405 : vector<8x128xf32>
    %2417 = arith.addf %2399, %2416 : vector<8x128xf32>
    %c683 = arith.constant 683 : index
    %2418 = memref.load %arg2[%c683] : memref<784xf32, #tpu.memory_space<smem>>
    %2419 = vector.broadcast %2418 : f32 to vector<8x128xf32>
    %2420 = arith.mulf %2419, %2405 : vector<8x128xf32>
    %2421 = arith.addf %2403, %2420 : vector<8x128xf32>
    %c127_i32_180 = arith.constant 127 : i32
    %2422 = tpu.dynamic_rotate %2405 by %c127_i32_180 dim 1 : vector<8x128xf32>, i32 -> vector<8x128xf32>
    %c696 = arith.constant 696 : index
    %2423 = memref.load %arg2[%c696] : memref<784xf32, #tpu.memory_space<smem>>
    %2424 = vector.broadcast %2423 : f32 to vector<8x128xf32>
    %2425 = arith.mulf %2424, %2422 : vector<8x128xf32>
    %2426 = arith.addf %2409, %2425 : vector<8x128xf32>
    %c697 = arith.constant 697 : index
    %2427 = memref.load %arg2[%c697] : memref<784xf32, #tpu.memory_space<smem>>
    %2428 = vector.broadcast %2427 : f32 to vector<8x128xf32>
    %2429 = arith.mulf %2428, %2422 : vector<8x128xf32>
    %2430 = arith.addf %2413, %2429 : vector<8x128xf32>
    %c698 = arith.constant 698 : index
    %2431 = memref.load %arg2[%c698] : memref<784xf32, #tpu.memory_space<smem>>
    %2432 = vector.broadcast %2431 : f32 to vector<8x128xf32>
    %2433 = arith.mulf %2432, %2422 : vector<8x128xf32>
    %2434 = arith.addf %2417, %2433 : vector<8x128xf32>
    %c699 = arith.constant 699 : index
    %2435 = memref.load %arg2[%c699] : memref<784xf32, #tpu.memory_space<smem>>
    %2436 = vector.broadcast %2435 : f32 to vector<8x128xf32>
    %2437 = arith.mulf %2436, %2422 : vector<8x128xf32>
    %2438 = arith.addf %2421, %2437 : vector<8x128xf32>
    %c126_i32_181 = arith.constant 126 : i32
    %2439 = tpu.dynamic_rotate %2405 by %c126_i32_181 dim 1 : vector<8x128xf32>, i32 -> vector<8x128xf32>
    %c712 = arith.constant 712 : index
    %2440 = memref.load %arg2[%c712] : memref<784xf32, #tpu.memory_space<smem>>
    %2441 = vector.broadcast %2440 : f32 to vector<8x128xf32>
    %2442 = arith.mulf %2441, %2439 : vector<8x128xf32>
    %2443 = arith.addf %2426, %2442 : vector<8x128xf32>
    %c713 = arith.constant 713 : index
    %2444 = memref.load %arg2[%c713] : memref<784xf32, #tpu.memory_space<smem>>
    %2445 = vector.broadcast %2444 : f32 to vector<8x128xf32>
    %2446 = arith.mulf %2445, %2439 : vector<8x128xf32>
    %2447 = arith.addf %2430, %2446 : vector<8x128xf32>
    %c714 = arith.constant 714 : index
    %2448 = memref.load %arg2[%c714] : memref<784xf32, #tpu.memory_space<smem>>
    %2449 = vector.broadcast %2448 : f32 to vector<8x128xf32>
    %2450 = arith.mulf %2449, %2439 : vector<8x128xf32>
    %2451 = arith.addf %2434, %2450 : vector<8x128xf32>
    %c715 = arith.constant 715 : index
    %2452 = memref.load %arg2[%c715] : memref<784xf32, #tpu.memory_space<smem>>
    %2453 = vector.broadcast %2452 : f32 to vector<8x128xf32>
    %2454 = arith.mulf %2453, %2439 : vector<8x128xf32>
    %2455 = arith.addf %2438, %2454 : vector<8x128xf32>
    %c125_i32_182 = arith.constant 125 : i32
    %2456 = tpu.dynamic_rotate %2405 by %c125_i32_182 dim 1 : vector<8x128xf32>, i32 -> vector<8x128xf32>
    %c728 = arith.constant 728 : index
    %2457 = memref.load %arg2[%c728] : memref<784xf32, #tpu.memory_space<smem>>
    %2458 = vector.broadcast %2457 : f32 to vector<8x128xf32>
    %2459 = arith.mulf %2458, %2456 : vector<8x128xf32>
    %2460 = arith.addf %2443, %2459 : vector<8x128xf32>
    %c729 = arith.constant 729 : index
    %2461 = memref.load %arg2[%c729] : memref<784xf32, #tpu.memory_space<smem>>
    %2462 = vector.broadcast %2461 : f32 to vector<8x128xf32>
    %2463 = arith.mulf %2462, %2456 : vector<8x128xf32>
    %2464 = arith.addf %2447, %2463 : vector<8x128xf32>
    %c730 = arith.constant 730 : index
    %2465 = memref.load %arg2[%c730] : memref<784xf32, #tpu.memory_space<smem>>
    %2466 = vector.broadcast %2465 : f32 to vector<8x128xf32>
    %2467 = arith.mulf %2466, %2456 : vector<8x128xf32>
    %2468 = arith.addf %2451, %2467 : vector<8x128xf32>
    %c731 = arith.constant 731 : index
    %2469 = memref.load %arg2[%c731] : memref<784xf32, #tpu.memory_space<smem>>
    %2470 = vector.broadcast %2469 : f32 to vector<8x128xf32>
    %2471 = arith.mulf %2470, %2456 : vector<8x128xf32>
    %2472 = arith.addf %2455, %2471 : vector<8x128xf32>
    %c124_i32_183 = arith.constant 124 : i32
    %2473 = tpu.dynamic_rotate %2405 by %c124_i32_183 dim 1 : vector<8x128xf32>, i32 -> vector<8x128xf32>
    %c744 = arith.constant 744 : index
    %2474 = memref.load %arg2[%c744] : memref<784xf32, #tpu.memory_space<smem>>
    %2475 = vector.broadcast %2474 : f32 to vector<8x128xf32>
    %2476 = arith.mulf %2475, %2473 : vector<8x128xf32>
    %2477 = arith.addf %2460, %2476 : vector<8x128xf32>
    %c745 = arith.constant 745 : index
    %2478 = memref.load %arg2[%c745] : memref<784xf32, #tpu.memory_space<smem>>
    %2479 = vector.broadcast %2478 : f32 to vector<8x128xf32>
    %2480 = arith.mulf %2479, %2473 : vector<8x128xf32>
    %2481 = arith.addf %2464, %2480 : vector<8x128xf32>
    %c746 = arith.constant 746 : index
    %2482 = memref.load %arg2[%c746] : memref<784xf32, #tpu.memory_space<smem>>
    %2483 = vector.broadcast %2482 : f32 to vector<8x128xf32>
    %2484 = arith.mulf %2483, %2473 : vector<8x128xf32>
    %2485 = arith.addf %2468, %2484 : vector<8x128xf32>
    %c747 = arith.constant 747 : index
    %2486 = memref.load %arg2[%c747] : memref<784xf32, #tpu.memory_space<smem>>
    %2487 = vector.broadcast %2486 : f32 to vector<8x128xf32>
    %2488 = arith.mulf %2487, %2473 : vector<8x128xf32>
    %2489 = arith.addf %2472, %2488 : vector<8x128xf32>
    %c123_i32_184 = arith.constant 123 : i32
    %2490 = tpu.dynamic_rotate %2405 by %c123_i32_184 dim 1 : vector<8x128xf32>, i32 -> vector<8x128xf32>
    %c760 = arith.constant 760 : index
    %2491 = memref.load %arg2[%c760] : memref<784xf32, #tpu.memory_space<smem>>
    %2492 = vector.broadcast %2491 : f32 to vector<8x128xf32>
    %2493 = arith.mulf %2492, %2490 : vector<8x128xf32>
    %2494 = arith.addf %2477, %2493 : vector<8x128xf32>
    %c761 = arith.constant 761 : index
    %2495 = memref.load %arg2[%c761] : memref<784xf32, #tpu.memory_space<smem>>
    %2496 = vector.broadcast %2495 : f32 to vector<8x128xf32>
    %2497 = arith.mulf %2496, %2490 : vector<8x128xf32>
    %2498 = arith.addf %2481, %2497 : vector<8x128xf32>
    %c762 = arith.constant 762 : index
    %2499 = memref.load %arg2[%c762] : memref<784xf32, #tpu.memory_space<smem>>
    %2500 = vector.broadcast %2499 : f32 to vector<8x128xf32>
    %2501 = arith.mulf %2500, %2490 : vector<8x128xf32>
    %2502 = arith.addf %2485, %2501 : vector<8x128xf32>
    %c763 = arith.constant 763 : index
    %2503 = memref.load %arg2[%c763] : memref<784xf32, #tpu.memory_space<smem>>
    %2504 = vector.broadcast %2503 : f32 to vector<8x128xf32>
    %2505 = arith.mulf %2504, %2490 : vector<8x128xf32>
    %2506 = arith.addf %2489, %2505 : vector<8x128xf32>
    %c122_i32_185 = arith.constant 122 : i32
    %2507 = tpu.dynamic_rotate %2405 by %c122_i32_185 dim 1 : vector<8x128xf32>, i32 -> vector<8x128xf32>
    %c776 = arith.constant 776 : index
    %2508 = memref.load %arg2[%c776] : memref<784xf32, #tpu.memory_space<smem>>
    %2509 = vector.broadcast %2508 : f32 to vector<8x128xf32>
    %2510 = arith.mulf %2509, %2507 : vector<8x128xf32>
    %2511 = arith.addf %2494, %2510 : vector<8x128xf32>
    %c777 = arith.constant 777 : index
    %2512 = memref.load %arg2[%c777] : memref<784xf32, #tpu.memory_space<smem>>
    %2513 = vector.broadcast %2512 : f32 to vector<8x128xf32>
    %2514 = arith.mulf %2513, %2507 : vector<8x128xf32>
    %2515 = arith.addf %2498, %2514 : vector<8x128xf32>
    %c778 = arith.constant 778 : index
    %2516 = memref.load %arg2[%c778] : memref<784xf32, #tpu.memory_space<smem>>
    %2517 = vector.broadcast %2516 : f32 to vector<8x128xf32>
    %2518 = arith.mulf %2517, %2507 : vector<8x128xf32>
    %2519 = arith.addf %2502, %2518 : vector<8x128xf32>
    %c779 = arith.constant 779 : index
    %2520 = memref.load %arg2[%c779] : memref<784xf32, #tpu.memory_space<smem>>
    %2521 = vector.broadcast %2520 : f32 to vector<8x128xf32>
    %2522 = arith.mulf %2521, %2507 : vector<8x128xf32>
    %2523 = arith.addf %2506, %2522 : vector<8x128xf32>
    %c3_186 = arith.constant 3 : index
    %c0_187 = arith.constant 0 : index
    %c0_188 = arith.constant 0 : index
    %2524 = vector.load %arg1[%c3_186, %c0_187, %c0_188] : memref<4x14x128xf32, #tpu.memory_space<vmem>>, vector<1x8x128xf32>
    %2525 = vector.shape_cast %2524 : vector<1x8x128xf32> to vector<8x128xf32>
    %c12 = arith.constant 12 : index
    %2526 = memref.load %arg2[%c12] : memref<784xf32, #tpu.memory_space<smem>>
    %2527 = vector.broadcast %2526 : f32 to vector<8x128xf32>
    %2528 = arith.mulf %2527, %2525 : vector<8x128xf32>
    %2529 = arith.addf %2511, %2528 : vector<8x128xf32>
    %c13 = arith.constant 13 : index
    %2530 = memref.load %arg2[%c13] : memref<784xf32, #tpu.memory_space<smem>>
    %2531 = vector.broadcast %2530 : f32 to vector<8x128xf32>
    %2532 = arith.mulf %2531, %2525 : vector<8x128xf32>
    %2533 = arith.addf %2515, %2532 : vector<8x128xf32>
    %c14 = arith.constant 14 : index
    %2534 = memref.load %arg2[%c14] : memref<784xf32, #tpu.memory_space<smem>>
    %2535 = vector.broadcast %2534 : f32 to vector<8x128xf32>
    %2536 = arith.mulf %2535, %2525 : vector<8x128xf32>
    %2537 = arith.addf %2519, %2536 : vector<8x128xf32>
    %c15 = arith.constant 15 : index
    %2538 = memref.load %arg2[%c15] : memref<784xf32, #tpu.memory_space<smem>>
    %2539 = vector.broadcast %2538 : f32 to vector<8x128xf32>
    %2540 = arith.mulf %2539, %2525 : vector<8x128xf32>
    %2541 = arith.addf %2523, %2540 : vector<8x128xf32>
    %c127_i32_189 = arith.constant 127 : i32
    %2542 = tpu.dynamic_rotate %2525 by %c127_i32_189 dim 1 : vector<8x128xf32>, i32 -> vector<8x128xf32>
    %c28 = arith.constant 28 : index
    %2543 = memref.load %arg2[%c28] : memref<784xf32, #tpu.memory_space<smem>>
    %2544 = vector.broadcast %2543 : f32 to vector<8x128xf32>
    %2545 = arith.mulf %2544, %2542 : vector<8x128xf32>
    %2546 = arith.addf %2529, %2545 : vector<8x128xf32>
    %c29 = arith.constant 29 : index
    %2547 = memref.load %arg2[%c29] : memref<784xf32, #tpu.memory_space<smem>>
    %2548 = vector.broadcast %2547 : f32 to vector<8x128xf32>
    %2549 = arith.mulf %2548, %2542 : vector<8x128xf32>
    %2550 = arith.addf %2533, %2549 : vector<8x128xf32>
    %c30 = arith.constant 30 : index
    %2551 = memref.load %arg2[%c30] : memref<784xf32, #tpu.memory_space<smem>>
    %2552 = vector.broadcast %2551 : f32 to vector<8x128xf32>
    %2553 = arith.mulf %2552, %2542 : vector<8x128xf32>
    %2554 = arith.addf %2537, %2553 : vector<8x128xf32>
    %c31 = arith.constant 31 : index
    %2555 = memref.load %arg2[%c31] : memref<784xf32, #tpu.memory_space<smem>>
    %2556 = vector.broadcast %2555 : f32 to vector<8x128xf32>
    %2557 = arith.mulf %2556, %2542 : vector<8x128xf32>
    %2558 = arith.addf %2541, %2557 : vector<8x128xf32>
    %c126_i32_190 = arith.constant 126 : i32
    %2559 = tpu.dynamic_rotate %2525 by %c126_i32_190 dim 1 : vector<8x128xf32>, i32 -> vector<8x128xf32>
    %c44 = arith.constant 44 : index
    %2560 = memref.load %arg2[%c44] : memref<784xf32, #tpu.memory_space<smem>>
    %2561 = vector.broadcast %2560 : f32 to vector<8x128xf32>
    %2562 = arith.mulf %2561, %2559 : vector<8x128xf32>
    %2563 = arith.addf %2546, %2562 : vector<8x128xf32>
    %c45 = arith.constant 45 : index
    %2564 = memref.load %arg2[%c45] : memref<784xf32, #tpu.memory_space<smem>>
    %2565 = vector.broadcast %2564 : f32 to vector<8x128xf32>
    %2566 = arith.mulf %2565, %2559 : vector<8x128xf32>
    %2567 = arith.addf %2550, %2566 : vector<8x128xf32>
    %c46 = arith.constant 46 : index
    %2568 = memref.load %arg2[%c46] : memref<784xf32, #tpu.memory_space<smem>>
    %2569 = vector.broadcast %2568 : f32 to vector<8x128xf32>
    %2570 = arith.mulf %2569, %2559 : vector<8x128xf32>
    %2571 = arith.addf %2554, %2570 : vector<8x128xf32>
    %c47 = arith.constant 47 : index
    %2572 = memref.load %arg2[%c47] : memref<784xf32, #tpu.memory_space<smem>>
    %2573 = vector.broadcast %2572 : f32 to vector<8x128xf32>
    %2574 = arith.mulf %2573, %2559 : vector<8x128xf32>
    %2575 = arith.addf %2558, %2574 : vector<8x128xf32>
    %c125_i32_191 = arith.constant 125 : i32
    %2576 = tpu.dynamic_rotate %2525 by %c125_i32_191 dim 1 : vector<8x128xf32>, i32 -> vector<8x128xf32>
    %c60 = arith.constant 60 : index
    %2577 = memref.load %arg2[%c60] : memref<784xf32, #tpu.memory_space<smem>>
    %2578 = vector.broadcast %2577 : f32 to vector<8x128xf32>
    %2579 = arith.mulf %2578, %2576 : vector<8x128xf32>
    %2580 = arith.addf %2563, %2579 : vector<8x128xf32>
    %c61 = arith.constant 61 : index
    %2581 = memref.load %arg2[%c61] : memref<784xf32, #tpu.memory_space<smem>>
    %2582 = vector.broadcast %2581 : f32 to vector<8x128xf32>
    %2583 = arith.mulf %2582, %2576 : vector<8x128xf32>
    %2584 = arith.addf %2567, %2583 : vector<8x128xf32>
    %c62 = arith.constant 62 : index
    %2585 = memref.load %arg2[%c62] : memref<784xf32, #tpu.memory_space<smem>>
    %2586 = vector.broadcast %2585 : f32 to vector<8x128xf32>
    %2587 = arith.mulf %2586, %2576 : vector<8x128xf32>
    %2588 = arith.addf %2571, %2587 : vector<8x128xf32>
    %c63 = arith.constant 63 : index
    %2589 = memref.load %arg2[%c63] : memref<784xf32, #tpu.memory_space<smem>>
    %2590 = vector.broadcast %2589 : f32 to vector<8x128xf32>
    %2591 = arith.mulf %2590, %2576 : vector<8x128xf32>
    %2592 = arith.addf %2575, %2591 : vector<8x128xf32>
    %c124_i32_192 = arith.constant 124 : i32
    %2593 = tpu.dynamic_rotate %2525 by %c124_i32_192 dim 1 : vector<8x128xf32>, i32 -> vector<8x128xf32>
    %c76 = arith.constant 76 : index
    %2594 = memref.load %arg2[%c76] : memref<784xf32, #tpu.memory_space<smem>>
    %2595 = vector.broadcast %2594 : f32 to vector<8x128xf32>
    %2596 = arith.mulf %2595, %2593 : vector<8x128xf32>
    %2597 = arith.addf %2580, %2596 : vector<8x128xf32>
    %c77 = arith.constant 77 : index
    %2598 = memref.load %arg2[%c77] : memref<784xf32, #tpu.memory_space<smem>>
    %2599 = vector.broadcast %2598 : f32 to vector<8x128xf32>
    %2600 = arith.mulf %2599, %2593 : vector<8x128xf32>
    %2601 = arith.addf %2584, %2600 : vector<8x128xf32>
    %c78 = arith.constant 78 : index
    %2602 = memref.load %arg2[%c78] : memref<784xf32, #tpu.memory_space<smem>>
    %2603 = vector.broadcast %2602 : f32 to vector<8x128xf32>
    %2604 = arith.mulf %2603, %2593 : vector<8x128xf32>
    %2605 = arith.addf %2588, %2604 : vector<8x128xf32>
    %c79 = arith.constant 79 : index
    %2606 = memref.load %arg2[%c79] : memref<784xf32, #tpu.memory_space<smem>>
    %2607 = vector.broadcast %2606 : f32 to vector<8x128xf32>
    %2608 = arith.mulf %2607, %2593 : vector<8x128xf32>
    %2609 = arith.addf %2592, %2608 : vector<8x128xf32>
    %c123_i32_193 = arith.constant 123 : i32
    %2610 = tpu.dynamic_rotate %2525 by %c123_i32_193 dim 1 : vector<8x128xf32>, i32 -> vector<8x128xf32>
    %c92 = arith.constant 92 : index
    %2611 = memref.load %arg2[%c92] : memref<784xf32, #tpu.memory_space<smem>>
    %2612 = vector.broadcast %2611 : f32 to vector<8x128xf32>
    %2613 = arith.mulf %2612, %2610 : vector<8x128xf32>
    %2614 = arith.addf %2597, %2613 : vector<8x128xf32>
    %c93 = arith.constant 93 : index
    %2615 = memref.load %arg2[%c93] : memref<784xf32, #tpu.memory_space<smem>>
    %2616 = vector.broadcast %2615 : f32 to vector<8x128xf32>
    %2617 = arith.mulf %2616, %2610 : vector<8x128xf32>
    %2618 = arith.addf %2601, %2617 : vector<8x128xf32>
    %c94 = arith.constant 94 : index
    %2619 = memref.load %arg2[%c94] : memref<784xf32, #tpu.memory_space<smem>>
    %2620 = vector.broadcast %2619 : f32 to vector<8x128xf32>
    %2621 = arith.mulf %2620, %2610 : vector<8x128xf32>
    %2622 = arith.addf %2605, %2621 : vector<8x128xf32>
    %c95 = arith.constant 95 : index
    %2623 = memref.load %arg2[%c95] : memref<784xf32, #tpu.memory_space<smem>>
    %2624 = vector.broadcast %2623 : f32 to vector<8x128xf32>
    %2625 = arith.mulf %2624, %2610 : vector<8x128xf32>
    %2626 = arith.addf %2609, %2625 : vector<8x128xf32>
    %c122_i32_194 = arith.constant 122 : i32
    %2627 = tpu.dynamic_rotate %2525 by %c122_i32_194 dim 1 : vector<8x128xf32>, i32 -> vector<8x128xf32>
    %c108 = arith.constant 108 : index
    %2628 = memref.load %arg2[%c108] : memref<784xf32, #tpu.memory_space<smem>>
    %2629 = vector.broadcast %2628 : f32 to vector<8x128xf32>
    %2630 = arith.mulf %2629, %2627 : vector<8x128xf32>
    %2631 = arith.addf %2614, %2630 : vector<8x128xf32>
    %c109 = arith.constant 109 : index
    %2632 = memref.load %arg2[%c109] : memref<784xf32, #tpu.memory_space<smem>>
    %2633 = vector.broadcast %2632 : f32 to vector<8x128xf32>
    %2634 = arith.mulf %2633, %2627 : vector<8x128xf32>
    %2635 = arith.addf %2618, %2634 : vector<8x128xf32>
    %c110 = arith.constant 110 : index
    %2636 = memref.load %arg2[%c110] : memref<784xf32, #tpu.memory_space<smem>>
    %2637 = vector.broadcast %2636 : f32 to vector<8x128xf32>
    %2638 = arith.mulf %2637, %2627 : vector<8x128xf32>
    %2639 = arith.addf %2622, %2638 : vector<8x128xf32>
    %c111 = arith.constant 111 : index
    %2640 = memref.load %arg2[%c111] : memref<784xf32, #tpu.memory_space<smem>>
    %2641 = vector.broadcast %2640 : f32 to vector<8x128xf32>
    %2642 = arith.mulf %2641, %2627 : vector<8x128xf32>
    %2643 = arith.addf %2626, %2642 : vector<8x128xf32>
    %c3_195 = arith.constant 3 : index
    %c1_196 = arith.constant 1 : index
    %c0_197 = arith.constant 0 : index
    %2644 = vector.load %arg1[%c3_195, %c1_196, %c0_197] : memref<4x14x128xf32, #tpu.memory_space<vmem>>, vector<1x8x128xf32>
    %2645 = vector.shape_cast %2644 : vector<1x8x128xf32> to vector<8x128xf32>
    %c124 = arith.constant 124 : index
    %2646 = memref.load %arg2[%c124] : memref<784xf32, #tpu.memory_space<smem>>
    %2647 = vector.broadcast %2646 : f32 to vector<8x128xf32>
    %2648 = arith.mulf %2647, %2645 : vector<8x128xf32>
    %2649 = arith.addf %2631, %2648 : vector<8x128xf32>
    %c125 = arith.constant 125 : index
    %2650 = memref.load %arg2[%c125] : memref<784xf32, #tpu.memory_space<smem>>
    %2651 = vector.broadcast %2650 : f32 to vector<8x128xf32>
    %2652 = arith.mulf %2651, %2645 : vector<8x128xf32>
    %2653 = arith.addf %2635, %2652 : vector<8x128xf32>
    %c126 = arith.constant 126 : index
    %2654 = memref.load %arg2[%c126] : memref<784xf32, #tpu.memory_space<smem>>
    %2655 = vector.broadcast %2654 : f32 to vector<8x128xf32>
    %2656 = arith.mulf %2655, %2645 : vector<8x128xf32>
    %2657 = arith.addf %2639, %2656 : vector<8x128xf32>
    %c127 = arith.constant 127 : index
    %2658 = memref.load %arg2[%c127] : memref<784xf32, #tpu.memory_space<smem>>
    %2659 = vector.broadcast %2658 : f32 to vector<8x128xf32>
    %2660 = arith.mulf %2659, %2645 : vector<8x128xf32>
    %2661 = arith.addf %2643, %2660 : vector<8x128xf32>
    %c127_i32_198 = arith.constant 127 : i32
    %2662 = tpu.dynamic_rotate %2645 by %c127_i32_198 dim 1 : vector<8x128xf32>, i32 -> vector<8x128xf32>
    %c140 = arith.constant 140 : index
    %2663 = memref.load %arg2[%c140] : memref<784xf32, #tpu.memory_space<smem>>
    %2664 = vector.broadcast %2663 : f32 to vector<8x128xf32>
    %2665 = arith.mulf %2664, %2662 : vector<8x128xf32>
    %2666 = arith.addf %2649, %2665 : vector<8x128xf32>
    %c141 = arith.constant 141 : index
    %2667 = memref.load %arg2[%c141] : memref<784xf32, #tpu.memory_space<smem>>
    %2668 = vector.broadcast %2667 : f32 to vector<8x128xf32>
    %2669 = arith.mulf %2668, %2662 : vector<8x128xf32>
    %2670 = arith.addf %2653, %2669 : vector<8x128xf32>
    %c142 = arith.constant 142 : index
    %2671 = memref.load %arg2[%c142] : memref<784xf32, #tpu.memory_space<smem>>
    %2672 = vector.broadcast %2671 : f32 to vector<8x128xf32>
    %2673 = arith.mulf %2672, %2662 : vector<8x128xf32>
    %2674 = arith.addf %2657, %2673 : vector<8x128xf32>
    %c143 = arith.constant 143 : index
    %2675 = memref.load %arg2[%c143] : memref<784xf32, #tpu.memory_space<smem>>
    %2676 = vector.broadcast %2675 : f32 to vector<8x128xf32>
    %2677 = arith.mulf %2676, %2662 : vector<8x128xf32>
    %2678 = arith.addf %2661, %2677 : vector<8x128xf32>
    %c126_i32_199 = arith.constant 126 : i32
    %2679 = tpu.dynamic_rotate %2645 by %c126_i32_199 dim 1 : vector<8x128xf32>, i32 -> vector<8x128xf32>
    %c156 = arith.constant 156 : index
    %2680 = memref.load %arg2[%c156] : memref<784xf32, #tpu.memory_space<smem>>
    %2681 = vector.broadcast %2680 : f32 to vector<8x128xf32>
    %2682 = arith.mulf %2681, %2679 : vector<8x128xf32>
    %2683 = arith.addf %2666, %2682 : vector<8x128xf32>
    %c157 = arith.constant 157 : index
    %2684 = memref.load %arg2[%c157] : memref<784xf32, #tpu.memory_space<smem>>
    %2685 = vector.broadcast %2684 : f32 to vector<8x128xf32>
    %2686 = arith.mulf %2685, %2679 : vector<8x128xf32>
    %2687 = arith.addf %2670, %2686 : vector<8x128xf32>
    %c158 = arith.constant 158 : index
    %2688 = memref.load %arg2[%c158] : memref<784xf32, #tpu.memory_space<smem>>
    %2689 = vector.broadcast %2688 : f32 to vector<8x128xf32>
    %2690 = arith.mulf %2689, %2679 : vector<8x128xf32>
    %2691 = arith.addf %2674, %2690 : vector<8x128xf32>
    %c159 = arith.constant 159 : index
    %2692 = memref.load %arg2[%c159] : memref<784xf32, #tpu.memory_space<smem>>
    %2693 = vector.broadcast %2692 : f32 to vector<8x128xf32>
    %2694 = arith.mulf %2693, %2679 : vector<8x128xf32>
    %2695 = arith.addf %2678, %2694 : vector<8x128xf32>
    %c125_i32_200 = arith.constant 125 : i32
    %2696 = tpu.dynamic_rotate %2645 by %c125_i32_200 dim 1 : vector<8x128xf32>, i32 -> vector<8x128xf32>
    %c172 = arith.constant 172 : index
    %2697 = memref.load %arg2[%c172] : memref<784xf32, #tpu.memory_space<smem>>
    %2698 = vector.broadcast %2697 : f32 to vector<8x128xf32>
    %2699 = arith.mulf %2698, %2696 : vector<8x128xf32>
    %2700 = arith.addf %2683, %2699 : vector<8x128xf32>
    %c173 = arith.constant 173 : index
    %2701 = memref.load %arg2[%c173] : memref<784xf32, #tpu.memory_space<smem>>
    %2702 = vector.broadcast %2701 : f32 to vector<8x128xf32>
    %2703 = arith.mulf %2702, %2696 : vector<8x128xf32>
    %2704 = arith.addf %2687, %2703 : vector<8x128xf32>
    %c174 = arith.constant 174 : index
    %2705 = memref.load %arg2[%c174] : memref<784xf32, #tpu.memory_space<smem>>
    %2706 = vector.broadcast %2705 : f32 to vector<8x128xf32>
    %2707 = arith.mulf %2706, %2696 : vector<8x128xf32>
    %2708 = arith.addf %2691, %2707 : vector<8x128xf32>
    %c175 = arith.constant 175 : index
    %2709 = memref.load %arg2[%c175] : memref<784xf32, #tpu.memory_space<smem>>
    %2710 = vector.broadcast %2709 : f32 to vector<8x128xf32>
    %2711 = arith.mulf %2710, %2696 : vector<8x128xf32>
    %2712 = arith.addf %2695, %2711 : vector<8x128xf32>
    %c124_i32_201 = arith.constant 124 : i32
    %2713 = tpu.dynamic_rotate %2645 by %c124_i32_201 dim 1 : vector<8x128xf32>, i32 -> vector<8x128xf32>
    %c188 = arith.constant 188 : index
    %2714 = memref.load %arg2[%c188] : memref<784xf32, #tpu.memory_space<smem>>
    %2715 = vector.broadcast %2714 : f32 to vector<8x128xf32>
    %2716 = arith.mulf %2715, %2713 : vector<8x128xf32>
    %2717 = arith.addf %2700, %2716 : vector<8x128xf32>
    %c189 = arith.constant 189 : index
    %2718 = memref.load %arg2[%c189] : memref<784xf32, #tpu.memory_space<smem>>
    %2719 = vector.broadcast %2718 : f32 to vector<8x128xf32>
    %2720 = arith.mulf %2719, %2713 : vector<8x128xf32>
    %2721 = arith.addf %2704, %2720 : vector<8x128xf32>
    %c190 = arith.constant 190 : index
    %2722 = memref.load %arg2[%c190] : memref<784xf32, #tpu.memory_space<smem>>
    %2723 = vector.broadcast %2722 : f32 to vector<8x128xf32>
    %2724 = arith.mulf %2723, %2713 : vector<8x128xf32>
    %2725 = arith.addf %2708, %2724 : vector<8x128xf32>
    %c191 = arith.constant 191 : index
    %2726 = memref.load %arg2[%c191] : memref<784xf32, #tpu.memory_space<smem>>
    %2727 = vector.broadcast %2726 : f32 to vector<8x128xf32>
    %2728 = arith.mulf %2727, %2713 : vector<8x128xf32>
    %2729 = arith.addf %2712, %2728 : vector<8x128xf32>
    %c123_i32_202 = arith.constant 123 : i32
    %2730 = tpu.dynamic_rotate %2645 by %c123_i32_202 dim 1 : vector<8x128xf32>, i32 -> vector<8x128xf32>
    %c204 = arith.constant 204 : index
    %2731 = memref.load %arg2[%c204] : memref<784xf32, #tpu.memory_space<smem>>
    %2732 = vector.broadcast %2731 : f32 to vector<8x128xf32>
    %2733 = arith.mulf %2732, %2730 : vector<8x128xf32>
    %2734 = arith.addf %2717, %2733 : vector<8x128xf32>
    %c205 = arith.constant 205 : index
    %2735 = memref.load %arg2[%c205] : memref<784xf32, #tpu.memory_space<smem>>
    %2736 = vector.broadcast %2735 : f32 to vector<8x128xf32>
    %2737 = arith.mulf %2736, %2730 : vector<8x128xf32>
    %2738 = arith.addf %2721, %2737 : vector<8x128xf32>
    %c206 = arith.constant 206 : index
    %2739 = memref.load %arg2[%c206] : memref<784xf32, #tpu.memory_space<smem>>
    %2740 = vector.broadcast %2739 : f32 to vector<8x128xf32>
    %2741 = arith.mulf %2740, %2730 : vector<8x128xf32>
    %2742 = arith.addf %2725, %2741 : vector<8x128xf32>
    %c207 = arith.constant 207 : index
    %2743 = memref.load %arg2[%c207] : memref<784xf32, #tpu.memory_space<smem>>
    %2744 = vector.broadcast %2743 : f32 to vector<8x128xf32>
    %2745 = arith.mulf %2744, %2730 : vector<8x128xf32>
    %2746 = arith.addf %2729, %2745 : vector<8x128xf32>
    %c122_i32_203 = arith.constant 122 : i32
    %2747 = tpu.dynamic_rotate %2645 by %c122_i32_203 dim 1 : vector<8x128xf32>, i32 -> vector<8x128xf32>
    %c220 = arith.constant 220 : index
    %2748 = memref.load %arg2[%c220] : memref<784xf32, #tpu.memory_space<smem>>
    %2749 = vector.broadcast %2748 : f32 to vector<8x128xf32>
    %2750 = arith.mulf %2749, %2747 : vector<8x128xf32>
    %2751 = arith.addf %2734, %2750 : vector<8x128xf32>
    %c221 = arith.constant 221 : index
    %2752 = memref.load %arg2[%c221] : memref<784xf32, #tpu.memory_space<smem>>
    %2753 = vector.broadcast %2752 : f32 to vector<8x128xf32>
    %2754 = arith.mulf %2753, %2747 : vector<8x128xf32>
    %2755 = arith.addf %2738, %2754 : vector<8x128xf32>
    %c222 = arith.constant 222 : index
    %2756 = memref.load %arg2[%c222] : memref<784xf32, #tpu.memory_space<smem>>
    %2757 = vector.broadcast %2756 : f32 to vector<8x128xf32>
    %2758 = arith.mulf %2757, %2747 : vector<8x128xf32>
    %2759 = arith.addf %2742, %2758 : vector<8x128xf32>
    %c223 = arith.constant 223 : index
    %2760 = memref.load %arg2[%c223] : memref<784xf32, #tpu.memory_space<smem>>
    %2761 = vector.broadcast %2760 : f32 to vector<8x128xf32>
    %2762 = arith.mulf %2761, %2747 : vector<8x128xf32>
    %2763 = arith.addf %2746, %2762 : vector<8x128xf32>
    %c3_204 = arith.constant 3 : index
    %c2_205 = arith.constant 2 : index
    %c0_206 = arith.constant 0 : index
    %2764 = vector.load %arg1[%c3_204, %c2_205, %c0_206] : memref<4x14x128xf32, #tpu.memory_space<vmem>>, vector<1x8x128xf32>
    %2765 = vector.shape_cast %2764 : vector<1x8x128xf32> to vector<8x128xf32>
    %c236 = arith.constant 236 : index
    %2766 = memref.load %arg2[%c236] : memref<784xf32, #tpu.memory_space<smem>>
    %2767 = vector.broadcast %2766 : f32 to vector<8x128xf32>
    %2768 = arith.mulf %2767, %2765 : vector<8x128xf32>
    %2769 = arith.addf %2751, %2768 : vector<8x128xf32>
    %c237 = arith.constant 237 : index
    %2770 = memref.load %arg2[%c237] : memref<784xf32, #tpu.memory_space<smem>>
    %2771 = vector.broadcast %2770 : f32 to vector<8x128xf32>
    %2772 = arith.mulf %2771, %2765 : vector<8x128xf32>
    %2773 = arith.addf %2755, %2772 : vector<8x128xf32>
    %c238 = arith.constant 238 : index
    %2774 = memref.load %arg2[%c238] : memref<784xf32, #tpu.memory_space<smem>>
    %2775 = vector.broadcast %2774 : f32 to vector<8x128xf32>
    %2776 = arith.mulf %2775, %2765 : vector<8x128xf32>
    %2777 = arith.addf %2759, %2776 : vector<8x128xf32>
    %c239 = arith.constant 239 : index
    %2778 = memref.load %arg2[%c239] : memref<784xf32, #tpu.memory_space<smem>>
    %2779 = vector.broadcast %2778 : f32 to vector<8x128xf32>
    %2780 = arith.mulf %2779, %2765 : vector<8x128xf32>
    %2781 = arith.addf %2763, %2780 : vector<8x128xf32>
    %c127_i32_207 = arith.constant 127 : i32
    %2782 = tpu.dynamic_rotate %2765 by %c127_i32_207 dim 1 : vector<8x128xf32>, i32 -> vector<8x128xf32>
    %c252 = arith.constant 252 : index
    %2783 = memref.load %arg2[%c252] : memref<784xf32, #tpu.memory_space<smem>>
    %2784 = vector.broadcast %2783 : f32 to vector<8x128xf32>
    %2785 = arith.mulf %2784, %2782 : vector<8x128xf32>
    %2786 = arith.addf %2769, %2785 : vector<8x128xf32>
    %c253 = arith.constant 253 : index
    %2787 = memref.load %arg2[%c253] : memref<784xf32, #tpu.memory_space<smem>>
    %2788 = vector.broadcast %2787 : f32 to vector<8x128xf32>
    %2789 = arith.mulf %2788, %2782 : vector<8x128xf32>
    %2790 = arith.addf %2773, %2789 : vector<8x128xf32>
    %c254 = arith.constant 254 : index
    %2791 = memref.load %arg2[%c254] : memref<784xf32, #tpu.memory_space<smem>>
    %2792 = vector.broadcast %2791 : f32 to vector<8x128xf32>
    %2793 = arith.mulf %2792, %2782 : vector<8x128xf32>
    %2794 = arith.addf %2777, %2793 : vector<8x128xf32>
    %c255 = arith.constant 255 : index
    %2795 = memref.load %arg2[%c255] : memref<784xf32, #tpu.memory_space<smem>>
    %2796 = vector.broadcast %2795 : f32 to vector<8x128xf32>
    %2797 = arith.mulf %2796, %2782 : vector<8x128xf32>
    %2798 = arith.addf %2781, %2797 : vector<8x128xf32>
    %c126_i32_208 = arith.constant 126 : i32
    %2799 = tpu.dynamic_rotate %2765 by %c126_i32_208 dim 1 : vector<8x128xf32>, i32 -> vector<8x128xf32>
    %c268 = arith.constant 268 : index
    %2800 = memref.load %arg2[%c268] : memref<784xf32, #tpu.memory_space<smem>>
    %2801 = vector.broadcast %2800 : f32 to vector<8x128xf32>
    %2802 = arith.mulf %2801, %2799 : vector<8x128xf32>
    %2803 = arith.addf %2786, %2802 : vector<8x128xf32>
    %c269 = arith.constant 269 : index
    %2804 = memref.load %arg2[%c269] : memref<784xf32, #tpu.memory_space<smem>>
    %2805 = vector.broadcast %2804 : f32 to vector<8x128xf32>
    %2806 = arith.mulf %2805, %2799 : vector<8x128xf32>
    %2807 = arith.addf %2790, %2806 : vector<8x128xf32>
    %c270 = arith.constant 270 : index
    %2808 = memref.load %arg2[%c270] : memref<784xf32, #tpu.memory_space<smem>>
    %2809 = vector.broadcast %2808 : f32 to vector<8x128xf32>
    %2810 = arith.mulf %2809, %2799 : vector<8x128xf32>
    %2811 = arith.addf %2794, %2810 : vector<8x128xf32>
    %c271 = arith.constant 271 : index
    %2812 = memref.load %arg2[%c271] : memref<784xf32, #tpu.memory_space<smem>>
    %2813 = vector.broadcast %2812 : f32 to vector<8x128xf32>
    %2814 = arith.mulf %2813, %2799 : vector<8x128xf32>
    %2815 = arith.addf %2798, %2814 : vector<8x128xf32>
    %c125_i32_209 = arith.constant 125 : i32
    %2816 = tpu.dynamic_rotate %2765 by %c125_i32_209 dim 1 : vector<8x128xf32>, i32 -> vector<8x128xf32>
    %c284 = arith.constant 284 : index
    %2817 = memref.load %arg2[%c284] : memref<784xf32, #tpu.memory_space<smem>>
    %2818 = vector.broadcast %2817 : f32 to vector<8x128xf32>
    %2819 = arith.mulf %2818, %2816 : vector<8x128xf32>
    %2820 = arith.addf %2803, %2819 : vector<8x128xf32>
    %c285 = arith.constant 285 : index
    %2821 = memref.load %arg2[%c285] : memref<784xf32, #tpu.memory_space<smem>>
    %2822 = vector.broadcast %2821 : f32 to vector<8x128xf32>
    %2823 = arith.mulf %2822, %2816 : vector<8x128xf32>
    %2824 = arith.addf %2807, %2823 : vector<8x128xf32>
    %c286 = arith.constant 286 : index
    %2825 = memref.load %arg2[%c286] : memref<784xf32, #tpu.memory_space<smem>>
    %2826 = vector.broadcast %2825 : f32 to vector<8x128xf32>
    %2827 = arith.mulf %2826, %2816 : vector<8x128xf32>
    %2828 = arith.addf %2811, %2827 : vector<8x128xf32>
    %c287 = arith.constant 287 : index
    %2829 = memref.load %arg2[%c287] : memref<784xf32, #tpu.memory_space<smem>>
    %2830 = vector.broadcast %2829 : f32 to vector<8x128xf32>
    %2831 = arith.mulf %2830, %2816 : vector<8x128xf32>
    %2832 = arith.addf %2815, %2831 : vector<8x128xf32>
    %c124_i32_210 = arith.constant 124 : i32
    %2833 = tpu.dynamic_rotate %2765 by %c124_i32_210 dim 1 : vector<8x128xf32>, i32 -> vector<8x128xf32>
    %c300 = arith.constant 300 : index
    %2834 = memref.load %arg2[%c300] : memref<784xf32, #tpu.memory_space<smem>>
    %2835 = vector.broadcast %2834 : f32 to vector<8x128xf32>
    %2836 = arith.mulf %2835, %2833 : vector<8x128xf32>
    %2837 = arith.addf %2820, %2836 : vector<8x128xf32>
    %c301 = arith.constant 301 : index
    %2838 = memref.load %arg2[%c301] : memref<784xf32, #tpu.memory_space<smem>>
    %2839 = vector.broadcast %2838 : f32 to vector<8x128xf32>
    %2840 = arith.mulf %2839, %2833 : vector<8x128xf32>
    %2841 = arith.addf %2824, %2840 : vector<8x128xf32>
    %c302 = arith.constant 302 : index
    %2842 = memref.load %arg2[%c302] : memref<784xf32, #tpu.memory_space<smem>>
    %2843 = vector.broadcast %2842 : f32 to vector<8x128xf32>
    %2844 = arith.mulf %2843, %2833 : vector<8x128xf32>
    %2845 = arith.addf %2828, %2844 : vector<8x128xf32>
    %c303 = arith.constant 303 : index
    %2846 = memref.load %arg2[%c303] : memref<784xf32, #tpu.memory_space<smem>>
    %2847 = vector.broadcast %2846 : f32 to vector<8x128xf32>
    %2848 = arith.mulf %2847, %2833 : vector<8x128xf32>
    %2849 = arith.addf %2832, %2848 : vector<8x128xf32>
    %c123_i32_211 = arith.constant 123 : i32
    %2850 = tpu.dynamic_rotate %2765 by %c123_i32_211 dim 1 : vector<8x128xf32>, i32 -> vector<8x128xf32>
    %c316 = arith.constant 316 : index
    %2851 = memref.load %arg2[%c316] : memref<784xf32, #tpu.memory_space<smem>>
    %2852 = vector.broadcast %2851 : f32 to vector<8x128xf32>
    %2853 = arith.mulf %2852, %2850 : vector<8x128xf32>
    %2854 = arith.addf %2837, %2853 : vector<8x128xf32>
    %c317 = arith.constant 317 : index
    %2855 = memref.load %arg2[%c317] : memref<784xf32, #tpu.memory_space<smem>>
    %2856 = vector.broadcast %2855 : f32 to vector<8x128xf32>
    %2857 = arith.mulf %2856, %2850 : vector<8x128xf32>
    %2858 = arith.addf %2841, %2857 : vector<8x128xf32>
    %c318 = arith.constant 318 : index
    %2859 = memref.load %arg2[%c318] : memref<784xf32, #tpu.memory_space<smem>>
    %2860 = vector.broadcast %2859 : f32 to vector<8x128xf32>
    %2861 = arith.mulf %2860, %2850 : vector<8x128xf32>
    %2862 = arith.addf %2845, %2861 : vector<8x128xf32>
    %c319 = arith.constant 319 : index
    %2863 = memref.load %arg2[%c319] : memref<784xf32, #tpu.memory_space<smem>>
    %2864 = vector.broadcast %2863 : f32 to vector<8x128xf32>
    %2865 = arith.mulf %2864, %2850 : vector<8x128xf32>
    %2866 = arith.addf %2849, %2865 : vector<8x128xf32>
    %c122_i32_212 = arith.constant 122 : i32
    %2867 = tpu.dynamic_rotate %2765 by %c122_i32_212 dim 1 : vector<8x128xf32>, i32 -> vector<8x128xf32>
    %c332 = arith.constant 332 : index
    %2868 = memref.load %arg2[%c332] : memref<784xf32, #tpu.memory_space<smem>>
    %2869 = vector.broadcast %2868 : f32 to vector<8x128xf32>
    %2870 = arith.mulf %2869, %2867 : vector<8x128xf32>
    %2871 = arith.addf %2854, %2870 : vector<8x128xf32>
    %c333 = arith.constant 333 : index
    %2872 = memref.load %arg2[%c333] : memref<784xf32, #tpu.memory_space<smem>>
    %2873 = vector.broadcast %2872 : f32 to vector<8x128xf32>
    %2874 = arith.mulf %2873, %2867 : vector<8x128xf32>
    %2875 = arith.addf %2858, %2874 : vector<8x128xf32>
    %c334 = arith.constant 334 : index
    %2876 = memref.load %arg2[%c334] : memref<784xf32, #tpu.memory_space<smem>>
    %2877 = vector.broadcast %2876 : f32 to vector<8x128xf32>
    %2878 = arith.mulf %2877, %2867 : vector<8x128xf32>
    %2879 = arith.addf %2862, %2878 : vector<8x128xf32>
    %c335 = arith.constant 335 : index
    %2880 = memref.load %arg2[%c335] : memref<784xf32, #tpu.memory_space<smem>>
    %2881 = vector.broadcast %2880 : f32 to vector<8x128xf32>
    %2882 = arith.mulf %2881, %2867 : vector<8x128xf32>
    %2883 = arith.addf %2866, %2882 : vector<8x128xf32>
    %c3_213 = arith.constant 3 : index
    %c3_214 = arith.constant 3 : index
    %c0_215 = arith.constant 0 : index
    %2884 = vector.load %arg1[%c3_213, %c3_214, %c0_215] : memref<4x14x128xf32, #tpu.memory_space<vmem>>, vector<1x8x128xf32>
    %2885 = vector.shape_cast %2884 : vector<1x8x128xf32> to vector<8x128xf32>
    %c348 = arith.constant 348 : index
    %2886 = memref.load %arg2[%c348] : memref<784xf32, #tpu.memory_space<smem>>
    %2887 = vector.broadcast %2886 : f32 to vector<8x128xf32>
    %2888 = arith.mulf %2887, %2885 : vector<8x128xf32>
    %2889 = arith.addf %2871, %2888 : vector<8x128xf32>
    %c349 = arith.constant 349 : index
    %2890 = memref.load %arg2[%c349] : memref<784xf32, #tpu.memory_space<smem>>
    %2891 = vector.broadcast %2890 : f32 to vector<8x128xf32>
    %2892 = arith.mulf %2891, %2885 : vector<8x128xf32>
    %2893 = arith.addf %2875, %2892 : vector<8x128xf32>
    %c350 = arith.constant 350 : index
    %2894 = memref.load %arg2[%c350] : memref<784xf32, #tpu.memory_space<smem>>
    %2895 = vector.broadcast %2894 : f32 to vector<8x128xf32>
    %2896 = arith.mulf %2895, %2885 : vector<8x128xf32>
    %2897 = arith.addf %2879, %2896 : vector<8x128xf32>
    %c351 = arith.constant 351 : index
    %2898 = memref.load %arg2[%c351] : memref<784xf32, #tpu.memory_space<smem>>
    %2899 = vector.broadcast %2898 : f32 to vector<8x128xf32>
    %2900 = arith.mulf %2899, %2885 : vector<8x128xf32>
    %2901 = arith.addf %2883, %2900 : vector<8x128xf32>
    %c127_i32_216 = arith.constant 127 : i32
    %2902 = tpu.dynamic_rotate %2885 by %c127_i32_216 dim 1 : vector<8x128xf32>, i32 -> vector<8x128xf32>
    %c364 = arith.constant 364 : index
    %2903 = memref.load %arg2[%c364] : memref<784xf32, #tpu.memory_space<smem>>
    %2904 = vector.broadcast %2903 : f32 to vector<8x128xf32>
    %2905 = arith.mulf %2904, %2902 : vector<8x128xf32>
    %2906 = arith.addf %2889, %2905 : vector<8x128xf32>
    %c365 = arith.constant 365 : index
    %2907 = memref.load %arg2[%c365] : memref<784xf32, #tpu.memory_space<smem>>
    %2908 = vector.broadcast %2907 : f32 to vector<8x128xf32>
    %2909 = arith.mulf %2908, %2902 : vector<8x128xf32>
    %2910 = arith.addf %2893, %2909 : vector<8x128xf32>
    %c366 = arith.constant 366 : index
    %2911 = memref.load %arg2[%c366] : memref<784xf32, #tpu.memory_space<smem>>
    %2912 = vector.broadcast %2911 : f32 to vector<8x128xf32>
    %2913 = arith.mulf %2912, %2902 : vector<8x128xf32>
    %2914 = arith.addf %2897, %2913 : vector<8x128xf32>
    %c367 = arith.constant 367 : index
    %2915 = memref.load %arg2[%c367] : memref<784xf32, #tpu.memory_space<smem>>
    %2916 = vector.broadcast %2915 : f32 to vector<8x128xf32>
    %2917 = arith.mulf %2916, %2902 : vector<8x128xf32>
    %2918 = arith.addf %2901, %2917 : vector<8x128xf32>
    %c126_i32_217 = arith.constant 126 : i32
    %2919 = tpu.dynamic_rotate %2885 by %c126_i32_217 dim 1 : vector<8x128xf32>, i32 -> vector<8x128xf32>
    %c380 = arith.constant 380 : index
    %2920 = memref.load %arg2[%c380] : memref<784xf32, #tpu.memory_space<smem>>
    %2921 = vector.broadcast %2920 : f32 to vector<8x128xf32>
    %2922 = arith.mulf %2921, %2919 : vector<8x128xf32>
    %2923 = arith.addf %2906, %2922 : vector<8x128xf32>
    %c381 = arith.constant 381 : index
    %2924 = memref.load %arg2[%c381] : memref<784xf32, #tpu.memory_space<smem>>
    %2925 = vector.broadcast %2924 : f32 to vector<8x128xf32>
    %2926 = arith.mulf %2925, %2919 : vector<8x128xf32>
    %2927 = arith.addf %2910, %2926 : vector<8x128xf32>
    %c382 = arith.constant 382 : index
    %2928 = memref.load %arg2[%c382] : memref<784xf32, #tpu.memory_space<smem>>
    %2929 = vector.broadcast %2928 : f32 to vector<8x128xf32>
    %2930 = arith.mulf %2929, %2919 : vector<8x128xf32>
    %2931 = arith.addf %2914, %2930 : vector<8x128xf32>
    %c383 = arith.constant 383 : index
    %2932 = memref.load %arg2[%c383] : memref<784xf32, #tpu.memory_space<smem>>
    %2933 = vector.broadcast %2932 : f32 to vector<8x128xf32>
    %2934 = arith.mulf %2933, %2919 : vector<8x128xf32>
    %2935 = arith.addf %2918, %2934 : vector<8x128xf32>
    %c125_i32_218 = arith.constant 125 : i32
    %2936 = tpu.dynamic_rotate %2885 by %c125_i32_218 dim 1 : vector<8x128xf32>, i32 -> vector<8x128xf32>
    %c396 = arith.constant 396 : index
    %2937 = memref.load %arg2[%c396] : memref<784xf32, #tpu.memory_space<smem>>
    %2938 = vector.broadcast %2937 : f32 to vector<8x128xf32>
    %2939 = arith.mulf %2938, %2936 : vector<8x128xf32>
    %2940 = arith.addf %2923, %2939 : vector<8x128xf32>
    %c397 = arith.constant 397 : index
    %2941 = memref.load %arg2[%c397] : memref<784xf32, #tpu.memory_space<smem>>
    %2942 = vector.broadcast %2941 : f32 to vector<8x128xf32>
    %2943 = arith.mulf %2942, %2936 : vector<8x128xf32>
    %2944 = arith.addf %2927, %2943 : vector<8x128xf32>
    %c398 = arith.constant 398 : index
    %2945 = memref.load %arg2[%c398] : memref<784xf32, #tpu.memory_space<smem>>
    %2946 = vector.broadcast %2945 : f32 to vector<8x128xf32>
    %2947 = arith.mulf %2946, %2936 : vector<8x128xf32>
    %2948 = arith.addf %2931, %2947 : vector<8x128xf32>
    %c399 = arith.constant 399 : index
    %2949 = memref.load %arg2[%c399] : memref<784xf32, #tpu.memory_space<smem>>
    %2950 = vector.broadcast %2949 : f32 to vector<8x128xf32>
    %2951 = arith.mulf %2950, %2936 : vector<8x128xf32>
    %2952 = arith.addf %2935, %2951 : vector<8x128xf32>
    %c124_i32_219 = arith.constant 124 : i32
    %2953 = tpu.dynamic_rotate %2885 by %c124_i32_219 dim 1 : vector<8x128xf32>, i32 -> vector<8x128xf32>
    %c412 = arith.constant 412 : index
    %2954 = memref.load %arg2[%c412] : memref<784xf32, #tpu.memory_space<smem>>
    %2955 = vector.broadcast %2954 : f32 to vector<8x128xf32>
    %2956 = arith.mulf %2955, %2953 : vector<8x128xf32>
    %2957 = arith.addf %2940, %2956 : vector<8x128xf32>
    %c413 = arith.constant 413 : index
    %2958 = memref.load %arg2[%c413] : memref<784xf32, #tpu.memory_space<smem>>
    %2959 = vector.broadcast %2958 : f32 to vector<8x128xf32>
    %2960 = arith.mulf %2959, %2953 : vector<8x128xf32>
    %2961 = arith.addf %2944, %2960 : vector<8x128xf32>
    %c414 = arith.constant 414 : index
    %2962 = memref.load %arg2[%c414] : memref<784xf32, #tpu.memory_space<smem>>
    %2963 = vector.broadcast %2962 : f32 to vector<8x128xf32>
    %2964 = arith.mulf %2963, %2953 : vector<8x128xf32>
    %2965 = arith.addf %2948, %2964 : vector<8x128xf32>
    %c415 = arith.constant 415 : index
    %2966 = memref.load %arg2[%c415] : memref<784xf32, #tpu.memory_space<smem>>
    %2967 = vector.broadcast %2966 : f32 to vector<8x128xf32>
    %2968 = arith.mulf %2967, %2953 : vector<8x128xf32>
    %2969 = arith.addf %2952, %2968 : vector<8x128xf32>
    %c123_i32_220 = arith.constant 123 : i32
    %2970 = tpu.dynamic_rotate %2885 by %c123_i32_220 dim 1 : vector<8x128xf32>, i32 -> vector<8x128xf32>
    %c428 = arith.constant 428 : index
    %2971 = memref.load %arg2[%c428] : memref<784xf32, #tpu.memory_space<smem>>
    %2972 = vector.broadcast %2971 : f32 to vector<8x128xf32>
    %2973 = arith.mulf %2972, %2970 : vector<8x128xf32>
    %2974 = arith.addf %2957, %2973 : vector<8x128xf32>
    %c429 = arith.constant 429 : index
    %2975 = memref.load %arg2[%c429] : memref<784xf32, #tpu.memory_space<smem>>
    %2976 = vector.broadcast %2975 : f32 to vector<8x128xf32>
    %2977 = arith.mulf %2976, %2970 : vector<8x128xf32>
    %2978 = arith.addf %2961, %2977 : vector<8x128xf32>
    %c430 = arith.constant 430 : index
    %2979 = memref.load %arg2[%c430] : memref<784xf32, #tpu.memory_space<smem>>
    %2980 = vector.broadcast %2979 : f32 to vector<8x128xf32>
    %2981 = arith.mulf %2980, %2970 : vector<8x128xf32>
    %2982 = arith.addf %2965, %2981 : vector<8x128xf32>
    %c431 = arith.constant 431 : index
    %2983 = memref.load %arg2[%c431] : memref<784xf32, #tpu.memory_space<smem>>
    %2984 = vector.broadcast %2983 : f32 to vector<8x128xf32>
    %2985 = arith.mulf %2984, %2970 : vector<8x128xf32>
    %2986 = arith.addf %2969, %2985 : vector<8x128xf32>
    %c122_i32_221 = arith.constant 122 : i32
    %2987 = tpu.dynamic_rotate %2885 by %c122_i32_221 dim 1 : vector<8x128xf32>, i32 -> vector<8x128xf32>
    %c444 = arith.constant 444 : index
    %2988 = memref.load %arg2[%c444] : memref<784xf32, #tpu.memory_space<smem>>
    %2989 = vector.broadcast %2988 : f32 to vector<8x128xf32>
    %2990 = arith.mulf %2989, %2987 : vector<8x128xf32>
    %2991 = arith.addf %2974, %2990 : vector<8x128xf32>
    %c445 = arith.constant 445 : index
    %2992 = memref.load %arg2[%c445] : memref<784xf32, #tpu.memory_space<smem>>
    %2993 = vector.broadcast %2992 : f32 to vector<8x128xf32>
    %2994 = arith.mulf %2993, %2987 : vector<8x128xf32>
    %2995 = arith.addf %2978, %2994 : vector<8x128xf32>
    %c446 = arith.constant 446 : index
    %2996 = memref.load %arg2[%c446] : memref<784xf32, #tpu.memory_space<smem>>
    %2997 = vector.broadcast %2996 : f32 to vector<8x128xf32>
    %2998 = arith.mulf %2997, %2987 : vector<8x128xf32>
    %2999 = arith.addf %2982, %2998 : vector<8x128xf32>
    %c447 = arith.constant 447 : index
    %3000 = memref.load %arg2[%c447] : memref<784xf32, #tpu.memory_space<smem>>
    %3001 = vector.broadcast %3000 : f32 to vector<8x128xf32>
    %3002 = arith.mulf %3001, %2987 : vector<8x128xf32>
    %3003 = arith.addf %2986, %3002 : vector<8x128xf32>
    %c3_222 = arith.constant 3 : index
    %c4_223 = arith.constant 4 : index
    %c0_224 = arith.constant 0 : index
    %3004 = vector.load %arg1[%c3_222, %c4_223, %c0_224] : memref<4x14x128xf32, #tpu.memory_space<vmem>>, vector<1x8x128xf32>
    %3005 = vector.shape_cast %3004 : vector<1x8x128xf32> to vector<8x128xf32>
    %c460 = arith.constant 460 : index
    %3006 = memref.load %arg2[%c460] : memref<784xf32, #tpu.memory_space<smem>>
    %3007 = vector.broadcast %3006 : f32 to vector<8x128xf32>
    %3008 = arith.mulf %3007, %3005 : vector<8x128xf32>
    %3009 = arith.addf %2991, %3008 : vector<8x128xf32>
    %c461 = arith.constant 461 : index
    %3010 = memref.load %arg2[%c461] : memref<784xf32, #tpu.memory_space<smem>>
    %3011 = vector.broadcast %3010 : f32 to vector<8x128xf32>
    %3012 = arith.mulf %3011, %3005 : vector<8x128xf32>
    %3013 = arith.addf %2995, %3012 : vector<8x128xf32>
    %c462 = arith.constant 462 : index
    %3014 = memref.load %arg2[%c462] : memref<784xf32, #tpu.memory_space<smem>>
    %3015 = vector.broadcast %3014 : f32 to vector<8x128xf32>
    %3016 = arith.mulf %3015, %3005 : vector<8x128xf32>
    %3017 = arith.addf %2999, %3016 : vector<8x128xf32>
    %c463 = arith.constant 463 : index
    %3018 = memref.load %arg2[%c463] : memref<784xf32, #tpu.memory_space<smem>>
    %3019 = vector.broadcast %3018 : f32 to vector<8x128xf32>
    %3020 = arith.mulf %3019, %3005 : vector<8x128xf32>
    %3021 = arith.addf %3003, %3020 : vector<8x128xf32>
    %c127_i32_225 = arith.constant 127 : i32
    %3022 = tpu.dynamic_rotate %3005 by %c127_i32_225 dim 1 : vector<8x128xf32>, i32 -> vector<8x128xf32>
    %c476 = arith.constant 476 : index
    %3023 = memref.load %arg2[%c476] : memref<784xf32, #tpu.memory_space<smem>>
    %3024 = vector.broadcast %3023 : f32 to vector<8x128xf32>
    %3025 = arith.mulf %3024, %3022 : vector<8x128xf32>
    %3026 = arith.addf %3009, %3025 : vector<8x128xf32>
    %c477 = arith.constant 477 : index
    %3027 = memref.load %arg2[%c477] : memref<784xf32, #tpu.memory_space<smem>>
    %3028 = vector.broadcast %3027 : f32 to vector<8x128xf32>
    %3029 = arith.mulf %3028, %3022 : vector<8x128xf32>
    %3030 = arith.addf %3013, %3029 : vector<8x128xf32>
    %c478 = arith.constant 478 : index
    %3031 = memref.load %arg2[%c478] : memref<784xf32, #tpu.memory_space<smem>>
    %3032 = vector.broadcast %3031 : f32 to vector<8x128xf32>
    %3033 = arith.mulf %3032, %3022 : vector<8x128xf32>
    %3034 = arith.addf %3017, %3033 : vector<8x128xf32>
    %c479 = arith.constant 479 : index
    %3035 = memref.load %arg2[%c479] : memref<784xf32, #tpu.memory_space<smem>>
    %3036 = vector.broadcast %3035 : f32 to vector<8x128xf32>
    %3037 = arith.mulf %3036, %3022 : vector<8x128xf32>
    %3038 = arith.addf %3021, %3037 : vector<8x128xf32>
    %c126_i32_226 = arith.constant 126 : i32
    %3039 = tpu.dynamic_rotate %3005 by %c126_i32_226 dim 1 : vector<8x128xf32>, i32 -> vector<8x128xf32>
    %c492 = arith.constant 492 : index
    %3040 = memref.load %arg2[%c492] : memref<784xf32, #tpu.memory_space<smem>>
    %3041 = vector.broadcast %3040 : f32 to vector<8x128xf32>
    %3042 = arith.mulf %3041, %3039 : vector<8x128xf32>
    %3043 = arith.addf %3026, %3042 : vector<8x128xf32>
    %c493 = arith.constant 493 : index
    %3044 = memref.load %arg2[%c493] : memref<784xf32, #tpu.memory_space<smem>>
    %3045 = vector.broadcast %3044 : f32 to vector<8x128xf32>
    %3046 = arith.mulf %3045, %3039 : vector<8x128xf32>
    %3047 = arith.addf %3030, %3046 : vector<8x128xf32>
    %c494 = arith.constant 494 : index
    %3048 = memref.load %arg2[%c494] : memref<784xf32, #tpu.memory_space<smem>>
    %3049 = vector.broadcast %3048 : f32 to vector<8x128xf32>
    %3050 = arith.mulf %3049, %3039 : vector<8x128xf32>
    %3051 = arith.addf %3034, %3050 : vector<8x128xf32>
    %c495 = arith.constant 495 : index
    %3052 = memref.load %arg2[%c495] : memref<784xf32, #tpu.memory_space<smem>>
    %3053 = vector.broadcast %3052 : f32 to vector<8x128xf32>
    %3054 = arith.mulf %3053, %3039 : vector<8x128xf32>
    %3055 = arith.addf %3038, %3054 : vector<8x128xf32>
    %c125_i32_227 = arith.constant 125 : i32
    %3056 = tpu.dynamic_rotate %3005 by %c125_i32_227 dim 1 : vector<8x128xf32>, i32 -> vector<8x128xf32>
    %c508 = arith.constant 508 : index
    %3057 = memref.load %arg2[%c508] : memref<784xf32, #tpu.memory_space<smem>>
    %3058 = vector.broadcast %3057 : f32 to vector<8x128xf32>
    %3059 = arith.mulf %3058, %3056 : vector<8x128xf32>
    %3060 = arith.addf %3043, %3059 : vector<8x128xf32>
    %c509 = arith.constant 509 : index
    %3061 = memref.load %arg2[%c509] : memref<784xf32, #tpu.memory_space<smem>>
    %3062 = vector.broadcast %3061 : f32 to vector<8x128xf32>
    %3063 = arith.mulf %3062, %3056 : vector<8x128xf32>
    %3064 = arith.addf %3047, %3063 : vector<8x128xf32>
    %c510 = arith.constant 510 : index
    %3065 = memref.load %arg2[%c510] : memref<784xf32, #tpu.memory_space<smem>>
    %3066 = vector.broadcast %3065 : f32 to vector<8x128xf32>
    %3067 = arith.mulf %3066, %3056 : vector<8x128xf32>
    %3068 = arith.addf %3051, %3067 : vector<8x128xf32>
    %c511 = arith.constant 511 : index
    %3069 = memref.load %arg2[%c511] : memref<784xf32, #tpu.memory_space<smem>>
    %3070 = vector.broadcast %3069 : f32 to vector<8x128xf32>
    %3071 = arith.mulf %3070, %3056 : vector<8x128xf32>
    %3072 = arith.addf %3055, %3071 : vector<8x128xf32>
    %c124_i32_228 = arith.constant 124 : i32
    %3073 = tpu.dynamic_rotate %3005 by %c124_i32_228 dim 1 : vector<8x128xf32>, i32 -> vector<8x128xf32>
    %c524 = arith.constant 524 : index
    %3074 = memref.load %arg2[%c524] : memref<784xf32, #tpu.memory_space<smem>>
    %3075 = vector.broadcast %3074 : f32 to vector<8x128xf32>
    %3076 = arith.mulf %3075, %3073 : vector<8x128xf32>
    %3077 = arith.addf %3060, %3076 : vector<8x128xf32>
    %c525 = arith.constant 525 : index
    %3078 = memref.load %arg2[%c525] : memref<784xf32, #tpu.memory_space<smem>>
    %3079 = vector.broadcast %3078 : f32 to vector<8x128xf32>
    %3080 = arith.mulf %3079, %3073 : vector<8x128xf32>
    %3081 = arith.addf %3064, %3080 : vector<8x128xf32>
    %c526 = arith.constant 526 : index
    %3082 = memref.load %arg2[%c526] : memref<784xf32, #tpu.memory_space<smem>>
    %3083 = vector.broadcast %3082 : f32 to vector<8x128xf32>
    %3084 = arith.mulf %3083, %3073 : vector<8x128xf32>
    %3085 = arith.addf %3068, %3084 : vector<8x128xf32>
    %c527 = arith.constant 527 : index
    %3086 = memref.load %arg2[%c527] : memref<784xf32, #tpu.memory_space<smem>>
    %3087 = vector.broadcast %3086 : f32 to vector<8x128xf32>
    %3088 = arith.mulf %3087, %3073 : vector<8x128xf32>
    %3089 = arith.addf %3072, %3088 : vector<8x128xf32>
    %c123_i32_229 = arith.constant 123 : i32
    %3090 = tpu.dynamic_rotate %3005 by %c123_i32_229 dim 1 : vector<8x128xf32>, i32 -> vector<8x128xf32>
    %c540 = arith.constant 540 : index
    %3091 = memref.load %arg2[%c540] : memref<784xf32, #tpu.memory_space<smem>>
    %3092 = vector.broadcast %3091 : f32 to vector<8x128xf32>
    %3093 = arith.mulf %3092, %3090 : vector<8x128xf32>
    %3094 = arith.addf %3077, %3093 : vector<8x128xf32>
    %c541 = arith.constant 541 : index
    %3095 = memref.load %arg2[%c541] : memref<784xf32, #tpu.memory_space<smem>>
    %3096 = vector.broadcast %3095 : f32 to vector<8x128xf32>
    %3097 = arith.mulf %3096, %3090 : vector<8x128xf32>
    %3098 = arith.addf %3081, %3097 : vector<8x128xf32>
    %c542 = arith.constant 542 : index
    %3099 = memref.load %arg2[%c542] : memref<784xf32, #tpu.memory_space<smem>>
    %3100 = vector.broadcast %3099 : f32 to vector<8x128xf32>
    %3101 = arith.mulf %3100, %3090 : vector<8x128xf32>
    %3102 = arith.addf %3085, %3101 : vector<8x128xf32>
    %c543 = arith.constant 543 : index
    %3103 = memref.load %arg2[%c543] : memref<784xf32, #tpu.memory_space<smem>>
    %3104 = vector.broadcast %3103 : f32 to vector<8x128xf32>
    %3105 = arith.mulf %3104, %3090 : vector<8x128xf32>
    %3106 = arith.addf %3089, %3105 : vector<8x128xf32>
    %c122_i32_230 = arith.constant 122 : i32
    %3107 = tpu.dynamic_rotate %3005 by %c122_i32_230 dim 1 : vector<8x128xf32>, i32 -> vector<8x128xf32>
    %c556 = arith.constant 556 : index
    %3108 = memref.load %arg2[%c556] : memref<784xf32, #tpu.memory_space<smem>>
    %3109 = vector.broadcast %3108 : f32 to vector<8x128xf32>
    %3110 = arith.mulf %3109, %3107 : vector<8x128xf32>
    %3111 = arith.addf %3094, %3110 : vector<8x128xf32>
    %c557 = arith.constant 557 : index
    %3112 = memref.load %arg2[%c557] : memref<784xf32, #tpu.memory_space<smem>>
    %3113 = vector.broadcast %3112 : f32 to vector<8x128xf32>
    %3114 = arith.mulf %3113, %3107 : vector<8x128xf32>
    %3115 = arith.addf %3098, %3114 : vector<8x128xf32>
    %c558 = arith.constant 558 : index
    %3116 = memref.load %arg2[%c558] : memref<784xf32, #tpu.memory_space<smem>>
    %3117 = vector.broadcast %3116 : f32 to vector<8x128xf32>
    %3118 = arith.mulf %3117, %3107 : vector<8x128xf32>
    %3119 = arith.addf %3102, %3118 : vector<8x128xf32>
    %c559 = arith.constant 559 : index
    %3120 = memref.load %arg2[%c559] : memref<784xf32, #tpu.memory_space<smem>>
    %3121 = vector.broadcast %3120 : f32 to vector<8x128xf32>
    %3122 = arith.mulf %3121, %3107 : vector<8x128xf32>
    %3123 = arith.addf %3106, %3122 : vector<8x128xf32>
    %c3_231 = arith.constant 3 : index
    %c5_232 = arith.constant 5 : index
    %c0_233 = arith.constant 0 : index
    %3124 = vector.load %arg1[%c3_231, %c5_232, %c0_233] : memref<4x14x128xf32, #tpu.memory_space<vmem>>, vector<1x8x128xf32>
    %3125 = vector.shape_cast %3124 : vector<1x8x128xf32> to vector<8x128xf32>
    %c572 = arith.constant 572 : index
    %3126 = memref.load %arg2[%c572] : memref<784xf32, #tpu.memory_space<smem>>
    %3127 = vector.broadcast %3126 : f32 to vector<8x128xf32>
    %3128 = arith.mulf %3127, %3125 : vector<8x128xf32>
    %3129 = arith.addf %3111, %3128 : vector<8x128xf32>
    %c573 = arith.constant 573 : index
    %3130 = memref.load %arg2[%c573] : memref<784xf32, #tpu.memory_space<smem>>
    %3131 = vector.broadcast %3130 : f32 to vector<8x128xf32>
    %3132 = arith.mulf %3131, %3125 : vector<8x128xf32>
    %3133 = arith.addf %3115, %3132 : vector<8x128xf32>
    %c574 = arith.constant 574 : index
    %3134 = memref.load %arg2[%c574] : memref<784xf32, #tpu.memory_space<smem>>
    %3135 = vector.broadcast %3134 : f32 to vector<8x128xf32>
    %3136 = arith.mulf %3135, %3125 : vector<8x128xf32>
    %3137 = arith.addf %3119, %3136 : vector<8x128xf32>
    %c575 = arith.constant 575 : index
    %3138 = memref.load %arg2[%c575] : memref<784xf32, #tpu.memory_space<smem>>
    %3139 = vector.broadcast %3138 : f32 to vector<8x128xf32>
    %3140 = arith.mulf %3139, %3125 : vector<8x128xf32>
    %3141 = arith.addf %3123, %3140 : vector<8x128xf32>
    %c127_i32_234 = arith.constant 127 : i32
    %3142 = tpu.dynamic_rotate %3125 by %c127_i32_234 dim 1 : vector<8x128xf32>, i32 -> vector<8x128xf32>
    %c588 = arith.constant 588 : index
    %3143 = memref.load %arg2[%c588] : memref<784xf32, #tpu.memory_space<smem>>
    %3144 = vector.broadcast %3143 : f32 to vector<8x128xf32>
    %3145 = arith.mulf %3144, %3142 : vector<8x128xf32>
    %3146 = arith.addf %3129, %3145 : vector<8x128xf32>
    %c589 = arith.constant 589 : index
    %3147 = memref.load %arg2[%c589] : memref<784xf32, #tpu.memory_space<smem>>
    %3148 = vector.broadcast %3147 : f32 to vector<8x128xf32>
    %3149 = arith.mulf %3148, %3142 : vector<8x128xf32>
    %3150 = arith.addf %3133, %3149 : vector<8x128xf32>
    %c590 = arith.constant 590 : index
    %3151 = memref.load %arg2[%c590] : memref<784xf32, #tpu.memory_space<smem>>
    %3152 = vector.broadcast %3151 : f32 to vector<8x128xf32>
    %3153 = arith.mulf %3152, %3142 : vector<8x128xf32>
    %3154 = arith.addf %3137, %3153 : vector<8x128xf32>
    %c591 = arith.constant 591 : index
    %3155 = memref.load %arg2[%c591] : memref<784xf32, #tpu.memory_space<smem>>
    %3156 = vector.broadcast %3155 : f32 to vector<8x128xf32>
    %3157 = arith.mulf %3156, %3142 : vector<8x128xf32>
    %3158 = arith.addf %3141, %3157 : vector<8x128xf32>
    %c126_i32_235 = arith.constant 126 : i32
    %3159 = tpu.dynamic_rotate %3125 by %c126_i32_235 dim 1 : vector<8x128xf32>, i32 -> vector<8x128xf32>
    %c604 = arith.constant 604 : index
    %3160 = memref.load %arg2[%c604] : memref<784xf32, #tpu.memory_space<smem>>
    %3161 = vector.broadcast %3160 : f32 to vector<8x128xf32>
    %3162 = arith.mulf %3161, %3159 : vector<8x128xf32>
    %3163 = arith.addf %3146, %3162 : vector<8x128xf32>
    %c605 = arith.constant 605 : index
    %3164 = memref.load %arg2[%c605] : memref<784xf32, #tpu.memory_space<smem>>
    %3165 = vector.broadcast %3164 : f32 to vector<8x128xf32>
    %3166 = arith.mulf %3165, %3159 : vector<8x128xf32>
    %3167 = arith.addf %3150, %3166 : vector<8x128xf32>
    %c606 = arith.constant 606 : index
    %3168 = memref.load %arg2[%c606] : memref<784xf32, #tpu.memory_space<smem>>
    %3169 = vector.broadcast %3168 : f32 to vector<8x128xf32>
    %3170 = arith.mulf %3169, %3159 : vector<8x128xf32>
    %3171 = arith.addf %3154, %3170 : vector<8x128xf32>
    %c607 = arith.constant 607 : index
    %3172 = memref.load %arg2[%c607] : memref<784xf32, #tpu.memory_space<smem>>
    %3173 = vector.broadcast %3172 : f32 to vector<8x128xf32>
    %3174 = arith.mulf %3173, %3159 : vector<8x128xf32>
    %3175 = arith.addf %3158, %3174 : vector<8x128xf32>
    %c125_i32_236 = arith.constant 125 : i32
    %3176 = tpu.dynamic_rotate %3125 by %c125_i32_236 dim 1 : vector<8x128xf32>, i32 -> vector<8x128xf32>
    %c620 = arith.constant 620 : index
    %3177 = memref.load %arg2[%c620] : memref<784xf32, #tpu.memory_space<smem>>
    %3178 = vector.broadcast %3177 : f32 to vector<8x128xf32>
    %3179 = arith.mulf %3178, %3176 : vector<8x128xf32>
    %3180 = arith.addf %3163, %3179 : vector<8x128xf32>
    %c621 = arith.constant 621 : index
    %3181 = memref.load %arg2[%c621] : memref<784xf32, #tpu.memory_space<smem>>
    %3182 = vector.broadcast %3181 : f32 to vector<8x128xf32>
    %3183 = arith.mulf %3182, %3176 : vector<8x128xf32>
    %3184 = arith.addf %3167, %3183 : vector<8x128xf32>
    %c622 = arith.constant 622 : index
    %3185 = memref.load %arg2[%c622] : memref<784xf32, #tpu.memory_space<smem>>
    %3186 = vector.broadcast %3185 : f32 to vector<8x128xf32>
    %3187 = arith.mulf %3186, %3176 : vector<8x128xf32>
    %3188 = arith.addf %3171, %3187 : vector<8x128xf32>
    %c623 = arith.constant 623 : index
    %3189 = memref.load %arg2[%c623] : memref<784xf32, #tpu.memory_space<smem>>
    %3190 = vector.broadcast %3189 : f32 to vector<8x128xf32>
    %3191 = arith.mulf %3190, %3176 : vector<8x128xf32>
    %3192 = arith.addf %3175, %3191 : vector<8x128xf32>
    %c124_i32_237 = arith.constant 124 : i32
    %3193 = tpu.dynamic_rotate %3125 by %c124_i32_237 dim 1 : vector<8x128xf32>, i32 -> vector<8x128xf32>
    %c636 = arith.constant 636 : index
    %3194 = memref.load %arg2[%c636] : memref<784xf32, #tpu.memory_space<smem>>
    %3195 = vector.broadcast %3194 : f32 to vector<8x128xf32>
    %3196 = arith.mulf %3195, %3193 : vector<8x128xf32>
    %3197 = arith.addf %3180, %3196 : vector<8x128xf32>
    %c637 = arith.constant 637 : index
    %3198 = memref.load %arg2[%c637] : memref<784xf32, #tpu.memory_space<smem>>
    %3199 = vector.broadcast %3198 : f32 to vector<8x128xf32>
    %3200 = arith.mulf %3199, %3193 : vector<8x128xf32>
    %3201 = arith.addf %3184, %3200 : vector<8x128xf32>
    %c638 = arith.constant 638 : index
    %3202 = memref.load %arg2[%c638] : memref<784xf32, #tpu.memory_space<smem>>
    %3203 = vector.broadcast %3202 : f32 to vector<8x128xf32>
    %3204 = arith.mulf %3203, %3193 : vector<8x128xf32>
    %3205 = arith.addf %3188, %3204 : vector<8x128xf32>
    %c639 = arith.constant 639 : index
    %3206 = memref.load %arg2[%c639] : memref<784xf32, #tpu.memory_space<smem>>
    %3207 = vector.broadcast %3206 : f32 to vector<8x128xf32>
    %3208 = arith.mulf %3207, %3193 : vector<8x128xf32>
    %3209 = arith.addf %3192, %3208 : vector<8x128xf32>
    %c123_i32_238 = arith.constant 123 : i32
    %3210 = tpu.dynamic_rotate %3125 by %c123_i32_238 dim 1 : vector<8x128xf32>, i32 -> vector<8x128xf32>
    %c652 = arith.constant 652 : index
    %3211 = memref.load %arg2[%c652] : memref<784xf32, #tpu.memory_space<smem>>
    %3212 = vector.broadcast %3211 : f32 to vector<8x128xf32>
    %3213 = arith.mulf %3212, %3210 : vector<8x128xf32>
    %3214 = arith.addf %3197, %3213 : vector<8x128xf32>
    %c653 = arith.constant 653 : index
    %3215 = memref.load %arg2[%c653] : memref<784xf32, #tpu.memory_space<smem>>
    %3216 = vector.broadcast %3215 : f32 to vector<8x128xf32>
    %3217 = arith.mulf %3216, %3210 : vector<8x128xf32>
    %3218 = arith.addf %3201, %3217 : vector<8x128xf32>
    %c654 = arith.constant 654 : index
    %3219 = memref.load %arg2[%c654] : memref<784xf32, #tpu.memory_space<smem>>
    %3220 = vector.broadcast %3219 : f32 to vector<8x128xf32>
    %3221 = arith.mulf %3220, %3210 : vector<8x128xf32>
    %3222 = arith.addf %3205, %3221 : vector<8x128xf32>
    %c655 = arith.constant 655 : index
    %3223 = memref.load %arg2[%c655] : memref<784xf32, #tpu.memory_space<smem>>
    %3224 = vector.broadcast %3223 : f32 to vector<8x128xf32>
    %3225 = arith.mulf %3224, %3210 : vector<8x128xf32>
    %3226 = arith.addf %3209, %3225 : vector<8x128xf32>
    %c122_i32_239 = arith.constant 122 : i32
    %3227 = tpu.dynamic_rotate %3125 by %c122_i32_239 dim 1 : vector<8x128xf32>, i32 -> vector<8x128xf32>
    %c668 = arith.constant 668 : index
    %3228 = memref.load %arg2[%c668] : memref<784xf32, #tpu.memory_space<smem>>
    %3229 = vector.broadcast %3228 : f32 to vector<8x128xf32>
    %3230 = arith.mulf %3229, %3227 : vector<8x128xf32>
    %3231 = arith.addf %3214, %3230 : vector<8x128xf32>
    %c669 = arith.constant 669 : index
    %3232 = memref.load %arg2[%c669] : memref<784xf32, #tpu.memory_space<smem>>
    %3233 = vector.broadcast %3232 : f32 to vector<8x128xf32>
    %3234 = arith.mulf %3233, %3227 : vector<8x128xf32>
    %3235 = arith.addf %3218, %3234 : vector<8x128xf32>
    %c670 = arith.constant 670 : index
    %3236 = memref.load %arg2[%c670] : memref<784xf32, #tpu.memory_space<smem>>
    %3237 = vector.broadcast %3236 : f32 to vector<8x128xf32>
    %3238 = arith.mulf %3237, %3227 : vector<8x128xf32>
    %3239 = arith.addf %3222, %3238 : vector<8x128xf32>
    %c671 = arith.constant 671 : index
    %3240 = memref.load %arg2[%c671] : memref<784xf32, #tpu.memory_space<smem>>
    %3241 = vector.broadcast %3240 : f32 to vector<8x128xf32>
    %3242 = arith.mulf %3241, %3227 : vector<8x128xf32>
    %3243 = arith.addf %3226, %3242 : vector<8x128xf32>
    %c3_240 = arith.constant 3 : index
    %c6_241 = arith.constant 6 : index
    %c0_242 = arith.constant 0 : index
    %3244 = vector.load %arg1[%c3_240, %c6_241, %c0_242] : memref<4x14x128xf32, #tpu.memory_space<vmem>>, vector<1x8x128xf32>
    %3245 = vector.shape_cast %3244 : vector<1x8x128xf32> to vector<8x128xf32>
    %c684 = arith.constant 684 : index
    %3246 = memref.load %arg2[%c684] : memref<784xf32, #tpu.memory_space<smem>>
    %3247 = vector.broadcast %3246 : f32 to vector<8x128xf32>
    %3248 = arith.mulf %3247, %3245 : vector<8x128xf32>
    %3249 = arith.addf %3231, %3248 : vector<8x128xf32>
    %c685 = arith.constant 685 : index
    %3250 = memref.load %arg2[%c685] : memref<784xf32, #tpu.memory_space<smem>>
    %3251 = vector.broadcast %3250 : f32 to vector<8x128xf32>
    %3252 = arith.mulf %3251, %3245 : vector<8x128xf32>
    %3253 = arith.addf %3235, %3252 : vector<8x128xf32>
    %c686 = arith.constant 686 : index
    %3254 = memref.load %arg2[%c686] : memref<784xf32, #tpu.memory_space<smem>>
    %3255 = vector.broadcast %3254 : f32 to vector<8x128xf32>
    %3256 = arith.mulf %3255, %3245 : vector<8x128xf32>
    %3257 = arith.addf %3239, %3256 : vector<8x128xf32>
    %c687 = arith.constant 687 : index
    %3258 = memref.load %arg2[%c687] : memref<784xf32, #tpu.memory_space<smem>>
    %3259 = vector.broadcast %3258 : f32 to vector<8x128xf32>
    %3260 = arith.mulf %3259, %3245 : vector<8x128xf32>
    %3261 = arith.addf %3243, %3260 : vector<8x128xf32>
    %c127_i32_243 = arith.constant 127 : i32
    %3262 = tpu.dynamic_rotate %3245 by %c127_i32_243 dim 1 : vector<8x128xf32>, i32 -> vector<8x128xf32>
    %c700 = arith.constant 700 : index
    %3263 = memref.load %arg2[%c700] : memref<784xf32, #tpu.memory_space<smem>>
    %3264 = vector.broadcast %3263 : f32 to vector<8x128xf32>
    %3265 = arith.mulf %3264, %3262 : vector<8x128xf32>
    %3266 = arith.addf %3249, %3265 : vector<8x128xf32>
    %c701 = arith.constant 701 : index
    %3267 = memref.load %arg2[%c701] : memref<784xf32, #tpu.memory_space<smem>>
    %3268 = vector.broadcast %3267 : f32 to vector<8x128xf32>
    %3269 = arith.mulf %3268, %3262 : vector<8x128xf32>
    %3270 = arith.addf %3253, %3269 : vector<8x128xf32>
    %c702 = arith.constant 702 : index
    %3271 = memref.load %arg2[%c702] : memref<784xf32, #tpu.memory_space<smem>>
    %3272 = vector.broadcast %3271 : f32 to vector<8x128xf32>
    %3273 = arith.mulf %3272, %3262 : vector<8x128xf32>
    %3274 = arith.addf %3257, %3273 : vector<8x128xf32>
    %c703 = arith.constant 703 : index
    %3275 = memref.load %arg2[%c703] : memref<784xf32, #tpu.memory_space<smem>>
    %3276 = vector.broadcast %3275 : f32 to vector<8x128xf32>
    %3277 = arith.mulf %3276, %3262 : vector<8x128xf32>
    %3278 = arith.addf %3261, %3277 : vector<8x128xf32>
    %c126_i32_244 = arith.constant 126 : i32
    %3279 = tpu.dynamic_rotate %3245 by %c126_i32_244 dim 1 : vector<8x128xf32>, i32 -> vector<8x128xf32>
    %c716 = arith.constant 716 : index
    %3280 = memref.load %arg2[%c716] : memref<784xf32, #tpu.memory_space<smem>>
    %3281 = vector.broadcast %3280 : f32 to vector<8x128xf32>
    %3282 = arith.mulf %3281, %3279 : vector<8x128xf32>
    %3283 = arith.addf %3266, %3282 : vector<8x128xf32>
    %c717 = arith.constant 717 : index
    %3284 = memref.load %arg2[%c717] : memref<784xf32, #tpu.memory_space<smem>>
    %3285 = vector.broadcast %3284 : f32 to vector<8x128xf32>
    %3286 = arith.mulf %3285, %3279 : vector<8x128xf32>
    %3287 = arith.addf %3270, %3286 : vector<8x128xf32>
    %c718 = arith.constant 718 : index
    %3288 = memref.load %arg2[%c718] : memref<784xf32, #tpu.memory_space<smem>>
    %3289 = vector.broadcast %3288 : f32 to vector<8x128xf32>
    %3290 = arith.mulf %3289, %3279 : vector<8x128xf32>
    %3291 = arith.addf %3274, %3290 : vector<8x128xf32>
    %c719 = arith.constant 719 : index
    %3292 = memref.load %arg2[%c719] : memref<784xf32, #tpu.memory_space<smem>>
    %3293 = vector.broadcast %3292 : f32 to vector<8x128xf32>
    %3294 = arith.mulf %3293, %3279 : vector<8x128xf32>
    %3295 = arith.addf %3278, %3294 : vector<8x128xf32>
    %c125_i32_245 = arith.constant 125 : i32
    %3296 = tpu.dynamic_rotate %3245 by %c125_i32_245 dim 1 : vector<8x128xf32>, i32 -> vector<8x128xf32>
    %c732 = arith.constant 732 : index
    %3297 = memref.load %arg2[%c732] : memref<784xf32, #tpu.memory_space<smem>>
    %3298 = vector.broadcast %3297 : f32 to vector<8x128xf32>
    %3299 = arith.mulf %3298, %3296 : vector<8x128xf32>
    %3300 = arith.addf %3283, %3299 : vector<8x128xf32>
    %c733 = arith.constant 733 : index
    %3301 = memref.load %arg2[%c733] : memref<784xf32, #tpu.memory_space<smem>>
    %3302 = vector.broadcast %3301 : f32 to vector<8x128xf32>
    %3303 = arith.mulf %3302, %3296 : vector<8x128xf32>
    %3304 = arith.addf %3287, %3303 : vector<8x128xf32>
    %c734 = arith.constant 734 : index
    %3305 = memref.load %arg2[%c734] : memref<784xf32, #tpu.memory_space<smem>>
    %3306 = vector.broadcast %3305 : f32 to vector<8x128xf32>
    %3307 = arith.mulf %3306, %3296 : vector<8x128xf32>
    %3308 = arith.addf %3291, %3307 : vector<8x128xf32>
    %c735 = arith.constant 735 : index
    %3309 = memref.load %arg2[%c735] : memref<784xf32, #tpu.memory_space<smem>>
    %3310 = vector.broadcast %3309 : f32 to vector<8x128xf32>
    %3311 = arith.mulf %3310, %3296 : vector<8x128xf32>
    %3312 = arith.addf %3295, %3311 : vector<8x128xf32>
    %c124_i32_246 = arith.constant 124 : i32
    %3313 = tpu.dynamic_rotate %3245 by %c124_i32_246 dim 1 : vector<8x128xf32>, i32 -> vector<8x128xf32>
    %c748 = arith.constant 748 : index
    %3314 = memref.load %arg2[%c748] : memref<784xf32, #tpu.memory_space<smem>>
    %3315 = vector.broadcast %3314 : f32 to vector<8x128xf32>
    %3316 = arith.mulf %3315, %3313 : vector<8x128xf32>
    %3317 = arith.addf %3300, %3316 : vector<8x128xf32>
    %c749 = arith.constant 749 : index
    %3318 = memref.load %arg2[%c749] : memref<784xf32, #tpu.memory_space<smem>>
    %3319 = vector.broadcast %3318 : f32 to vector<8x128xf32>
    %3320 = arith.mulf %3319, %3313 : vector<8x128xf32>
    %3321 = arith.addf %3304, %3320 : vector<8x128xf32>
    %c750 = arith.constant 750 : index
    %3322 = memref.load %arg2[%c750] : memref<784xf32, #tpu.memory_space<smem>>
    %3323 = vector.broadcast %3322 : f32 to vector<8x128xf32>
    %3324 = arith.mulf %3323, %3313 : vector<8x128xf32>
    %3325 = arith.addf %3308, %3324 : vector<8x128xf32>
    %c751 = arith.constant 751 : index
    %3326 = memref.load %arg2[%c751] : memref<784xf32, #tpu.memory_space<smem>>
    %3327 = vector.broadcast %3326 : f32 to vector<8x128xf32>
    %3328 = arith.mulf %3327, %3313 : vector<8x128xf32>
    %3329 = arith.addf %3312, %3328 : vector<8x128xf32>
    %c123_i32_247 = arith.constant 123 : i32
    %3330 = tpu.dynamic_rotate %3245 by %c123_i32_247 dim 1 : vector<8x128xf32>, i32 -> vector<8x128xf32>
    %c764 = arith.constant 764 : index
    %3331 = memref.load %arg2[%c764] : memref<784xf32, #tpu.memory_space<smem>>
    %3332 = vector.broadcast %3331 : f32 to vector<8x128xf32>
    %3333 = arith.mulf %3332, %3330 : vector<8x128xf32>
    %3334 = arith.addf %3317, %3333 : vector<8x128xf32>
    %c765 = arith.constant 765 : index
    %3335 = memref.load %arg2[%c765] : memref<784xf32, #tpu.memory_space<smem>>
    %3336 = vector.broadcast %3335 : f32 to vector<8x128xf32>
    %3337 = arith.mulf %3336, %3330 : vector<8x128xf32>
    %3338 = arith.addf %3321, %3337 : vector<8x128xf32>
    %c766 = arith.constant 766 : index
    %3339 = memref.load %arg2[%c766] : memref<784xf32, #tpu.memory_space<smem>>
    %3340 = vector.broadcast %3339 : f32 to vector<8x128xf32>
    %3341 = arith.mulf %3340, %3330 : vector<8x128xf32>
    %3342 = arith.addf %3325, %3341 : vector<8x128xf32>
    %c767 = arith.constant 767 : index
    %3343 = memref.load %arg2[%c767] : memref<784xf32, #tpu.memory_space<smem>>
    %3344 = vector.broadcast %3343 : f32 to vector<8x128xf32>
    %3345 = arith.mulf %3344, %3330 : vector<8x128xf32>
    %3346 = arith.addf %3329, %3345 : vector<8x128xf32>
    %c122_i32_248 = arith.constant 122 : i32
    %3347 = tpu.dynamic_rotate %3245 by %c122_i32_248 dim 1 : vector<8x128xf32>, i32 -> vector<8x128xf32>
    %c780 = arith.constant 780 : index
    %3348 = memref.load %arg2[%c780] : memref<784xf32, #tpu.memory_space<smem>>
    %3349 = vector.broadcast %3348 : f32 to vector<8x128xf32>
    %3350 = arith.mulf %3349, %3347 : vector<8x128xf32>
    %3351 = arith.addf %3334, %3350 : vector<8x128xf32>
    %c781 = arith.constant 781 : index
    %3352 = memref.load %arg2[%c781] : memref<784xf32, #tpu.memory_space<smem>>
    %3353 = vector.broadcast %3352 : f32 to vector<8x128xf32>
    %3354 = arith.mulf %3353, %3347 : vector<8x128xf32>
    %3355 = arith.addf %3338, %3354 : vector<8x128xf32>
    %c782 = arith.constant 782 : index
    %3356 = memref.load %arg2[%c782] : memref<784xf32, #tpu.memory_space<smem>>
    %3357 = vector.broadcast %3356 : f32 to vector<8x128xf32>
    %3358 = arith.mulf %3357, %3347 : vector<8x128xf32>
    %3359 = arith.addf %3342, %3358 : vector<8x128xf32>
    %c783 = arith.constant 783 : index
    %3360 = memref.load %arg2[%c783] : memref<784xf32, #tpu.memory_space<smem>>
    %3361 = vector.broadcast %3360 : f32 to vector<8x128xf32>
    %3362 = arith.mulf %3361, %3347 : vector<8x128xf32>
    %3363 = arith.addf %3346, %3362 : vector<8x128xf32>
    %c0_249 = arith.constant 0 : index
    %c0_250 = arith.constant 0 : index
    %c0_251 = arith.constant 0 : index
    %3364 = vector.load %arg3[%c0_249, %c0_250, %c0_251] : memref<4x8x128xf32, #tpu.memory_space<vmem>>, vector<1x8x128xf32>
    %3365 = vector.shape_cast %3364 : vector<1x8x128xf32> to vector<8x128xf32>
    %3366 = vector.shape_cast %3351 : vector<8x128xf32> to vector<1x8x128xf32>
    tpu.vector_store %arg3[%c0_249, %c0_250, %c0_251], %3366 {strides = array<i32>} : memref<4x8x128xf32, #tpu.memory_space<vmem>>, vector<1x8x128xf32>,
    %c1_252 = arith.constant 1 : index
    %c0_253 = arith.constant 0 : index
    %c0_254 = arith.constant 0 : index
    %3367 = vector.load %arg3[%c1_252, %c0_253, %c0_254] : memref<4x8x128xf32, #tpu.memory_space<vmem>>, vector<1x8x128xf32>
    %3368 = vector.shape_cast %3367 : vector<1x8x128xf32> to vector<8x128xf32>
    %3369 = vector.shape_cast %3355 : vector<8x128xf32> to vector<1x8x128xf32>
    tpu.vector_store %arg3[%c1_252, %c0_253, %c0_254], %3369 {strides = array<i32>} : memref<4x8x128xf32, #tpu.memory_space<vmem>>, vector<1x8x128xf32>,
    %c2_255 = arith.constant 2 : index
    %c0_256 = arith.constant 0 : index
    %c0_257 = arith.constant 0 : index
    %3370 = vector.load %arg3[%c2_255, %c0_256, %c0_257] : memref<4x8x128xf32, #tpu.memory_space<vmem>>, vector<1x8x128xf32>
    %3371 = vector.shape_cast %3370 : vector<1x8x128xf32> to vector<8x128xf32>
    %3372 = vector.shape_cast %3359 : vector<8x128xf32> to vector<1x8x128xf32>
    tpu.vector_store %arg3[%c2_255, %c0_256, %c0_257], %3372 {strides = array<i32>} : memref<4x8x128xf32, #tpu.memory_space<vmem>>, vector<1x8x128xf32>,
    %c3_258 = arith.constant 3 : index
    %c0_259 = arith.constant 0 : index
    %c0_260 = arith.constant 0 : index
    %3373 = vector.load %arg3[%c3_258, %c0_259, %c0_260] : memref<4x8x128xf32, #tpu.memory_space<vmem>>, vector<1x8x128xf32>
    %3374 = vector.shape_cast %3373 : vector<1x8x128xf32> to vector<8x128xf32>
    %3375 = vector.shape_cast %3363 : vector<8x128xf32> to vector<1x8x128xf32>
    tpu.vector_store %arg3[%c3_258, %c0_259, %c0_260], %3375 {strides = array<i32>} : memref<4x8x128xf32, #tpu.memory_space<vmem>>, vector<1x8x128xf32>,
    return
  }
  func.func @transform_0(%arg0: i32) -> (i32, i32, i32) {
    %c0_i32 = arith.constant 0 : i32
    %c0_i32_0 = arith.constant 0 : i32
    %c0_i32_1 = arith.constant 0 : i32
    return %c0_i32, %c0_i32_0, %arg0 : i32, i32, i32
  }
  func.func @transform_1(%arg0: i32) -> i32 {
    %c0_i32 = arith.constant 0 : i32
    %c0_i32_0 = arith.constant 0 : i32
    return %c0_i32 : i32
  }
  func.func @transform_2(%arg0: i32) -> (i32, i32, i32) {
    %c0_i32 = arith.constant 0 : i32
    %c0_i32_0 = arith.constant 0 : i32
    %c0_i32_1 = arith.constant 0 : i32
    return %c0_i32, %c0_i32_0, %arg0 : i32, i32, i32
  }
}

</mosaic_0001>

<llo_original>
// kernel: multi_scale_conv.1
$region0: #{multi_scale_conv.1}
  #allocation0 [shape = 'u32[]', space=smem, size = 0x4, offset = 0x4, fixed_abs, tag = 'smem constant byte address 0x4 - core index']
  #allocation1 [shape = 'u32[144,128]{1,0:T(1,128)}', space=vmem, size = 0x12000, scoped, tag = 'internal scratch']
  %s0 = inlined_call_operand.vmem [shape: f32[4,14,256], index: 0, kind: input, shape index: {}]
  %s1 = inlined_call_operand.vmem [shape: f32[784], index: 1, kind: input, shape index: {}]
  %s2 = inlined_call_operand.vmem [shape: f32[4,8,256], index: 2, kind: output, shape index: {}]
  %s3 = sld [smem:[#allocation0]]
  $region117: #{multi_scale_conv.1} parent=0
    _
  %s5 = ssub.s32 1, %s3
  %s6 = scalar_select 0, %s5, %s3
  $region1: #{multi_scale_conv.1} parent=0
    #allocation2 [shape = 'u8[65536]{0}', space=vmem, size = 0x10000, scoped, tag = 'input window, operand 0']
    #allocation3 [shape = 'u8[3584]{0}', space=smem, size = 0xe00, scoped, tag = 'input window, operand 1, single buffered']
    #allocation4 [shape = 's32[2]{0}', space=sflag, size = 0x8, scoped, tag = 'scoped memory for multi_scale_conv.1']
    #allocation5 [shape = 'u8[32768]{0}', space=vmem, size = 0x8000, scoped, tag = 'output window, operand 0']
    %7 = vsyncpa [#allocation4], 0
    loop: start=0, step=1, limit=4
    $region2: #{multi_scale_conv.1} parent=1 // loop_pre_header
      _
    $region3: #{multi_scale_conv.1} parent=1 // loop_header
      %s9 = sphi 0, %s13
      %p10 = scmp.ge.s32.totalorder %s9, 4
      %s19 = sphi 0, %s21
      %s22 = sphi 0, %s19
      %s23 = sphi 0, %s22
      %s39 = sphi 0, %s23
      %s43 = sphi 0, %s43
      %s45 = sphi 0, %s43
      %s46 = sphi 0, %s45
      %s60 = sphi 0, %s46
      %s66 = sphi 0, %s68
      %s69 = sphi 0, %s66
      %s70 = sphi 0, %s69
      %s86 = sphi 0, %s70
    $region4: #{multi_scale_conv.1} parent=1 // loop_header_branch
      %12 = sbr.rel (%p10) target = $region8
    $region5: #{multi_scale_conv.1} parent=1 // loop_body
      %s14 = ssub.s32 %s9, 1
      %s15 = ssub.s32 %s9, 2
      %s16 = sadd.s32 %s9, 1
      %s17 = ssub.s32 %s9, %s16
      %p18 = scmp.eq.s32.totalorder %s17, 0
      %s20 = sadd.s32 %s19, 1
      %s21 = scalar_select %p18, %s19, %s20
      %p24 = pneg %p18
      %p25 = scmp.eq.s32.totalorder %s9, 1
      %p26 = por %p24, %p25
      %p27 = scmp.ne.s32.totalorder %s19, %s22
      %p28 = scmp.eq.s32.totalorder %s9, 0
      %p29 = por %p27, %p28
      %p30 = scmp.ne.s32.totalorder %s19, %s22
      %p31 = scmp.eq.s32.totalorder %s14, 1
      %p32 = por %p30, %p31
      %p33 = scmp.ne.s32.totalorder %s22, %s23
      %p34 = scmp.eq.s32.totalorder %s14, 0
      %p35 = por %p33, %p34
      %p36 = scmp.ne.s32.totalorder %s22, %s23
      %p37 = scmp.eq.s32.totalorder %s15, 1
      %p38 = por %p36, %p37
      %p40 = scmp.ne.s32.totalorder %s23, %s39
      %p41 = scmp.eq.s32.totalorder %s15, 0
      %p42 = por %p40, %p41
      %s44 = sadd.s32 %s43, 1
      %p47 = scmp.eq.s32.totalorder %s9, 1
      %p48 = scmp.ne.s32.totalorder %s43, %s45
      %p49 = scmp.eq.s32.totalorder %s9, 0
      %p50 = por %p48, %p49
      %p51 = scmp.ne.s32.totalorder %s43, %s45
      %p52 = scmp.eq.s32.totalorder %s14, 1
      %p53 = por %p51, %p52
      %p54 = scmp.ne.s32.totalorder %s45, %s46
      %p55 = scmp.eq.s32.totalorder %s14, 0
      %p56 = por %p54, %p55
      %p57 = scmp.ne.s32.totalorder %s45, %s46
      %p58 = scmp.eq.s32.totalorder %s15, 1
      %p59 = por %p57, %p58
      %p61 = scmp.ne.s32.totalorder %s46, %s60
      %p62 = scmp.eq.s32.totalorder %s15, 0
      %p63 = por %p61, %p62
      %s64 = ssub.s32 %s9, %s16
      %p65 = scmp.eq.s32.totalorder %s64, 0
      %s67 = sadd.s32 %s66, 1
      %s68 = scalar_select %p65, %s66, %s67
      %p71 = pneg %p65
      %p72 = scmp.eq.s32.totalorder %s9, 1
      %p73 = por %p71, %p72
      %p74 = scmp.ne.s32.totalorder %s66, %s69
      %p75 = scmp.eq.s32.totalorder %s9, 0
      %p76 = por %p74, %p75
      %p77 = scmp.ne.s32.totalorder %s66, %s69
      %p78 = scmp.eq.s32.totalorder %s14, 1
      %p79 = por %p77, %p78
      %p80 = scmp.ne.s32.totalorder %s69, %s70
      %p81 = scmp.eq.s32.totalorder %s14, 0
      %p82 = por %p80, %p81
      %p83 = scmp.ne.s32.totalorder %s69, %s70
      %p84 = scmp.eq.s32.totalorder %s15, 1
      %p85 = por %p83, %p84
      %p87 = scmp.ne.s32.totalorder %s70, %s86
      %p88 = scmp.eq.s32.totalorder %s15, 0
      %p89 = por %p87, %p88
      %p90 = scmp.le.s32.totalorder 1, %s9
      %p91 = scmp.lt.s32.totalorder %s9, 3
      %p92 = pnand %p90, %p91
      %p93 = pneg %p92
      // Predicated region
      $region9: #{multi_scale_conv.1} parent=5 // pred_check
        _
      $region10: #{multi_scale_conv.1} parent=5 // pred_check_branch
        %95 = sbr.rel (%p92) target = $region12
      $region11: #{multi_scale_conv.1} parent=5 // pred_region
        %s96 = ssub.s32 %s9, 1
        // Predicated region
        $region13: #{multi_scale_conv.1} parent=11 // pred_check
          %p97 = pneg %p56
        $region14: #{multi_scale_conv.1} parent=11 // pred_check_branch
          %99 = sbr.rel (%p97) target = $region16
        $region15: #{multi_scale_conv.1} parent=11 // pred_region
          %s101 = ssub.s32 112, 112
          %102 = vsyncadd [#allocation4], %s101
          %s104 = sshll.u32 %s1, 4
          %s105 = int_to_ptr.vmem [resolvable:$true] %s104
          %107 = dma.vmem_to_smem %s105, 112, [#allocation3], [#allocation4]
        $region16: #{multi_scale_conv.1} parent=11 // pred_fallthru
          _
      $region12: #{multi_scale_conv.1} parent=5 // pred_fallthru
        _
      %p108 = scmp.lt.s32.totalorder %s9, 2
      // Predicated region
      $region17: #{multi_scale_conv.1} parent=5 // pred_check
        %p109 = pneg %p108
      $region18: #{multi_scale_conv.1} parent=5 // pred_check_branch
        %111 = sbr.rel (%p109) target = $region20
      $region19: #{multi_scale_conv.1} parent=5 // pred_region
        // Predicated region
        $region21: #{multi_scale_conv.1} parent=19 // pred_check
          %p112 = pneg %p29
        $region22: #{multi_scale_conv.1} parent=19 // pred_check_branch
          %114 = sbr.rel (%p112) target = $region24
        $region23: #{multi_scale_conv.1} parent=19 // pred_region
          %s115 = sand.u32 %s19, 1
          %s116 = sand.u32 %s19, 1
          %s117 = smul.addr %s116, 64
          %s118 = scalar_lea.vmem [#allocation2], %s117
          %s119 = smul.addr %s9, 8
          %s120 = scalar_lea.vmem %s0, %s119
          // Predicated region
          $region25: #{multi_scale_conv.1} parent=23 // pred_check
            _
          $region26: #{multi_scale_conv.1} parent=23 // pred_check_branch
            %122 = sbr.rel (0) target = $region28
          $region27: #{multi_scale_conv.1} parent=23 // pred_region
            // Predicated region
            $region29: #{multi_scale_conv.1} parent=27 // pred_check
              _
            $region30: #{multi_scale_conv.1} parent=27 // pred_check_branch
              %124 = sbr.rel (0) target = $region32
            $region31: #{multi_scale_conv.1} parent=27 // pred_region
              // Predicated region
              $region44: #{multi_scale_conv.1} parent=31 // pred_check
                _
              $region45: #{multi_scale_conv.1} parent=31 // pred_check_branch
                %154 = sbr.rel (0) target = $region47
              $region46: #{multi_scale_conv.1} parent=31 // pred_region
                loop: start=0, step=1, limit=1
                $region48: #{multi_scale_conv.1} parent=46 // loop_pre_header
                  _
                $region49: #{multi_scale_conv.1} parent=46 // loop_header
                  %s156 = sphi 0, %s160
                  %p157 = scmp.ge.s32.totalorder %s156, 1
                  %s161 = sphi %s120, %s120
                  %s162 = sphi %s118, %s118
                $region50: #{multi_scale_conv.1} parent=46 // loop_header_branch
                  %159 = sbr.rel (%p157) target = $region54
                $region51: #{multi_scale_conv.1} parent=46 // loop_body
                  %v163 = vld [vmem:[%s161] sm:$0xff]
                  %164 = vst [vmem:[%s162] sm:$0xff] %v163
                  %v165 = vld [vmem:[%s161 + $0x10] sm:$0xff]
                  %166 = vst [vmem:[%s162 + $0x8] sm:$0xff] %v165
                  %v167 = vld [vmem:[%s161 + $0x20] sm:$0xff]
                  %168 = vst [vmem:[%s162 + $0x10] sm:$0xff] %v167
                  %v169 = vld [vmem:[%s161 + $0x30] sm:$0xff]
                  %170 = vst [vmem:[%s162 + $0x18] sm:$0xff] %v169
                  %v171 = vld [vmem:[%s161 + $0x40] sm:$0xff]
                  %172 = vst [vmem:[%s162 + $0x20] sm:$0xff] %v171
                  %v173 = vld [vmem:[%s161 + $0x50] sm:$0xff]
                  %174 = vst [vmem:[%s162 + $0x28] sm:$0xff] %v173
                  %v175 = vld [vmem:[%s161 + $0x60] sm:$0xff]
                  %176 = vst [vmem:[%s162 + $0x30] sm:$0xff] %v175
                  %v177 = vld [vmem:[%s161 + $0x70] sm:$0xff]
                  %178 = vst [vmem:[%s162 + $0x38] sm:$0xff] %v177
                $region52: #{multi_scale_conv.1} parent=46 // loop_footer
                  %s160 = sadd.s32 1, %s156
                $region53: #{multi_scale_conv.1} parent=46 // loop_footer_branch
                  %155 = sbr.rel target = $region49
                $region54: #{multi_scale_conv.1} parent=46 // loop_exit
                  _
              $region47: #{multi_scale_conv.1} parent=31 // pred_fallthru
                _
              // Predicated region
              $region55: #{multi_scale_conv.1} parent=31 // pred_check
                _
              $region56: #{multi_scale_conv.1} parent=31 // pred_check_branch
                %180 = sbr.rel target = $region58
              $region57: #{multi_scale_conv.1} parent=31 // pred_region
                _
              $region58: #{multi_scale_conv.1} parent=31 // pred_fallthru
                _
            $region32: #{multi_scale_conv.1} parent=27 // pred_fallthru
              _
            // Predicated region
            $region33: #{multi_scale_conv.1} parent=27 // pred_check
              _
            $region34: #{multi_scale_conv.1} parent=27 // pred_check_branch
              %126 = sbr.rel target = $region36
            $region35: #{multi_scale_conv.1} parent=27 // pred_region
              %s128 = ssub.s32 256, 1
              loop: start=0, step=1, limit=1
              $region37: #{multi_scale_conv.1} parent=35 // loop_pre_header
                _
              $region38: #{multi_scale_conv.1} parent=35 // loop_header
                %s130 = sphi 0, %s134
                %p131 = scmp.ge.s32.totalorder %s130, 1
                %s135 = sphi %s120, %s120
                %s136 = sphi %s118, %s118
              $region39: #{multi_scale_conv.1} parent=35 // loop_header_branch
                %133 = sbr.rel (%p131) target = $region43
              $region40: #{multi_scale_conv.1} parent=35 // loop_body
                %v137 = vld [vmem:[%s135] sm:%s128]
                %138 = vst [vmem:[%s136] sm:%s128] %v137
                %v139 = vld [vmem:[%s135 + $0x10] sm:%s128]
                %140 = vst [vmem:[%s136 + $0x8] sm:%s128] %v139
                %v141 = vld [vmem:[%s135 + $0x20] sm:%s128]
                %142 = vst [vmem:[%s136 + $0x10] sm:%s128] %v141
                %v143 = vld [vmem:[%s135 + $0x30] sm:%s128]
                %144 = vst [vmem:[%s136 + $0x18] sm:%s128] %v143
                %v145 = vld [vmem:[%s135 + $0x40] sm:%s128]
                %146 = vst [vmem:[%s136 + $0x20] sm:%s128] %v145
                %v147 = vld [vmem:[%s135 + $0x50] sm:%s128]
                %148 = vst [vmem:[%s136 + $0x28] sm:%s128] %v147
                %v149 = vld [vmem:[%s135 + $0x60] sm:%s128]
                %150 = vst [vmem:[%s136 + $0x30] sm:%s128] %v149
                %v151 = vld [vmem:[%s135 + $0x70] sm:%s128]
                %152 = vst [vmem:[%s136 + $0x38] sm:%s128] %v151
              $region41: #{multi_scale_conv.1} parent=35 // loop_footer
                %s134 = sadd.s32 1, %s130
              $region42: #{multi_scale_conv.1} parent=35 // loop_footer_branch
                %129 = sbr.rel target = $region38
              $region43: #{multi_scale_conv.1} parent=35 // loop_exit
                _
            $region36: #{multi_scale_conv.1} parent=27 // pred_fallthru
              _
          $region28: #{multi_scale_conv.1} parent=23 // pred_fallthru
            _
          %181 = vnop
        $region24: #{multi_scale_conv.1} parent=19 // pred_fallthru
          _
      $region20: #{multi_scale_conv.1} parent=5 // pred_fallthru
        _
      %p182 = scmp.le.s32.totalorder 1, %s9
      %p183 = scmp.lt.s32.totalorder %s9, 3
      %p184 = pnand %p182, %p183
      %p185 = pneg %p184
      // Predicated region
      $region59: #{multi_scale_conv.1} parent=5 // pred_check
        _
      $region60: #{multi_scale_conv.1} parent=5 // pred_check_branch
        %187 = sbr.rel (%p184) target = $region62
      $region61: #{multi_scale_conv.1} parent=5 // pred_region
        %s188 = ssub.s32 %s9, 1
        %s189 = sand.u32 %s22, 1
        %s190 = sand.u32 %s22, 1
        %s191 = smul.addr %s190, 64
        %s192 = scalar_lea.vmem [#allocation2], %s191
        // Predicated region
        $region63: #{multi_scale_conv.1} parent=61 // pred_check
          %p193 = pneg %p35
        $region64: #{multi_scale_conv.1} parent=61 // pred_check_branch
          %195 = sbr.rel (%p193) target = $region66
        $region65: #{multi_scale_conv.1} parent=61 // pred_region
          _
        $region66: #{multi_scale_conv.1} parent=61 // pred_fallthru
          _
        // Predicated region
        $region67: #{multi_scale_conv.1} parent=61 // pred_check
          %p196 = pneg %p56
        $region68: #{multi_scale_conv.1} parent=61 // pred_check_branch
          %198 = sbr.rel (%p196) target = $region70
        $region69: #{multi_scale_conv.1} parent=61 // pred_region
          %199 = dma.done [#allocation4], 112
        $region70: #{multi_scale_conv.1} parent=61 // pred_fallthru
          _
        %200 = sfence
        %s201 = sand.u32 %s22, 1
        %s202 = sand.u32 %s22, 1
        %s203 = smul.addr %s202, 64
        %s204 = scalar_lea.vmem [#allocation2], %s203
        %p205 = pneg %p35
        %p206 = pneg %p32
        %p207 = pneg %p56
        %p208 = pneg %p53
        %p209 = pneg %p82
        %p210 = pneg %p79
        %s211 = sand.u32 %s69, 1
        %s212 = sand.u32 %s69, 1
        %s213 = smul.addr %s212, 32
        %s214 = scalar_lea.vmem [#allocation5], %s213
        %v215 = vld [vmem:[%s192] sm:$0xff]
        %s216 = sld [smem:[#allocation3]]
        %v217 = vstv %s216
        %v218 = vmul.f32 %v217, %v215
        %v219 = vadd.f32 %v218, 0.0
        %s220 = sld [smem:[#allocation3 + $0x1]]
        %v221 = vstv %s220
        %v222 = vmul.f32 %v221, %v215
        %v223 = vadd.f32 %v222, 0.0
        %s224 = sld [smem:[#allocation3 + $0x2]]
        %v225 = vstv %s224
        %v226 = vmul.f32 %v225, %v215
        %v227 = vadd.f32 %v226, 0.0
        %s228 = sld [smem:[#allocation3 + $0x3]]
        %v229 = vstv %s228
        %v230 = vmul.f32 %v229, %v215
        %v231 = vadd.f32 %v230, 0.0
        %232 = vrot.lane.b32.xlu0 %v215, 127
        %v233 = vpop.permute.xlu0 %232
        %s234 = sld [smem:[#allocation3 + $0x10]]
        %v235 = vstv %s234
        %v236 = vmul.f32 %v235, %v233
        %v237 = vadd.f32 %v219, %v236
        %s238 = sld [smem:[#allocation3 + $0x11]]
        %v239 = vstv %s238
        %v240 = vmul.f32 %v239, %v233
        %v241 = vadd.f32 %v223, %v240
        %s242 = sld [smem:[#allocation3 + $0x12]]
        %v243 = vstv %s242
        %v244 = vmul.f32 %v243, %v233
        %v245 = vadd.f32 %v227, %v244
        %s246 = sld [smem:[#allocation3 + $0x13]]
        %v247 = vstv %s246
        %v248 = vmul.f32 %v247, %v233
        %v249 = vadd.f32 %v231, %v248
        %250 = vrot.lane.b32.xlu0 %v215, 126
        %v251 = vpop.permute.xlu0 %250
        %s252 = sld [smem:[#allocation3 + $0x20]]
        %v253 = vstv %s252
        %v254 = vmul.f32 %v253, %v251
        %v255 = vadd.f32 %v237, %v254
        %s256 = sld [smem:[#allocation3 + $0x21]]
        %v257 = vstv %s256
        %v258 = vmul.f32 %v257, %v251
        %v259 = vadd.f32 %v241, %v258
        %s260 = sld [smem:[#allocation3 + $0x22]]
        %v261 = vstv %s260
        %v262 = vmul.f32 %v261, %v251
        %v263 = vadd.f32 %v245, %v262
        %s264 = sld [smem:[#allocation3 + $0x23]]
        %v265 = vstv %s264
        %v266 = vmul.f32 %v265, %v251
        %v267 = vadd.f32 %v249, %v266
        %268 = vrot.lane.b32.xlu0 %v215, 125
        %v269 = vpop.permute.xlu0 %268
        %s270 = sld [smem:[#allocation3 + $0x30]]
        %v271 = vstv %s270
        %v272 = vmul.f32 %v271, %v269
        %v273 = vadd.f32 %v255, %v272
        %s274 = sld [smem:[#allocation3 + $0x31]]
        %v275 = vstv %s274
        %v276 = vmul.f32 %v275, %v269
        %v277 = vadd.f32 %v259, %v276
        %s278 = sld [smem:[#allocation3 + $0x32]]
        %v279 = vstv %s278
        %v280 = vmul.f32 %v279, %v269
        %v281 = vadd.f32 %v263, %v280
        %s282 = sld [smem:[#allocation3 + $0x33]]
        %v283 = vstv %s282
        %v284 = vmul.f32 %v283, %v269
        %v285 = vadd.f32 %v267, %v284
        %286 = vrot.lane.b32.xlu0 %v215, 124
        %v287 = vpop.permute.xlu0 %286
        %s288 = sld [smem:[#allocation3 + $0x40]]
        %v289 = vstv %s288
        %v290 = vmul.f32 %v289, %v287
        %v291 = vadd.f32 %v273, %v290
        %s292 = sld [smem:[#allocation3 + $0x41]]
        %v293 = vstv %s292
        %v294 = vmul.f32 %v293, %v287
        %v295 = vadd.f32 %v277, %v294
        %s296 = sld [smem:[#allocation3 + $0x42]]
        %v297 = vstv %s296
        %v298 = vmul.f32 %v297, %v287
        %v299 = vadd.f32 %v281, %v298
        %s300 = sld [smem:[#allocation3 + $0x43]]
        %v301 = vstv %s300
        %v302 = vmul.f32 %v301, %v287
        %v303 = vadd.f32 %v285, %v302
        %304 = vrot.lane.b32.xlu0 %v215, 123
        %v305 = vpop.permute.xlu0 %304
        %s306 = sld [smem:[#allocation3 + $0x50]]
        %v307 = vstv %s306
        %v308 = vmul.f32 %v307, %v305
        %v309 = vadd.f32 %v291, %v308
        %s310 = sld [smem:[#allocation3 + $0x51]]
        %v311 = vstv %s310
        %v312 = vmul.f32 %v311, %v305
        %v313 = vadd.f32 %v295, %v312
        %s314 = sld [smem:[#allocation3 + $0x52]]
        %v315 = vstv %s314
        %v316 = vmul.f32 %v315, %v305
        %v317 = vadd.f32 %v299, %v316
        %s318 = sld [smem:[#allocation3 + $0x53]]
        %v319 = vstv %s318
        %v320 = vmul.f32 %v319, %v305
        %v321 = vadd.f32 %v303, %v320
        %322 = vrot.lane.b32.xlu0 %v215, 122
        %v323 = vpop.permute.xlu0 %322
        %s324 = sld [smem:[#allocation3 + $0x60]]
        %v325 = vstv %s324
        %v326 = vmul.f32 %v325, %v323
        %v327 = vadd.f32 %v309, %v326
        %s328 = sld [smem:[#allocation3 + $0x61]]
        %v329 = vstv %s328
        %v330 = vmul.f32 %v329, %v323
        %v331 = vadd.f32 %v313, %v330
        %s332 = sld [smem:[#allocation3 + $0x62]]
        %v333 = vstv %s332
        %v334 = vmul.f32 %v333, %v323
        %v335 = vadd.f32 %v317, %v334
        %s336 = sld [smem:[#allocation3 + $0x63]]
        %v337 = vstv %s336
        %v338 = vmul.f32 %v337, %v323
        %v339 = vadd.f32 %v321, %v338
        %v340 = vld [vmem:[%s192 + $0x1] sm:$0xff]
        %s341 = sld [smem:[#allocation3 + $0x70]]
        %v342 = vstv %s341
        %v343 = vmul.f32 %v342, %v340
        %v344 = vadd.f32 %v327, %v343
        %s345 = sld [smem:[#allocation3 + $0x71]]
        %v346 = vstv %s345
        %v347 = vmul.f32 %v346, %v340
        %v348 = vadd.f32 %v331, %v347
        %s349 = sld [smem:[#allocation3 + $0x72]]
        %v350 = vstv %s349
        %v351 = vmul.f32 %v350, %v340
        %v352 = vadd.f32 %v335, %v351
        %s353 = sld [smem:[#allocation3 + $0x73]]
        %v354 = vstv %s353
        %v355 = vmul.f32 %v354, %v340
        %v356 = vadd.f32 %v339, %v355
        %357 = vrot.lane.b32.xlu0 %v340, 127
        %v358 = vpop.permute.xlu0 %357
        %s359 = sld [smem:[#allocation3 + $0x80]]
        %v360 = vstv %s359
        %v361 = vmul.f32 %v360, %v358
        %v362 = vadd.f32 %v344, %v361
        %s363 = sld [smem:[#allocation3 + $0x81]]
        %v364 = vstv %s363
        %v365 = vmul.f32 %v364, %v358
        %v366 = vadd.f32 %v348, %v365
        %s367 = sld [smem:[#allocation3 + $0x82]]
        %v368 = vstv %s367
        %v369 = vmul.f32 %v368, %v358
        %v370 = vadd.f32 %v352, %v369
        %s371 = sld [smem:[#allocation3 + $0x83]]
        %v372 = vstv %s371
        %v373 = vmul.f32 %v372, %v358
        %v374 = vadd.f32 %v356, %v373
        %375 = vrot.lane.b32.xlu0 %v340, 126
        %v376 = vpop.permute.xlu0 %375
        %s377 = sld [smem:[#allocation3 + $0x90]]
        %v378 = vstv %s377
        %v379 = vmul.f32 %v378, %v376
        %v380 = vadd.f32 %v362, %v379
        %s381 = sld [smem:[#allocation3 + $0x91]]
        %v382 = vstv %s381
        %v383 = vmul.f32 %v382, %v376
        %v384 = vadd.f32 %v366, %v383
        %s385 = sld [smem:[#allocation3 + $0x92]]
        %v386 = vstv %s385
        %v387 = vmul.f32 %v386, %v376
        %v388 = vadd.f32 %v370, %v387
        %s389 = sld [smem:[#allocation3 + $0x93]]
        %v390 = vstv %s389
        %v391 = vmul.f32 %v390, %v376
        %v392 = vadd.f32 %v374, %v391
        %393 = vrot.lane.b32.xlu0 %v340, 125
        %v394 = vpop.permute.xlu0 %393
        %s395 = sld [smem:[#allocation3 + $0xa0]]
        %v396 = vstv %s395
        %v397 = vmul.f32 %v396, %v394
        %v398 = vadd.f32 %v380, %v397
        %s399 = sld [smem:[#allocation3 + $0xa1]]
        %v400 = vstv %s399
        %v401 = vmul.f32 %v400, %v394
        %v402 = vadd.f32 %v384, %v401
        %s403 = sld [smem:[#allocation3 + $0xa2]]
        %v404 = vstv %s403
        %v405 = vmul.f32 %v404, %v394
        %v406 = vadd.f32 %v388, %v405
        %s407 = sld [smem:[#allocation3 + $0xa3]]
        %v408 = vstv %s407
        %v409 = vmul.f32 %v408, %v394
        %v410 = vadd.f32 %v392, %v409
        %411 = vrot.lane.b32.xlu0 %v340, 124
        %v412 = vpop.permute.xlu0 %411
        %s413 = sld [smem:[#allocation3 + $0xb0]]
        %v414 = vstv %s413
        %v415 = vmul.f32 %v414, %v412
        %v416 = vadd.f32 %v398, %v415
        %s417 = sld [smem:[#allocation3 + $0xb1]]
        %v418 = vstv %s417
        %v419 = vmul.f32 %v418, %v412
        %v420 = vadd.f32 %v402, %v419
        %s421 = sld [smem:[#allocation3 + $0xb2]]
        %v422 = vstv %s421
        %v423 = vmul.f32 %v422, %v412
        %v424 = vadd.f32 %v406, %v423
        %s425 = sld [smem:[#allocation3 + $0xb3]]
        %v426 = vstv %s425
        %v427 = vmul.f32 %v426, %v412
        %v428 = vadd.f32 %v410, %v427
        %429 = vrot.lane.b32.xlu0 %v340, 123
        %v430 = vpop.permute.xlu0 %429
        %s431 = sld [smem:[#allocation3 + $0xc0]]
        %v432 = vstv %s431
        %v433 = vmul.f32 %v432, %v430
        %v434 = vadd.f32 %v416, %v433
        %s435 = sld [smem:[#allocation3 + $0xc1]]
        %v436 = vstv %s435
        %v437 = vmul.f32 %v436, %v430
        %v438 = vadd.f32 %v420, %v437
        %s439 = sld [smem:[#allocation3 + $0xc2]]
        %v440 = vstv %s439
        %v441 = vmul.f32 %v440, %v430
        %v442 = vadd.f32 %v424, %v441
        %s443 = sld [smem:[#allocation3 + $0xc3]]
        %v444 = vstv %s443
        %v445 = vmul.f32 %v444, %v430
        %v446 = vadd.f32 %v428, %v445
        %447 = vrot.lane.b32.xlu0 %v340, 122
        %v448 = vpop.permute.xlu0 %447
        %s449 = sld [smem:[#allocation3 + $0xd0]]
        %v450 = vstv %s449
        %v451 = vmul.f32 %v450, %v448
        %v452 = vadd.f32 %v434, %v451
        %s453 = sld [smem:[#allocation3 + $0xd1]]
        %v454 = vstv %s453
        %v455 = vmul.f32 %v454, %v448
        %v456 = vadd.f32 %v438, %v455
        %s457 = sld [smem:[#allocation3 + $0xd2]]
        %v458 = vstv %s457
        %v459 = vmul.f32 %v458, %v448
        %v460 = vadd.f32 %v442, %v459
        %s461 = sld [smem:[#allocation3 + $0xd3]]
        %v462 = vstv %s461
        %v463 = vmul.f32 %v462, %v448
        %v464 = vadd.f32 %v446, %v463
        %v465 = vld [vmem:[%s192 + $0x2] sm:$0xff]
        %s466 = sld [smem:[#allocation3 + $0xe0]]
        %v467 = vstv %s466
        %v468 = vmul.f32 %v467, %v465
        %v469 = vadd.f32 %v452, %v468
        %s470 = sld [smem:[#allocation3 + $0xe1]]
        %v471 = vstv %s470
        %v472 = vmul.f32 %v471, %v465
        %v473 = vadd.f32 %v456, %v472
        %s474 = sld [smem:[#allocation3 + $0xe2]]
        %v475 = vstv %s474
        %v476 = vmul.f32 %v475, %v465
        %v477 = vadd.f32 %v460, %v476
        %s478 = sld [smem:[#allocation3 + $0xe3]]
        %v479 = vstv %s478
        %v480 = vmul.f32 %v479, %v465
        %v481 = vadd.f32 %v464, %v480
        %482 = vrot.lane.b32.xlu0 %v465, 127
        %v483 = vpop.permute.xlu0 %482
        %s484 = sld [smem:[#allocation3 + $0xf0]]
        %v485 = vstv %s484
        %v486 = vmul.f32 %v485, %v483
        %v487 = vadd.f32 %v469, %v486
        %s488 = sld [smem:[#allocation3 + $0xf1]]
        %v489 = vstv %s488
        %v490 = vmul.f32 %v489, %v483
        %v491 = vadd.f32 %v473, %v490
        %s492 = sld [smem:[#allocation3 + $0xf2]]
        %v493 = vstv %s492
        %v494 = vmul.f32 %v493, %v483
        %v495 = vadd.f32 %v477, %v494
        %s496 = sld [smem:[#allocation3 + $0xf3]]
        %v497 = vstv %s496
        %v498 = vmul.f32 %v497, %v483
        %v499 = vadd.f32 %v481, %v498
        %500 = vrot.lane.b32.xlu0 %v465, 126
        %v501 = vpop.permute.xlu0 %500
        %s502 = sld [smem:[#allocation3 + $0x100]]
        %v503 = vstv %s502
        %v504 = vmul.f32 %v503, %v501
        %v505 = vadd.f32 %v487, %v504
        %s506 = sld [smem:[#allocation3 + $0x101]]
        %v507 = vstv %s506
        %v508 = vmul.f32 %v507, %v501
        %v509 = vadd.f32 %v491, %v508
        %s510 = sld [smem:[#allocation3 + $0x102]]
        %v511 = vstv %s510
        %v512 = vmul.f32 %v511, %v501
        %v513 = vadd.f32 %v495, %v512
        %s514 = sld [smem:[#allocation3 + $0x103]]
        %v515 = vstv %s514
        %v516 = vmul.f32 %v515, %v501
        %v517 = vadd.f32 %v499, %v516
        %518 = vrot.lane.b32.xlu0 %v465, 125
        %v519 = vpop.permute.xlu0 %518
        %s520 = sld [smem:[#allocation3 + $0x110]]
        %v521 = vstv %s520
        %v522 = vmul.f32 %v521, %v519
        %v523 = vadd.f32 %v505, %v522
        %s524 = sld [smem:[#allocation3 + $0x111]]
        %v525 = vstv %s524
        %v526 = vmul.f32 %v525, %v519
        %v527 = vadd.f32 %v509, %v526
        %s528 = sld [smem:[#allocation3 + $0x112]]
        %v529 = vstv %s528
        %v530 = vmul.f32 %v529, %v519
        %v531 = vadd.f32 %v513, %v530
        %s532 = sld [smem:[#allocation3 + $0x113]]
        %v533 = vstv %s532
        %v534 = vmul.f32 %v533, %v519
        %v535 = vadd.f32 %v517, %v534
        %536 = vrot.lane.b32.xlu0 %v465, 124
        %v537 = vpop.permute.xlu0 %536
        %s538 = sld [smem:[#allocation3 + $0x120]]
        %v539 = vstv %s538
        %v540 = vmul.f32 %v539, %v537
        %v541 = vadd.f32 %v523, %v540
        %s542 = sld [smem:[#allocation3 + $0x121]]
        %v543 = vstv %s542
        %v544 = vmul.f32 %v543, %v537
        %v545 = vadd.f32 %v527, %v544
        %s546 = sld [smem:[#allocation3 + $0x122]]
        %v547 = vstv %s546
        %v548 = vmul.f32 %v547, %v537
        %v549 = vadd.f32 %v531, %v548
        %s550 = sld [smem:[#allocation3 + $0x123]]
        %v551 = vstv %s550
        %v552 = vmul.f32 %v551, %v537
        %v553 = vadd.f32 %v535, %v552
        %554 = vrot.lane.b32.xlu0 %v465, 123
        %v555 = vpop.permute.xlu0 %554
        %s556 = sld [smem:[#allocation3 + $0x130]]
        %v557 = vstv %s556
        %v558 = vmul.f32 %v557, %v555
        %v559 = vadd.f32 %v541, %v558
        %s560 = sld [smem:[#allocation3 + $0x131]]
        %v561 = vstv %s560
        %v562 = vmul.f32 %v561, %v555
        %v563 = vadd.f32 %v545, %v562
        %s564 = sld [smem:[#allocation3 + $0x132]]
        %v565 = vstv %s564
        %v566 = vmul.f32 %v565, %v555
        %v567 = vadd.f32 %v549, %v566
        %s568 = sld [smem:[#allocation3 + $0x133]]
        %v569 = vstv %s568
        %v570 = vmul.f32 %v569, %v555
        %v571 = vadd.f32 %v553, %v570
        %572 = vrot.lane.b32.xlu0 %v465, 122
        %v573 = vpop.permute.xlu0 %572
        %s574 = sld [smem:[#allocation3 + $0x140]]
        %v575 = vstv %s574
        %v576 = vmul.f32 %v575, %v573
        %v577 = vadd.f32 %v559, %v576
        %s578 = sld [smem:[#allocation3 + $0x141]]
        %v579 = vstv %s578
        %v580 = vmul.f32 %v579, %v573
        %v581 = vadd.f32 %v563, %v580
        %s582 = sld [smem:[#allocation3 + $0x142]]
        %v583 = vstv %s582
        %v584 = vmul.f32 %v583, %v573
        %v585 = vadd.f32 %v567, %v584
        %s586 = sld [smem:[#allocation3 + $0x143]]
        %v587 = vstv %s586
        %v588 = vmul.f32 %v587, %v573
        %v589 = vadd.f32 %v571, %v588
        %v590 = vld [vmem:[%s192 + $0x3] sm:$0xff]
        %s591 = sld [smem:[#allocation3 + $0x150]]
        %v592 = vstv %s591
        %v593 = vmul.f32 %v592, %v590
        %v594 = vadd.f32 %v577, %v593
        %s595 = sld [smem:[#allocation3 + $0x151]]
        %v596 = vstv %s595
        %v597 = vmul.f32 %v596, %v590
        %v598 = vadd.f32 %v581, %v597
        %s599 = sld [smem:[#allocation3 + $0x152]]
        %v600 = vstv %s599
        %v601 = vmul.f32 %v600, %v590
        %v602 = vadd.f32 %v585, %v601
        %s603 = sld [smem:[#allocation3 + $0x153]]
        %v604 = vstv %s603
        %v605 = vmul.f32 %v604, %v590
        %v606 = vadd.f32 %v589, %v605
        %607 = vrot.lane.b32.xlu0 %v590, 127
        %v608 = vpop.permute.xlu0 %607
        %s609 = sld [smem:[#allocation3 + $0x160]]
        %v610 = vstv %s609
        %v611 = vmul.f32 %v610, %v608
        %v612 = vadd.f32 %v594, %v611
        %s613 = sld [smem:[#allocation3 + $0x161]]
        %v614 = vstv %s613
        %v615 = vmul.f32 %v614, %v608
        %v616 = vadd.f32 %v598, %v615
        %s617 = sld [smem:[#allocation3 + $0x162]]
        %v618 = vstv %s617
        %v619 = vmul.f32 %v618, %v608
        %v620 = vadd.f32 %v602, %v619
        %s621 = sld [smem:[#allocation3 + $0x163]]
        %v622 = vstv %s621
        %v623 = vmul.f32 %v622, %v608
        %v624 = vadd.f32 %v606, %v623
        %625 = vrot.lane.b32.xlu0 %v590, 126
        %v626 = vpop.permute.xlu0 %625
        %s627 = sld [smem:[#allocation3 + $0x170]]
        %v628 = vstv %s627
        %v629 = vmul.f32 %v628, %v626
        %v630 = vadd.f32 %v612, %v629
        %s631 = sld [smem:[#allocation3 + $0x171]]
        %v632 = vstv %s631
        %v633 = vmul.f32 %v632, %v626
        %v634 = vadd.f32 %v616, %v633
        %s635 = sld [smem:[#allocation3 + $0x172]]
        %v636 = vstv %s635
        %v637 = vmul.f32 %v636, %v626
        %v638 = vadd.f32 %v620, %v637
        %s639 = sld [smem:[#allocation3 + $0x173]]
        %v640 = vstv %s639
        %v641 = vmul.f32 %v640, %v626
        %v642 = vadd.f32 %v624, %v641
        %643 = vrot.lane.b32.xlu0 %v590, 125
        %v644 = vpop.permute.xlu0 %643
        %s645 = sld [smem:[#allocation3 + $0x180]]
        %v646 = vstv %s645
        %v647 = vmul.f32 %v646, %v644
        %v648 = vadd.f32 %v630, %v647
        %s649 = sld [smem:[#allocation3 + $0x181]]
        %v650 = vstv %s649
        %v651 = vmul.f32 %v650, %v644
        %v652 = vadd.f32 %v634, %v651
        %s653 = sld [smem:[#allocation3 + $0x182]]
        %v654 = vstv %s653
        %v655 = vmul.f32 %v654, %v644
        %v656 = vadd.f32 %v638, %v655
        %s657 = sld [smem:[#allocation3 + $0x183]]
        %v658 = vstv %s657
        %v659 = vmul.f32 %v658, %v644
        %v660 = vadd.f32 %v642, %v659
        %661 = vrot.lane.b32.xlu0 %v590, 124
        %v662 = vpop.permute.xlu0 %661
        %s663 = sld [smem:[#allocation3 + $0x190]]
        %v664 = vstv %s663
        %v665 = vmul.f32 %v664, %v662
        %v666 = vadd.f32 %v648, %v665
        %s667 = sld [smem:[#allocation3 + $0x191]]
        %v668 = vstv %s667
        %v669 = vmul.f32 %v668, %v662
        %v670 = vadd.f32 %v652, %v669
        %s671 = sld [smem:[#allocation3 + $0x192]]
        %v672 = vstv %s671
        %v673 = vmul.f32 %v672, %v662
        %v674 = vadd.f32 %v656, %v673
        %s675 = sld [smem:[#allocation3 + $0x193]]
        %v676 = vstv %s675
        %v677 = vmul.f32 %v676, %v662
        %v678 = vadd.f32 %v660, %v677
        %679 = vrot.lane.b32.xlu0 %v590, 123
        %v680 = vpop.permute.xlu0 %679
        %s681 = sld [smem:[#allocation3 + $0x1a0]]
        %v682 = vstv %s681
        %v683 = vmul.f32 %v682, %v680
        %v684 = vadd.f32 %v666, %v683
        %s685 = sld [smem:[#allocation3 + $0x1a1]]
        %v686 = vstv %s685
        %v687 = vmul.f32 %v686, %v680
        %v688 = vadd.f32 %v670, %v687
        %s689 = sld [smem:[#allocation3 + $0x1a2]]
        %v690 = vstv %s689
        %v691 = vmul.f32 %v690, %v680
        %v692 = vadd.f32 %v674, %v691
        %s693 = sld [smem:[#allocation3 + $0x1a3]]
        %v694 = vstv %s693
        %v695 = vmul.f32 %v694, %v680
        %v696 = vadd.f32 %v678, %v695
        %697 = vrot.lane.b32.xlu0 %v590, 122
        %v698 = vpop.permute.xlu0 %697
        %s699 = sld [smem:[#allocation3 + $0x1b0]]
        %v700 = vstv %s699
        %v701 = vmul.f32 %v700, %v698
        %v702 = vadd.f32 %v684, %v701
        %s703 = sld [smem:[#allocation3 + $0x1b1]]
        %v704 = vstv %s703
        %v705 = vmul.f32 %v704, %v698
        %v706 = vadd.f32 %v688, %v705
        %s707 = sld [smem:[#allocation3 + $0x1b2]]
        %v708 = vstv %s707
        %v709 = vmul.f32 %v708, %v698
        %v710 = vadd.f32 %v692, %v709
        %s711 = sld [smem:[#allocation3 + $0x1b3]]
        %v712 = vstv %s711
        %v713 = vmul.f32 %v712, %v698
        %v714 = vadd.f32 %v696, %v713
        %v715 = vld [vmem:[%s192 + $0x4] sm:$0xff]
        %s716 = sld [smem:[#allocation3 + $0x1c0]]
        %v717 = vstv %s716
        %v718 = vmul.f32 %v717, %v715
        %v719 = vadd.f32 %v702, %v718
        %s720 = sld [smem:[#allocation3 + $0x1c1]]
        %v721 = vstv %s720
        %v722 = vmul.f32 %v721, %v715
        %v723 = vadd.f32 %v706, %v722
        %s724 = sld [smem:[#allocation3 + $0x1c2]]
        %v725 = vstv %s724
        %v726 = vmul.f32 %v725, %v715
        %v727 = vadd.f32 %v710, %v726
        %s728 = sld [smem:[#allocation3 + $0x1c3]]
        %v729 = vstv %s728
        %v730 = vmul.f32 %v729, %v715
        %v731 = vadd.f32 %v714, %v730
        %732 = vrot.lane.b32.xlu0 %v715, 127
        %v733 = vpop.permute.xlu0 %732
        %s734 = sld [smem:[#allocation3 + $0x1d0]]
        %v735 = vstv %s734
        %v736 = vmul.f32 %v735, %v733
        %v737 = vadd.f32 %v719, %v736
        %s738 = sld [smem:[#allocation3 + $0x1d1]]
        %v739 = vstv %s738
        %v740 = vmul.f32 %v739, %v733
        %v741 = vadd.f32 %v723, %v740
        %s742 = sld [smem:[#allocation3 + $0x1d2]]
        %v743 = vstv %s742
        %v744 = vmul.f32 %v743, %v733
        %v745 = vadd.f32 %v727, %v744
        %s746 = sld [smem:[#allocation3 + $0x1d3]]
        %v747 = vstv %s746
        %v748 = vmul.f32 %v747, %v733
        %v749 = vadd.f32 %v731, %v748
        %750 = vrot.lane.b32.xlu0 %v715, 126
        %v751 = vpop.permute.xlu0 %750
        %s752 = sld [smem:[#allocation3 + $0x1e0]]
        %v753 = vstv %s752
        %v754 = vmul.f32 %v753, %v751
        %v755 = vadd.f32 %v737, %v754
        %s756 = sld [smem:[#allocation3 + $0x1e1]]
        %v757 = vstv %s756
        %v758 = vmul.f32 %v757, %v751
        %v759 = vadd.f32 %v741, %v758
        %s760 = sld [smem:[#allocation3 + $0x1e2]]
        %v761 = vstv %s760
        %v762 = vmul.f32 %v761, %v751
        %v763 = vadd.f32 %v745, %v762
        %s764 = sld [smem:[#allocation3 + $0x1e3]]
        %v765 = vstv %s764
        %v766 = vmul.f32 %v765, %v751
        %v767 = vadd.f32 %v749, %v766
        %768 = vrot.lane.b32.xlu0 %v715, 125
        %v769 = vpop.permute.xlu0 %768
        %s770 = sld [smem:[#allocation3 + $0x1f0]]
        %v771 = vstv %s770
        %v772 = vmul.f32 %v771, %v769
        %v773 = vadd.f32 %v755, %v772
        %s774 = sld [smem:[#allocation3 + $0x1f1]]
        %v775 = vstv %s774
        %v776 = vmul.f32 %v775, %v769
        %v777 = vadd.f32 %v759, %v776
        %s778 = sld [smem:[#allocation3 + $0x1f2]]
        %v779 = vstv %s778
        %v780 = vmul.f32 %v779, %v769
        %v781 = vadd.f32 %v763, %v780
        %s782 = sld [smem:[#allocation3 + $0x1f3]]
        %v783 = vstv %s782
        %v784 = vmul.f32 %v783, %v769
        %v785 = vadd.f32 %v767, %v784
        %786 = vrot.lane.b32.xlu0 %v715, 124
        %v787 = vpop.permute.xlu0 %786
        %s788 = sld [smem:[#allocation3 + $0x200]]
        %v789 = vstv %s788
        %v790 = vmul.f32 %v789, %v787
        %v791 = vadd.f32 %v773, %v790
        %s792 = sld [smem:[#allocation3 + $0x201]]
        %v793 = vstv %s792
        %v794 = vmul.f32 %v793, %v787
        %v795 = vadd.f32 %v777, %v794
        %s796 = sld [smem:[#allocation3 + $0x202]]
        %v797 = vstv %s796
        %v798 = vmul.f32 %v797, %v787
        %v799 = vadd.f32 %v781, %v798
        %s800 = sld [smem:[#allocation3 + $0x203]]
        %v801 = vstv %s800
        %v802 = vmul.f32 %v801, %v787
        %v803 = vadd.f32 %v785, %v802
        %804 = vrot.lane.b32.xlu0 %v715, 123
        %v805 = vpop.permute.xlu0 %804
        %s806 = sld [smem:[#allocation3 + $0x210]]
        %v807 = vstv %s806
        %v808 = vmul.f32 %v807, %v805
        %v809 = vadd.f32 %v791, %v808
        %s810 = sld [smem:[#allocation3 + $0x211]]
        %v811 = vstv %s810
        %v812 = vmul.f32 %v811, %v805
        %v813 = vadd.f32 %v795, %v812
        %s814 = sld [smem:[#allocation3 + $0x212]]
        %v815 = vstv %s814
        %v816 = vmul.f32 %v815, %v805
        %v817 = vadd.f32 %v799, %v816
        %s818 = sld [smem:[#allocation3 + $0x213]]
        %v819 = vstv %s818
        %v820 = vmul.f32 %v819, %v805
        %v821 = vadd.f32 %v803, %v820
        %822 = vrot.lane.b32.xlu0 %v715, 122
        %v823 = vpop.permute.xlu0 %822
        %s824 = sld [smem:[#allocation3 + $0x220]]
        %v825 = vstv %s824
        %v826 = vmul.f32 %v825, %v823
        %v827 = vadd.f32 %v809, %v826
        %s828 = sld [smem:[#allocation3 + $0x221]]
        %v829 = vstv %s828
        %v830 = vmul.f32 %v829, %v823
        %v831 = vadd.f32 %v813, %v830
        %s832 = sld [smem:[#allocation3 + $0x222]]
        %v833 = vstv %s832
        %v834 = vmul.f32 %v833, %v823
        %v835 = vadd.f32 %v817, %v834
        %s836 = sld [smem:[#allocation3 + $0x223]]
        %v837 = vstv %s836
        %v838 = vmul.f32 %v837, %v823
        %v839 = vadd.f32 %v821, %v838
        %v840 = vld [vmem:[%s192 + $0x5] sm:$0xff]
        %s841 = sld [smem:[#allocation3 + $0x230]]
        %v842 = vstv %s841
        %v843 = vmul.f32 %v842, %v840
        %v844 = vadd.f32 %v827, %v843
        %s845 = sld [smem:[#allocation3 + $0x231]]
        %v846 = vstv %s845
        %v847 = vmul.f32 %v846, %v840
        %v848 = vadd.f32 %v831, %v847
        %s849 = sld [smem:[#allocation3 + $0x232]]
        %v850 = vstv %s849
        %v851 = vmul.f32 %v850, %v840
        %v852 = vadd.f32 %v835, %v851
        %s853 = sld [smem:[#allocation3 + $0x233]]
        %v854 = vstv %s853
        %v855 = vmul.f32 %v854, %v840
        %v856 = vadd.f32 %v839, %v855
        %857 = vrot.lane.b32.xlu0 %v840, 127
        %v858 = vpop.permute.xlu0 %857
        %s859 = sld [smem:[#allocation3 + $0x240]]
        %v860 = vstv %s859
        %v861 = vmul.f32 %v860, %v858
        %v862 = vadd.f32 %v844, %v861
        %s863 = sld [smem:[#allocation3 + $0x241]]
        %v864 = vstv %s863
        %v865 = vmul.f32 %v864, %v858
        %v866 = vadd.f32 %v848, %v865
        %s867 = sld [smem:[#allocation3 + $0x242]]
        %v868 = vstv %s867
        %v869 = vmul.f32 %v868, %v858
        %v870 = vadd.f32 %v852, %v869
        %s871 = sld [smem:[#allocation3 + $0x243]]
        %v872 = vstv %s871
        %v873 = vmul.f32 %v872, %v858
        %v874 = vadd.f32 %v856, %v873
        %875 = vrot.lane.b32.xlu0 %v840, 126
        %v876 = vpop.permute.xlu0 %875
        %s877 = sld [smem:[#allocation3 + $0x250]]
        %v878 = vstv %s877
        %v879 = vmul.f32 %v878, %v876
        %v880 = vadd.f32 %v862, %v879
        %s881 = sld [smem:[#allocation3 + $0x251]]
        %v882 = vstv %s881
        %v883 = vmul.f32 %v882, %v876
        %v884 = vadd.f32 %v866, %v883
        %s885 = sld [smem:[#allocation3 + $0x252]]
        %v886 = vstv %s885
        %v887 = vmul.f32 %v886, %v876
        %v888 = vadd.f32 %v870, %v887
        %s889 = sld [smem:[#allocation3 + $0x253]]
        %v890 = vstv %s889
        %v891 = vmul.f32 %v890, %v876
        %v892 = vadd.f32 %v874, %v891
        %893 = vrot.lane.b32.xlu0 %v840, 125
        %v894 = vpop.permute.xlu0 %893
        %s895 = sld [smem:[#allocation3 + $0x260]]
        %v896 = vstv %s895
        %v897 = vmul.f32 %v896, %v894
        %v898 = vadd.f32 %v880, %v897
        %s899 = sld [smem:[#allocation3 + $0x261]]
        %v900 = vstv %s899
        %v901 = vmul.f32 %v900, %v894
        %v902 = vadd.f32 %v884, %v901
        %s903 = sld [smem:[#allocation3 + $0x262]]
        %v904 = vstv %s903
        %v905 = vmul.f32 %v904, %v894
        %v906 = vadd.f32 %v888, %v905
        %s907 = sld [smem:[#allocation3 + $0x263]]
        %v908 = vstv %s907
        %v909 = vmul.f32 %v908, %v894
        %v910 = vadd.f32 %v892, %v909
        %911 = vrot.lane.b32.xlu0 %v840, 124
        %v912 = vpop.permute.xlu0 %911
        %s913 = sld [smem:[#allocation3 + $0x270]]
        %v914 = vstv %s913
        %v915 = vmul.f32 %v914, %v912
        %v916 = vadd.f32 %v898, %v915
        %s917 = sld [smem:[#allocation3 + $0x271]]
        %v918 = vstv %s917
        %v919 = vmul.f32 %v918, %v912
        %v920 = vadd.f32 %v902, %v919
        %s921 = sld [smem:[#allocation3 + $0x272]]
        %v922 = vstv %s921
        %v923 = vmul.f32 %v922, %v912
        %v924 = vadd.f32 %v906, %v923
        %s925 = sld [smem:[#allocation3 + $0x273]]
        %v926 = vstv %s925
        %v927 = vmul.f32 %v926, %v912
        %v928 = vadd.f32 %v910, %v927
        %929 = vrot.lane.b32.xlu0 %v840, 123
        %v930 = vpop.permute.xlu0 %929
        %s931 = sld [smem:[#allocation3 + $0x280]]
        %v932 = vstv %s931
        %v933 = vmul.f32 %v932, %v930
        %v934 = vadd.f32 %v916, %v933
        %s935 = sld [smem:[#allocation3 + $0x281]]
        %v936 = vstv %s935
        %v937 = vmul.f32 %v936, %v930
        %v938 = vadd.f32 %v920, %v937
        %s939 = sld [smem:[#allocation3 + $0x282]]
        %v940 = vstv %s939
        %v941 = vmul.f32 %v940, %v930
        %v942 = vadd.f32 %v924, %v941
        %s943 = sld [smem:[#allocation3 + $0x283]]
        %v944 = vstv %s943
        %v945 = vmul.f32 %v944, %v930
        %v946 = vadd.f32 %v928, %v945
        %947 = vrot.lane.b32.xlu0 %v840, 122
        %v948 = vpop.permute.xlu0 %947
        %s949 = sld [smem:[#allocation3 + $0x290]]
        %v950 = vstv %s949
        %v951 = vmul.f32 %v950, %v948
        %v952 = vadd.f32 %v934, %v951
        %s953 = sld [smem:[#allocation3 + $0x291]]
        %v954 = vstv %s953
        %v955 = vmul.f32 %v954, %v948
        %v956 = vadd.f32 %v938, %v955
        %s957 = sld [smem:[#allocation3 + $0x292]]
        %v958 = vstv %s957
        %v959 = vmul.f32 %v958, %v948
        %v960 = vadd.f32 %v942, %v959
        %s961 = sld [smem:[#allocation3 + $0x293]]
        %v962 = vstv %s961
        %v963 = vmul.f32 %v962, %v948
        %v964 = vadd.f32 %v946, %v963
        %v965 = vld [vmem:[%s192 + $0x6] sm:$0xff]
        %s966 = sld [smem:[#allocation3 + $0x2a0]]
        %v967 = vstv %s966
        %v968 = vmul.f32 %v967, %v965
        %v969 = vadd.f32 %v952, %v968
        %s970 = sld [smem:[#allocation3 + $0x2a1]]
        %v971 = vstv %s970
        %v972 = vmul.f32 %v971, %v965
        %v973 = vadd.f32 %v956, %v972
        %s974 = sld [smem:[#allocation3 + $0x2a2]]
        %v975 = vstv %s974
        %v976 = vmul.f32 %v975, %v965
        %v977 = vadd.f32 %v960, %v976
        %s978 = sld [smem:[#allocation3 + $0x2a3]]
        %v979 = vstv %s978
        %v980 = vmul.f32 %v979, %v965
        %v981 = vadd.f32 %v964, %v980
        %982 = vrot.lane.b32.xlu0 %v965, 127
        %v983 = vpop.permute.xlu0 %982
        %s984 = sld [smem:[#allocation3 + $0x2b0]]
        %v985 = vstv %s984
        %v986 = vmul.f32 %v985, %v983
        %v987 = vadd.f32 %v969, %v986
        %s988 = sld [smem:[#allocation3 + $0x2b1]]
        %v989 = vstv %s988
        %v990 = vmul.f32 %v989, %v983
        %v991 = vadd.f32 %v973, %v990
        %s992 = sld [smem:[#allocation3 + $0x2b2]]
        %v993 = vstv %s992
        %v994 = vmul.f32 %v993, %v983
        %v995 = vadd.f32 %v977, %v994
        %s996 = sld [smem:[#allocation3 + $0x2b3]]
        %v997 = vstv %s996
        %v998 = vmul.f32 %v997, %v983
        %v999 = vadd.f32 %v981, %v998
        %1000 = vrot.lane.b32.xlu0 %v965, 126
        %v1001 = vpop.permute.xlu0 %1000
        %s1002 = sld [smem:[#allocation3 + $0x2c0]]
        %v1003 = vstv %s1002
        %v1004 = vmul.f32 %v1003, %v1001
        %v1005 = vadd.f32 %v987, %v1004
        %s1006 = sld [smem:[#allocation3 + $0x2c1]]
        %v1007 = vstv %s1006
        %v1008 = vmul.f32 %v1007, %v1001
        %v1009 = vadd.f32 %v991, %v1008
        %s1010 = sld [smem:[#allocation3 + $0x2c2]]
        %v1011 = vstv %s1010
        %v1012 = vmul.f32 %v1011, %v1001
        %v1013 = vadd.f32 %v995, %v1012
        %s1014 = sld [smem:[#allocation3 + $0x2c3]]
        %v1015 = vstv %s1014
        %v1016 = vmul.f32 %v1015, %v1001
        %v1017 = vadd.f32 %v999, %v1016
        %1018 = vrot.lane.b32.xlu0 %v965, 125
        %v1019 = vpop.permute.xlu0 %1018
        %s1020 = sld [smem:[#allocation3 + $0x2d0]]
        %v1021 = vstv %s1020
        %v1022 = vmul.f32 %v1021, %v1019
        %v1023 = vadd.f32 %v1005, %v1022
        %s1024 = sld [smem:[#allocation3 + $0x2d1]]
        %v1025 = vstv %s1024
        %v1026 = vmul.f32 %v1025, %v1019
        %v1027 = vadd.f32 %v1009, %v1026
        %s1028 = sld [smem:[#allocation3 + $0x2d2]]
        %v1029 = vstv %s1028
        %v1030 = vmul.f32 %v1029, %v1019
        %v1031 = vadd.f32 %v1013, %v1030
        %s1032 = sld [smem:[#allocation3 + $0x2d3]]
        %v1033 = vstv %s1032
        %v1034 = vmul.f32 %v1033, %v1019
        %v1035 = vadd.f32 %v1017, %v1034
        %1036 = vrot.lane.b32.xlu0 %v965, 124
        %v1037 = vpop.permute.xlu0 %1036
        %s1038 = sld [smem:[#allocation3 + $0x2e0]]
        %v1039 = vstv %s1038
        %v1040 = vmul.f32 %v1039, %v1037
        %v1041 = vadd.f32 %v1023, %v1040
        %s1042 = sld [smem:[#allocation3 + $0x2e1]]
        %v1043 = vstv %s1042
        %v1044 = vmul.f32 %v1043, %v1037
        %v1045 = vadd.f32 %v1027, %v1044
        %s1046 = sld [smem:[#allocation3 + $0x2e2]]
        %v1047 = vstv %s1046
        %v1048 = vmul.f32 %v1047, %v1037
        %v1049 = vadd.f32 %v1031, %v1048
        %s1050 = sld [smem:[#allocation3 + $0x2e3]]
        %v1051 = vstv %s1050
        %v1052 = vmul.f32 %v1051, %v1037
        %v1053 = vadd.f32 %v1035, %v1052
        %1054 = vrot.lane.b32.xlu0 %v965, 123
        %v1055 = vpop.permute.xlu0 %1054
        %s1056 = sld [smem:[#allocation3 + $0x2f0]]
        %v1057 = vstv %s1056
        %v1058 = vmul.f32 %v1057, %v1055
        %v1059 = vadd.f32 %v1041, %v1058
        %s1060 = sld [smem:[#allocation3 + $0x2f1]]
        %v1061 = vstv %s1060
        %v1062 = vmul.f32 %v1061, %v1055
        %v1063 = vadd.f32 %v1045, %v1062
        %s1064 = sld [smem:[#allocation3 + $0x2f2]]
        %v1065 = vstv %s1064
        %v1066 = vmul.f32 %v1065, %v1055
        %v1067 = vadd.f32 %v1049, %v1066
        %s1068 = sld [smem:[#allocation3 + $0x2f3]]
        %v1069 = vstv %s1068
        %v1070 = vmul.f32 %v1069, %v1055
        %v1071 = vadd.f32 %v1053, %v1070
        %1072 = vrot.lane.b32.xlu0 %v965, 122
        %v1073 = vpop.permute.xlu0 %1072
        %s1074 = sld [smem:[#allocation3 + $0x300]]
        %v1075 = vstv %s1074
        %v1076 = vmul.f32 %v1075, %v1073
        %v1077 = vadd.f32 %v1059, %v1076
        %s1078 = sld [smem:[#allocation3 + $0x301]]
        %v1079 = vstv %s1078
        %v1080 = vmul.f32 %v1079, %v1073
        %v1081 = vadd.f32 %v1063, %v1080
        %s1082 = sld [smem:[#allocation3 + $0x302]]
        %v1083 = vstv %s1082
        %v1084 = vmul.f32 %v1083, %v1073
        %v1085 = vadd.f32 %v1067, %v1084
        %s1086 = sld [smem:[#allocation3 + $0x303]]
        %v1087 = vstv %s1086
        %v1088 = vmul.f32 %v1087, %v1073
        %v1089 = vadd.f32 %v1071, %v1088
        %s1090 = scalar_lea.vmem %s192, 16 [#allocation2]
        %v1091 = vld [vmem:[%s1090] sm:$0xff]
        %s1092 = sld [smem:[#allocation3 + $0x4]]
        %v1093 = vstv %s1092
        %v1094 = vmul.f32 %v1093, %v1091
        %v1095 = vadd.f32 %v1077, %v1094
        %s1096 = sld [smem:[#allocation3 + $0x5]]
        %v1097 = vstv %s1096
        %v1098 = vmul.f32 %v1097, %v1091
        %v1099 = vadd.f32 %v1081, %v1098
        %s1100 = sld [smem:[#allocation3 + $0x6]]
        %v1101 = vstv %s1100
        %v1102 = vmul.f32 %v1101, %v1091
        %v1103 = vadd.f32 %v1085, %v1102
        %s1104 = sld [smem:[#allocation3 + $0x7]]
        %v1105 = vstv %s1104
        %v1106 = vmul.f32 %v1105, %v1091
        %v1107 = vadd.f32 %v1089, %v1106
        %1108 = vrot.lane.b32.xlu0 %v1091, 127
        %v1109 = vpop.permute.xlu0 %1108
        %s1110 = sld [smem:[#allocation3 + $0x14]]
        %v1111 = vstv %s1110
        %v1112 = vmul.f32 %v1111, %v1109
        %v1113 = vadd.f32 %v1095, %v1112
        %s1114 = sld [smem:[#allocation3 + $0x15]]
        %v1115 = vstv %s1114
        %v1116 = vmul.f32 %v1115, %v1109
        %v1117 = vadd.f32 %v1099, %v1116
        %s1118 = sld [smem:[#allocation3 + $0x16]]
        %v1119 = vstv %s1118
        %v1120 = vmul.f32 %v1119, %v1109
        %v1121 = vadd.f32 %v1103, %v1120
        %s1122 = sld [smem:[#allocation3 + $0x17]]
        %v1123 = vstv %s1122
        %v1124 = vmul.f32 %v1123, %v1109
        %v1125 = vadd.f32 %v1107, %v1124
        %1126 = vrot.lane.b32.xlu0 %v1091, 126
        %v1127 = vpop.permute.xlu0 %1126
        %s1128 = sld [smem:[#allocation3 + $0x24]]
        %v1129 = vstv %s1128
        %v1130 = vmul.f32 %v1129, %v1127
        %v1131 = vadd.f32 %v1113, %v1130
        %s1132 = sld [smem:[#allocation3 + $0x25]]
        %v1133 = vstv %s1132
        %v1134 = vmul.f32 %v1133, %v1127
        %v1135 = vadd.f32 %v1117, %v1134
        %s1136 = sld [smem:[#allocation3 + $0x26]]
        %v1137 = vstv %s1136
        %v1138 = vmul.f32 %v1137, %v1127
        %v1139 = vadd.f32 %v1121, %v1138
        %s1140 = sld [smem:[#allocation3 + $0x27]]
        %v1141 = vstv %s1140
        %v1142 = vmul.f32 %v1141, %v1127
        %v1143 = vadd.f32 %v1125, %v1142
        %1144 = vrot.lane.b32.xlu0 %v1091, 125
        %v1145 = vpop.permute.xlu0 %1144
        %s1146 = sld [smem:[#allocation3 + $0x34]]
        %v1147 = vstv %s1146
        %v1148 = vmul.f32 %v1147, %v1145
        %v1149 = vadd.f32 %v1131, %v1148
        %s1150 = sld [smem:[#allocation3 + $0x35]]
        %v1151 = vstv %s1150
        %v1152 = vmul.f32 %v1151, %v1145
        %v1153 = vadd.f32 %v1135, %v1152
        %s1154 = sld [smem:[#allocation3 + $0x36]]
        %v1155 = vstv %s1154
        %v1156 = vmul.f32 %v1155, %v1145
        %v1157 = vadd.f32 %v1139, %v1156
        %s1158 = sld [smem:[#allocation3 + $0x37]]
        %v1159 = vstv %s1158
        %v1160 = vmul.f32 %v1159, %v1145
        %v1161 = vadd.f32 %v1143, %v1160
        %1162 = vrot.lane.b32.xlu0 %v1091, 124
        %v1163 = vpop.permute.xlu0 %1162
        %s1164 = sld [smem:[#allocation3 + $0x44]]
        %v1165 = vstv %s1164
        %v1166 = vmul.f32 %v1165, %v1163
        %v1167 = vadd.f32 %v1149, %v1166
        %s1168 = sld [smem:[#allocation3 + $0x45]]
        %v1169 = vstv %s1168
        %v1170 = vmul.f32 %v1169, %v1163
        %v1171 = vadd.f32 %v1153, %v1170
        %s1172 = sld [smem:[#allocation3 + $0x46]]
        %v1173 = vstv %s1172
        %v1174 = vmul.f32 %v1173, %v1163
        %v1175 = vadd.f32 %v1157, %v1174
        %s1176 = sld [smem:[#allocation3 + $0x47]]
        %v1177 = vstv %s1176
        %v1178 = vmul.f32 %v1177, %v1163
        %v1179 = vadd.f32 %v1161, %v1178
        %1180 = vrot.lane.b32.xlu0 %v1091, 123
        %v1181 = vpop.permute.xlu0 %1180
        %s1182 = sld [smem:[#allocation3 + $0x54]]
        %v1183 = vstv %s1182
        %v1184 = vmul.f32 %v1183, %v1181
        %v1185 = vadd.f32 %v1167, %v1184
        %s1186 = sld [smem:[#allocation3 + $0x55]]
        %v1187 = vstv %s1186
        %v1188 = vmul.f32 %v1187, %v1181
        %v1189 = vadd.f32 %v1171, %v1188
        %s1190 = sld [smem:[#allocation3 + $0x56]]
        %v1191 = vstv %s1190
        %v1192 = vmul.f32 %v1191, %v1181
        %v1193 = vadd.f32 %v1175, %v1192
        %s1194 = sld [smem:[#allocation3 + $0x57]]
        %v1195 = vstv %s1194
        %v1196 = vmul.f32 %v1195, %v1181
        %v1197 = vadd.f32 %v1179, %v1196
        %1198 = vrot.lane.b32.xlu0 %v1091, 122
        %v1199 = vpop.permute.xlu0 %1198
        %s1200 = sld [smem:[#allocation3 + $0x64]]
        %v1201 = vstv %s1200
        %v1202 = vmul.f32 %v1201, %v1199
        %v1203 = vadd.f32 %v1185, %v1202
        %s1204 = sld [smem:[#allocation3 + $0x65]]
        %v1205 = vstv %s1204
        %v1206 = vmul.f32 %v1205, %v1199
        %v1207 = vadd.f32 %v1189, %v1206
        %s1208 = sld [smem:[#allocation3 + $0x66]]
        %v1209 = vstv %s1208
        %v1210 = vmul.f32 %v1209, %v1199
        %v1211 = vadd.f32 %v1193, %v1210
        %s1212 = sld [smem:[#allocation3 + $0x67]]
        %v1213 = vstv %s1212
        %v1214 = vmul.f32 %v1213, %v1199
        %v1215 = vadd.f32 %v1197, %v1214
        %v1216 = vld [vmem:[%s1090 + $0x1] sm:$0xff]
        %s1217 = sld [smem:[#allocation3 + $0x74]]
        %v1218 = vstv %s1217
        %v1219 = vmul.f32 %v1218, %v1216
        %v1220 = vadd.f32 %v1203, %v1219
        %s1221 = sld [smem:[#allocation3 + $0x75]]
        %v1222 = vstv %s1221
        %v1223 = vmul.f32 %v1222, %v1216
        %v1224 = vadd.f32 %v1207, %v1223
        %s1225 = sld [smem:[#allocation3 + $0x76]]
        %v1226 = vstv %s1225
        %v1227 = vmul.f32 %v1226, %v1216
        %v1228 = vadd.f32 %v1211, %v1227
        %s1229 = sld [smem:[#allocation3 + $0x77]]
        %v1230 = vstv %s1229
        %v1231 = vmul.f32 %v1230, %v1216
        %v1232 = vadd.f32 %v1215, %v1231
        %1233 = vrot.lane.b32.xlu0 %v1216, 127
        %v1234 = vpop.permute.xlu0 %1233
        %s1235 = sld [smem:[#allocation3 + $0x84]]
        %v1236 = vstv %s1235
        %v1237 = vmul.f32 %v1236, %v1234
        %v1238 = vadd.f32 %v1220, %v1237
        %s1239 = sld [smem:[#allocation3 + $0x85]]
        %v1240 = vstv %s1239
        %v1241 = vmul.f32 %v1240, %v1234
        %v1242 = vadd.f32 %v1224, %v1241
        %s1243 = sld [smem:[#allocation3 + $0x86]]
        %v1244 = vstv %s1243
        %v1245 = vmul.f32 %v1244, %v1234
        %v1246 = vadd.f32 %v1228, %v1245
        %s1247 = sld [smem:[#allocation3 + $0x87]]
        %v1248 = vstv %s1247
        %v1249 = vmul.f32 %v1248, %v1234
        %v1250 = vadd.f32 %v1232, %v1249
        %1251 = vrot.lane.b32.xlu0 %v1216, 126
        %v1252 = vpop.permute.xlu0 %1251
        %s1253 = sld [smem:[#allocation3 + $0x94]]
        %v1254 = vstv %s1253
        %v1255 = vmul.f32 %v1254, %v1252
        %v1256 = vadd.f32 %v1238, %v1255
        %s1257 = sld [smem:[#allocation3 + $0x95]]
        %v1258 = vstv %s1257
        %v1259 = vmul.f32 %v1258, %v1252
        %v1260 = vadd.f32 %v1242, %v1259
        %s1261 = sld [smem:[#allocation3 + $0x96]]
        %v1262 = vstv %s1261
        %v1263 = vmul.f32 %v1262, %v1252
        %v1264 = vadd.f32 %v1246, %v1263
        %s1265 = sld [smem:[#allocation3 + $0x97]]
        %v1266 = vstv %s1265
        %v1267 = vmul.f32 %v1266, %v1252
        %v1268 = vadd.f32 %v1250, %v1267
        %1269 = vrot.lane.b32.xlu0 %v1216, 125
        %v1270 = vpop.permute.xlu0 %1269
        %s1271 = sld [smem:[#allocation3 + $0xa4]]
        %v1272 = vstv %s1271
        %v1273 = vmul.f32 %v1272, %v1270
        %v1274 = vadd.f32 %v1256, %v1273
        %s1275 = sld [smem:[#allocation3 + $0xa5]]
        %v1276 = vstv %s1275
        %v1277 = vmul.f32 %v1276, %v1270
        %v1278 = vadd.f32 %v1260, %v1277
        %s1279 = sld [smem:[#allocation3 + $0xa6]]
        %v1280 = vstv %s1279
        %v1281 = vmul.f32 %v1280, %v1270
        %v1282 = vadd.f32 %v1264, %v1281
        %s1283 = sld [smem:[#allocation3 + $0xa7]]
        %v1284 = vstv %s1283
        %v1285 = vmul.f32 %v1284, %v1270
        %v1286 = vadd.f32 %v1268, %v1285
        %1287 = vrot.lane.b32.xlu0 %v1216, 124
        %v1288 = vpop.permute.xlu0 %1287
        %s1289 = sld [smem:[#allocation3 + $0xb4]]
        %v1290 = vstv %s1289
        %v1291 = vmul.f32 %v1290, %v1288
        %v1292 = vadd.f32 %v1274, %v1291
        %s1293 = sld [smem:[#allocation3 + $0xb5]]
        %v1294 = vstv %s1293
        %v1295 = vmul.f32 %v1294, %v1288
        %v1296 = vadd.f32 %v1278, %v1295
        %s1297 = sld [smem:[#allocation3 + $0xb6]]
        %v1298 = vstv %s1297
        %v1299 = vmul.f32 %v1298, %v1288
        %v1300 = vadd.f32 %v1282, %v1299
        %s1301 = sld [smem:[#allocation3 + $0xb7]]
        %v1302 = vstv %s1301
        %v1303 = vmul.f32 %v1302, %v1288
        %v1304 = vadd.f32 %v1286, %v1303
        %1305 = vrot.lane.b32.xlu0 %v1216, 123
        %v1306 = vpop.permute.xlu0 %1305
        %s1307 = sld [smem:[#allocation3 + $0xc4]]
        %v1308 = vstv %s1307
        %v1309 = vmul.f32 %v1308, %v1306
        %v1310 = vadd.f32 %v1292, %v1309
        %s1311 = sld [smem:[#allocation3 + $0xc5]]
        %v1312 = vstv %s1311
        %v1313 = vmul.f32 %v1312, %v1306
        %v1314 = vadd.f32 %v1296, %v1313
        %s1315 = sld [smem:[#allocation3 + $0xc6]]
        %v1316 = vstv %s1315
        %v1317 = vmul.f32 %v1316, %v1306
        %v1318 = vadd.f32 %v1300, %v1317
        %s1319 = sld [smem:[#allocation3 + $0xc7]]
        %v1320 = vstv %s1319
        %v1321 = vmul.f32 %v1320, %v1306
        %v1322 = vadd.f32 %v1304, %v1321
        %1323 = vrot.lane.b32.xlu0 %v1216, 122
        %v1324 = vpop.permute.xlu0 %1323
        %s1325 = sld [smem:[#allocation3 + $0xd4]]
        %v1326 = vstv %s1325
        %v1327 = vmul.f32 %v1326, %v1324
        %v1328 = vadd.f32 %v1310, %v1327
        %s1329 = sld [smem:[#allocation3 + $0xd5]]
        %v1330 = vstv %s1329
        %v1331 = vmul.f32 %v1330, %v1324
        %v1332 = vadd.f32 %v1314, %v1331
        %s1333 = sld [smem:[#allocation3 + $0xd6]]
        %v1334 = vstv %s1333
        %v1335 = vmul.f32 %v1334, %v1324
        %v1336 = vadd.f32 %v1318, %v1335
        %s1337 = sld [smem:[#allocation3 + $0xd7]]
        %v1338 = vstv %s1337
        %v1339 = vmul.f32 %v1338, %v1324
        %v1340 = vadd.f32 %v1322, %v1339
        %v1341 = vld [vmem:[%s1090 + $0x2] sm:$0xff]
        %s1342 = sld [smem:[#allocation3 + $0xe4]]
        %v1343 = vstv %s1342
        %v1344 = vmul.f32 %v1343, %v1341
        %v1345 = vadd.f32 %v1328, %v1344
        %s1346 = sld [smem:[#allocation3 + $0xe5]]
        %v1347 = vstv %s1346
        %v1348 = vmul.f32 %v1347, %v1341
        %v1349 = vadd.f32 %v1332, %v1348
        %s1350 = sld [smem:[#allocation3 + $0xe6]]
        %v1351 = vstv %s1350
        %v1352 = vmul.f32 %v1351, %v1341
        %v1353 = vadd.f32 %v1336, %v1352
        %s1354 = sld [smem:[#allocation3 + $0xe7]]
        %v1355 = vstv %s1354
        %v1356 = vmul.f32 %v1355, %v1341
        %v1357 = vadd.f32 %v1340, %v1356
        %1358 = vrot.lane.b32.xlu0 %v1341, 127
        %v1359 = vpop.permute.xlu0 %1358
        %s1360 = sld [smem:[#allocation3 + $0xf4]]
        %v1361 = vstv %s1360
        %v1362 = vmul.f32 %v1361, %v1359
        %v1363 = vadd.f32 %v1345, %v1362
        %s1364 = sld [smem:[#allocation3 + $0xf5]]
        %v1365 = vstv %s1364
        %v1366 = vmul.f32 %v1365, %v1359
        %v1367 = vadd.f32 %v1349, %v1366
        %s1368 = sld [smem:[#allocation3 + $0xf6]]
        %v1369 = vstv %s1368
        %v1370 = vmul.f32 %v1369, %v1359
        %v1371 = vadd.f32 %v1353, %v1370
        %s1372 = sld [smem:[#allocation3 + $0xf7]]
        %v1373 = vstv %s1372
        %v1374 = vmul.f32 %v1373, %v1359
        %v1375 = vadd.f32 %v1357, %v1374
        %1376 = vrot.lane.b32.xlu0 %v1341, 126
        %v1377 = vpop.permute.xlu0 %1376
        %s1378 = sld [smem:[#allocation3 + $0x104]]
        %v1379 = vstv %s1378
        %v1380 = vmul.f32 %v1379, %v1377
        %v1381 = vadd.f32 %v1363, %v1380
        %s1382 = sld [smem:[#allocation3 + $0x105]]
        %v1383 = vstv %s1382
        %v1384 = vmul.f32 %v1383, %v1377
        %v1385 = vadd.f32 %v1367, %v1384
        %s1386 = sld [smem:[#allocation3 + $0x106]]
        %v1387 = vstv %s1386
        %v1388 = vmul.f32 %v1387, %v1377
        %v1389 = vadd.f32 %v1371, %v1388
        %s1390 = sld [smem:[#allocation3 + $0x107]]
        %v1391 = vstv %s1390
        %v1392 = vmul.f32 %v1391, %v1377
        %v1393 = vadd.f32 %v1375, %v1392
        %1394 = vrot.lane.b32.xlu0 %v1341, 125
        %v1395 = vpop.permute.xlu0 %1394
        %s1396 = sld [smem:[#allocation3 + $0x114]]
        %v1397 = vstv %s1396
        %v1398 = vmul.f32 %v1397, %v1395
        %v1399 = vadd.f32 %v1381, %v1398
        %s1400 = sld [smem:[#allocation3 + $0x115]]
        %v1401 = vstv %s1400
        %v1402 = vmul.f32 %v1401, %v1395
        %v1403 = vadd.f32 %v1385, %v1402
        %s1404 = sld [smem:[#allocation3 + $0x116]]
        %v1405 = vstv %s1404
        %v1406 = vmul.f32 %v1405, %v1395
        %v1407 = vadd.f32 %v1389, %v1406
        %s1408 = sld [smem:[#allocation3 + $0x117]]
        %v1409 = vstv %s1408
        %v1410 = vmul.f32 %v1409, %v1395
        %v1411 = vadd.f32 %v1393, %v1410
        %1412 = vrot.lane.b32.xlu0 %v1341, 124
        %v1413 = vpop.permute.xlu0 %1412
        %s1414 = sld [smem:[#allocation3 + $0x124]]
        %v1415 = vstv %s1414
        %v1416 = vmul.f32 %v1415, %v1413
        %v1417 = vadd.f32 %v1399, %v1416
        %s1418 = sld [smem:[#allocation3 + $0x125]]
        %v1419 = vstv %s1418
        %v1420 = vmul.f32 %v1419, %v1413
        %v1421 = vadd.f32 %v1403, %v1420
        %s1422 = sld [smem:[#allocation3 + $0x126]]
        %v1423 = vstv %s1422
        %v1424 = vmul.f32 %v1423, %v1413
        %v1425 = vadd.f32 %v1407, %v1424
        %s1426 = sld [smem:[#allocation3 + $0x127]]
        %v1427 = vstv %s1426
        %v1428 = vmul.f32 %v1427, %v1413
        %v1429 = vadd.f32 %v1411, %v1428
        %1430 = vrot.lane.b32.xlu0 %v1341, 123
        %v1431 = vpop.permute.xlu0 %1430
        %s1432 = sld [smem:[#allocation3 + $0x134]]
        %v1433 = vstv %s1432
        %v1434 = vmul.f32 %v1433, %v1431
        %v1435 = vadd.f32 %v1417, %v1434
        %s1436 = sld [smem:[#allocation3 + $0x135]]
        %v1437 = vstv %s1436
        %v1438 = vmul.f32 %v1437, %v1431
        %v1439 = vadd.f32 %v1421, %v1438
        %s1440 = sld [smem:[#allocation3 + $0x136]]
        %v1441 = vstv %s1440
        %v1442 = vmul.f32 %v1441, %v1431
        %v1443 = vadd.f32 %v1425, %v1442
        %s1444 = sld [smem:[#allocation3 + $0x137]]
        %v1445 = vstv %s1444
        %v1446 = vmul.f32 %v1445, %v1431
        %v1447 = vadd.f32 %v1429, %v1446
        %1448 = vrot.lane.b32.xlu0 %v1341, 122
        %v1449 = vpop.permute.xlu0 %1448
        %s1450 = sld [smem:[#allocation3 + $0x144]]
        %v1451 = vstv %s1450
        %v1452 = vmul.f32 %v1451, %v1449
        %v1453 = vadd.f32 %v1435, %v1452
        %s1454 = sld [smem:[#allocation3 + $0x145]]
        %v1455 = vstv %s1454
        %v1456 = vmul.f32 %v1455, %v1449
        %v1457 = vadd.f32 %v1439, %v1456
        %s1458 = sld [smem:[#allocation3 + $0x146]]
        %v1459 = vstv %s1458
        %v1460 = vmul.f32 %v1459, %v1449
        %v1461 = vadd.f32 %v1443, %v1460
        %s1462 = sld [smem:[#allocation3 + $0x147]]
        %v1463 = vstv %s1462
        %v1464 = vmul.f32 %v1463, %v1449
        %v1465 = vadd.f32 %v1447, %v1464
        %v1466 = vld [vmem:[%s1090 + $0x3] sm:$0xff]
        %s1467 = sld [smem:[#allocation3 + $0x154]]
        %v1468 = vstv %s1467
        %v1469 = vmul.f32 %v1468, %v1466
        %v1470 = vadd.f32 %v1453, %v1469
        %s1471 = sld [smem:[#allocation3 + $0x155]]
        %v1472 = vstv %s1471
        %v1473 = vmul.f32 %v1472, %v1466
        %v1474 = vadd.f32 %v1457, %v1473
        %s1475 = sld [smem:[#allocation3 + $0x156]]
        %v1476 = vstv %s1475
        %v1477 = vmul.f32 %v1476, %v1466
        %v1478 = vadd.f32 %v1461, %v1477
        %s1479 = sld [smem:[#allocation3 + $0x157]]
        %v1480 = vstv %s1479
        %v1481 = vmul.f32 %v1480, %v1466
        %v1482 = vadd.f32 %v1465, %v1481
        %1483 = vrot.lane.b32.xlu0 %v1466, 127
        %v1484 = vpop.permute.xlu0 %1483
        %s1485 = sld [smem:[#allocation3 + $0x164]]
        %v1486 = vstv %s1485
        %v1487 = vmul.f32 %v1486, %v1484
        %v1488 = vadd.f32 %v1470, %v1487
        %s1489 = sld [smem:[#allocation3 + $0x165]]
        %v1490 = vstv %s1489
        %v1491 = vmul.f32 %v1490, %v1484
        %v1492 = vadd.f32 %v1474, %v1491
        %s1493 = sld [smem:[#allocation3 + $0x166]]
        %v1494 = vstv %s1493
        %v1495 = vmul.f32 %v1494, %v1484
        %v1496 = vadd.f32 %v1478, %v1495
        %s1497 = sld [smem:[#allocation3 + $0x167]]
        %v1498 = vstv %s1497
        %v1499 = vmul.f32 %v1498, %v1484
        %v1500 = vadd.f32 %v1482, %v1499
        %1501 = vrot.lane.b32.xlu0 %v1466, 126
        %v1502 = vpop.permute.xlu0 %1501
        %s1503 = sld [smem:[#allocation3 + $0x174]]
        %v1504 = vstv %s1503
        %v1505 = vmul.f32 %v1504, %v1502
        %v1506 = vadd.f32 %v1488, %v1505
        %s1507 = sld [smem:[#allocation3 + $0x175]]
        %v1508 = vstv %s1507
        %v1509 = vmul.f32 %v1508, %v1502
        %v1510 = vadd.f32 %v1492, %v1509
        %s1511 = sld [smem:[#allocation3 + $0x176]]
        %v1512 = vstv %s1511
        %v1513 = vmul.f32 %v1512, %v1502
        %v1514 = vadd.f32 %v1496, %v1513
        %s1515 = sld [smem:[#allocation3 + $0x177]]
        %v1516 = vstv %s1515
        %v1517 = vmul.f32 %v1516, %v1502
        %v1518 = vadd.f32 %v1500, %v1517
        %1519 = vrot.lane.b32.xlu0 %v1466, 125
        %v1520 = vpop.permute.xlu0 %1519
        %s1521 = sld [smem:[#allocation3 + $0x184]]
        %v1522 = vstv %s1521
        %v1523 = vmul.f32 %v1522, %v1520
        %v1524 = vadd.f32 %v1506, %v1523
        %s1525 = sld [smem:[#allocation3 + $0x185]]
        %v1526 = vstv %s1525
        %v1527 = vmul.f32 %v1526, %v1520
        %v1528 = vadd.f32 %v1510, %v1527
        %s1529 = sld [smem:[#allocation3 + $0x186]]
        %v1530 = vstv %s1529
        %v1531 = vmul.f32 %v1530, %v1520
        %v1532 = vadd.f32 %v1514, %v1531
        %s1533 = sld [smem:[#allocation3 + $0x187]]
        %v1534 = vstv %s1533
        %v1535 = vmul.f32 %v1534, %v1520
        %v1536 = vadd.f32 %v1518, %v1535
        %1537 = vrot.lane.b32.xlu0 %v1466, 124
        %v1538 = vpop.permute.xlu0 %1537
        %s1539 = sld [smem:[#allocation3 + $0x194]]
        %v1540 = vstv %s1539
        %v1541 = vmul.f32 %v1540, %v1538
        %v1542 = vadd.f32 %v1524, %v1541
        %s1543 = sld [smem:[#allocation3 + $0x195]]
        %v1544 = vstv %s1543
        %v1545 = vmul.f32 %v1544, %v1538
        %v1546 = vadd.f32 %v1528, %v1545
        %s1547 = sld [smem:[#allocation3 + $0x196]]
        %v1548 = vstv %s1547
        %v1549 = vmul.f32 %v1548, %v1538
        %v1550 = vadd.f32 %v1532, %v1549
        %s1551 = sld [smem:[#allocation3 + $0x197]]
        %v1552 = vstv %s1551
        %v1553 = vmul.f32 %v1552, %v1538
        %v1554 = vadd.f32 %v1536, %v1553
        %1555 = vrot.lane.b32.xlu0 %v1466, 123
        %v1556 = vpop.permute.xlu0 %1555
        %s1557 = sld [smem:[#allocation3 + $0x1a4]]
        %v1558 = vstv %s1557
        %v1559 = vmul.f32 %v1558, %v1556
        %v1560 = vadd.f32 %v1542, %v1559
        %s1561 = sld [smem:[#allocation3 + $0x1a5]]
        %v1562 = vstv %s1561
        %v1563 = vmul.f32 %v1562, %v1556
        %v1564 = vadd.f32 %v1546, %v1563
        %s1565 = sld [smem:[#allocation3 + $0x1a6]]
        %v1566 = vstv %s1565
        %v1567 = vmul.f32 %v1566, %v1556
        %v1568 = vadd.f32 %v1550, %v1567
        %s1569 = sld [smem:[#allocation3 + $0x1a7]]
        %v1570 = vstv %s1569
        %v1571 = vmul.f32 %v1570, %v1556
        %v1572 = vadd.f32 %v1554, %v1571
        %1573 = vrot.lane.b32.xlu0 %v1466, 122
        %v1574 = vpop.permute.xlu0 %1573
        %s1575 = sld [smem:[#allocation3 + $0x1b4]]
        %v1576 = vstv %s1575
        %v1577 = vmul.f32 %v1576, %v1574
        %v1578 = vadd.f32 %v1560, %v1577
        %s1579 = sld [smem:[#allocation3 + $0x1b5]]
        %v1580 = vstv %s1579
        %v1581 = vmul.f32 %v1580, %v1574
        %v1582 = vadd.f32 %v1564, %v1581
        %s1583 = sld [smem:[#allocation3 + $0x1b6]]
        %v1584 = vstv %s1583
        %v1585 = vmul.f32 %v1584, %v1574
        %v1586 = vadd.f32 %v1568, %v1585
        %s1587 = sld [smem:[#allocation3 + $0x1b7]]
        %v1588 = vstv %s1587
        %v1589 = vmul.f32 %v1588, %v1574
        %v1590 = vadd.f32 %v1572, %v1589
        %v1591 = vld [vmem:[%s1090 + $0x4] sm:$0xff]
        %s1592 = sld [smem:[#allocation3 + $0x1c4]]
        %v1593 = vstv %s1592
        %v1594 = vmul.f32 %v1593, %v1591
        %v1595 = vadd.f32 %v1578, %v1594
        %s1596 = sld [smem:[#allocation3 + $0x1c5]]
        %v1597 = vstv %s1596
        %v1598 = vmul.f32 %v1597, %v1591
        %v1599 = vadd.f32 %v1582, %v1598
        %s1600 = sld [smem:[#allocation3 + $0x1c6]]
        %v1601 = vstv %s1600
        %v1602 = vmul.f32 %v1601, %v1591
        %v1603 = vadd.f32 %v1586, %v1602
        %s1604 = sld [smem:[#allocation3 + $0x1c7]]
        %v1605 = vstv %s1604
        %v1606 = vmul.f32 %v1605, %v1591
        %v1607 = vadd.f32 %v1590, %v1606
        %1608 = vrot.lane.b32.xlu0 %v1591, 127
        %v1609 = vpop.permute.xlu0 %1608
        %s1610 = sld [smem:[#allocation3 + $0x1d4]]
        %v1611 = vstv %s1610
        %v1612 = vmul.f32 %v1611, %v1609
        %v1613 = vadd.f32 %v1595, %v1612
        %s1614 = sld [smem:[#allocation3 + $0x1d5]]
        %v1615 = vstv %s1614
        %v1616 = vmul.f32 %v1615, %v1609
        %v1617 = vadd.f32 %v1599, %v1616
        %s1618 = sld [smem:[#allocation3 + $0x1d6]]
        %v1619 = vstv %s1618
        %v1620 = vmul.f32 %v1619, %v1609
        %v1621 = vadd.f32 %v1603, %v1620
        %s1622 = sld [smem:[#allocation3 + $0x1d7]]
        %v1623 = vstv %s1622
        %v1624 = vmul.f32 %v1623, %v1609
        %v1625 = vadd.f32 %v1607, %v1624
        %1626 = vrot.lane.b32.xlu0 %v1591, 126
        %v1627 = vpop.permute.xlu0 %1626
        %s1628 = sld [smem:[#allocation3 + $0x1e4]]
        %v1629 = vstv %s1628
        %v1630 = vmul.f32 %v1629, %v1627
        %v1631 = vadd.f32 %v1613, %v1630
        %s1632 = sld [smem:[#allocation3 + $0x1e5]]
        %v1633 = vstv %s1632
        %v1634 = vmul.f32 %v1633, %v1627
        %v1635 = vadd.f32 %v1617, %v1634
        %s1636 = sld [smem:[#allocation3 + $0x1e6]]
        %v1637 = vstv %s1636
        %v1638 = vmul.f32 %v1637, %v1627
        %v1639 = vadd.f32 %v1621, %v1638
        %s1640 = sld [smem:[#allocation3 + $0x1e7]]
        %v1641 = vstv %s1640
        %v1642 = vmul.f32 %v1641, %v1627
        %v1643 = vadd.f32 %v1625, %v1642
        %1644 = vrot.lane.b32.xlu0 %v1591, 125
        %v1645 = vpop.permute.xlu0 %1644
        %s1646 = sld [smem:[#allocation3 + $0x1f4]]
        %v1647 = vstv %s1646
        %v1648 = vmul.f32 %v1647, %v1645
        %v1649 = vadd.f32 %v1631, %v1648
        %s1650 = sld [smem:[#allocation3 + $0x1f5]]
        %v1651 = vstv %s1650
        %v1652 = vmul.f32 %v1651, %v1645
        %v1653 = vadd.f32 %v1635, %v1652
        %s1654 = sld [smem:[#allocation3 + $0x1f6]]
        %v1655 = vstv %s1654
        %v1656 = vmul.f32 %v1655, %v1645
        %v1657 = vadd.f32 %v1639, %v1656
        %s1658 = sld [smem:[#allocation3 + $0x1f7]]
        %v1659 = vstv %s1658
        %v1660 = vmul.f32 %v1659, %v1645
        %v1661 = vadd.f32 %v1643, %v1660
        %1662 = vrot.lane.b32.xlu0 %v1591, 124
        %v1663 = vpop.permute.xlu0 %1662
        %s1664 = sld [smem:[#allocation3 + $0x204]]
        %v1665 = vstv %s1664
        %v1666 = vmul.f32 %v1665, %v1663
        %v1667 = vadd.f32 %v1649, %v1666
        %s1668 = sld [smem:[#allocation3 + $0x205]]
        %v1669 = vstv %s1668
        %v1670 = vmul.f32 %v1669, %v1663
        %v1671 = vadd.f32 %v1653, %v1670
        %s1672 = sld [smem:[#allocation3 + $0x206]]
        %v1673 = vstv %s1672
        %v1674 = vmul.f32 %v1673, %v1663
        %v1675 = vadd.f32 %v1657, %v1674
        %s1676 = sld [smem:[#allocation3 + $0x207]]
        %v1677 = vstv %s1676
        %v1678 = vmul.f32 %v1677, %v1663
        %v1679 = vadd.f32 %v1661, %v1678
        %1680 = vrot.lane.b32.xlu0 %v1591, 123
        %v1681 = vpop.permute.xlu0 %1680
        %s1682 = sld [smem:[#allocation3 + $0x214]]
        %v1683 = vstv %s1682
        %v1684 = vmul.f32 %v1683, %v1681
        %v1685 = vadd.f32 %v1667, %v1684
        %s1686 = sld [smem:[#allocation3 + $0x215]]
        %v1687 = vstv %s1686
        %v1688 = vmul.f32 %v1687, %v1681
        %v1689 = vadd.f32 %v1671, %v1688
        %s1690 = sld [smem:[#allocation3 + $0x216]]
        %v1691 = vstv %s1690
        %v1692 = vmul.f32 %v1691, %v1681
        %v1693 = vadd.f32 %v1675, %v1692
        %s1694 = sld [smem:[#allocation3 + $0x217]]
        %v1695 = vstv %s1694
        %v1696 = vmul.f32 %v1695, %v1681
        %v1697 = vadd.f32 %v1679, %v1696
        %1698 = vrot.lane.b32.xlu0 %v1591, 122
        %v1699 = vpop.permute.xlu0 %1698
        %s1700 = sld [smem:[#allocation3 + $0x224]]
        %v1701 = vstv %s1700
        %v1702 = vmul.f32 %v1701, %v1699
        %v1703 = vadd.f32 %v1685, %v1702
        %s1704 = sld [smem:[#allocation3 + $0x225]]
        %v1705 = vstv %s1704
        %v1706 = vmul.f32 %v1705, %v1699
        %v1707 = vadd.f32 %v1689, %v1706
        %s1708 = sld [smem:[#allocation3 + $0x226]]
        %v1709 = vstv %s1708
        %v1710 = vmul.f32 %v1709, %v1699
        %v1711 = vadd.f32 %v1693, %v1710
        %s1712 = sld [smem:[#allocation3 + $0x227]]
        %v1713 = vstv %s1712
        %v1714 = vmul.f32 %v1713, %v1699
        %v1715 = vadd.f32 %v1697, %v1714
        %v1716 = vld [vmem:[%s1090 + $0x5] sm:$0xff]
        %s1717 = sld [smem:[#allocation3 + $0x234]]
        %v1718 = vstv %s1717
        %v1719 = vmul.f32 %v1718, %v1716
        %v1720 = vadd.f32 %v1703, %v1719
        %s1721 = sld [smem:[#allocation3 + $0x235]]
        %v1722 = vstv %s1721
        %v1723 = vmul.f32 %v1722, %v1716
        %v1724 = vadd.f32 %v1707, %v1723
        %s1725 = sld [smem:[#allocation3 + $0x236]]
        %v1726 = vstv %s1725
        %v1727 = vmul.f32 %v1726, %v1716
        %v1728 = vadd.f32 %v1711, %v1727
        %s1729 = sld [smem:[#allocation3 + $0x237]]
        %v1730 = vstv %s1729
        %v1731 = vmul.f32 %v1730, %v1716
        %v1732 = vadd.f32 %v1715, %v1731
        %1733 = vrot.lane.b32.xlu0 %v1716, 127
        %v1734 = vpop.permute.xlu0 %1733
        %s1735 = sld [smem:[#allocation3 + $0x244]]
        %v1736 = vstv %s1735
        %v1737 = vmul.f32 %v1736, %v1734
        %v1738 = vadd.f32 %v1720, %v1737
        %s1739 = sld [smem:[#allocation3 + $0x245]]
        %v1740 = vstv %s1739
        %v1741 = vmul.f32 %v1740, %v1734
        %v1742 = vadd.f32 %v1724, %v1741
        %s1743 = sld [smem:[#allocation3 + $0x246]]
        %v1744 = vstv %s1743
        %v1745 = vmul.f32 %v1744, %v1734
        %v1746 = vadd.f32 %v1728, %v1745
        %s1747 = sld [smem:[#allocation3 + $0x247]]
        %v1748 = vstv %s1747
        %v1749 = vmul.f32 %v1748, %v1734
        %v1750 = vadd.f32 %v1732, %v1749
        %1751 = vrot.lane.b32.xlu0 %v1716, 126
        %v1752 = vpop.permute.xlu0 %1751
        %s1753 = sld [smem:[#allocation3 + $0x254]]
        %v1754 = vstv %s1753
        %v1755 = vmul.f32 %v1754, %v1752
        %v1756 = vadd.f32 %v1738, %v1755
        %s1757 = sld [smem:[#allocation3 + $0x255]]
        %v1758 = vstv %s1757
        %v1759 = vmul.f32 %v1758, %v1752
        %v1760 = vadd.f32 %v1742, %v1759
        %s1761 = sld [smem:[#allocation3 + $0x256]]
        %v1762 = vstv %s1761
        %v1763 = vmul.f32 %v1762, %v1752
        %v1764 = vadd.f32 %v1746, %v1763
        %s1765 = sld [smem:[#allocation3 + $0x257]]
        %v1766 = vstv %s1765
        %v1767 = vmul.f32 %v1766, %v1752
        %v1768 = vadd.f32 %v1750, %v1767
        %1769 = vrot.lane.b32.xlu0 %v1716, 125
        %v1770 = vpop.permute.xlu0 %1769
        %s1771 = sld [smem:[#allocation3 + $0x264]]
        %v1772 = vstv %s1771
        %v1773 = vmul.f32 %v1772, %v1770
        %v1774 = vadd.f32 %v1756, %v1773
        %s1775 = sld [smem:[#allocation3 + $0x265]]
        %v1776 = vstv %s1775
        %v1777 = vmul.f32 %v1776, %v1770
        %v1778 = vadd.f32 %v1760, %v1777
        %s1779 = sld [smem:[#allocation3 + $0x266]]
        %v1780 = vstv %s1779
        %v1781 = vmul.f32 %v1780, %v1770
        %v1782 = vadd.f32 %v1764, %v1781
        %s1783 = sld [smem:[#allocation3 + $0x267]]
        %v1784 = vstv %s1783
        %v1785 = vmul.f32 %v1784, %v1770
        %v1786 = vadd.f32 %v1768, %v1785
        %1787 = vrot.lane.b32.xlu0 %v1716, 124
        %v1788 = vpop.permute.xlu0 %1787
        %s1789 = sld [smem:[#allocation3 + $0x274]]
        %v1790 = vstv %s1789
        %v1791 = vmul.f32 %v1790, %v1788
        %v1792 = vadd.f32 %v1774, %v1791
        %s1793 = sld [smem:[#allocation3 + $0x275]]
        %v1794 = vstv %s1793
        %v1795 = vmul.f32 %v1794, %v1788
        %v1796 = vadd.f32 %v1778, %v1795
        %s1797 = sld [smem:[#allocation3 + $0x276]]
        %v1798 = vstv %s1797
        %v1799 = vmul.f32 %v1798, %v1788
        %v1800 = vadd.f32 %v1782, %v1799
        %s1801 = sld [smem:[#allocation3 + $0x277]]
        %v1802 = vstv %s1801
        %v1803 = vmul.f32 %v1802, %v1788
        %v1804 = vadd.f32 %v1786, %v1803
        %1805 = vrot.lane.b32.xlu0 %v1716, 123
        %v1806 = vpop.permute.xlu0 %1805
        %s1807 = sld [smem:[#allocation3 + $0x284]]
        %v1808 = vstv %s1807
        %v1809 = vmul.f32 %v1808, %v1806
        %v1810 = vadd.f32 %v1792, %v1809
        %s1811 = sld [smem:[#allocation3 + $0x285]]
        %v1812 = vstv %s1811
        %v1813 = vmul.f32 %v1812, %v1806
        %v1814 = vadd.f32 %v1796, %v1813
        %s1815 = sld [smem:[#allocation3 + $0x286]]
        %v1816 = vstv %s1815
        %v1817 = vmul.f32 %v1816, %v1806
        %v1818 = vadd.f32 %v1800, %v1817
        %s1819 = sld [smem:[#allocation3 + $0x287]]
        %v1820 = vstv %s1819
        %v1821 = vmul.f32 %v1820, %v1806
        %v1822 = vadd.f32 %v1804, %v1821
        %1823 = vrot.lane.b32.xlu0 %v1716, 122
        %v1824 = vpop.permute.xlu0 %1823
        %s1825 = sld [smem:[#allocation3 + $0x294]]
        %v1826 = vstv %s1825
        %v1827 = vmul.f32 %v1826, %v1824
        %v1828 = vadd.f32 %v1810, %v1827
        %s1829 = sld [smem:[#allocation3 + $0x295]]
        %v1830 = vstv %s1829
        %v1831 = vmul.f32 %v1830, %v1824
        %v1832 = vadd.f32 %v1814, %v1831
        %s1833 = sld [smem:[#allocation3 + $0x296]]
        %v1834 = vstv %s1833
        %v1835 = vmul.f32 %v1834, %v1824
        %v1836 = vadd.f32 %v1818, %v1835
        %s1837 = sld [smem:[#allocation3 + $0x297]]
        %v1838 = vstv %s1837
        %v1839 = vmul.f32 %v1838, %v1824
        %v1840 = vadd.f32 %v1822, %v1839
        %v1841 = vld [vmem:[%s1090 + $0x6] sm:$0xff]
        %s1842 = sld [smem:[#allocation3 + $0x2a4]]
        %v1843 = vstv %s1842
        %v1844 = vmul.f32 %v1843, %v1841
        %v1845 = vadd.f32 %v1828, %v1844
        %s1846 = sld [smem:[#allocation3 + $0x2a5]]
        %v1847 = vstv %s1846
        %v1848 = vmul.f32 %v1847, %v1841
        %v1849 = vadd.f32 %v1832, %v1848
        %s1850 = sld [smem:[#allocation3 + $0x2a6]]
        %v1851 = vstv %s1850
        %v1852 = vmul.f32 %v1851, %v1841
        %v1853 = vadd.f32 %v1836, %v1852
        %s1854 = sld [smem:[#allocation3 + $0x2a7]]
        %v1855 = vstv %s1854
        %v1856 = vmul.f32 %v1855, %v1841
        %v1857 = vadd.f32 %v1840, %v1856
        %1858 = vrot.lane.b32.xlu0 %v1841, 127
        %v1859 = vpop.permute.xlu0 %1858
        %s1860 = sld [smem:[#allocation3 + $0x2b4]]
        %v1861 = vstv %s1860
        %v1862 = vmul.f32 %v1861, %v1859
        %v1863 = vadd.f32 %v1845, %v1862
        %s1864 = sld [smem:[#allocation3 + $0x2b5]]
        %v1865 = vstv %s1864
        %v1866 = vmul.f32 %v1865, %v1859
        %v1867 = vadd.f32 %v1849, %v1866
        %s1868 = sld [smem:[#allocation3 + $0x2b6]]
        %v1869 = vstv %s1868
        %v1870 = vmul.f32 %v1869, %v1859
        %v1871 = vadd.f32 %v1853, %v1870
        %s1872 = sld [smem:[#allocation3 + $0x2b7]]
        %v1873 = vstv %s1872
        %v1874 = vmul.f32 %v1873, %v1859
        %v1875 = vadd.f32 %v1857, %v1874
        %1876 = vrot.lane.b32.xlu0 %v1841, 126
        %v1877 = vpop.permute.xlu0 %1876
        %s1878 = sld [smem:[#allocation3 + $0x2c4]]
        %v1879 = vstv %s1878
        %v1880 = vmul.f32 %v1879, %v1877
        %v1881 = vadd.f32 %v1863, %v1880
        %s1882 = sld [smem:[#allocation3 + $0x2c5]]
        %v1883 = vstv %s1882
        %v1884 = vmul.f32 %v1883, %v1877
        %v1885 = vadd.f32 %v1867, %v1884
        %s1886 = sld [smem:[#allocation3 + $0x2c6]]
        %v1887 = vstv %s1886
        %v1888 = vmul.f32 %v1887, %v1877
        %v1889 = vadd.f32 %v1871, %v1888
        %s1890 = sld [smem:[#allocation3 + $0x2c7]]
        %v1891 = vstv %s1890
        %v1892 = vmul.f32 %v1891, %v1877
        %v1893 = vadd.f32 %v1875, %v1892
        %1894 = vrot.lane.b32.xlu0 %v1841, 125
        %v1895 = vpop.permute.xlu0 %1894
        %s1896 = sld [smem:[#allocation3 + $0x2d4]]
        %v1897 = vstv %s1896
        %v1898 = vmul.f32 %v1897, %v1895
        %v1899 = vadd.f32 %v1881, %v1898
        %s1900 = sld [smem:[#allocation3 + $0x2d5]]
        %v1901 = vstv %s1900
        %v1902 = vmul.f32 %v1901, %v1895
        %v1903 = vadd.f32 %v1885, %v1902
        %s1904 = sld [smem:[#allocation3 + $0x2d6]]
        %v1905 = vstv %s1904
        %v1906 = vmul.f32 %v1905, %v1895
        %v1907 = vadd.f32 %v1889, %v1906
        %s1908 = sld [smem:[#allocation3 + $0x2d7]]
        %v1909 = vstv %s1908
        %v1910 = vmul.f32 %v1909, %v1895
        %v1911 = vadd.f32 %v1893, %v1910
        %1912 = vrot.lane.b32.xlu0 %v1841, 124
        %v1913 = vpop.permute.xlu0 %1912
        %s1914 = sld [smem:[#allocation3 + $0x2e4]]
        %v1915 = vstv %s1914
        %v1916 = vmul.f32 %v1915, %v1913
        %v1917 = vadd.f32 %v1899, %v1916
        %s1918 = sld [smem:[#allocation3 + $0x2e5]]
        %v1919 = vstv %s1918
        %v1920 = vmul.f32 %v1919, %v1913
        %v1921 = vadd.f32 %v1903, %v1920
        %s1922 = sld [smem:[#allocation3 + $0x2e6]]
        %v1923 = vstv %s1922
        %v1924 = vmul.f32 %v1923, %v1913
        %v1925 = vadd.f32 %v1907, %v1924
        %s1926 = sld [smem:[#allocation3 + $0x2e7]]
        %v1927 = vstv %s1926
        %v1928 = vmul.f32 %v1927, %v1913
        %v1929 = vadd.f32 %v1911, %v1928
        %1930 = vrot.lane.b32.xlu0 %v1841, 123
        %v1931 = vpop.permute.xlu0 %1930
        %s1932 = sld [smem:[#allocation3 + $0x2f4]]
        %v1933 = vstv %s1932
        %v1934 = vmul.f32 %v1933, %v1931
        %v1935 = vadd.f32 %v1917, %v1934
        %s1936 = sld [smem:[#allocation3 + $0x2f5]]
        %v1937 = vstv %s1936
        %v1938 = vmul.f32 %v1937, %v1931
        %v1939 = vadd.f32 %v1921, %v1938
        %s1940 = sld [smem:[#allocation3 + $0x2f6]]
        %v1941 = vstv %s1940
        %v1942 = vmul.f32 %v1941, %v1931
        %v1943 = vadd.f32 %v1925, %v1942
        %s1944 = sld [smem:[#allocation3 + $0x2f7]]
        %v1945 = vstv %s1944
        %v1946 = vmul.f32 %v1945, %v1931
        %v1947 = vadd.f32 %v1929, %v1946
        %1948 = vrot.lane.b32.xlu0 %v1841, 122
        %v1949 = vpop.permute.xlu0 %1948
        %s1950 = sld [smem:[#allocation3 + $0x304]]
        %v1951 = vstv %s1950
        %v1952 = vmul.f32 %v1951, %v1949
        %v1953 = vadd.f32 %v1935, %v1952
        %s1954 = sld [smem:[#allocation3 + $0x305]]
        %v1955 = vstv %s1954
        %v1956 = vmul.f32 %v1955, %v1949
        %v1957 = vadd.f32 %v1939, %v1956
        %s1958 = sld [smem:[#allocation3 + $0x306]]
        %v1959 = vstv %s1958
        %v1960 = vmul.f32 %v1959, %v1949
        %v1961 = vadd.f32 %v1943, %v1960
        %s1962 = sld [smem:[#allocation3 + $0x307]]
        %v1963 = vstv %s1962
        %v1964 = vmul.f32 %v1963, %v1949
        %v1965 = vadd.f32 %v1947, %v1964
        %s1966 = scalar_lea.vmem %s192, 32 [#allocation2]
        %v1967 = vld [vmem:[%s1966] sm:$0xff]
        %s1968 = sld [smem:[#allocation3 + $0x8]]
        %v1969 = vstv %s1968
        %v1970 = vmul.f32 %v1969, %v1967
        %v1971 = vadd.f32 %v1953, %v1970
        %s1972 = sld [smem:[#allocation3 + $0x9]]
        %v1973 = vstv %s1972
        %v1974 = vmul.f32 %v1973, %v1967
        %v1975 = vadd.f32 %v1957, %v1974
        %s1976 = sld [smem:[#allocation3 + $0xa]]
        %v1977 = vstv %s1976
        %v1978 = vmul.f32 %v1977, %v1967
        %v1979 = vadd.f32 %v1961, %v1978
        %s1980 = sld [smem:[#allocation3 + $0xb]]
        %v1981 = vstv %s1980
        %v1982 = vmul.f32 %v1981, %v1967
        %v1983 = vadd.f32 %v1965, %v1982
        %1984 = vrot.lane.b32.xlu0 %v1967, 127
        %v1985 = vpop.permute.xlu0 %1984
        %s1986 = sld [smem:[#allocation3 + $0x18]]
        %v1987 = vstv %s1986
        %v1988 = vmul.f32 %v1987, %v1985
        %v1989 = vadd.f32 %v1971, %v1988
        %s1990 = sld [smem:[#allocation3 + $0x19]]
        %v1991 = vstv %s1990
        %v1992 = vmul.f32 %v1991, %v1985
        %v1993 = vadd.f32 %v1975, %v1992
        %s1994 = sld [smem:[#allocation3 + $0x1a]]
        %v1995 = vstv %s1994
        %v1996 = vmul.f32 %v1995, %v1985
        %v1997 = vadd.f32 %v1979, %v1996
        %s1998 = sld [smem:[#allocation3 + $0x1b]]
        %v1999 = vstv %s1998
        %v2000 = vmul.f32 %v1999, %v1985
        %v2001 = vadd.f32 %v1983, %v2000
        %2002 = vrot.lane.b32.xlu0 %v1967, 126
        %v2003 = vpop.permute.xlu0 %2002
        %s2004 = sld [smem:[#allocation3 + $0x28]]
        %v2005 = vstv %s2004
        %v2006 = vmul.f32 %v2005, %v2003
        %v2007 = vadd.f32 %v1989, %v2006
        %s2008 = sld [smem:[#allocation3 + $0x29]]
        %v2009 = vstv %s2008
        %v2010 = vmul.f32 %v2009, %v2003
        %v2011 = vadd.f32 %v1993, %v2010
        %s2012 = sld [smem:[#allocation3 + $0x2a]]
        %v2013 = vstv %s2012
        %v2014 = vmul.f32 %v2013, %v2003
        %v2015 = vadd.f32 %v1997, %v2014
        %s2016 = sld [smem:[#allocation3 + $0x2b]]
        %v2017 = vstv %s2016
        %v2018 = vmul.f32 %v2017, %v2003
        %v2019 = vadd.f32 %v2001, %v2018
        %2020 = vrot.lane.b32.xlu0 %v1967, 125
        %v2021 = vpop.permute.xlu0 %2020
        %s2022 = sld [smem:[#allocation3 + $0x38]]
        %v2023 = vstv %s2022
        %v2024 = vmul.f32 %v2023, %v2021
        %v2025 = vadd.f32 %v2007, %v2024
        %s2026 = sld [smem:[#allocation3 + $0x39]]
        %v2027 = vstv %s2026
        %v2028 = vmul.f32 %v2027, %v2021
        %v2029 = vadd.f32 %v2011, %v2028
        %s2030 = sld [smem:[#allocation3 + $0x3a]]
        %v2031 = vstv %s2030
        %v2032 = vmul.f32 %v2031, %v2021
        %v2033 = vadd.f32 %v2015, %v2032
        %s2034 = sld [smem:[#allocation3 + $0x3b]]
        %v2035 = vstv %s2034
        %v2036 = vmul.f32 %v2035, %v2021
        %v2037 = vadd.f32 %v2019, %v2036
        %2038 = vrot.lane.b32.xlu0 %v1967, 124
        %v2039 = vpop.permute.xlu0 %2038
        %s2040 = sld [smem:[#allocation3 + $0x48]]
        %v2041 = vstv %s2040
        %v2042 = vmul.f32 %v2041, %v2039
        %v2043 = vadd.f32 %v2025, %v2042
        %s2044 = sld [smem:[#allocation3 + $0x49]]
        %v2045 = vstv %s2044
        %v2046 = vmul.f32 %v2045, %v2039
        %v2047 = vadd.f32 %v2029, %v2046
        %s2048 = sld [smem:[#allocation3 + $0x4a]]
        %v2049 = vstv %s2048
        %v2050 = vmul.f32 %v2049, %v2039
        %v2051 = vadd.f32 %v2033, %v2050
        %s2052 = sld [smem:[#allocation3 + $0x4b]]
        %v2053 = vstv %s2052
        %v2054 = vmul.f32 %v2053, %v2039
        %v2055 = vadd.f32 %v2037, %v2054
        %2056 = vrot.lane.b32.xlu0 %v1967, 123
        %v2057 = vpop.permute.xlu0 %2056
        %s2058 = sld [smem:[#allocation3 + $0x58]]
        %v2059 = vstv %s2058
        %v2060 = vmul.f32 %v2059, %v2057
        %v2061 = vadd.f32 %v2043, %v2060
        %s2062 = sld [smem:[#allocation3 + $0x59]]
        %v2063 = vstv %s2062
        %v2064 = vmul.f32 %v2063, %v2057
        %v2065 = vadd.f32 %v2047, %v2064
        %s2066 = sld [smem:[#allocation3 + $0x5a]]
        %v2067 = vstv %s2066
        %v2068 = vmul.f32 %v2067, %v2057
        %v2069 = vadd.f32 %v2051, %v2068
        %s2070 = sld [smem:[#allocation3 + $0x5b]]
        %v2071 = vstv %s2070
        %v2072 = vmul.f32 %v2071, %v2057
        %v2073 = vadd.f32 %v2055, %v2072
        %2074 = vrot.lane.b32.xlu0 %v1967, 122
        %v2075 = vpop.permute.xlu0 %2074
        %s2076 = sld [smem:[#allocation3 + $0x68]]
        %v2077 = vstv %s2076
        %v2078 = vmul.f32 %v2077, %v2075
        %v2079 = vadd.f32 %v2061, %v2078
        %s2080 = sld [smem:[#allocation3 + $0x69]]
        %v2081 = vstv %s2080
        %v2082 = vmul.f32 %v2081, %v2075
        %v2083 = vadd.f32 %v2065, %v2082
        %s2084 = sld [smem:[#allocation3 + $0x6a]]
        %v2085 = vstv %s2084
        %v2086 = vmul.f32 %v2085, %v2075
        %v2087 = vadd.f32 %v2069, %v2086
        %s2088 = sld [smem:[#allocation3 + $0x6b]]
        %v2089 = vstv %s2088
        %v2090 = vmul.f32 %v2089, %v2075
        %v2091 = vadd.f32 %v2073, %v2090
        %v2092 = vld [vmem:[%s1966 + $0x1] sm:$0xff]
        %s2093 = sld [smem:[#allocation3 + $0x78]]
        %v2094 = vstv %s2093
        %v2095 = vmul.f32 %v2094, %v2092
        %v2096 = vadd.f32 %v2079, %v2095
        %s2097 = sld [smem:[#allocation3 + $0x79]]
        %v2098 = vstv %s2097
        %v2099 = vmul.f32 %v2098, %v2092
        %v2100 = vadd.f32 %v2083, %v2099
        %s2101 = sld [smem:[#allocation3 + $0x7a]]
        %v2102 = vstv %s2101
        %v2103 = vmul.f32 %v2102, %v2092
        %v2104 = vadd.f32 %v2087, %v2103
        %s2105 = sld [smem:[#allocation3 + $0x7b]]
        %v2106 = vstv %s2105
        %v2107 = vmul.f32 %v2106, %v2092
        %v2108 = vadd.f32 %v2091, %v2107
        %2109 = vrot.lane.b32.xlu0 %v2092, 127
        %v2110 = vpop.permute.xlu0 %2109
        %s2111 = sld [smem:[#allocation3 + $0x88]]
        %v2112 = vstv %s2111
        %v2113 = vmul.f32 %v2112, %v2110
        %v2114 = vadd.f32 %v2096, %v2113
        %s2115 = sld [smem:[#allocation3 + $0x89]]
        %v2116 = vstv %s2115
        %v2117 = vmul.f32 %v2116, %v2110
        %v2118 = vadd.f32 %v2100, %v2117
        %s2119 = sld [smem:[#allocation3 + $0x8a]]
        %v2120 = vstv %s2119
        %v2121 = vmul.f32 %v2120, %v2110
        %v2122 = vadd.f32 %v2104, %v2121
        %s2123 = sld [smem:[#allocation3 + $0x8b]]
        %v2124 = vstv %s2123
        %v2125 = vmul.f32 %v2124, %v2110
        %v2126 = vadd.f32 %v2108, %v2125
        %2127 = vrot.lane.b32.xlu0 %v2092, 126
        %v2128 = vpop.permute.xlu0 %2127
        %s2129 = sld [smem:[#allocation3 + $0x98]]
        %v2130 = vstv %s2129
        %v2131 = vmul.f32 %v2130, %v2128
        %v2132 = vadd.f32 %v2114, %v2131
        %s2133 = sld [smem:[#allocation3 + $0x99]]
        %v2134 = vstv %s2133
        %v2135 = vmul.f32 %v2134, %v2128
        %v2136 = vadd.f32 %v2118, %v2135
        %s2137 = sld [smem:[#allocation3 + $0x9a]]
        %v2138 = vstv %s2137
        %v2139 = vmul.f32 %v2138, %v2128
        %v2140 = vadd.f32 %v2122, %v2139
        %s2141 = sld [smem:[#allocation3 + $0x9b]]
        %v2142 = vstv %s2141
        %v2143 = vmul.f32 %v2142, %v2128
        %v2144 = vadd.f32 %v2126, %v2143
        %2145 = vrot.lane.b32.xlu0 %v2092, 125
        %v2146 = vpop.permute.xlu0 %2145
        %s2147 = sld [smem:[#allocation3 + $0xa8]]
        %v2148 = vstv %s2147
        %v2149 = vmul.f32 %v2148, %v2146
        %v2150 = vadd.f32 %v2132, %v2149
        %s2151 = sld [smem:[#allocation3 + $0xa9]]
        %v2152 = vstv %s2151
        %v2153 = vmul.f32 %v2152, %v2146
        %v2154 = vadd.f32 %v2136, %v2153
        %s2155 = sld [smem:[#allocation3 + $0xaa]]
        %v2156 = vstv %s2155
        %v2157 = vmul.f32 %v2156, %v2146
        %v2158 = vadd.f32 %v2140, %v2157
        %s2159 = sld [smem:[#allocation3 + $0xab]]
        %v2160 = vstv %s2159
        %v2161 = vmul.f32 %v2160, %v2146
        %v2162 = vadd.f32 %v2144, %v2161
        %2163 = vrot.lane.b32.xlu0 %v2092, 124
        %v2164 = vpop.permute.xlu0 %2163
        %s2165 = sld [smem:[#allocation3 + $0xb8]]
        %v2166 = vstv %s2165
        %v2167 = vmul.f32 %v2166, %v2164
        %v2168 = vadd.f32 %v2150, %v2167
        %s2169 = sld [smem:[#allocation3 + $0xb9]]
        %v2170 = vstv %s2169
        %v2171 = vmul.f32 %v2170, %v2164
        %v2172 = vadd.f32 %v2154, %v2171
        %s2173 = sld [smem:[#allocation3 + $0xba]]
        %v2174 = vstv %s2173
        %v2175 = vmul.f32 %v2174, %v2164
        %v2176 = vadd.f32 %v2158, %v2175
        %s2177 = sld [smem:[#allocation3 + $0xbb]]
        %v2178 = vstv %s2177
        %v2179 = vmul.f32 %v2178, %v2164
        %v2180 = vadd.f32 %v2162, %v2179
        %2181 = vrot.lane.b32.xlu0 %v2092, 123
        %v2182 = vpop.permute.xlu0 %2181
        %s2183 = sld [smem:[#allocation3 + $0xc8]]
        %v2184 = vstv %s2183
        %v2185 = vmul.f32 %v2184, %v2182
        %v2186 = vadd.f32 %v2168, %v2185
        %s2187 = sld [smem:[#allocation3 + $0xc9]]
        %v2188 = vstv %s2187
        %v2189 = vmul.f32 %v2188, %v2182
        %v2190 = vadd.f32 %v2172, %v2189
        %s2191 = sld [smem:[#allocation3 + $0xca]]
        %v2192 = vstv %s2191
        %v2193 = vmul.f32 %v2192, %v2182
        %v2194 = vadd.f32 %v2176, %v2193
        %s2195 = sld [smem:[#allocation3 + $0xcb]]
        %v2196 = vstv %s2195
        %v2197 = vmul.f32 %v2196, %v2182
        %v2198 = vadd.f32 %v2180, %v2197
        %2199 = vrot.lane.b32.xlu0 %v2092, 122
        %v2200 = vpop.permute.xlu0 %2199
        %s2201 = sld [smem:[#allocation3 + $0xd8]]
        %v2202 = vstv %s2201
        %v2203 = vmul.f32 %v2202, %v2200
        %v2204 = vadd.f32 %v2186, %v2203
        %s2205 = sld [smem:[#allocation3 + $0xd9]]
        %v2206 = vstv %s2205
        %v2207 = vmul.f32 %v2206, %v2200
        %v2208 = vadd.f32 %v2190, %v2207
        %s2209 = sld [smem:[#allocation3 + $0xda]]
        %v2210 = vstv %s2209
        %v2211 = vmul.f32 %v2210, %v2200
        %v2212 = vadd.f32 %v2194, %v2211
        %s2213 = sld [smem:[#allocation3 + $0xdb]]
        %v2214 = vstv %s2213
        %v2215 = vmul.f32 %v2214, %v2200
        %v2216 = vadd.f32 %v2198, %v2215
        %v2217 = vld [vmem:[%s1966 + $0x2] sm:$0xff]
        %s2218 = sld [smem:[#allocation3 + $0xe8]]
        %v2219 = vstv %s2218
        %v2220 = vmul.f32 %v2219, %v2217
        %v2221 = vadd.f32 %v2204, %v2220
        %s2222 = sld [smem:[#allocation3 + $0xe9]]
        %v2223 = vstv %s2222
        %v2224 = vmul.f32 %v2223, %v2217
        %v2225 = vadd.f32 %v2208, %v2224
        %s2226 = sld [smem:[#allocation3 + $0xea]]
        %v2227 = vstv %s2226
        %v2228 = vmul.f32 %v2227, %v2217
        %v2229 = vadd.f32 %v2212, %v2228
        %s2230 = sld [smem:[#allocation3 + $0xeb]]
        %v2231 = vstv %s2230
        %v2232 = vmul.f32 %v2231, %v2217
        %v2233 = vadd.f32 %v2216, %v2232
        %2234 = vrot.lane.b32.xlu0 %v2217, 127
        %v2235 = vpop.permute.xlu0 %2234
        %s2236 = sld [smem:[#allocation3 + $0xf8]]
        %v2237 = vstv %s2236
        %v2238 = vmul.f32 %v2237, %v2235
        %v2239 = vadd.f32 %v2221, %v2238
        %s2240 = sld [smem:[#allocation3 + $0xf9]]
        %v2241 = vstv %s2240
        %v2242 = vmul.f32 %v2241, %v2235
        %v2243 = vadd.f32 %v2225, %v2242
        %s2244 = sld [smem:[#allocation3 + $0xfa]]
        %v2245 = vstv %s2244
        %v2246 = vmul.f32 %v2245, %v2235
        %v2247 = vadd.f32 %v2229, %v2246
        %s2248 = sld [smem:[#allocation3 + $0xfb]]
        %v2249 = vstv %s2248
        %v2250 = vmul.f32 %v2249, %v2235
        %v2251 = vadd.f32 %v2233, %v2250
        %2252 = vrot.lane.b32.xlu0 %v2217, 126
        %v2253 = vpop.permute.xlu0 %2252
        %s2254 = sld [smem:[#allocation3 + $0x108]]
        %v2255 = vstv %s2254
        %v2256 = vmul.f32 %v2255, %v2253
        %v2257 = vadd.f32 %v2239, %v2256
        %s2258 = sld [smem:[#allocation3 + $0x109]]
        %v2259 = vstv %s2258
        %v2260 = vmul.f32 %v2259, %v2253
        %v2261 = vadd.f32 %v2243, %v2260
        %s2262 = sld [smem:[#allocation3 + $0x10a]]
        %v2263 = vstv %s2262
        %v2264 = vmul.f32 %v2263, %v2253
        %v2265 = vadd.f32 %v2247, %v2264
        %s2266 = sld [smem:[#allocation3 + $0x10b]]
        %v2267 = vstv %s2266
        %v2268 = vmul.f32 %v2267, %v2253
        %v2269 = vadd.f32 %v2251, %v2268
        %2270 = vrot.lane.b32.xlu0 %v2217, 125
        %v2271 = vpop.permute.xlu0 %2270
        %s2272 = sld [smem:[#allocation3 + $0x118]]
        %v2273 = vstv %s2272
        %v2274 = vmul.f32 %v2273, %v2271
        %v2275 = vadd.f32 %v2257, %v2274
        %s2276 = sld [smem:[#allocation3 + $0x119]]
        %v2277 = vstv %s2276
        %v2278 = vmul.f32 %v2277, %v2271
        %v2279 = vadd.f32 %v2261, %v2278
        %s2280 = sld [smem:[#allocation3 + $0x11a]]
        %v2281 = vstv %s2280
        %v2282 = vmul.f32 %v2281, %v2271
        %v2283 = vadd.f32 %v2265, %v2282
        %s2284 = sld [smem:[#allocation3 + $0x11b]]
        %v2285 = vstv %s2284
        %v2286 = vmul.f32 %v2285, %v2271
        %v2287 = vadd.f32 %v2269, %v2286
        %2288 = vrot.lane.b32.xlu0 %v2217, 124
        %v2289 = vpop.permute.xlu0 %2288
        %s2290 = sld [smem:[#allocation3 + $0x128]]
        %v2291 = vstv %s2290
        %v2292 = vmul.f32 %v2291, %v2289
        %v2293 = vadd.f32 %v2275, %v2292
        %s2294 = sld [smem:[#allocation3 + $0x129]]
        %v2295 = vstv %s2294
        %v2296 = vmul.f32 %v2295, %v2289
        %v2297 = vadd.f32 %v2279, %v2296
        %s2298 = sld [smem:[#allocation3 + $0x12a]]
        %v2299 = vstv %s2298
        %v2300 = vmul.f32 %v2299, %v2289
        %v2301 = vadd.f32 %v2283, %v2300
        %s2302 = sld [smem:[#allocation3 + $0x12b]]
        %v2303 = vstv %s2302
        %v2304 = vmul.f32 %v2303, %v2289
        %v2305 = vadd.f32 %v2287, %v2304
        %2306 = vrot.lane.b32.xlu0 %v2217, 123
        %v2307 = vpop.permute.xlu0 %2306
        %s2308 = sld [smem:[#allocation3 + $0x138]]
        %v2309 = vstv %s2308
        %v2310 = vmul.f32 %v2309, %v2307
        %v2311 = vadd.f32 %v2293, %v2310
        %s2312 = sld [smem:[#allocation3 + $0x139]]
        %v2313 = vstv %s2312
        %v2314 = vmul.f32 %v2313, %v2307
        %v2315 = vadd.f32 %v2297, %v2314
        %s2316 = sld [smem:[#allocation3 + $0x13a]]
        %v2317 = vstv %s2316
        %v2318 = vmul.f32 %v2317, %v2307
        %v2319 = vadd.f32 %v2301, %v2318
        %s2320 = sld [smem:[#allocation3 + $0x13b]]
        %v2321 = vstv %s2320
        %v2322 = vmul.f32 %v2321, %v2307
        %v2323 = vadd.f32 %v2305, %v2322
        %2324 = vrot.lane.b32.xlu0 %v2217, 122
        %v2325 = vpop.permute.xlu0 %2324
        %s2326 = sld [smem:[#allocation3 + $0x148]]
        %v2327 = vstv %s2326
        %v2328 = vmul.f32 %v2327, %v2325
        %v2329 = vadd.f32 %v2311, %v2328
        %s2330 = sld [smem:[#allocation3 + $0x149]]
        %v2331 = vstv %s2330
        %v2332 = vmul.f32 %v2331, %v2325
        %v2333 = vadd.f32 %v2315, %v2332
        %s2334 = sld [smem:[#allocation3 + $0x14a]]
        %v2335 = vstv %s2334
        %v2336 = vmul.f32 %v2335, %v2325
        %v2337 = vadd.f32 %v2319, %v2336
        %s2338 = sld [smem:[#allocation3 + $0x14b]]
        %v2339 = vstv %s2338
        %v2340 = vmul.f32 %v2339, %v2325
        %v2341 = vadd.f32 %v2323, %v2340
        %v2342 = vld [vmem:[%s1966 + $0x3] sm:$0xff]
        %s2343 = sld [smem:[#allocation3 + $0x158]]
        %v2344 = vstv %s2343
        %v2345 = vmul.f32 %v2344, %v2342
        %v2346 = vadd.f32 %v2329, %v2345
        %s2347 = sld [smem:[#allocation3 + $0x159]]
        %v2348 = vstv %s2347
        %v2349 = vmul.f32 %v2348, %v2342
        %v2350 = vadd.f32 %v2333, %v2349
        %s2351 = sld [smem:[#allocation3 + $0x15a]]
        %v2352 = vstv %s2351
        %v2353 = vmul.f32 %v2352, %v2342
        %v2354 = vadd.f32 %v2337, %v2353
        %s2355 = sld [smem:[#allocation3 + $0x15b]]
        %v2356 = vstv %s2355
        %v2357 = vmul.f32 %v2356, %v2342
        %v2358 = vadd.f32 %v2341, %v2357
        %2359 = vrot.lane.b32.xlu0 %v2342, 127
        %v2360 = vpop.permute.xlu0 %2359
        %s2361 = sld [smem:[#allocation3 + $0x168]]
        %v2362 = vstv %s2361
        %v2363 = vmul.f32 %v2362, %v2360
        %v2364 = vadd.f32 %v2346, %v2363
        %s2365 = sld [smem:[#allocation3 + $0x169]]
        %v2366 = vstv %s2365
        %v2367 = vmul.f32 %v2366, %v2360
        %v2368 = vadd.f32 %v2350, %v2367
        %s2369 = sld [smem:[#allocation3 + $0x16a]]
        %v2370 = vstv %s2369
        %v2371 = vmul.f32 %v2370, %v2360
        %v2372 = vadd.f32 %v2354, %v2371
        %s2373 = sld [smem:[#allocation3 + $0x16b]]
        %v2374 = vstv %s2373
        %v2375 = vmul.f32 %v2374, %v2360
        %v2376 = vadd.f32 %v2358, %v2375
        %2377 = vrot.lane.b32.xlu0 %v2342, 126
        %v2378 = vpop.permute.xlu0 %2377
        %s2379 = sld [smem:[#allocation3 + $0x178]]
        %v2380 = vstv %s2379
        %v2381 = vmul.f32 %v2380, %v2378
        %v2382 = vadd.f32 %v2364, %v2381
        %s2383 = sld [smem:[#allocation3 + $0x179]]
        %v2384 = vstv %s2383
        %v2385 = vmul.f32 %v2384, %v2378
        %v2386 = vadd.f32 %v2368, %v2385
        %s2387 = sld [smem:[#allocation3 + $0x17a]]
        %v2388 = vstv %s2387
        %v2389 = vmul.f32 %v2388, %v2378
        %v2390 = vadd.f32 %v2372, %v2389
        %s2391 = sld [smem:[#allocation3 + $0x17b]]
        %v2392 = vstv %s2391
        %v2393 = vmul.f32 %v2392, %v2378
        %v2394 = vadd.f32 %v2376, %v2393
        %2395 = vrot.lane.b32.xlu0 %v2342, 125
        %v2396 = vpop.permute.xlu0 %2395
        %s2397 = sld [smem:[#allocation3 + $0x188]]
        %v2398 = vstv %s2397
        %v2399 = vmul.f32 %v2398, %v2396
        %v2400 = vadd.f32 %v2382, %v2399
        %s2401 = sld [smem:[#allocation3 + $0x189]]
        %v2402 = vstv %s2401
        %v2403 = vmul.f32 %v2402, %v2396
        %v2404 = vadd.f32 %v2386, %v2403
        %s2405 = sld [smem:[#allocation3 + $0x18a]]
        %v2406 = vstv %s2405
        %v2407 = vmul.f32 %v2406, %v2396
        %v2408 = vadd.f32 %v2390, %v2407
        %s2409 = sld [smem:[#allocation3 + $0x18b]]
        %v2410 = vstv %s2409
        %v2411 = vmul.f32 %v2410, %v2396
        %v2412 = vadd.f32 %v2394, %v2411
        %2413 = vrot.lane.b32.xlu0 %v2342, 124
        %v2414 = vpop.permute.xlu0 %2413
        %s2415 = sld [smem:[#allocation3 + $0x198]]
        %v2416 = vstv %s2415
        %v2417 = vmul.f32 %v2416, %v2414
        %v2418 = vadd.f32 %v2400, %v2417
        %s2419 = sld [smem:[#allocation3 + $0x199]]
        %v2420 = vstv %s2419
        %v2421 = vmul.f32 %v2420, %v2414
        %v2422 = vadd.f32 %v2404, %v2421
        %s2423 = sld [smem:[#allocation3 + $0x19a]]
        %v2424 = vstv %s2423
        %v2425 = vmul.f32 %v2424, %v2414
        %v2426 = vadd.f32 %v2408, %v2425
        %s2427 = sld [smem:[#allocation3 + $0x19b]]
        %v2428 = vstv %s2427
        %v2429 = vmul.f32 %v2428, %v2414
        %v2430 = vadd.f32 %v2412, %v2429
        %2431 = vrot.lane.b32.xlu0 %v2342, 123
        %v2432 = vpop.permute.xlu0 %2431
        %s2433 = sld [smem:[#allocation3 + $0x1a8]]
        %v2434 = vstv %s2433
        %v2435 = vmul.f32 %v2434, %v2432
        %v2436 = vadd.f32 %v2418, %v2435
        %s2437 = sld [smem:[#allocation3 + $0x1a9]]
        %v2438 = vstv %s2437
        %v2439 = vmul.f32 %v2438, %v2432
        %v2440 = vadd.f32 %v2422, %v2439
        %s2441 = sld [smem:[#allocation3 + $0x1aa]]
        %v2442 = vstv %s2441
        %v2443 = vmul.f32 %v2442, %v2432
        %v2444 = vadd.f32 %v2426, %v2443
        %s2445 = sld [smem:[#allocation3 + $0x1ab]]
        %v2446 = vstv %s2445
        %v2447 = vmul.f32 %v2446, %v2432
        %v2448 = vadd.f32 %v2430, %v2447
        %2449 = vrot.lane.b32.xlu0 %v2342, 122
        %v2450 = vpop.permute.xlu0 %2449
        %s2451 = sld [smem:[#allocation3 + $0x1b8]]
        %v2452 = vstv %s2451
        %v2453 = vmul.f32 %v2452, %v2450
        %v2454 = vadd.f32 %v2436, %v2453
        %s2455 = sld [smem:[#allocation3 + $0x1b9]]
        %v2456 = vstv %s2455
        %v2457 = vmul.f32 %v2456, %v2450
        %v2458 = vadd.f32 %v2440, %v2457
        %s2459 = sld [smem:[#allocation3 + $0x1ba]]
        %v2460 = vstv %s2459
        %v2461 = vmul.f32 %v2460, %v2450
        %v2462 = vadd.f32 %v2444, %v2461
        %s2463 = sld [smem:[#allocation3 + $0x1bb]]
        %v2464 = vstv %s2463
        %v2465 = vmul.f32 %v2464, %v2450
        %v2466 = vadd.f32 %v2448, %v2465
        %v2467 = vld [vmem:[%s1966 + $0x4] sm:$0xff]
        %s2468 = sld [smem:[#allocation3 + $0x1c8]]
        %v2469 = vstv %s2468
        %v2470 = vmul.f32 %v2469, %v2467
        %v2471 = vadd.f32 %v2454, %v2470
        %s2472 = sld [smem:[#allocation3 + $0x1c9]]
        %v2473 = vstv %s2472
        %v2474 = vmul.f32 %v2473, %v2467
        %v2475 = vadd.f32 %v2458, %v2474
        %s2476 = sld [smem:[#allocation3 + $0x1ca]]
        %v2477 = vstv %s2476
        %v2478 = vmul.f32 %v2477, %v2467
        %v2479 = vadd.f32 %v2462, %v2478
        %s2480 = sld [smem:[#allocation3 + $0x1cb]]
        %v2481 = vstv %s2480
        %v2482 = vmul.f32 %v2481, %v2467
        %v2483 = vadd.f32 %v2466, %v2482
        %2484 = vrot.lane.b32.xlu0 %v2467, 127
        %v2485 = vpop.permute.xlu0 %2484
        %s2486 = sld [smem:[#allocation3 + $0x1d8]]
        %v2487 = vstv %s2486
        %v2488 = vmul.f32 %v2487, %v2485
        %v2489 = vadd.f32 %v2471, %v2488
        %s2490 = sld [smem:[#allocation3 + $0x1d9]]
        %v2491 = vstv %s2490
        %v2492 = vmul.f32 %v2491, %v2485
        %v2493 = vadd.f32 %v2475, %v2492
        %s2494 = sld [smem:[#allocation3 + $0x1da]]
        %v2495 = vstv %s2494
        %v2496 = vmul.f32 %v2495, %v2485
        %v2497 = vadd.f32 %v2479, %v2496
        %s2498 = sld [smem:[#allocation3 + $0x1db]]
        %v2499 = vstv %s2498
        %v2500 = vmul.f32 %v2499, %v2485
        %v2501 = vadd.f32 %v2483, %v2500
        %2502 = vrot.lane.b32.xlu0 %v2467, 126
        %v2503 = vpop.permute.xlu0 %2502
        %s2504 = sld [smem:[#allocation3 + $0x1e8]]
        %v2505 = vstv %s2504
        %v2506 = vmul.f32 %v2505, %v2503
        %v2507 = vadd.f32 %v2489, %v2506
        %s2508 = sld [smem:[#allocation3 + $0x1e9]]
        %v2509 = vstv %s2508
        %v2510 = vmul.f32 %v2509, %v2503
        %v2511 = vadd.f32 %v2493, %v2510
        %s2512 = sld [smem:[#allocation3 + $0x1ea]]
        %v2513 = vstv %s2512
        %v2514 = vmul.f32 %v2513, %v2503
        %v2515 = vadd.f32 %v2497, %v2514
        %s2516 = sld [smem:[#allocation3 + $0x1eb]]
        %v2517 = vstv %s2516
        %v2518 = vmul.f32 %v2517, %v2503
        %v2519 = vadd.f32 %v2501, %v2518
        %2520 = vrot.lane.b32.xlu0 %v2467, 125
        %v2521 = vpop.permute.xlu0 %2520
        %s2522 = sld [smem:[#allocation3 + $0x1f8]]
        %v2523 = vstv %s2522
        %v2524 = vmul.f32 %v2523, %v2521
        %v2525 = vadd.f32 %v2507, %v2524
        %s2526 = sld [smem:[#allocation3 + $0x1f9]]
        %v2527 = vstv %s2526
        %v2528 = vmul.f32 %v2527, %v2521
        %v2529 = vadd.f32 %v2511, %v2528
        %s2530 = sld [smem:[#allocation3 + $0x1fa]]
        %v2531 = vstv %s2530
        %v2532 = vmul.f32 %v2531, %v2521
        %v2533 = vadd.f32 %v2515, %v2532
        %s2534 = sld [smem:[#allocation3 + $0x1fb]]
        %v2535 = vstv %s2534
        %v2536 = vmul.f32 %v2535, %v2521
        %v2537 = vadd.f32 %v2519, %v2536
        %2538 = vrot.lane.b32.xlu0 %v2467, 124
        %v2539 = vpop.permute.xlu0 %2538
        %s2540 = sld [smem:[#allocation3 + $0x208]]
        %v2541 = vstv %s2540
        %v2542 = vmul.f32 %v2541, %v2539
        %v2543 = vadd.f32 %v2525, %v2542
        %s2544 = sld [smem:[#allocation3 + $0x209]]
        %v2545 = vstv %s2544
        %v2546 = vmul.f32 %v2545, %v2539
        %v2547 = vadd.f32 %v2529, %v2546
        %s2548 = sld [smem:[#allocation3 + $0x20a]]
        %v2549 = vstv %s2548
        %v2550 = vmul.f32 %v2549, %v2539
        %v2551 = vadd.f32 %v2533, %v2550
        %s2552 = sld [smem:[#allocation3 + $0x20b]]
        %v2553 = vstv %s2552
        %v2554 = vmul.f32 %v2553, %v2539
        %v2555 = vadd.f32 %v2537, %v2554
        %2556 = vrot.lane.b32.xlu0 %v2467, 123
        %v2557 = vpop.permute.xlu0 %2556
        %s2558 = sld [smem:[#allocation3 + $0x218]]
        %v2559 = vstv %s2558
        %v2560 = vmul.f32 %v2559, %v2557
        %v2561 = vadd.f32 %v2543, %v2560
        %s2562 = sld [smem:[#allocation3 + $0x219]]
        %v2563 = vstv %s2562
        %v2564 = vmul.f32 %v2563, %v2557
        %v2565 = vadd.f32 %v2547, %v2564
        %s2566 = sld [smem:[#allocation3 + $0x21a]]
        %v2567 = vstv %s2566
        %v2568 = vmul.f32 %v2567, %v2557
        %v2569 = vadd.f32 %v2551, %v2568
        %s2570 = sld [smem:[#allocation3 + $0x21b]]
        %v2571 = vstv %s2570
        %v2572 = vmul.f32 %v2571, %v2557
        %v2573 = vadd.f32 %v2555, %v2572
        %2574 = vrot.lane.b32.xlu0 %v2467, 122
        %v2575 = vpop.permute.xlu0 %2574
        %s2576 = sld [smem:[#allocation3 + $0x228]]
        %v2577 = vstv %s2576
        %v2578 = vmul.f32 %v2577, %v2575
        %v2579 = vadd.f32 %v2561, %v2578
        %s2580 = sld [smem:[#allocation3 + $0x229]]
        %v2581 = vstv %s2580
        %v2582 = vmul.f32 %v2581, %v2575
        %v2583 = vadd.f32 %v2565, %v2582
        %s2584 = sld [smem:[#allocation3 + $0x22a]]
        %v2585 = vstv %s2584
        %v2586 = vmul.f32 %v2585, %v2575
        %v2587 = vadd.f32 %v2569, %v2586
        %s2588 = sld [smem:[#allocation3 + $0x22b]]
        %v2589 = vstv %s2588
        %v2590 = vmul.f32 %v2589, %v2575
        %v2591 = vadd.f32 %v2573, %v2590
        %v2592 = vld [vmem:[%s1966 + $0x5] sm:$0xff]
        %s2593 = sld [smem:[#allocation3 + $0x238]]
        %v2594 = vstv %s2593
        %v2595 = vmul.f32 %v2594, %v2592
        %v2596 = vadd.f32 %v2579, %v2595
        %s2597 = sld [smem:[#allocation3 + $0x239]]
        %v2598 = vstv %s2597
        %v2599 = vmul.f32 %v2598, %v2592
        %v2600 = vadd.f32 %v2583, %v2599
        %s2601 = sld [smem:[#allocation3 + $0x23a]]
        %v2602 = vstv %s2601
        %v2603 = vmul.f32 %v2602, %v2592
        %v2604 = vadd.f32 %v2587, %v2603
        %s2605 = sld [smem:[#allocation3 + $0x23b]]
        %v2606 = vstv %s2605
        %v2607 = vmul.f32 %v2606, %v2592
        %v2608 = vadd.f32 %v2591, %v2607
        %2609 = vrot.lane.b32.xlu0 %v2592, 127
        %v2610 = vpop.permute.xlu0 %2609
        %s2611 = sld [smem:[#allocation3 + $0x248]]
        %v2612 = vstv %s2611
        %v2613 = vmul.f32 %v2612, %v2610
        %v2614 = vadd.f32 %v2596, %v2613
        %s2615 = sld [smem:[#allocation3 + $0x249]]
        %v2616 = vstv %s2615
        %v2617 = vmul.f32 %v2616, %v2610
        %v2618 = vadd.f32 %v2600, %v2617
        %s2619 = sld [smem:[#allocation3 + $0x24a]]
        %v2620 = vstv %s2619
        %v2621 = vmul.f32 %v2620, %v2610
        %v2622 = vadd.f32 %v2604, %v2621
        %s2623 = sld [smem:[#allocation3 + $0x24b]]
        %v2624 = vstv %s2623
        %v2625 = vmul.f32 %v2624, %v2610
        %v2626 = vadd.f32 %v2608, %v2625
        %2627 = vrot.lane.b32.xlu0 %v2592, 126
        %v2628 = vpop.permute.xlu0 %2627
        %s2629 = sld [smem:[#allocation3 + $0x258]]
        %v2630 = vstv %s2629
        %v2631 = vmul.f32 %v2630, %v2628
        %v2632 = vadd.f32 %v2614, %v2631
        %s2633 = sld [smem:[#allocation3 + $0x259]]
        %v2634 = vstv %s2633
        %v2635 = vmul.f32 %v2634, %v2628
        %v2636 = vadd.f32 %v2618, %v2635
        %s2637 = sld [smem:[#allocation3 + $0x25a]]
        %v2638 = vstv %s2637
        %v2639 = vmul.f32 %v2638, %v2628
        %v2640 = vadd.f32 %v2622, %v2639
        %s2641 = sld [smem:[#allocation3 + $0x25b]]
        %v2642 = vstv %s2641
        %v2643 = vmul.f32 %v2642, %v2628
        %v2644 = vadd.f32 %v2626, %v2643
        %2645 = vrot.lane.b32.xlu0 %v2592, 125
        %v2646 = vpop.permute.xlu0 %2645
        %s2647 = sld [smem:[#allocation3 + $0x268]]
        %v2648 = vstv %s2647
        %v2649 = vmul.f32 %v2648, %v2646
        %v2650 = vadd.f32 %v2632, %v2649
        %s2651 = sld [smem:[#allocation3 + $0x269]]
        %v2652 = vstv %s2651
        %v2653 = vmul.f32 %v2652, %v2646
        %v2654 = vadd.f32 %v2636, %v2653
        %s2655 = sld [smem:[#allocation3 + $0x26a]]
        %v2656 = vstv %s2655
        %v2657 = vmul.f32 %v2656, %v2646
        %v2658 = vadd.f32 %v2640, %v2657
        %s2659 = sld [smem:[#allocation3 + $0x26b]]
        %v2660 = vstv %s2659
        %v2661 = vmul.f32 %v2660, %v2646
        %v2662 = vadd.f32 %v2644, %v2661
        %2663 = vrot.lane.b32.xlu0 %v2592, 124
        %v2664 = vpop.permute.xlu0 %2663
        %s2665 = sld [smem:[#allocation3 + $0x278]]
        %v2666 = vstv %s2665
        %v2667 = vmul.f32 %v2666, %v2664
        %v2668 = vadd.f32 %v2650, %v2667
        %s2669 = sld [smem:[#allocation3 + $0x279]]
        %v2670 = vstv %s2669
        %v2671 = vmul.f32 %v2670, %v2664
        %v2672 = vadd.f32 %v2654, %v2671
        %s2673 = sld [smem:[#allocation3 + $0x27a]]
        %v2674 = vstv %s2673
        %v2675 = vmul.f32 %v2674, %v2664
        %v2676 = vadd.f32 %v2658, %v2675
        %s2677 = sld [smem:[#allocation3 + $0x27b]]
        %v2678 = vstv %s2677
        %v2679 = vmul.f32 %v2678, %v2664
        %v2680 = vadd.f32 %v2662, %v2679
        %2681 = vrot.lane.b32.xlu0 %v2592, 123
        %v2682 = vpop.permute.xlu0 %2681
        %s2683 = sld [smem:[#allocation3 + $0x288]]
        %v2684 = vstv %s2683
        %v2685 = vmul.f32 %v2684, %v2682
        %v2686 = vadd.f32 %v2668, %v2685
        %s2687 = sld [smem:[#allocation3 + $0x289]]
        %v2688 = vstv %s2687
        %v2689 = vmul.f32 %v2688, %v2682
        %v2690 = vadd.f32 %v2672, %v2689
        %s2691 = sld [smem:[#allocation3 + $0x28a]]
        %v2692 = vstv %s2691
        %v2693 = vmul.f32 %v2692, %v2682
        %v2694 = vadd.f32 %v2676, %v2693
        %s2695 = sld [smem:[#allocation3 + $0x28b]]
        %v2696 = vstv %s2695
        %v2697 = vmul.f32 %v2696, %v2682
        %v2698 = vadd.f32 %v2680, %v2697
        %2699 = vrot.lane.b32.xlu0 %v2592, 122
        %v2700 = vpop.permute.xlu0 %2699
        %s2701 = sld [smem:[#allocation3 + $0x298]]
        %v2702 = vstv %s2701
        %v2703 = vmul.f32 %v2702, %v2700
        %v2704 = vadd.f32 %v2686, %v2703
        %s2705 = sld [smem:[#allocation3 + $0x299]]
        %v2706 = vstv %s2705
        %v2707 = vmul.f32 %v2706, %v2700
        %v2708 = vadd.f32 %v2690, %v2707
        %s2709 = sld [smem:[#allocation3 + $0x29a]]
        %v2710 = vstv %s2709
        %v2711 = vmul.f32 %v2710, %v2700
        %v2712 = vadd.f32 %v2694, %v2711
        %s2713 = sld [smem:[#allocation3 + $0x29b]]
        %v2714 = vstv %s2713
        %v2715 = vmul.f32 %v2714, %v2700
        %v2716 = vadd.f32 %v2698, %v2715
        %v2717 = vld [vmem:[%s1966 + $0x6] sm:$0xff]
        %s2718 = sld [smem:[#allocation3 + $0x2a8]]
        %v2719 = vstv %s2718
        %v2720 = vmul.f32 %v2719, %v2717
        %v2721 = vadd.f32 %v2704, %v2720
        %s2722 = sld [smem:[#allocation3 + $0x2a9]]
        %v2723 = vstv %s2722
        %v2724 = vmul.f32 %v2723, %v2717
        %v2725 = vadd.f32 %v2708, %v2724
        %s2726 = sld [smem:[#allocation3 + $0x2aa]]
        %v2727 = vstv %s2726
        %v2728 = vmul.f32 %v2727, %v2717
        %v2729 = vadd.f32 %v2712, %v2728
        %s2730 = sld [smem:[#allocation3 + $0x2ab]]
        %v2731 = vstv %s2730
        %v2732 = vmul.f32 %v2731, %v2717
        %v2733 = vadd.f32 %v2716, %v2732
        %2734 = vrot.lane.b32.xlu0 %v2717, 127
        %v2735 = vpop.permute.xlu0 %2734
        %s2736 = sld [smem:[#allocation3 + $0x2b8]]
        %v2737 = vstv %s2736
        %v2738 = vmul.f32 %v2737, %v2735
        %v2739 = vadd.f32 %v2721, %v2738
        %s2740 = sld [smem:[#allocation3 + $0x2b9]]
        %v2741 = vstv %s2740
        %v2742 = vmul.f32 %v2741, %v2735
        %v2743 = vadd.f32 %v2725, %v2742
        %s2744 = sld [smem:[#allocation3 + $0x2ba]]
        %v2745 = vstv %s2744
        %v2746 = vmul.f32 %v2745, %v2735
        %v2747 = vadd.f32 %v2729, %v2746
        %s2748 = sld [smem:[#allocation3 + $0x2bb]]
        %v2749 = vstv %s2748
        %v2750 = vmul.f32 %v2749, %v2735
        %v2751 = vadd.f32 %v2733, %v2750
        %2752 = vrot.lane.b32.xlu0 %v2717, 126
        %v2753 = vpop.permute.xlu0 %2752
        %s2754 = sld [smem:[#allocation3 + $0x2c8]]
        %v2755 = vstv %s2754
        %v2756 = vmul.f32 %v2755, %v2753
        %v2757 = vadd.f32 %v2739, %v2756
        %s2758 = sld [smem:[#allocation3 + $0x2c9]]
        %v2759 = vstv %s2758
        %v2760 = vmul.f32 %v2759, %v2753
        %v2761 = vadd.f32 %v2743, %v2760
        %s2762 = sld [smem:[#allocation3 + $0x2ca]]
        %v2763 = vstv %s2762
        %v2764 = vmul.f32 %v2763, %v2753
        %v2765 = vadd.f32 %v2747, %v2764
        %s2766 = sld [smem:[#allocation3 + $0x2cb]]
        %v2767 = vstv %s2766
        %v2768 = vmul.f32 %v2767, %v2753
        %v2769 = vadd.f32 %v2751, %v2768
        %2770 = vrot.lane.b32.xlu0 %v2717, 125
        %v2771 = vpop.permute.xlu0 %2770
        %s2772 = sld [smem:[#allocation3 + $0x2d8]]
        %v2773 = vstv %s2772
        %v2774 = vmul.f32 %v2773, %v2771
        %v2775 = vadd.f32 %v2757, %v2774
        %s2776 = sld [smem:[#allocation3 + $0x2d9]]
        %v2777 = vstv %s2776
        %v2778 = vmul.f32 %v2777, %v2771
        %v2779 = vadd.f32 %v2761, %v2778
        %s2780 = sld [smem:[#allocation3 + $0x2da]]
        %v2781 = vstv %s2780
        %v2782 = vmul.f32 %v2781, %v2771
        %v2783 = vadd.f32 %v2765, %v2782
        %s2784 = sld [smem:[#allocation3 + $0x2db]]
        %v2785 = vstv %s2784
        %v2786 = vmul.f32 %v2785, %v2771
        %v2787 = vadd.f32 %v2769, %v2786
        %2788 = vrot.lane.b32.xlu0 %v2717, 124
        %v2789 = vpop.permute.xlu0 %2788
        %s2790 = sld [smem:[#allocation3 + $0x2e8]]
        %v2791 = vstv %s2790
        %v2792 = vmul.f32 %v2791, %v2789
        %v2793 = vadd.f32 %v2775, %v2792
        %s2794 = sld [smem:[#allocation3 + $0x2e9]]
        %v2795 = vstv %s2794
        %v2796 = vmul.f32 %v2795, %v2789
        %v2797 = vadd.f32 %v2779, %v2796
        %s2798 = sld [smem:[#allocation3 + $0x2ea]]
        %v2799 = vstv %s2798
        %v2800 = vmul.f32 %v2799, %v2789
        %v2801 = vadd.f32 %v2783, %v2800
        %s2802 = sld [smem:[#allocation3 + $0x2eb]]
        %v2803 = vstv %s2802
        %v2804 = vmul.f32 %v2803, %v2789
        %v2805 = vadd.f32 %v2787, %v2804
        %2806 = vrot.lane.b32.xlu0 %v2717, 123
        %v2807 = vpop.permute.xlu0 %2806
        %s2808 = sld [smem:[#allocation3 + $0x2f8]]
        %v2809 = vstv %s2808
        %v2810 = vmul.f32 %v2809, %v2807
        %v2811 = vadd.f32 %v2793, %v2810
        %s2812 = sld [smem:[#allocation3 + $0x2f9]]
        %v2813 = vstv %s2812
        %v2814 = vmul.f32 %v2813, %v2807
        %v2815 = vadd.f32 %v2797, %v2814
        %s2816 = sld [smem:[#allocation3 + $0x2fa]]
        %v2817 = vstv %s2816
        %v2818 = vmul.f32 %v2817, %v2807
        %v2819 = vadd.f32 %v2801, %v2818
        %s2820 = sld [smem:[#allocation3 + $0x2fb]]
        %v2821 = vstv %s2820
        %v2822 = vmul.f32 %v2821, %v2807
        %v2823 = vadd.f32 %v2805, %v2822
        %2824 = vrot.lane.b32.xlu0 %v2717, 122
        %v2825 = vpop.permute.xlu0 %2824
        %s2826 = sld [smem:[#allocation3 + $0x308]]
        %v2827 = vstv %s2826
        %v2828 = vmul.f32 %v2827, %v2825
        %v2829 = vadd.f32 %v2811, %v2828
        %s2830 = sld [smem:[#allocation3 + $0x309]]
        %v2831 = vstv %s2830
        %v2832 = vmul.f32 %v2831, %v2825
        %v2833 = vadd.f32 %v2815, %v2832
        %s2834 = sld [smem:[#allocation3 + $0x30a]]
        %v2835 = vstv %s2834
        %v2836 = vmul.f32 %v2835, %v2825
        %v2837 = vadd.f32 %v2819, %v2836
        %s2838 = sld [smem:[#allocation3 + $0x30b]]
        %v2839 = vstv %s2838
        %v2840 = vmul.f32 %v2839, %v2825
        %v2841 = vadd.f32 %v2823, %v2840
        %s2842 = scalar_lea.vmem %s192, 48 [#allocation2]
        %v2843 = vld [vmem:[%s2842] sm:$0xff]
        %s2844 = sld [smem:[#allocation3 + $0xc]]
        %v2845 = vstv %s2844
        %v2846 = vmul.f32 %v2845, %v2843
        %v2847 = vadd.f32 %v2829, %v2846
        %s2848 = sld [smem:[#allocation3 + $0xd]]
        %v2849 = vstv %s2848
        %v2850 = vmul.f32 %v2849, %v2843
        %v2851 = vadd.f32 %v2833, %v2850
        %s2852 = sld [smem:[#allocation3 + $0xe]]
        %v2853 = vstv %s2852
        %v2854 = vmul.f32 %v2853, %v2843
        %v2855 = vadd.f32 %v2837, %v2854
        %s2856 = sld [smem:[#allocation3 + $0xf]]
        %v2857 = vstv %s2856
        %v2858 = vmul.f32 %v2857, %v2843
        %v2859 = vadd.f32 %v2841, %v2858
        %2860 = vrot.lane.b32.xlu0 %v2843, 127
        %v2861 = vpop.permute.xlu0 %2860
        %s2862 = sld [smem:[#allocation3 + $0x1c]]
        %v2863 = vstv %s2862
        %v2864 = vmul.f32 %v2863, %v2861
        %v2865 = vadd.f32 %v2847, %v2864
        %s2866 = sld [smem:[#allocation3 + $0x1d]]
        %v2867 = vstv %s2866
        %v2868 = vmul.f32 %v2867, %v2861
        %v2869 = vadd.f32 %v2851, %v2868
        %s2870 = sld [smem:[#allocation3 + $0x1e]]
        %v2871 = vstv %s2870
        %v2872 = vmul.f32 %v2871, %v2861
        %v2873 = vadd.f32 %v2855, %v2872
        %s2874 = sld [smem:[#allocation3 + $0x1f]]
        %v2875 = vstv %s2874
        %v2876 = vmul.f32 %v2875, %v2861
        %v2877 = vadd.f32 %v2859, %v2876
        %2878 = vrot.lane.b32.xlu0 %v2843, 126
        %v2879 = vpop.permute.xlu0 %2878
        %s2880 = sld [smem:[#allocation3 + $0x2c]]
        %v2881 = vstv %s2880
        %v2882 = vmul.f32 %v2881, %v2879
        %v2883 = vadd.f32 %v2865, %v2882
        %s2884 = sld [smem:[#allocation3 + $0x2d]]
        %v2885 = vstv %s2884
        %v2886 = vmul.f32 %v2885, %v2879
        %v2887 = vadd.f32 %v2869, %v2886
        %s2888 = sld [smem:[#allocation3 + $0x2e]]
        %v2889 = vstv %s2888
        %v2890 = vmul.f32 %v2889, %v2879
        %v2891 = vadd.f32 %v2873, %v2890
        %s2892 = sld [smem:[#allocation3 + $0x2f]]
        %v2893 = vstv %s2892
        %v2894 = vmul.f32 %v2893, %v2879
        %v2895 = vadd.f32 %v2877, %v2894
        %2896 = vrot.lane.b32.xlu0 %v2843, 125
        %v2897 = vpop.permute.xlu0 %2896
        %s2898 = sld [smem:[#allocation3 + $0x3c]]
        %v2899 = vstv %s2898
        %v2900 = vmul.f32 %v2899, %v2897
        %v2901 = vadd.f32 %v2883, %v2900
        %s2902 = sld [smem:[#allocation3 + $0x3d]]
        %v2903 = vstv %s2902
        %v2904 = vmul.f32 %v2903, %v2897
        %v2905 = vadd.f32 %v2887, %v2904
        %s2906 = sld [smem:[#allocation3 + $0x3e]]
        %v2907 = vstv %s2906
        %v2908 = vmul.f32 %v2907, %v2897
        %v2909 = vadd.f32 %v2891, %v2908
        %s2910 = sld [smem:[#allocation3 + $0x3f]]
        %v2911 = vstv %s2910
        %v2912 = vmul.f32 %v2911, %v2897
        %v2913 = vadd.f32 %v2895, %v2912
        %2914 = vrot.lane.b32.xlu0 %v2843, 124
        %v2915 = vpop.permute.xlu0 %2914
        %s2916 = sld [smem:[#allocation3 + $0x4c]]
        %v2917 = vstv %s2916
        %v2918 = vmul.f32 %v2917, %v2915
        %v2919 = vadd.f32 %v2901, %v2918
        %s2920 = sld [smem:[#allocation3 + $0x4d]]
        %v2921 = vstv %s2920
        %v2922 = vmul.f32 %v2921, %v2915
        %v2923 = vadd.f32 %v2905, %v2922
        %s2924 = sld [smem:[#allocation3 + $0x4e]]
        %v2925 = vstv %s2924
        %v2926 = vmul.f32 %v2925, %v2915
        %v2927 = vadd.f32 %v2909, %v2926
        %s2928 = sld [smem:[#allocation3 + $0x4f]]
        %v2929 = vstv %s2928
        %v2930 = vmul.f32 %v2929, %v2915
        %v2931 = vadd.f32 %v2913, %v2930
        %2932 = vrot.lane.b32.xlu0 %v2843, 123
        %v2933 = vpop.permute.xlu0 %2932
        %s2934 = sld [smem:[#allocation3 + $0x5c]]
        %v2935 = vstv %s2934
        %v2936 = vmul.f32 %v2935, %v2933
        %v2937 = vadd.f32 %v2919, %v2936
        %s2938 = sld [smem:[#allocation3 + $0x5d]]
        %v2939 = vstv %s2938
        %v2940 = vmul.f32 %v2939, %v2933
        %v2941 = vadd.f32 %v2923, %v2940
        %s2942 = sld [smem:[#allocation3 + $0x5e]]
        %v2943 = vstv %s2942
        %v2944 = vmul.f32 %v2943, %v2933
        %v2945 = vadd.f32 %v2927, %v2944
        %s2946 = sld [smem:[#allocation3 + $0x5f]]
        %v2947 = vstv %s2946
        %v2948 = vmul.f32 %v2947, %v2933
        %v2949 = vadd.f32 %v2931, %v2948
        %2950 = vrot.lane.b32.xlu0 %v2843, 122
        %v2951 = vpop.permute.xlu0 %2950
        %s2952 = sld [smem:[#allocation3 + $0x6c]]
        %v2953 = vstv %s2952
        %v2954 = vmul.f32 %v2953, %v2951
        %v2955 = vadd.f32 %v2937, %v2954
        %s2956 = sld [smem:[#allocation3 + $0x6d]]
        %v2957 = vstv %s2956
        %v2958 = vmul.f32 %v2957, %v2951
        %v2959 = vadd.f32 %v2941, %v2958
        %s2960 = sld [smem:[#allocation3 + $0x6e]]
        %v2961 = vstv %s2960
        %v2962 = vmul.f32 %v2961, %v2951
        %v2963 = vadd.f32 %v2945, %v2962
        %s2964 = sld [smem:[#allocation3 + $0x6f]]
        %v2965 = vstv %s2964
        %v2966 = vmul.f32 %v2965, %v2951
        %v2967 = vadd.f32 %v2949, %v2966
        %v2968 = vld [vmem:[%s2842 + $0x1] sm:$0xff]
        %s2969 = sld [smem:[#allocation3 + $0x7c]]
        %v2970 = vstv %s2969
        %v2971 = vmul.f32 %v2970, %v2968
        %v2972 = vadd.f32 %v2955, %v2971
        %s2973 = sld [smem:[#allocation3 + $0x7d]]
        %v2974 = vstv %s2973
        %v2975 = vmul.f32 %v2974, %v2968
        %v2976 = vadd.f32 %v2959, %v2975
        %s2977 = sld [smem:[#allocation3 + $0x7e]]
        %v2978 = vstv %s2977
        %v2979 = vmul.f32 %v2978, %v2968
        %v2980 = vadd.f32 %v2963, %v2979
        %s2981 = sld [smem:[#allocation3 + $0x7f]]
        %v2982 = vstv %s2981
        %v2983 = vmul.f32 %v2982, %v2968
        %v2984 = vadd.f32 %v2967, %v2983
        %2985 = vrot.lane.b32.xlu0 %v2968, 127
        %v2986 = vpop.permute.xlu0 %2985
        %s2987 = sld [smem:[#allocation3 + $0x8c]]
        %v2988 = vstv %s2987
        %v2989 = vmul.f32 %v2988, %v2986
        %v2990 = vadd.f32 %v2972, %v2989
        %s2991 = sld [smem:[#allocation3 + $0x8d]]
        %v2992 = vstv %s2991
        %v2993 = vmul.f32 %v2992, %v2986
        %v2994 = vadd.f32 %v2976, %v2993
        %s2995 = sld [smem:[#allocation3 + $0x8e]]
        %v2996 = vstv %s2995
        %v2997 = vmul.f32 %v2996, %v2986
        %v2998 = vadd.f32 %v2980, %v2997
        %s2999 = sld [smem:[#allocation3 + $0x8f]]
        %v3000 = vstv %s2999
        %v3001 = vmul.f32 %v3000, %v2986
        %v3002 = vadd.f32 %v2984, %v3001
        %3003 = vrot.lane.b32.xlu0 %v2968, 126
        %v3004 = vpop.permute.xlu0 %3003
        %s3005 = sld [smem:[#allocation3 + $0x9c]]
        %v3006 = vstv %s3005
        %v3007 = vmul.f32 %v3006, %v3004
        %v3008 = vadd.f32 %v2990, %v3007
        %s3009 = sld [smem:[#allocation3 + $0x9d]]
        %v3010 = vstv %s3009
        %v3011 = vmul.f32 %v3010, %v3004
        %v3012 = vadd.f32 %v2994, %v3011
        %s3013 = sld [smem:[#allocation3 + $0x9e]]
        %v3014 = vstv %s3013
        %v3015 = vmul.f32 %v3014, %v3004
        %v3016 = vadd.f32 %v2998, %v3015
        %s3017 = sld [smem:[#allocation3 + $0x9f]]
        %v3018 = vstv %s3017
        %v3019 = vmul.f32 %v3018, %v3004
        %v3020 = vadd.f32 %v3002, %v3019
        %3021 = vrot.lane.b32.xlu0 %v2968, 125
        %v3022 = vpop.permute.xlu0 %3021
        %s3023 = sld [smem:[#allocation3 + $0xac]]
        %v3024 = vstv %s3023
        %v3025 = vmul.f32 %v3024, %v3022
        %v3026 = vadd.f32 %v3008, %v3025
        %s3027 = sld [smem:[#allocation3 + $0xad]]
        %v3028 = vstv %s3027
        %v3029 = vmul.f32 %v3028, %v3022
        %v3030 = vadd.f32 %v3012, %v3029
        %s3031 = sld [smem:[#allocation3 + $0xae]]
        %v3032 = vstv %s3031
        %v3033 = vmul.f32 %v3032, %v3022
        %v3034 = vadd.f32 %v3016, %v3033
        %s3035 = sld [smem:[#allocation3 + $0xaf]]
        %v3036 = vstv %s3035
        %v3037 = vmul.f32 %v3036, %v3022
        %v3038 = vadd.f32 %v3020, %v3037
        %3039 = vrot.lane.b32.xlu0 %v2968, 124
        %v3040 = vpop.permute.xlu0 %3039
        %s3041 = sld [smem:[#allocation3 + $0xbc]]
        %v3042 = vstv %s3041
        %v3043 = vmul.f32 %v3042, %v3040
        %v3044 = vadd.f32 %v3026, %v3043
        %s3045 = sld [smem:[#allocation3 + $0xbd]]
        %v3046 = vstv %s3045
        %v3047 = vmul.f32 %v3046, %v3040
        %v3048 = vadd.f32 %v3030, %v3047
        %s3049 = sld [smem:[#allocation3 + $0xbe]]
        %v3050 = vstv %s3049
        %v3051 = vmul.f32 %v3050, %v3040
        %v3052 = vadd.f32 %v3034, %v3051
        %s3053 = sld [smem:[#allocation3 + $0xbf]]
        %v3054 = vstv %s3053
        %v3055 = vmul.f32 %v3054, %v3040
        %v3056 = vadd.f32 %v3038, %v3055
        %3057 = vrot.lane.b32.xlu0 %v2968, 123
        %v3058 = vpop.permute.xlu0 %3057
        %s3059 = sld [smem:[#allocation3 + $0xcc]]
        %v3060 = vstv %s3059
        %v3061 = vmul.f32 %v3060, %v3058
        %v3062 = vadd.f32 %v3044, %v3061
        %s3063 = sld [smem:[#allocation3 + $0xcd]]
        %v3064 = vstv %s3063
        %v3065 = vmul.f32 %v3064, %v3058
        %v3066 = vadd.f32 %v3048, %v3065
        %s3067 = sld [smem:[#allocation3 + $0xce]]
        %v3068 = vstv %s3067
        %v3069 = vmul.f32 %v3068, %v3058
        %v3070 = vadd.f32 %v3052, %v3069
        %s3071 = sld [smem:[#allocation3 + $0xcf]]
        %v3072 = vstv %s3071
        %v3073 = vmul.f32 %v3072, %v3058
        %v3074 = vadd.f32 %v3056, %v3073
        %3075 = vrot.lane.b32.xlu0 %v2968, 122
        %v3076 = vpop.permute.xlu0 %3075
        %s3077 = sld [smem:[#allocation3 + $0xdc]]
        %v3078 = vstv %s3077
        %v3079 = vmul.f32 %v3078, %v3076
        %v3080 = vadd.f32 %v3062, %v3079
        %s3081 = sld [smem:[#allocation3 + $0xdd]]
        %v3082 = vstv %s3081
        %v3083 = vmul.f32 %v3082, %v3076
        %v3084 = vadd.f32 %v3066, %v3083
        %s3085 = sld [smem:[#allocation3 + $0xde]]
        %v3086 = vstv %s3085
        %v3087 = vmul.f32 %v3086, %v3076
        %v3088 = vadd.f32 %v3070, %v3087
        %s3089 = sld [smem:[#allocation3 + $0xdf]]
        %v3090 = vstv %s3089
        %v3091 = vmul.f32 %v3090, %v3076
        %v3092 = vadd.f32 %v3074, %v3091
        %v3093 = vld [vmem:[%s2842 + $0x2] sm:$0xff]
        %s3094 = sld [smem:[#allocation3 + $0xec]]
        %v3095 = vstv %s3094
        %v3096 = vmul.f32 %v3095, %v3093
        %v3097 = vadd.f32 %v3080, %v3096
        %s3098 = sld [smem:[#allocation3 + $0xed]]
        %v3099 = vstv %s3098
        %v3100 = vmul.f32 %v3099, %v3093
        %v3101 = vadd.f32 %v3084, %v3100
        %s3102 = sld [smem:[#allocation3 + $0xee]]
        %v3103 = vstv %s3102
        %v3104 = vmul.f32 %v3103, %v3093
        %v3105 = vadd.f32 %v3088, %v3104
        %s3106 = sld [smem:[#allocation3 + $0xef]]
        %v3107 = vstv %s3106
        %v3108 = vmul.f32 %v3107, %v3093
        %v3109 = vadd.f32 %v3092, %v3108
        %3110 = vrot.lane.b32.xlu0 %v3093, 127
        %v3111 = vpop.permute.xlu0 %3110
        %s3112 = sld [smem:[#allocation3 + $0xfc]]
        %v3113 = vstv %s3112
        %v3114 = vmul.f32 %v3113, %v3111
        %v3115 = vadd.f32 %v3097, %v3114
        %s3116 = sld [smem:[#allocation3 + $0xfd]]
        %v3117 = vstv %s3116
        %v3118 = vmul.f32 %v3117, %v3111
        %v3119 = vadd.f32 %v3101, %v3118
        %s3120 = sld [smem:[#allocation3 + $0xfe]]
        %v3121 = vstv %s3120
        %v3122 = vmul.f32 %v3121, %v3111
        %v3123 = vadd.f32 %v3105, %v3122
        %s3124 = sld [smem:[#allocation3 + $0xff]]
        %v3125 = vstv %s3124
        %v3126 = vmul.f32 %v3125, %v3111
        %v3127 = vadd.f32 %v3109, %v3126
        %3128 = vrot.lane.b32.xlu0 %v3093, 126
        %v3129 = vpop.permute.xlu0 %3128
        %s3130 = sld [smem:[#allocation3 + $0x10c]]
        %v3131 = vstv %s3130
        %v3132 = vmul.f32 %v3131, %v3129
        %v3133 = vadd.f32 %v3115, %v3132
        %s3134 = sld [smem:[#allocation3 + $0x10d]]
        %v3135 = vstv %s3134
        %v3136 = vmul.f32 %v3135, %v3129
        %v3137 = vadd.f32 %v3119, %v3136
        %s3138 = sld [smem:[#allocation3 + $0x10e]]
        %v3139 = vstv %s3138
        %v3140 = vmul.f32 %v3139, %v3129
        %v3141 = vadd.f32 %v3123, %v3140
        %s3142 = sld [smem:[#allocation3 + $0x10f]]
        %v3143 = vstv %s3142
        %v3144 = vmul.f32 %v3143, %v3129
        %v3145 = vadd.f32 %v3127, %v3144
        %3146 = vrot.lane.b32.xlu0 %v3093, 125
        %v3147 = vpop.permute.xlu0 %3146
        %s3148 = sld [smem:[#allocation3 + $0x11c]]
        %v3149 = vstv %s3148
        %v3150 = vmul.f32 %v3149, %v3147
        %v3151 = vadd.f32 %v3133, %v3150
        %s3152 = sld [smem:[#allocation3 + $0x11d]]
        %v3153 = vstv %s3152
        %v3154 = vmul.f32 %v3153, %v3147
        %v3155 = vadd.f32 %v3137, %v3154
        %s3156 = sld [smem:[#allocation3 + $0x11e]]
        %v3157 = vstv %s3156
        %v3158 = vmul.f32 %v3157, %v3147
        %v3159 = vadd.f32 %v3141, %v3158
        %s3160 = sld [smem:[#allocation3 + $0x11f]]
        %v3161 = vstv %s3160
        %v3162 = vmul.f32 %v3161, %v3147
        %v3163 = vadd.f32 %v3145, %v3162
        %3164 = vrot.lane.b32.xlu0 %v3093, 124
        %v3165 = vpop.permute.xlu0 %3164
        %s3166 = sld [smem:[#allocation3 + $0x12c]]
        %v3167 = vstv %s3166
        %v3168 = vmul.f32 %v3167, %v3165
        %v3169 = vadd.f32 %v3151, %v3168
        %s3170 = sld [smem:[#allocation3 + $0x12d]]
        %v3171 = vstv %s3170
        %v3172 = vmul.f32 %v3171, %v3165
        %v3173 = vadd.f32 %v3155, %v3172
        %s3174 = sld [smem:[#allocation3 + $0x12e]]
        %v3175 = vstv %s3174
        %v3176 = vmul.f32 %v3175, %v3165
        %v3177 = vadd.f32 %v3159, %v3176
        %s3178 = sld [smem:[#allocation3 + $0x12f]]
        %v3179 = vstv %s3178
        %v3180 = vmul.f32 %v3179, %v3165
        %v3181 = vadd.f32 %v3163, %v3180
        %3182 = vrot.lane.b32.xlu0 %v3093, 123
        %v3183 = vpop.permute.xlu0 %3182
        %s3184 = sld [smem:[#allocation3 + $0x13c]]
        %v3185 = vstv %s3184
        %v3186 = vmul.f32 %v3185, %v3183
        %v3187 = vadd.f32 %v3169, %v3186
        %s3188 = sld [smem:[#allocation3 + $0x13d]]
        %v3189 = vstv %s3188
        %v3190 = vmul.f32 %v3189, %v3183
        %v3191 = vadd.f32 %v3173, %v3190
        %s3192 = sld [smem:[#allocation3 + $0x13e]]
        %v3193 = vstv %s3192
        %v3194 = vmul.f32 %v3193, %v3183
        %v3195 = vadd.f32 %v3177, %v3194
        %s3196 = sld [smem:[#allocation3 + $0x13f]]
        %v3197 = vstv %s3196
        %v3198 = vmul.f32 %v3197, %v3183
        %v3199 = vadd.f32 %v3181, %v3198
        %3200 = vrot.lane.b32.xlu0 %v3093, 122
        %v3201 = vpop.permute.xlu0 %3200
        %s3202 = sld [smem:[#allocation3 + $0x14c]]
        %v3203 = vstv %s3202
        %v3204 = vmul.f32 %v3203, %v3201
        %v3205 = vadd.f32 %v3187, %v3204
        %s3206 = sld [smem:[#allocation3 + $0x14d]]
        %v3207 = vstv %s3206
        %v3208 = vmul.f32 %v3207, %v3201
        %v3209 = vadd.f32 %v3191, %v3208
        %s3210 = sld [smem:[#allocation3 + $0x14e]]
        %v3211 = vstv %s3210
        %v3212 = vmul.f32 %v3211, %v3201
        %v3213 = vadd.f32 %v3195, %v3212
        %s3214 = sld [smem:[#allocation3 + $0x14f]]
        %v3215 = vstv %s3214
        %v3216 = vmul.f32 %v3215, %v3201
        %v3217 = vadd.f32 %v3199, %v3216
        %v3218 = vld [vmem:[%s2842 + $0x3] sm:$0xff]
        %s3219 = sld [smem:[#allocation3 + $0x15c]]
        %v3220 = vstv %s3219
        %v3221 = vmul.f32 %v3220, %v3218
        %v3222 = vadd.f32 %v3205, %v3221
        %s3223 = sld [smem:[#allocation3 + $0x15d]]
        %v3224 = vstv %s3223
        %v3225 = vmul.f32 %v3224, %v3218
        %v3226 = vadd.f32 %v3209, %v3225
        %s3227 = sld [smem:[#allocation3 + $0x15e]]
        %v3228 = vstv %s3227
        %v3229 = vmul.f32 %v3228, %v3218
        %v3230 = vadd.f32 %v3213, %v3229
        %s3231 = sld [smem:[#allocation3 + $0x15f]]
        %v3232 = vstv %s3231
        %v3233 = vmul.f32 %v3232, %v3218
        %v3234 = vadd.f32 %v3217, %v3233
        %3235 = vrot.lane.b32.xlu0 %v3218, 127
        %v3236 = vpop.permute.xlu0 %3235
        %s3237 = sld [smem:[#allocation3 + $0x16c]]
        %v3238 = vstv %s3237
        %v3239 = vmul.f32 %v3238, %v3236
        %v3240 = vadd.f32 %v3222, %v3239
        %s3241 = sld [smem:[#allocation3 + $0x16d]]
        %v3242 = vstv %s3241
        %v3243 = vmul.f32 %v3242, %v3236
        %v3244 = vadd.f32 %v3226, %v3243
        %s3245 = sld [smem:[#allocation3 + $0x16e]]
        %v3246 = vstv %s3245
        %v3247 = vmul.f32 %v3246, %v3236
        %v3248 = vadd.f32 %v3230, %v3247
        %s3249 = sld [smem:[#allocation3 + $0x16f]]
        %v3250 = vstv %s3249
        %v3251 = vmul.f32 %v3250, %v3236
        %v3252 = vadd.f32 %v3234, %v3251
        %3253 = vrot.lane.b32.xlu0 %v3218, 126
        %v3254 = vpop.permute.xlu0 %3253
        %s3255 = sld [smem:[#allocation3 + $0x17c]]
        %v3256 = vstv %s3255
        %v3257 = vmul.f32 %v3256, %v3254
        %v3258 = vadd.f32 %v3240, %v3257
        %s3259 = sld [smem:[#allocation3 + $0x17d]]
        %v3260 = vstv %s3259
        %v3261 = vmul.f32 %v3260, %v3254
        %v3262 = vadd.f32 %v3244, %v3261
        %s3263 = sld [smem:[#allocation3 + $0x17e]]
        %v3264 = vstv %s3263
        %v3265 = vmul.f32 %v3264, %v3254
        %v3266 = vadd.f32 %v3248, %v3265
        %s3267 = sld [smem:[#allocation3 + $0x17f]]
        %v3268 = vstv %s3267
        %v3269 = vmul.f32 %v3268, %v3254
        %v3270 = vadd.f32 %v3252, %v3269
        %3271 = vrot.lane.b32.xlu0 %v3218, 125
        %v3272 = vpop.permute.xlu0 %3271
        %s3273 = sld [smem:[#allocation3 + $0x18c]]
        %v3274 = vstv %s3273
        %v3275 = vmul.f32 %v3274, %v3272
        %v3276 = vadd.f32 %v3258, %v3275
        %s3277 = sld [smem:[#allocation3 + $0x18d]]
        %v3278 = vstv %s3277
        %v3279 = vmul.f32 %v3278, %v3272
        %v3280 = vadd.f32 %v3262, %v3279
        %s3281 = sld [smem:[#allocation3 + $0x18e]]
        %v3282 = vstv %s3281
        %v3283 = vmul.f32 %v3282, %v3272
        %v3284 = vadd.f32 %v3266, %v3283
        %s3285 = sld [smem:[#allocation3 + $0x18f]]
        %v3286 = vstv %s3285
        %v3287 = vmul.f32 %v3286, %v3272
        %v3288 = vadd.f32 %v3270, %v3287
        %3289 = vrot.lane.b32.xlu0 %v3218, 124
        %v3290 = vpop.permute.xlu0 %3289
        %s3291 = sld [smem:[#allocation3 + $0x19c]]
        %v3292 = vstv %s3291
        %v3293 = vmul.f32 %v3292, %v3290
        %v3294 = vadd.f32 %v3276, %v3293
        %s3295 = sld [smem:[#allocation3 + $0x19d]]
        %v3296 = vstv %s3295
        %v3297 = vmul.f32 %v3296, %v3290
        %v3298 = vadd.f32 %v3280, %v3297
        %s3299 = sld [smem:[#allocation3 + $0x19e]]
        %v3300 = vstv %s3299
        %v3301 = vmul.f32 %v3300, %v3290
        %v3302 = vadd.f32 %v3284, %v3301
        %s3303 = sld [smem:[#allocation3 + $0x19f]]
        %v3304 = vstv %s3303
        %v3305 = vmul.f32 %v3304, %v3290
        %v3306 = vadd.f32 %v3288, %v3305
        %3307 = vrot.lane.b32.xlu0 %v3218, 123
        %v3308 = vpop.permute.xlu0 %3307
        %s3309 = sld [smem:[#allocation3 + $0x1ac]]
        %v3310 = vstv %s3309
        %v3311 = vmul.f32 %v3310, %v3308
        %v3312 = vadd.f32 %v3294, %v3311
        %s3313 = sld [smem:[#allocation3 + $0x1ad]]
        %v3314 = vstv %s3313
        %v3315 = vmul.f32 %v3314, %v3308
        %v3316 = vadd.f32 %v3298, %v3315
        %s3317 = sld [smem:[#allocation3 + $0x1ae]]
        %v3318 = vstv %s3317
        %v3319 = vmul.f32 %v3318, %v3308
        %v3320 = vadd.f32 %v3302, %v3319
        %s3321 = sld [smem:[#allocation3 + $0x1af]]
        %v3322 = vstv %s3321
        %v3323 = vmul.f32 %v3322, %v3308
        %v3324 = vadd.f32 %v3306, %v3323
        %3325 = vrot.lane.b32.xlu0 %v3218, 122
        %v3326 = vpop.permute.xlu0 %3325
        %s3327 = sld [smem:[#allocation3 + $0x1bc]]
        %v3328 = vstv %s3327
        %v3329 = vmul.f32 %v3328, %v3326
        %v3330 = vadd.f32 %v3312, %v3329
        %s3331 = sld [smem:[#allocation3 + $0x1bd]]
        %v3332 = vstv %s3331
        %v3333 = vmul.f32 %v3332, %v3326
        %v3334 = vadd.f32 %v3316, %v3333
        %s3335 = sld [smem:[#allocation3 + $0x1be]]
        %v3336 = vstv %s3335
        %v3337 = vmul.f32 %v3336, %v3326
        %v3338 = vadd.f32 %v3320, %v3337
        %s3339 = sld [smem:[#allocation3 + $0x1bf]]
        %v3340 = vstv %s3339
        %v3341 = vmul.f32 %v3340, %v3326
        %v3342 = vadd.f32 %v3324, %v3341
        %v3343 = vld [vmem:[%s2842 + $0x4] sm:$0xff]
        %s3344 = sld [smem:[#allocation3 + $0x1cc]]
        %v3345 = vstv %s3344
        %v3346 = vmul.f32 %v3345, %v3343
        %v3347 = vadd.f32 %v3330, %v3346
        %s3348 = sld [smem:[#allocation3 + $0x1cd]]
        %v3349 = vstv %s3348
        %v3350 = vmul.f32 %v3349, %v3343
        %v3351 = vadd.f32 %v3334, %v3350
        %s3352 = sld [smem:[#allocation3 + $0x1ce]]
        %v3353 = vstv %s3352
        %v3354 = vmul.f32 %v3353, %v3343
        %v3355 = vadd.f32 %v3338, %v3354
        %s3356 = sld [smem:[#allocation3 + $0x1cf]]
        %v3357 = vstv %s3356
        %v3358 = vmul.f32 %v3357, %v3343
        %v3359 = vadd.f32 %v3342, %v3358
        %3360 = vrot.lane.b32.xlu0 %v3343, 127
        %v3361 = vpop.permute.xlu0 %3360
        %s3362 = sld [smem:[#allocation3 + $0x1dc]]
        %v3363 = vstv %s3362
        %v3364 = vmul.f32 %v3363, %v3361
        %v3365 = vadd.f32 %v3347, %v3364
        %s3366 = sld [smem:[#allocation3 + $0x1dd]]
        %v3367 = vstv %s3366
        %v3368 = vmul.f32 %v3367, %v3361
        %v3369 = vadd.f32 %v3351, %v3368
        %s3370 = sld [smem:[#allocation3 + $0x1de]]
        %v3371 = vstv %s3370
        %v3372 = vmul.f32 %v3371, %v3361
        %v3373 = vadd.f32 %v3355, %v3372
        %s3374 = sld [smem:[#allocation3 + $0x1df]]
        %v3375 = vstv %s3374
        %v3376 = vmul.f32 %v3375, %v3361
        %v3377 = vadd.f32 %v3359, %v3376
        %3378 = vrot.lane.b32.xlu0 %v3343, 126
        %v3379 = vpop.permute.xlu0 %3378
        %s3380 = sld [smem:[#allocation3 + $0x1ec]]
        %v3381 = vstv %s3380
        %v3382 = vmul.f32 %v3381, %v3379
        %v3383 = vadd.f32 %v3365, %v3382
        %s3384 = sld [smem:[#allocation3 + $0x1ed]]
        %v3385 = vstv %s3384
        %v3386 = vmul.f32 %v3385, %v3379
        %v3387 = vadd.f32 %v3369, %v3386
        %s3388 = sld [smem:[#allocation3 + $0x1ee]]
        %v3389 = vstv %s3388
        %v3390 = vmul.f32 %v3389, %v3379
        %v3391 = vadd.f32 %v3373, %v3390
        %s3392 = sld [smem:[#allocation3 + $0x1ef]]
        %v3393 = vstv %s3392
        %v3394 = vmul.f32 %v3393, %v3379
        %v3395 = vadd.f32 %v3377, %v3394
        %3396 = vrot.lane.b32.xlu0 %v3343, 125
        %v3397 = vpop.permute.xlu0 %3396
        %s3398 = sld [smem:[#allocation3 + $0x1fc]]
        %v3399 = vstv %s3398
        %v3400 = vmul.f32 %v3399, %v3397
        %v3401 = vadd.f32 %v3383, %v3400
        %s3402 = sld [smem:[#allocation3 + $0x1fd]]
        %v3403 = vstv %s3402
        %v3404 = vmul.f32 %v3403, %v3397
        %v3405 = vadd.f32 %v3387, %v3404
        %s3406 = sld [smem:[#allocation3 + $0x1fe]]
        %v3407 = vstv %s3406
        %v3408 = vmul.f32 %v3407, %v3397
        %v3409 = vadd.f32 %v3391, %v3408
        %s3410 = sld [smem:[#allocation3 + $0x1ff]]
        %v3411 = vstv %s3410
        %v3412 = vmul.f32 %v3411, %v3397
        %v3413 = vadd.f32 %v3395, %v3412
        %3414 = vrot.lane.b32.xlu0 %v3343, 124
        %v3415 = vpop.permute.xlu0 %3414
        %s3416 = sld [smem:[#allocation3 + $0x20c]]
        %v3417 = vstv %s3416
        %v3418 = vmul.f32 %v3417, %v3415
        %v3419 = vadd.f32 %v3401, %v3418
        %s3420 = sld [smem:[#allocation3 + $0x20d]]
        %v3421 = vstv %s3420
        %v3422 = vmul.f32 %v3421, %v3415
        %v3423 = vadd.f32 %v3405, %v3422
        %s3424 = sld [smem:[#allocation3 + $0x20e]]
        %v3425 = vstv %s3424
        %v3426 = vmul.f32 %v3425, %v3415
        %v3427 = vadd.f32 %v3409, %v3426
        %s3428 = sld [smem:[#allocation3 + $0x20f]]
        %v3429 = vstv %s3428
        %v3430 = vmul.f32 %v3429, %v3415
        %v3431 = vadd.f32 %v3413, %v3430
        %3432 = vrot.lane.b32.xlu0 %v3343, 123
        %v3433 = vpop.permute.xlu0 %3432
        %s3434 = sld [smem:[#allocation3 + $0x21c]]
        %v3435 = vstv %s3434
        %v3436 = vmul.f32 %v3435, %v3433
        %v3437 = vadd.f32 %v3419, %v3436
        %s3438 = sld [smem:[#allocation3 + $0x21d]]
        %v3439 = vstv %s3438
        %v3440 = vmul.f32 %v3439, %v3433
        %v3441 = vadd.f32 %v3423, %v3440
        %s3442 = sld [smem:[#allocation3 + $0x21e]]
        %v3443 = vstv %s3442
        %v3444 = vmul.f32 %v3443, %v3433
        %v3445 = vadd.f32 %v3427, %v3444
        %s3446 = sld [smem:[#allocation3 + $0x21f]]
        %v3447 = vstv %s3446
        %v3448 = vmul.f32 %v3447, %v3433
        %v3449 = vadd.f32 %v3431, %v3448
        %3450 = vrot.lane.b32.xlu0 %v3343, 122
        %v3451 = vpop.permute.xlu0 %3450
        %s3452 = sld [smem:[#allocation3 + $0x22c]]
        %v3453 = vstv %s3452
        %v3454 = vmul.f32 %v3453, %v3451
        %v3455 = vadd.f32 %v3437, %v3454
        %s3456 = sld [smem:[#allocation3 + $0x22d]]
        %v3457 = vstv %s3456
        %v3458 = vmul.f32 %v3457, %v3451
        %v3459 = vadd.f32 %v3441, %v3458
        %s3460 = sld [smem:[#allocation3 + $0x22e]]
        %v3461 = vstv %s3460
        %v3462 = vmul.f32 %v3461, %v3451
        %v3463 = vadd.f32 %v3445, %v3462
        %s3464 = sld [smem:[#allocation3 + $0x22f]]
        %v3465 = vstv %s3464
        %v3466 = vmul.f32 %v3465, %v3451
        %v3467 = vadd.f32 %v3449, %v3466
        %v3468 = vld [vmem:[%s2842 + $0x5] sm:$0xff]
        %s3469 = sld [smem:[#allocation3 + $0x23c]]
        %v3470 = vstv %s3469
        %v3471 = vmul.f32 %v3470, %v3468
        %v3472 = vadd.f32 %v3455, %v3471
        %s3473 = sld [smem:[#allocation3 + $0x23d]]
        %v3474 = vstv %s3473
        %v3475 = vmul.f32 %v3474, %v3468
        %v3476 = vadd.f32 %v3459, %v3475
        %s3477 = sld [smem:[#allocation3 + $0x23e]]
        %v3478 = vstv %s3477
        %v3479 = vmul.f32 %v3478, %v3468
        %v3480 = vadd.f32 %v3463, %v3479
        %s3481 = sld [smem:[#allocation3 + $0x23f]]
        %v3482 = vstv %s3481
        %v3483 = vmul.f32 %v3482, %v3468
        %v3484 = vadd.f32 %v3467, %v3483
        %3485 = vrot.lane.b32.xlu0 %v3468, 127
        %v3486 = vpop.permute.xlu0 %3485
        %s3487 = sld [smem:[#allocation3 + $0x24c]]
        %v3488 = vstv %s3487
        %v3489 = vmul.f32 %v3488, %v3486
        %v3490 = vadd.f32 %v3472, %v3489
        %s3491 = sld [smem:[#allocation3 + $0x24d]]
        %v3492 = vstv %s3491
        %v3493 = vmul.f32 %v3492, %v3486
        %v3494 = vadd.f32 %v3476, %v3493
        %s3495 = sld [smem:[#allocation3 + $0x24e]]
        %v3496 = vstv %s3495
        %v3497 = vmul.f32 %v3496, %v3486
        %v3498 = vadd.f32 %v3480, %v3497
        %s3499 = sld [smem:[#allocation3 + $0x24f]]
        %v3500 = vstv %s3499
        %v3501 = vmul.f32 %v3500, %v3486
        %v3502 = vadd.f32 %v3484, %v3501
        %3503 = vrot.lane.b32.xlu0 %v3468, 126
        %v3504 = vpop.permute.xlu0 %3503
        %s3505 = sld [smem:[#allocation3 + $0x25c]]
        %v3506 = vstv %s3505
        %v3507 = vmul.f32 %v3506, %v3504
        %v3508 = vadd.f32 %v3490, %v3507
        %s3509 = sld [smem:[#allocation3 + $0x25d]]
        %v3510 = vstv %s3509
        %v3511 = vmul.f32 %v3510, %v3504
        %v3512 = vadd.f32 %v3494, %v3511
        %s3513 = sld [smem:[#allocation3 + $0x25e]]
        %v3514 = vstv %s3513
        %v3515 = vmul.f32 %v3514, %v3504
        %v3516 = vadd.f32 %v3498, %v3515
        %s3517 = sld [smem:[#allocation3 + $0x25f]]
        %v3518 = vstv %s3517
        %v3519 = vmul.f32 %v3518, %v3504
        %v3520 = vadd.f32 %v3502, %v3519
        %3521 = vrot.lane.b32.xlu0 %v3468, 125
        %v3522 = vpop.permute.xlu0 %3521
        %s3523 = sld [smem:[#allocation3 + $0x26c]]
        %v3524 = vstv %s3523
        %v3525 = vmul.f32 %v3524, %v3522
        %v3526 = vadd.f32 %v3508, %v3525
        %s3527 = sld [smem:[#allocation3 + $0x26d]]
        %v3528 = vstv %s3527
        %v3529 = vmul.f32 %v3528, %v3522
        %v3530 = vadd.f32 %v3512, %v3529
        %s3531 = sld [smem:[#allocation3 + $0x26e]]
        %v3532 = vstv %s3531
        %v3533 = vmul.f32 %v3532, %v3522
        %v3534 = vadd.f32 %v3516, %v3533
        %s3535 = sld [smem:[#allocation3 + $0x26f]]
        %v3536 = vstv %s3535
        %v3537 = vmul.f32 %v3536, %v3522
        %v3538 = vadd.f32 %v3520, %v3537
        %3539 = vrot.lane.b32.xlu0 %v3468, 124
        %v3540 = vpop.permute.xlu0 %3539
        %s3541 = sld [smem:[#allocation3 + $0x27c]]
        %v3542 = vstv %s3541
        %v3543 = vmul.f32 %v3542, %v3540
        %v3544 = vadd.f32 %v3526, %v3543
        %s3545 = sld [smem:[#allocation3 + $0x27d]]
        %v3546 = vstv %s3545
        %v3547 = vmul.f32 %v3546, %v3540
        %v3548 = vadd.f32 %v3530, %v3547
        %s3549 = sld [smem:[#allocation3 + $0x27e]]
        %v3550 = vstv %s3549
        %v3551 = vmul.f32 %v3550, %v3540
        %v3552 = vadd.f32 %v3534, %v3551
        %s3553 = sld [smem:[#allocation3 + $0x27f]]
        %v3554 = vstv %s3553
        %v3555 = vmul.f32 %v3554, %v3540
        %v3556 = vadd.f32 %v3538, %v3555
        %3557 = vrot.lane.b32.xlu0 %v3468, 123
        %v3558 = vpop.permute.xlu0 %3557
        %s3559 = sld [smem:[#allocation3 + $0x28c]]
        %v3560 = vstv %s3559
        %v3561 = vmul.f32 %v3560, %v3558
        %v3562 = vadd.f32 %v3544, %v3561
        %s3563 = sld [smem:[#allocation3 + $0x28d]]
        %v3564 = vstv %s3563
        %v3565 = vmul.f32 %v3564, %v3558
        %v3566 = vadd.f32 %v3548, %v3565
        %s3567 = sld [smem:[#allocation3 + $0x28e]]
        %v3568 = vstv %s3567
        %v3569 = vmul.f32 %v3568, %v3558
        %v3570 = vadd.f32 %v3552, %v3569
        %s3571 = sld [smem:[#allocation3 + $0x28f]]
        %v3572 = vstv %s3571
        %v3573 = vmul.f32 %v3572, %v3558
        %v3574 = vadd.f32 %v3556, %v3573
        %3575 = vrot.lane.b32.xlu0 %v3468, 122
        %v3576 = vpop.permute.xlu0 %3575
        %s3577 = sld [smem:[#allocation3 + $0x29c]]
        %v3578 = vstv %s3577
        %v3579 = vmul.f32 %v3578, %v3576
        %v3580 = vadd.f32 %v3562, %v3579
        %s3581 = sld [smem:[#allocation3 + $0x29d]]
        %v3582 = vstv %s3581
        %v3583 = vmul.f32 %v3582, %v3576
        %v3584 = vadd.f32 %v3566, %v3583
        %s3585 = sld [smem:[#allocation3 + $0x29e]]
        %v3586 = vstv %s3585
        %v3587 = vmul.f32 %v3586, %v3576
        %v3588 = vadd.f32 %v3570, %v3587
        %s3589 = sld [smem:[#allocation3 + $0x29f]]
        %v3590 = vstv %s3589
        %v3591 = vmul.f32 %v3590, %v3576
        %v3592 = vadd.f32 %v3574, %v3591
        %v3593 = vld [vmem:[%s2842 + $0x6] sm:$0xff]
        %s3594 = sld [smem:[#allocation3 + $0x2ac]]
        %v3595 = vstv %s3594
        %v3596 = vmul.f32 %v3595, %v3593
        %v3597 = vadd.f32 %v3580, %v3596
        %s3598 = sld [smem:[#allocation3 + $0x2ad]]
        %v3599 = vstv %s3598
        %v3600 = vmul.f32 %v3599, %v3593
        %v3601 = vadd.f32 %v3584, %v3600
        %s3602 = sld [smem:[#allocation3 + $0x2ae]]
        %v3603 = vstv %s3602
        %v3604 = vmul.f32 %v3603, %v3593
        %v3605 = vadd.f32 %v3588, %v3604
        %s3606 = sld [smem:[#allocation3 + $0x2af]]
        %v3607 = vstv %s3606
        %v3608 = vmul.f32 %v3607, %v3593
        %v3609 = vadd.f32 %v3592, %v3608
        %3610 = vrot.lane.b32.xlu0 %v3593, 127
        %v3611 = vpop.permute.xlu0 %3610
        %s3612 = sld [smem:[#allocation3 + $0x2bc]]
        %v3613 = vstv %s3612
        %v3614 = vmul.f32 %v3613, %v3611
        %v3615 = vadd.f32 %v3597, %v3614
        %s3616 = sld [smem:[#allocation3 + $0x2bd]]
        %v3617 = vstv %s3616
        %v3618 = vmul.f32 %v3617, %v3611
        %v3619 = vadd.f32 %v3601, %v3618
        %s3620 = sld [smem:[#allocation3 + $0x2be]]
        %v3621 = vstv %s3620
        %v3622 = vmul.f32 %v3621, %v3611
        %v3623 = vadd.f32 %v3605, %v3622
        %s3624 = sld [smem:[#allocation3 + $0x2bf]]
        %v3625 = vstv %s3624
        %v3626 = vmul.f32 %v3625, %v3611
        %v3627 = vadd.f32 %v3609, %v3626
        %3628 = vrot.lane.b32.xlu0 %v3593, 126
        %v3629 = vpop.permute.xlu0 %3628
        %s3630 = sld [smem:[#allocation3 + $0x2cc]]
        %v3631 = vstv %s3630
        %v3632 = vmul.f32 %v3631, %v3629
        %v3633 = vadd.f32 %v3615, %v3632
        %s3634 = sld [smem:[#allocation3 + $0x2cd]]
        %v3635 = vstv %s3634
        %v3636 = vmul.f32 %v3635, %v3629
        %v3637 = vadd.f32 %v3619, %v3636
        %s3638 = sld [smem:[#allocation3 + $0x2ce]]
        %v3639 = vstv %s3638
        %v3640 = vmul.f32 %v3639, %v3629
        %v3641 = vadd.f32 %v3623, %v3640
        %s3642 = sld [smem:[#allocation3 + $0x2cf]]
        %v3643 = vstv %s3642
        %v3644 = vmul.f32 %v3643, %v3629
        %v3645 = vadd.f32 %v3627, %v3644
        %3646 = vrot.lane.b32.xlu0 %v3593, 125
        %v3647 = vpop.permute.xlu0 %3646
        %s3648 = sld [smem:[#allocation3 + $0x2dc]]
        %v3649 = vstv %s3648
        %v3650 = vmul.f32 %v3649, %v3647
        %v3651 = vadd.f32 %v3633, %v3650
        %s3652 = sld [smem:[#allocation3 + $0x2dd]]
        %v3653 = vstv %s3652
        %v3654 = vmul.f32 %v3653, %v3647
        %v3655 = vadd.f32 %v3637, %v3654
        %s3656 = sld [smem:[#allocation3 + $0x2de]]
        %v3657 = vstv %s3656
        %v3658 = vmul.f32 %v3657, %v3647
        %v3659 = vadd.f32 %v3641, %v3658
        %s3660 = sld [smem:[#allocation3 + $0x2df]]
        %v3661 = vstv %s3660
        %v3662 = vmul.f32 %v3661, %v3647
        %v3663 = vadd.f32 %v3645, %v3662
        %3664 = vrot.lane.b32.xlu0 %v3593, 124
        %v3665 = vpop.permute.xlu0 %3664
        %s3666 = sld [smem:[#allocation3 + $0x2ec]]
        %v3667 = vstv %s3666
        %v3668 = vmul.f32 %v3667, %v3665
        %v3669 = vadd.f32 %v3651, %v3668
        %s3670 = sld [smem:[#allocation3 + $0x2ed]]
        %v3671 = vstv %s3670
        %v3672 = vmul.f32 %v3671, %v3665
        %v3673 = vadd.f32 %v3655, %v3672
        %s3674 = sld [smem:[#allocation3 + $0x2ee]]
        %v3675 = vstv %s3674
        %v3676 = vmul.f32 %v3675, %v3665
        %v3677 = vadd.f32 %v3659, %v3676
        %s3678 = sld [smem:[#allocation3 + $0x2ef]]
        %v3679 = vstv %s3678
        %v3680 = vmul.f32 %v3679, %v3665
        %v3681 = vadd.f32 %v3663, %v3680
        %3682 = vrot.lane.b32.xlu0 %v3593, 123
        %v3683 = vpop.permute.xlu0 %3682
        %s3684 = sld [smem:[#allocation3 + $0x2fc]]
        %v3685 = vstv %s3684
        %v3686 = vmul.f32 %v3685, %v3683
        %v3687 = vadd.f32 %v3669, %v3686
        %s3688 = sld [smem:[#allocation3 + $0x2fd]]
        %v3689 = vstv %s3688
        %v3690 = vmul.f32 %v3689, %v3683
        %v3691 = vadd.f32 %v3673, %v3690
        %s3692 = sld [smem:[#allocation3 + $0x2fe]]
        %v3693 = vstv %s3692
        %v3694 = vmul.f32 %v3693, %v3683
        %v3695 = vadd.f32 %v3677, %v3694
        %s3696 = sld [smem:[#allocation3 + $0x2ff]]
        %v3697 = vstv %s3696
        %v3698 = vmul.f32 %v3697, %v3683
        %v3699 = vadd.f32 %v3681, %v3698
        %3700 = vrot.lane.b32.xlu0 %v3593, 122
        %v3701 = vpop.permute.xlu0 %3700
        %s3702 = sld [smem:[#allocation3 + $0x30c]]
        %v3703 = vstv %s3702
        %v3704 = vmul.f32 %v3703, %v3701
        %v3705 = vadd.f32 %v3687, %v3704
        %s3706 = sld [smem:[#allocation3 + $0x30d]]
        %v3707 = vstv %s3706
        %v3708 = vmul.f32 %v3707, %v3701
        %v3709 = vadd.f32 %v3691, %v3708
        %s3710 = sld [smem:[#allocation3 + $0x30e]]
        %v3711 = vstv %s3710
        %v3712 = vmul.f32 %v3711, %v3701
        %v3713 = vadd.f32 %v3695, %v3712
        %s3714 = sld [smem:[#allocation3 + $0x30f]]
        %v3715 = vstv %s3714
        %v3716 = vmul.f32 %v3715, %v3701
        %v3717 = vadd.f32 %v3699, %v3716
        %3718 = vst [vmem:[%s214] sm:$0xff] %v3705
        %s3719 = scalar_lea.vmem %s214, 8 [#allocation5]
        %3720 = vst [vmem:[%s3719] sm:$0xff] %v3709
        %s3721 = scalar_lea.vmem %s214, 16 [#allocation5]
        %3722 = vst [vmem:[%s3721] sm:$0xff] %v3713
        %s3723 = scalar_lea.vmem %s214, 24 [#allocation5]
        %3724 = vst [vmem:[%s3723] sm:$0xff] %v3717
        %s3725 = sand.u32 %s69, 1
        %s3726 = sand.u32 %s69, 1
        %s3727 = smul.addr %s3726, 32
        %s3728 = scalar_lea.vmem [#allocation5], %s3727
        // Predicated region
        $region71: #{multi_scale_conv.1} parent=61 // pred_check
          %p3729 = pneg %p79
        $region72: #{multi_scale_conv.1} parent=61 // pred_check_branch
          %3731 = sbr.rel (%p3729) target = $region74
        $region73: #{multi_scale_conv.1} parent=61 // pred_region
          %s3732 = smul.addr %s14, 8
          %s3733 = scalar_lea.vmem %s2, %s3732
          // Predicated region
          $region75: #{multi_scale_conv.1} parent=73 // pred_check
            _
          $region76: #{multi_scale_conv.1} parent=73 // pred_check_branch
            %3735 = sbr.rel (0) target = $region78
          $region77: #{multi_scale_conv.1} parent=73 // pred_region
            // Predicated region
            $region79: #{multi_scale_conv.1} parent=77 // pred_check
              _
            $region80: #{multi_scale_conv.1} parent=77 // pred_check_branch
              %3737 = sbr.rel (0) target = $region82
            $region81: #{multi_scale_conv.1} parent=77 // pred_region
              // Predicated region
              $region94: #{multi_scale_conv.1} parent=81 // pred_check
                _
              $region95: #{multi_scale_conv.1} parent=81 // pred_check_branch
                %3759 = sbr.rel (0) target = $region97
              $region96: #{multi_scale_conv.1} parent=81 // pred_region
                loop: start=0, step=1, limit=1
                $region98: #{multi_scale_conv.1} parent=96 // loop_pre_header
                  _
                $region99: #{multi_scale_conv.1} parent=96 // loop_header
                  %s3761 = sphi 0, %s3765
                  %p3762 = scmp.ge.s32.totalorder %s3761, 1
                  %s3766 = sphi %s3728, %s3728
                  %s3767 = sphi %s3733, %s3733
                $region100: #{multi_scale_conv.1} parent=96 // loop_header_branch
                  %3764 = sbr.rel (%p3762) target = $region104
                $region101: #{multi_scale_conv.1} parent=96 // loop_body
                  %v3768 = vld [vmem:[%s3766] sm:$0xff]
                  %3769 = vst [vmem:[%s3767] sm:$0xff] %v3768
                  %v3770 = vld [vmem:[%s3766 + $0x8] sm:$0xff]
                  %3771 = vst [vmem:[%s3767 + $0x10] sm:$0xff] %v3770
                  %v3772 = vld [vmem:[%s3766 + $0x10] sm:$0xff]
                  %3773 = vst [vmem:[%s3767 + $0x20] sm:$0xff] %v3772
                  %v3774 = vld [vmem:[%s3766 + $0x18] sm:$0xff]
                  %3775 = vst [vmem:[%s3767 + $0x30] sm:$0xff] %v3774
                $region102: #{multi_scale_conv.1} parent=96 // loop_footer
                  %s3765 = sadd.s32 1, %s3761
                $region103: #{multi_scale_conv.1} parent=96 // loop_footer_branch
                  %3760 = sbr.rel target = $region99
                $region104: #{multi_scale_conv.1} parent=96 // loop_exit
                  _
              $region97: #{multi_scale_conv.1} parent=81 // pred_fallthru
                _
              // Predicated region
              $region105: #{multi_scale_conv.1} parent=81 // pred_check
                _
              $region106: #{multi_scale_conv.1} parent=81 // pred_check_branch
                %3777 = sbr.rel target = $region108
              $region107: #{multi_scale_conv.1} parent=81 // pred_region
                _
              $region108: #{multi_scale_conv.1} parent=81 // pred_fallthru
                _
            $region82: #{multi_scale_conv.1} parent=77 // pred_fallthru
              _
            // Predicated region
            $region83: #{multi_scale_conv.1} parent=77 // pred_check
              _
            $region84: #{multi_scale_conv.1} parent=77 // pred_check_branch
              %3739 = sbr.rel target = $region86
            $region85: #{multi_scale_conv.1} parent=77 // pred_region
              %s3741 = ssub.s32 256, 1
              loop: start=0, step=1, limit=1
              $region87: #{multi_scale_conv.1} parent=85 // loop_pre_header
                _
              $region88: #{multi_scale_conv.1} parent=85 // loop_header
                %s3743 = sphi 0, %s3747
                %p3744 = scmp.ge.s32.totalorder %s3743, 1
                %s3748 = sphi %s3728, %s3728
                %s3749 = sphi %s3733, %s3733
              $region89: #{multi_scale_conv.1} parent=85 // loop_header_branch
                %3746 = sbr.rel (%p3744) target = $region93
              $region90: #{multi_scale_conv.1} parent=85 // loop_body
                %v3750 = vld [vmem:[%s3748] sm:%s3741]
                %3751 = vst [vmem:[%s3749] sm:%s3741] %v3750
                %v3752 = vld [vmem:[%s3748 + $0x8] sm:%s3741]
                %3753 = vst [vmem:[%s3749 + $0x10] sm:%s3741] %v3752
                %v3754 = vld [vmem:[%s3748 + $0x10] sm:%s3741]
                %3755 = vst [vmem:[%s3749 + $0x20] sm:%s3741] %v3754
                %v3756 = vld [vmem:[%s3748 + $0x18] sm:%s3741]
                %3757 = vst [vmem:[%s3749 + $0x30] sm:%s3741] %v3756
              $region91: #{multi_scale_conv.1} parent=85 // loop_footer
                %s3747 = sadd.s32 1, %s3743
              $region92: #{multi_scale_conv.1} parent=85 // loop_footer_branch
                %3742 = sbr.rel target = $region88
              $region93: #{multi_scale_conv.1} parent=85 // loop_exit
                _
            $region86: #{multi_scale_conv.1} parent=77 // pred_fallthru
              _
          $region78: #{multi_scale_conv.1} parent=73 // pred_fallthru
            _
          %3778 = vnop
        $region74: #{multi_scale_conv.1} parent=61 // pred_fallthru
          _
      $region62: #{multi_scale_conv.1} parent=5 // pred_fallthru
        _
      %p3779 = scmp.le.s32.totalorder 2, %s9
      // Predicated region
      $region109: #{multi_scale_conv.1} parent=5 // pred_check
        %p3780 = pneg %p3779
      $region110: #{multi_scale_conv.1} parent=5 // pred_check_branch
        %3782 = sbr.rel (%p3780) target = $region112
      $region111: #{multi_scale_conv.1} parent=5 // pred_region
        %s3783 = ssub.s32 %s9, 2
        // Predicated region
        $region113: #{multi_scale_conv.1} parent=111 // pred_check
          %p3784 = pneg %p85
        $region114: #{multi_scale_conv.1} parent=111 // pred_check_branch
          %3786 = sbr.rel (%p3784) target = $region116
        $region115: #{multi_scale_conv.1} parent=111 // pred_region
          %s3787 = sand.u32 %s70, 1
          %s3788 = sand.u32 %s70, 1
          %s3789 = smul.addr %s3788, 32
          %s3790 = scalar_lea.vmem [#allocation5], %s3789
        $region116: #{multi_scale_conv.1} parent=111 // pred_fallthru
          _
      $region112: #{multi_scale_conv.1} parent=5 // pred_fallthru
        _
    $region6: #{multi_scale_conv.1} parent=1 // loop_footer
      %s13 = sadd.s32 1, %s9
    $region7: #{multi_scale_conv.1} parent=1 // loop_footer_branch
      %8 = sbr.rel target = $region3
    $region8: #{multi_scale_conv.1} parent=1 // loop_exit
      _
    %3791 = vsyncpa [#allocation4], 1
    %s3792 = scalar_lea.sflag [#allocation4], 1
    %3793 = vsyncpa %s3792, 1

</llo_original>
